<compile_context>
chip_gen: v7x
topology: tpu7x:2x2x1
jax: 0.10.0
libtpu: 0.0.40
codegen_flags: <defaults>
</compile_context>

<pallas_src>
import jax
import jax.numpy as jnp
from jax.experimental import pallas as pl
from jax.experimental.pallas import tpu as pltpu

DROPOUT_P = 0.2
KEEP_SCALE = 1.0 / (1.0 - DROPOUT_P)
_VMEM_LIMIT = 32 * 1024 * 1024  # explicit, safe on v5e/v6e/v7x
_TILE_M = 512                   # multiple of 8; biggest layer (M=3200) -> 7 tiles


# ----------------------------- Pallas kernels -----------------------------

def _conv_mm_kernel(a_ref, w_ref, b_ref, o_ref):
    """o = relu(a @ w + b); a,w in bf16 on the MXU, f32 accumulate/epilogue."""
    acc = jnp.dot(a_ref[...], w_ref[...], preferred_element_type=jnp.float32)
    o_ref[...] = jnp.maximum(acc + b_ref[...], 0.0).astype(o_ref.dtype)


def _conv_mm_dropout_kernel(a_ref, w_ref, b_ref, m_ref, o_ref):
    """o = relu(a @ w + b) * keep_mask   (mask already holds 0 or 1/(1-p))."""
    acc = jnp.dot(a_ref[...], w_ref[...], preferred_element_type=jnp.float32)
    acc = jnp.maximum(acc + b_ref[...], 0.0)
    o_ref[...] = (acc * m_ref[...].astype(jnp.float32)).astype(o_ref.dtype)


def _tail_kernel(x_ref, w1_ref, b1_ref, w2_ref, b2_ref, w3_ref, b3_ref,
                 m_ref, pool_ref, wl_ref, bl_ref, o_ref):
    """Fused d1/d2/d3 (1x1 convs) + dropout + avg-pool + relu + Linear."""
    h = jnp.dot(x_ref[...], w1_ref[...], preferred_element_type=jnp.float32)
    h = jnp.maximum(h + b1_ref[...], 0.0)
    h = jnp.dot(h.astype(jnp.bfloat16), w2_ref[...],
                preferred_element_type=jnp.float32)
    h = jnp.maximum(h + b2_ref[...], 0.0)
    h = jnp.dot(h.astype(jnp.bfloat16), w3_ref[...],
                preferred_element_type=jnp.float32)
    h = jnp.maximum(h + b3_ref[...], 0.0)
    h = h * m_ref[...].astype(jnp.float32)                 # dropout (d3)
    # AvgPool2d(3, s=2) on a 3x3 map == mean over the 9 spatial rows per batch,
    # expressed as a tiny (N, N*9) averaging matmul (no reshapes in-kernel).
    pooled = jnp.dot(pool_ref[...], h, preferred_element_type=jnp.float32)
    pooled = jnp.maximum(pooled, 0.0)
    out = jnp.dot(pooled.astype(jnp.bfloat16), wl_ref[...],
                  preferred_element_type=jnp.float32) + bl_ref[...]
    o_ref[...] = out.astype(o_ref.dtype)


# --------------------------- pallas_call wrappers ---------------------------

def fused_conv_matmul(a, w, b, mask=None, *, out_dtype=jnp.bfloat16,
                      tile_m=_TILE_M):
    """relu(a @ w + b) (optionally * mask), M-tiled, grid axis parallel."""
    M, K = a.shape
    N = w.shape[1]
    # Small layers: one block (no grid-step overhead).  Large layers: 512-row
    # tiles (multiple of 8) so v7x can shard the "parallel" axis across TCs.
    tm = tile_m if M > tile_m else M
    grid = (pl.cdiv(M, tm),)

    in_specs = [pl.BlockSpec((tm, K), lambda i: (i, 0)),
                pl.BlockSpec((K, N), lambda i: (0, 0)),
                pl.BlockSpec((1, N), lambda i: (0, 0))]
    args = [a, w, b]
    kernel = _conv_mm_kernel
    if mask is not None:
        in_specs.append(pl.BlockSpec((tm, N), lambda i: (i, 0)))
        args.append(mask)
        kernel = _conv_mm_dropout_kernel

    return pl.pallas_call(
        kernel,
        grid=grid,
        in_specs=in_specs,
        out_specs=pl.BlockSpec((tm, N), lambda i: (i, 0)),
        out_shape=jax.ShapeDtypeStruct((M, N), out_dtype),
        compiler_params=pltpu.CompilerParams(
            dimension_semantics=("parallel",),
            vmem_limit_bytes=_VMEM_LIMIT,
        ),
    )(*args)


def fused_tail(x_flat, w1, b1, w2, b2, w3, b3, mask, pool_mat, wl, bl):
    nb = pool_mat.shape[0]
    vmem = lambda: pl.BlockSpec(memory_space=pltpu.MemorySpace.VMEM)
    return pl.pallas_call(
        _tail_kernel,
        in_specs=[vmem() for _ in range(11)],
        out_specs=vmem(),
        out_shape=jax.ShapeDtypeStruct((nb, wl.shape[1]), jnp.float32),
        compiler_params=pltpu.CompilerParams(vmem_limit_bytes=_VMEM_LIMIT),
    )(x_flat, w1, b1, w2, b2, w3, b3, mask, pool_mat, wl, bl)


# ------------------------------- glue (XLA) --------------------------------

def _extract_patches(x, kh, kw, stride, pad):
    """x: (N,H,W,C) bf16 -> (N*Ho*Wo, kh*kw*C) with (kh,kw,C) K-ordering."""
    if pad:
        x = jnp.pad(x, ((0, 0), (pad, pad), (pad, pad), (0, 0)))
    n, h, w, c = x.shape
    ho = (h - kh) // stride + 1
    wo = (w - kw) // stride + 1
    cols = []
    for i in range(kh):
        for j in range(kw):
            cols.append(x[:, i:i + stride * (ho - 1) + 1:stride,
                           j:j + stride * (wo - 1) + 1:stride, :])
    patches = jnp.concatenate(cols, axis=-1)
    return patches.reshape(n * ho * wo, kh * kw * c), ho, wo


def _keep_mask(key, shape):
    keep = jax.random.bernoulli(key, 1.0 - DROPOUT_P, shape)
    return keep.astype(jnp.bfloat16) * KEEP_SCALE     # {0, 1.25}, exact in bf16


def conv2d(x, wb, *, k, stride=1, pad=0, drop_key=None):
    """x: (N,H,W,Cin) bf16;  wb = (w_mat (K,Cout) bf16, b_row (1,Cout) f32)."""
    w_mat, b_row = wb
    n = x.shape[0]
    a, ho, wo = _extract_patches(x, k, k, stride, pad)
    cout = w_mat.shape[1]
    if drop_key is None:
        y = fused_conv_matmul(a, w_mat, b_row)
    else:
        mask = _keep_mask(drop_key, (a.shape[0], cout))
        y = fused_conv_matmul(a, w_mat, b_row, mask)
    return y.reshape(n, ho, wo, cout)


def net_forward(params, x_nchw, rng, training=True):
    p = params
    k_a4, k_b3, k_c3, k_d3 = jax.random.split(rng, 4)
    x = jnp.transpose(x_nchw, (0, 2, 3, 1)).astype(jnp.bfloat16)  # NCHW->NHWC

    x = conv2d(x, p['a1'], k=3, stride=1, pad=1)
    x = conv2d(x, p['a2'], k=3, stride=1, pad=1)
    x = conv2d(x, p['a3'], k=3, stride=2, pad=0)
    x = conv2d(x, p['a4'], k=3, stride=2, pad=0,
               drop_key=k_a4 if training else None)

    x = conv2d(x, p['b1'], k=3, stride=1, pad=1)
    x = conv2d(x, p['b2'], k=3, stride=1, pad=1)
    x = conv2d(x, p['b3'], k=3, stride=2, pad=0,
               drop_key=k_b3 if training else None)

    x = conv2d(x, p['c1'], k=2, stride=1, pad=1)
    x = conv2d(x, p['c2'], k=2, stride=1, pad=1)
    x = conv2d(x, p['c3'], k=2, stride=2, pad=0,
               drop_key=k_c3 if training else None)

    # Fused tail: d1/d2/d3 (1x1 convs == matmuls on (N*3*3, 128)), dropout,
    # avg-pool, relu, final Linear -- one pallas_call.
    n, ho, wo, c = x.shape                       # (N, 3, 3, 128)
    x_flat = x.reshape(n * ho * wo, c)
    if training:
        mask = _keep_mask(k_d3, x_flat.shape)
    else:
        mask = jnp.ones(x_flat.shape, jnp.bfloat16)
    # (N, N*9) averaging matrix; built from constants -> folded under jit.
    pool_mat = (jnp.repeat(jnp.eye(n, dtype=jnp.float32), ho * wo, axis=1)
                / float(ho * wo))
    w1, b1 = p['d1']
    w2, b2 = p['d2']
    w3, b3 = p['d3']
    wl, bl = p['last']
    return fused_tail(x_flat, w1, b1, w2, b2, w3, b3, mask, pool_mat, wl, bl)


# ---------------- parameter packing (done once, not per step) ---------------

_CONV_NAMES = ('a1', 'a2', 'a3', 'a4', 'b1', 'b2', 'b3',
               'c1', 'c2', 'c3', 'd1', 'd2', 'd3')


def prepare_params(raw):
    """PyTorch-layout weights -> (K, Cout) bf16 matmul weights + f32 biases."""
    packed = {}
    for name in _CONV_NAMES:
        w, b = raw[name]                                   # (Cout,Cin,KH,KW)
        cout, cin, kh, kw = w.shape
        w_mat = jnp.transpose(w, (2, 3, 1, 0)).reshape(kh * kw * cin, cout)
        packed[name] = (w_mat.astype(jnp.bfloat16),
                        b.reshape(1, cout).astype(jnp.float32))
    wl, bl = raw['last']                                   # (5,128), (5,)
    packed['last'] = (wl.T.astype(jnp.bfloat16),
                      bl.reshape(1, -1).astype(jnp.float32))
    return packed


# --------------------------- deterministic params ---------------------------

def init_conv(key, cout, cin, kh, kw):
    kw_, kb = jax.random.split(key)
    bound = 1.0 / float(cin * kh * kw) ** 0.5
    w = jax.random.uniform(kw_, (cout, cin, kh, kw), jnp.float32, -bound, bound)
    b = jax.random.uniform(kb, (cout,), jnp.float32, -bound, bound)
    return w, b


def init_linear(key, out_f, in_f):
    kw_, kb = jax.random.split(key)
    bound = 1.0 / float(in_f) ** 0.5
    w = jax.random.uniform(kw_, (out_f, in_f), jnp.float32, -bound, bound)
    b = jax.random.uniform(kb, (out_f,), jnp.float32, -bound, bound)
    return w, b


if __name__ == "__main__":
    key = jax.random.PRNGKey(0)
    keys = jax.random.split(key, 16)
    raw_params = {
        'a1': init_conv(keys[0], 16, 1, 3, 3),
        'a2': init_conv(keys[1], 16, 16, 3, 3),
        'a3': init_conv(keys[2], 16, 16, 3, 3),
        'a4': init_conv(keys[3], 32, 16, 3, 3),
        'b1': init_conv(keys[4], 32, 32, 3, 3),
        'b2': init_conv(keys[5], 32, 32, 3, 3),
        'b3': init_conv(keys[6], 64, 32, 3, 3),
        'c1': init_conv(keys[7], 64, 64, 2, 2),
        'c2': init_conv(keys[8], 64, 64, 2, 2),
        'c3': init_conv(keys[9], 128, 64, 2, 2),
        'd1': init_conv(keys[10], 128, 128, 1, 1),
        'd2': init_conv(keys[11], 128, 128, 1, 1),
        'd3': init_conv(keys[12], 128, 128, 1, 1),
        'last': init_linear(keys[13], 5, 128),
    }
    params = prepare_params(raw_params)

    x = jax.random.normal(keys[14], (2, 1, 40, 40), jnp.float32)   # NCHW
    rng = keys[15]

    fwd = jax.jit(net_forward, static_argnames=("training",))
    out = fwd(params, x, rng, training=True)
    out = jax.block_until_ready(out)
    assert out.shape == (2, 5) and out.dtype == jnp.float32
    print("KERNEL_OK")
</pallas_src>

<mosaic_0001>
module attributes {stable_mosaic.version = 11 : i64} {
  func.func @_conv_mm_kernel(%arg0: i32, %arg1: memref<512x9xbf16, #tpu.memory_space<vmem>>, %arg2: memref<9x16xbf16, #tpu.memory_space<vmem>>, %arg3: memref<1x16xf32, #tpu.memory_space<vmem>>, %arg4: memref<512x16xbf16, #tpu.memory_space<vmem>>) attributes {dimension_semantics = [#tpu.dimension_semantics<parallel>], iteration_bounds = array<i64: 7>, scalar_prefetch = 0 : i64, scratch_operands = 0 : i64, tpu.core_type = #tpu.core_type<tc>, window_params = [{transform_indices = @transform_0, window_bounds = array<i64: 512, 9>}, {pipeline_mode = #tpu.pipeline_mode<synchronous>, transform_indices = @transform_1, window_bounds = array<i64: 9, 16>}, {pipeline_mode = #tpu.pipeline_mode<synchronous>, transform_indices = @transform_2, window_bounds = array<i64: 1, 16>}, {transform_indices = @transform_3, window_bounds = array<i64: 512, 16>}]} {
    %c0 = arith.constant 0 : index
    %c0_0 = arith.constant 0 : index
    %0 = vector.load %arg1[%c0, %c0_0] : memref<512x9xbf16, #tpu.memory_space<vmem>>, vector<512x9xbf16>
    %c0_1 = arith.constant 0 : index
    %c0_2 = arith.constant 0 : index
    %1 = vector.load %arg2[%c0_1, %c0_2] : memref<9x16xbf16, #tpu.memory_space<vmem>>, vector<9x16xbf16>
    %cst = arith.constant dense<0.000000e+00> : vector<512x16xf32>
    %2 = tpu.matmul %0, %1, %cst {dimension_numbers = #tpu.dot_dimension_numbers<[1], [0], [0], [1], [0, 0, 1, 1], [], []>} : vector<512x9xbf16>, vector<9x16xbf16>, vector<512x16xf32> -> vector<512x16xf32>
    %c0_3 = arith.constant 0 : index
    %c0_4 = arith.constant 0 : index
    %3 = vector.load %arg3[%c0_3, %c0_4] : memref<1x16xf32, #tpu.memory_space<vmem>>, vector<1x16xf32>
    %4 = vector.broadcast %3 : vector<1x16xf32> to vector<512x16xf32>
    %5 = arith.addf %2, %4 : vector<512x16xf32>
    %cst_5 = arith.constant 0.000000e+00 : f32
    %6 = vector.broadcast %cst_5 : f32 to vector<512x16xf32>
    %7 = arith.maximumf %5, %6 : vector<512x16xf32>
    %8 = arith.truncf %7 : vector<512x16xf32> to vector<512x16xbf16>
    %c0_6 = arith.constant 0 : index
    %c0_7 = arith.constant 0 : index
    %9 = vector.load %arg4[%c0_6, %c0_7] : memref<512x16xbf16, #tpu.memory_space<vmem>>, vector<512x16xbf16>
    tpu.vector_store %arg4[%c0_6, %c0_7], %8 {strides = array<i32>} : memref<512x16xbf16, #tpu.memory_space<vmem>>, vector<512x16xbf16>,
    return
  }
  func.func @transform_0(%arg0: i32) -> (i32, i32) {
    %c0_i32 = arith.constant 0 : i32
    %c0_i32_0 = arith.constant 0 : i32
    return %arg0, %c0_i32 : i32, i32
  }
  func.func @transform_1(%arg0: i32) -> (i32, i32) {
    %c0_i32 = arith.constant 0 : i32
    %c0_i32_0 = arith.constant 0 : i32
    %c0_i32_1 = arith.constant 0 : i32
    return %c0_i32, %c0_i32_0 : i32, i32
  }
  func.func @transform_2(%arg0: i32) -> (i32, i32) {
    %c0_i32 = arith.constant 0 : i32
    %c0_i32_0 = arith.constant 0 : i32
    %c0_i32_1 = arith.constant 0 : i32
    return %c0_i32, %c0_i32_0 : i32, i32
  }
  func.func @transform_3(%arg0: i32) -> (i32, i32) {
    %c0_i32 = arith.constant 0 : i32
    %c0_i32_0 = arith.constant 0 : i32
    return %arg0, %c0_i32 : i32, i32
  }
}

module attributes {stable_mosaic.version = 11 : i64} {
  func.func @_conv_mm_kernel(%arg0: i32, %arg1: memref<512x144xbf16, #tpu.memory_space<vmem>>, %arg2: memref<144x16xbf16, #tpu.memory_space<vmem>>, %arg3: memref<1x16xf32, #tpu.memory_space<vmem>>, %arg4: memref<512x16xbf16, #tpu.memory_space<vmem>>) attributes {dimension_semantics = [#tpu.dimension_semantics<parallel>], iteration_bounds = array<i64: 7>, scalar_prefetch = 0 : i64, scratch_operands = 0 : i64, tpu.core_type = #tpu.core_type<tc>, window_params = [{transform_indices = @transform_0, window_bounds = array<i64: 512, 144>}, {pipeline_mode = #tpu.pipeline_mode<synchronous>, transform_indices = @transform_1, window_bounds = array<i64: 144, 16>}, {pipeline_mode = #tpu.pipeline_mode<synchronous>, transform_indices = @transform_2, window_bounds = array<i64: 1, 16>}, {transform_indices = @transform_3, window_bounds = array<i64: 512, 16>}]} {
    %c0 = arith.constant 0 : index
    %c0_0 = arith.constant 0 : index
    %0 = vector.load %arg1[%c0, %c0_0] : memref<512x144xbf16, #tpu.memory_space<vmem>>, vector<512x144xbf16>
    %c0_1 = arith.constant 0 : index
    %c0_2 = arith.constant 0 : index
    %1 = vector.load %arg2[%c0_1, %c0_2] : memref<144x16xbf16, #tpu.memory_space<vmem>>, vector<144x16xbf16>
    %cst = arith.constant dense<0.000000e+00> : vector<512x16xf32>
    %2 = tpu.matmul %0, %1, %cst {dimension_numbers = #tpu.dot_dimension_numbers<[1], [0], [0], [1], [0, 0, 1, 1], [], []>} : vector<512x144xbf16>, vector<144x16xbf16>, vector<512x16xf32> -> vector<512x16xf32>
    %c0_3 = arith.constant 0 : index
    %c0_4 = arith.constant 0 : index
    %3 = vector.load %arg3[%c0_3, %c0_4] : memref<1x16xf32, #tpu.memory_space<vmem>>, vector<1x16xf32>
    %4 = vector.broadcast %3 : vector<1x16xf32> to vector<512x16xf32>
    %5 = arith.addf %2, %4 : vector<512x16xf32>
    %cst_5 = arith.constant 0.000000e+00 : f32
    %6 = vector.broadcast %cst_5 : f32 to vector<512x16xf32>
    %7 = arith.maximumf %5, %6 : vector<512x16xf32>
    %8 = arith.truncf %7 : vector<512x16xf32> to vector<512x16xbf16>
    %c0_6 = arith.constant 0 : index
    %c0_7 = arith.constant 0 : index
    %9 = vector.load %arg4[%c0_6, %c0_7] : memref<512x16xbf16, #tpu.memory_space<vmem>>, vector<512x16xbf16>
    tpu.vector_store %arg4[%c0_6, %c0_7], %8 {strides = array<i32>} : memref<512x16xbf16, #tpu.memory_space<vmem>>, vector<512x16xbf16>,
    return
  }
  func.func @transform_0(%arg0: i32) -> (i32, i32) {
    %c0_i32 = arith.constant 0 : i32
    %c0_i32_0 = arith.constant 0 : i32
    return %arg0, %c0_i32 : i32, i32
  }
  func.func @transform_1(%arg0: i32) -> (i32, i32) {
    %c0_i32 = arith.constant 0 : i32
    %c0_i32_0 = arith.constant 0 : i32
    %c0_i32_1 = arith.constant 0 : i32
    return %c0_i32, %c0_i32_0 : i32, i32
  }
  func.func @transform_2(%arg0: i32) -> (i32, i32) {
    %c0_i32 = arith.constant 0 : i32
    %c0_i32_0 = arith.constant 0 : i32
    %c0_i32_1 = arith.constant 0 : i32
    return %c0_i32, %c0_i32_0 : i32, i32
  }
  func.func @transform_3(%arg0: i32) -> (i32, i32) {
    %c0_i32 = arith.constant 0 : i32
    %c0_i32_0 = arith.constant 0 : i32
    return %arg0, %c0_i32 : i32, i32
  }
}

module attributes {stable_mosaic.version = 11 : i64} {
  func.func @_conv_mm_kernel(%arg0: i32, %arg1: memref<512x144xbf16, #tpu.memory_space<vmem>>, %arg2: memref<144x16xbf16, #tpu.memory_space<vmem>>, %arg3: memref<1x16xf32, #tpu.memory_space<vmem>>, %arg4: memref<512x16xbf16, #tpu.memory_space<vmem>>) attributes {dimension_semantics = [#tpu.dimension_semantics<parallel>], iteration_bounds = array<i64: 2>, scalar_prefetch = 0 : i64, scratch_operands = 0 : i64, tpu.core_type = #tpu.core_type<tc>, window_params = [{transform_indices = @transform_0, window_bounds = array<i64: 512, 144>}, {pipeline_mode = #tpu.pipeline_mode<synchronous>, transform_indices = @transform_1, window_bounds = array<i64: 144, 16>}, {pipeline_mode = #tpu.pipeline_mode<synchronous>, transform_indices = @transform_2, window_bounds = array<i64: 1, 16>}, {transform_indices = @transform_3, window_bounds = array<i64: 512, 16>}]} {
    %c0 = arith.constant 0 : index
    %c0_0 = arith.constant 0 : index
    %0 = vector.load %arg1[%c0, %c0_0] : memref<512x144xbf16, #tpu.memory_space<vmem>>, vector<512x144xbf16>
    %c0_1 = arith.constant 0 : index
    %c0_2 = arith.constant 0 : index
    %1 = vector.load %arg2[%c0_1, %c0_2] : memref<144x16xbf16, #tpu.memory_space<vmem>>, vector<144x16xbf16>
    %cst = arith.constant dense<0.000000e+00> : vector<512x16xf32>
    %2 = tpu.matmul %0, %1, %cst {dimension_numbers = #tpu.dot_dimension_numbers<[1], [0], [0], [1], [0, 0, 1, 1], [], []>} : vector<512x144xbf16>, vector<144x16xbf16>, vector<512x16xf32> -> vector<512x16xf32>
    %c0_3 = arith.constant 0 : index
    %c0_4 = arith.constant 0 : index
    %3 = vector.load %arg3[%c0_3, %c0_4] : memref<1x16xf32, #tpu.memory_space<vmem>>, vector<1x16xf32>
    %4 = vector.broadcast %3 : vector<1x16xf32> to vector<512x16xf32>
    %5 = arith.addf %2, %4 : vector<512x16xf32>
    %cst_5 = arith.constant 0.000000e+00 : f32
    %6 = vector.broadcast %cst_5 : f32 to vector<512x16xf32>
    %7 = arith.maximumf %5, %6 : vector<512x16xf32>
    %8 = arith.truncf %7 : vector<512x16xf32> to vector<512x16xbf16>
    %c0_6 = arith.constant 0 : index
    %c0_7 = arith.constant 0 : index
    %9 = vector.load %arg4[%c0_6, %c0_7] : memref<512x16xbf16, #tpu.memory_space<vmem>>, vector<512x16xbf16>
    tpu.vector_store %arg4[%c0_6, %c0_7], %8 {strides = array<i32>} : memref<512x16xbf16, #tpu.memory_space<vmem>>, vector<512x16xbf16>,
    return
  }
  func.func @transform_0(%arg0: i32) -> (i32, i32) {
    %c0_i32 = arith.constant 0 : i32
    %c0_i32_0 = arith.constant 0 : i32
    return %arg0, %c0_i32 : i32, i32
  }
  func.func @transform_1(%arg0: i32) -> (i32, i32) {
    %c0_i32 = arith.constant 0 : i32
    %c0_i32_0 = arith.constant 0 : i32
    %c0_i32_1 = arith.constant 0 : i32
    return %c0_i32, %c0_i32_0 : i32, i32
  }
  func.func @transform_2(%arg0: i32) -> (i32, i32) {
    %c0_i32 = arith.constant 0 : i32
    %c0_i32_0 = arith.constant 0 : i32
    %c0_i32_1 = arith.constant 0 : i32
    return %c0_i32, %c0_i32_0 : i32, i32
  }
  func.func @transform_3(%arg0: i32) -> (i32, i32) {
    %c0_i32 = arith.constant 0 : i32
    %c0_i32_0 = arith.constant 0 : i32
    return %arg0, %c0_i32 : i32, i32
  }
}

module attributes {stable_mosaic.version = 11 : i64} {
  func.func @_conv_mm_dropout_kernel(%arg0: i32, %arg1: memref<162x144xbf16, #tpu.memory_space<vmem>>, %arg2: memref<144x32xbf16, #tpu.memory_space<vmem>>, %arg3: memref<1x32xf32, #tpu.memory_space<vmem>>, %arg4: memref<162x32xbf16, #tpu.memory_space<vmem>>, %arg5: memref<162x32xbf16, #tpu.memory_space<vmem>>) attributes {dimension_semantics = [#tpu.dimension_semantics<parallel>], iteration_bounds = array<i64: 1>, scalar_prefetch = 0 : i64, scratch_operands = 0 : i64, tpu.core_type = #tpu.core_type<tc>, window_params = [{transform_indices = @transform_0, window_bounds = array<i64: 162, 144>}, {pipeline_mode = #tpu.pipeline_mode<synchronous>, transform_indices = @transform_1, window_bounds = array<i64: 144, 32>}, {pipeline_mode = #tpu.pipeline_mode<synchronous>, transform_indices = @transform_2, window_bounds = array<i64: 1, 32>}, {transform_indices = @transform_3, window_bounds = array<i64: 162, 32>}, {transform_indices = @transform_4, window_bounds = array<i64: 162, 32>}]} {
    %c0 = arith.constant 0 : index
    %c0_0 = arith.constant 0 : index
    %0 = vector.load %arg1[%c0, %c0_0] : memref<162x144xbf16, #tpu.memory_space<vmem>>, vector<162x144xbf16>
    %c0_1 = arith.constant 0 : index
    %c0_2 = arith.constant 0 : index
    %1 = vector.load %arg2[%c0_1, %c0_2] : memref<144x32xbf16, #tpu.memory_space<vmem>>, vector<144x32xbf16>
    %cst = arith.constant dense<0.000000e+00> : vector<162x32xf32>
    %2 = tpu.matmul %0, %1, %cst {dimension_numbers = #tpu.dot_dimension_numbers<[1], [0], [0], [1], [0, 0, 1, 1], [], []>} : vector<162x144xbf16>, vector<144x32xbf16>, vector<162x32xf32> -> vector<162x32xf32>
    %c0_3 = arith.constant 0 : index
    %c0_4 = arith.constant 0 : index
    %3 = vector.load %arg3[%c0_3, %c0_4] : memref<1x32xf32, #tpu.memory_space<vmem>>, vector<1x32xf32>
    %4 = vector.broadcast %3 : vector<1x32xf32> to vector<162x32xf32>
    %5 = arith.addf %2, %4 : vector<162x32xf32>
    %cst_5 = arith.constant 0.000000e+00 : f32
    %6 = vector.broadcast %cst_5 : f32 to vector<162x32xf32>
    %7 = arith.maximumf %5, %6 : vector<162x32xf32>
    %c0_6 = arith.constant 0 : index
    %c0_7 = arith.constant 0 : index
    %8 = vector.load %arg4[%c0_6, %c0_7] : memref<162x32xbf16, #tpu.memory_space<vmem>>, vector<162x32xbf16>
    %9 = arith.extf %8 : vector<162x32xbf16> to vector<162x32xf32>
    %10 = arith.mulf %7, %9 : vector<162x32xf32>
    %11 = arith.truncf %10 : vector<162x32xf32> to vector<162x32xbf16>
    %c0_8 = arith.constant 0 : index
    %c0_9 = arith.constant 0 : index
    %12 = vector.load %arg5[%c0_8, %c0_9] : memref<162x32xbf16, #tpu.memory_space<vmem>>, vector<162x32xbf16>
    tpu.vector_store %arg5[%c0_8, %c0_9], %11 {strides = array<i32>} : memref<162x32xbf16, #tpu.memory_space<vmem>>, vector<162x32xbf16>,
    return
  }
  func.func @transform_0(%arg0: i32) -> (i32, i32) {
    %c0_i32 = arith.constant 0 : i32
    %c0_i32_0 = arith.constant 0 : i32
    return %arg0, %c0_i32 : i32, i32
  }
  func.func @transform_1(%arg0: i32) -> (i32, i32) {
    %c0_i32 = arith.constant 0 : i32
    %c0_i32_0 = arith.constant 0 : i32
    %c0_i32_1 = arith.constant 0 : i32
    return %c0_i32, %c0_i32_0 : i32, i32
  }
  func.func @transform_2(%arg0: i32) -> (i32, i32) {
    %c0_i32 = arith.constant 0 : i32
    %c0_i32_0 = arith.constant 0 : i32
    %c0_i32_1 = arith.constant 0 : i32
    return %c0_i32, %c0_i32_0 : i32, i32
  }
  func.func @transform_3(%arg0: i32) -> (i32, i32) {
    %c0_i32 = arith.constant 0 : i32
    %c0_i32_0 = arith.constant 0 : i32
    return %arg0, %c0_i32 : i32, i32
  }
  func.func @transform_4(%arg0: i32) -> (i32, i32) {
    %c0_i32 = arith.constant 0 : i32
    %c0_i32_0 = arith.constant 0 : i32
    return %arg0, %c0_i32 : i32, i32
  }
}

module attributes {stable_mosaic.version = 11 : i64} {
  func.func @_conv_mm_kernel(%arg0: i32, %arg1: memref<162x288xbf16, #tpu.memory_space<vmem>>, %arg2: memref<288x32xbf16, #tpu.memory_space<vmem>>, %arg3: memref<1x32xf32, #tpu.memory_space<vmem>>, %arg4: memref<162x32xbf16, #tpu.memory_space<vmem>>) attributes {dimension_semantics = [#tpu.dimension_semantics<parallel>], iteration_bounds = array<i64: 1>, scalar_prefetch = 0 : i64, scratch_operands = 0 : i64, tpu.core_type = #tpu.core_type<tc>, window_params = [{transform_indices = @transform_0, window_bounds = array<i64: 162, 288>}, {pipeline_mode = #tpu.pipeline_mode<synchronous>, transform_indices = @transform_1, window_bounds = array<i64: 288, 32>}, {pipeline_mode = #tpu.pipeline_mode<synchronous>, transform_indices = @transform_2, window_bounds = array<i64: 1, 32>}, {transform_indices = @transform_3, window_bounds = array<i64: 162, 32>}]} {
    %c0 = arith.constant 0 : index
    %c0_0 = arith.constant 0 : index
    %0 = vector.load %arg1[%c0, %c0_0] : memref<162x288xbf16, #tpu.memory_space<vmem>>, vector<162x288xbf16>
    %c0_1 = arith.constant 0 : index
    %c0_2 = arith.constant 0 : index
    %1 = vector.load %arg2[%c0_1, %c0_2] : memref<288x32xbf16, #tpu.memory_space<vmem>>, vector<288x32xbf16>
    %cst = arith.constant dense<0.000000e+00> : vector<162x32xf32>
    %2 = tpu.matmul %0, %1, %cst {dimension_numbers = #tpu.dot_dimension_numbers<[1], [0], [0], [1], [0, 0, 1, 1], [], []>} : vector<162x288xbf16>, vector<288x32xbf16>, vector<162x32xf32> -> vector<162x32xf32>
    %c0_3 = arith.constant 0 : index
    %c0_4 = arith.constant 0 : index
    %3 = vector.load %arg3[%c0_3, %c0_4] : memref<1x32xf32, #tpu.memory_space<vmem>>, vector<1x32xf32>
    %4 = vector.broadcast %3 : vector<1x32xf32> to vector<162x32xf32>
    %5 = arith.addf %2, %4 : vector<162x32xf32>
    %cst_5 = arith.constant 0.000000e+00 : f32
    %6 = vector.broadcast %cst_5 : f32 to vector<162x32xf32>
    %7 = arith.maximumf %5, %6 : vector<162x32xf32>
    %8 = arith.truncf %7 : vector<162x32xf32> to vector<162x32xbf16>
    %c0_6 = arith.constant 0 : index
    %c0_7 = arith.constant 0 : index
    %9 = vector.load %arg4[%c0_6, %c0_7] : memref<162x32xbf16, #tpu.memory_space<vmem>>, vector<162x32xbf16>
    tpu.vector_store %arg4[%c0_6, %c0_7], %8 {strides = array<i32>} : memref<162x32xbf16, #tpu.memory_space<vmem>>, vector<162x32xbf16>,
    return
  }
  func.func @transform_0(%arg0: i32) -> (i32, i32) {
    %c0_i32 = arith.constant 0 : i32
    %c0_i32_0 = arith.constant 0 : i32
    return %arg0, %c0_i32 : i32, i32
  }
  func.func @transform_1(%arg0: i32) -> (i32, i32) {
    %c0_i32 = arith.constant 0 : i32
    %c0_i32_0 = arith.constant 0 : i32
    %c0_i32_1 = arith.constant 0 : i32
    return %c0_i32, %c0_i32_0 : i32, i32
  }
  func.func @transform_2(%arg0: i32) -> (i32, i32) {
    %c0_i32 = arith.constant 0 : i32
    %c0_i32_0 = arith.constant 0 : i32
    %c0_i32_1 = arith.constant 0 : i32
    return %c0_i32, %c0_i32_0 : i32, i32
  }
  func.func @transform_3(%arg0: i32) -> (i32, i32) {
    %c0_i32 = arith.constant 0 : i32
    %c0_i32_0 = arith.constant 0 : i32
    return %arg0, %c0_i32 : i32, i32
  }
}

module attributes {stable_mosaic.version = 11 : i64} {
  func.func @_conv_mm_dropout_kernel(%arg0: i32, %arg1: memref<32x288xbf16, #tpu.memory_space<vmem>>, %arg2: memref<288x64xbf16, #tpu.memory_space<vmem>>, %arg3: memref<1x64xf32, #tpu.memory_space<vmem>>, %arg4: memref<32x64xbf16, #tpu.memory_space<vmem>>, %arg5: memref<32x64xbf16, #tpu.memory_space<vmem>>) attributes {dimension_semantics = [#tpu.dimension_semantics<parallel>], iteration_bounds = array<i64: 1>, scalar_prefetch = 0 : i64, scratch_operands = 0 : i64, tpu.core_type = #tpu.core_type<tc>, window_params = [{transform_indices = @transform_0, window_bounds = array<i64: 32, 288>}, {pipeline_mode = #tpu.pipeline_mode<synchronous>, transform_indices = @transform_1, window_bounds = array<i64: 288, 64>}, {pipeline_mode = #tpu.pipeline_mode<synchronous>, transform_indices = @transform_2, window_bounds = array<i64: 1, 64>}, {transform_indices = @transform_3, window_bounds = array<i64: 32, 64>}, {transform_indices = @transform_4, window_bounds = array<i64: 32, 64>}]} {
    %c0 = arith.constant 0 : index
    %c0_0 = arith.constant 0 : index
    %0 = vector.load %arg1[%c0, %c0_0] : memref<32x288xbf16, #tpu.memory_space<vmem>>, vector<32x288xbf16>
    %c0_1 = arith.constant 0 : index
    %c0_2 = arith.constant 0 : index
    %1 = vector.load %arg2[%c0_1, %c0_2] : memref<288x64xbf16, #tpu.memory_space<vmem>>, vector<288x64xbf16>
    %cst = arith.constant dense<0.000000e+00> : vector<32x64xf32>
    %2 = tpu.matmul %0, %1, %cst {dimension_numbers = #tpu.dot_dimension_numbers<[1], [0], [0], [1], [0, 0, 1, 1], [], []>} : vector<32x288xbf16>, vector<288x64xbf16>, vector<32x64xf32> -> vector<32x64xf32>
    %c0_3 = arith.constant 0 : index
    %c0_4 = arith.constant 0 : index
    %3 = vector.load %arg3[%c0_3, %c0_4] : memref<1x64xf32, #tpu.memory_space<vmem>>, vector<1x64xf32>
    %4 = vector.broadcast %3 : vector<1x64xf32> to vector<32x64xf32>
    %5 = arith.addf %2, %4 : vector<32x64xf32>
    %cst_5 = arith.constant 0.000000e+00 : f32
    %6 = vector.broadcast %cst_5 : f32 to vector<32x64xf32>
    %7 = arith.maximumf %5, %6 : vector<32x64xf32>
    %c0_6 = arith.constant 0 : index
    %c0_7 = arith.constant 0 : index
    %8 = vector.load %arg4[%c0_6, %c0_7] : memref<32x64xbf16, #tpu.memory_space<vmem>>, vector<32x64xbf16>
    %9 = arith.extf %8 : vector<32x64xbf16> to vector<32x64xf32>
    %10 = arith.mulf %7, %9 : vector<32x64xf32>
    %11 = arith.truncf %10 : vector<32x64xf32> to vector<32x64xbf16>
    %c0_8 = arith.constant 0 : index
    %c0_9 = arith.constant 0 : index
    %12 = vector.load %arg5[%c0_8, %c0_9] : memref<32x64xbf16, #tpu.memory_space<vmem>>, vector<32x64xbf16>
    tpu.vector_store %arg5[%c0_8, %c0_9], %11 {strides = array<i32>} : memref<32x64xbf16, #tpu.memory_space<vmem>>, vector<32x64xbf16>,
    return
  }
  func.func @transform_0(%arg0: i32) -> (i32, i32) {
    %c0_i32 = arith.constant 0 : i32
    %c0_i32_0 = arith.constant 0 : i32
    return %arg0, %c0_i32 : i32, i32
  }
  func.func @transform_1(%arg0: i32) -> (i32, i32) {
    %c0_i32 = arith.constant 0 : i32
    %c0_i32_0 = arith.constant 0 : i32
    %c0_i32_1 = arith.constant 0 : i32
    return %c0_i32, %c0_i32_0 : i32, i32
  }
  func.func @transform_2(%arg0: i32) -> (i32, i32) {
    %c0_i32 = arith.constant 0 : i32
    %c0_i32_0 = arith.constant 0 : i32
    %c0_i32_1 = arith.constant 0 : i32
    return %c0_i32, %c0_i32_0 : i32, i32
  }
  func.func @transform_3(%arg0: i32) -> (i32, i32) {
    %c0_i32 = arith.constant 0 : i32
    %c0_i32_0 = arith.constant 0 : i32
    return %arg0, %c0_i32 : i32, i32
  }
  func.func @transform_4(%arg0: i32) -> (i32, i32) {
    %c0_i32 = arith.constant 0 : i32
    %c0_i32_0 = arith.constant 0 : i32
    return %arg0, %c0_i32 : i32, i32
  }
}

module attributes {stable_mosaic.version = 11 : i64} {
  func.func @_conv_mm_kernel(%arg0: i32, %arg1: memref<50x256xbf16, #tpu.memory_space<vmem>>, %arg2: memref<256x64xbf16, #tpu.memory_space<vmem>>, %arg3: memref<1x64xf32, #tpu.memory_space<vmem>>, %arg4: memref<50x64xbf16, #tpu.memory_space<vmem>>) attributes {dimension_semantics = [#tpu.dimension_semantics<parallel>], iteration_bounds = array<i64: 1>, scalar_prefetch = 0 : i64, scratch_operands = 0 : i64, tpu.core_type = #tpu.core_type<tc>, window_params = [{transform_indices = @transform_0, window_bounds = array<i64: 50, 256>}, {pipeline_mode = #tpu.pipeline_mode<synchronous>, transform_indices = @transform_1, window_bounds = array<i64: 256, 64>}, {pipeline_mode = #tpu.pipeline_mode<synchronous>, transform_indices = @transform_2, window_bounds = array<i64: 1, 64>}, {transform_indices = @transform_3, window_bounds = array<i64: 50, 64>}]} {
    %c0 = arith.constant 0 : index
    %c0_0 = arith.constant 0 : index
    %0 = vector.load %arg1[%c0, %c0_0] : memref<50x256xbf16, #tpu.memory_space<vmem>>, vector<50x256xbf16>
    %c0_1 = arith.constant 0 : index
    %c0_2 = arith.constant 0 : index
    %1 = vector.load %arg2[%c0_1, %c0_2] : memref<256x64xbf16, #tpu.memory_space<vmem>>, vector<256x64xbf16>
    %cst = arith.constant dense<0.000000e+00> : vector<50x64xf32>
    %2 = tpu.matmul %0, %1, %cst {dimension_numbers = #tpu.dot_dimension_numbers<[1], [0], [0], [1], [0, 0, 1, 1], [], []>} : vector<50x256xbf16>, vector<256x64xbf16>, vector<50x64xf32> -> vector<50x64xf32>
    %c0_3 = arith.constant 0 : index
    %c0_4 = arith.constant 0 : index
    %3 = vector.load %arg3[%c0_3, %c0_4] : memref<1x64xf32, #tpu.memory_space<vmem>>, vector<1x64xf32>
    %4 = vector.broadcast %3 : vector<1x64xf32> to vector<50x64xf32>
    %5 = arith.addf %2, %4 : vector<50x64xf32>
    %cst_5 = arith.constant 0.000000e+00 : f32
    %6 = vector.broadcast %cst_5 : f32 to vector<50x64xf32>
    %7 = arith.maximumf %5, %6 : vector<50x64xf32>
    %8 = arith.truncf %7 : vector<50x64xf32> to vector<50x64xbf16>
    %c0_6 = arith.constant 0 : index
    %c0_7 = arith.constant 0 : index
    %9 = vector.load %arg4[%c0_6, %c0_7] : memref<50x64xbf16, #tpu.memory_space<vmem>>, vector<50x64xbf16>
    tpu.vector_store %arg4[%c0_6, %c0_7], %8 {strides = array<i32>} : memref<50x64xbf16, #tpu.memory_space<vmem>>, vector<50x64xbf16>,
    return
  }
  func.func @transform_0(%arg0: i32) -> (i32, i32) {
    %c0_i32 = arith.constant 0 : i32
    %c0_i32_0 = arith.constant 0 : i32
    return %arg0, %c0_i32 : i32, i32
  }
  func.func @transform_1(%arg0: i32) -> (i32, i32) {
    %c0_i32 = arith.constant 0 : i32
    %c0_i32_0 = arith.constant 0 : i32
    %c0_i32_1 = arith.constant 0 : i32
    return %c0_i32, %c0_i32_0 : i32, i32
  }
  func.func @transform_2(%arg0: i32) -> (i32, i32) {
    %c0_i32 = arith.constant 0 : i32
    %c0_i32_0 = arith.constant 0 : i32
    %c0_i32_1 = arith.constant 0 : i32
    return %c0_i32, %c0_i32_0 : i32, i32
  }
  func.func @transform_3(%arg0: i32) -> (i32, i32) {
    %c0_i32 = arith.constant 0 : i32
    %c0_i32_0 = arith.constant 0 : i32
    return %arg0, %c0_i32 : i32, i32
  }
}

module attributes {stable_mosaic.version = 11 : i64} {
  func.func @_conv_mm_kernel(%arg0: i32, %arg1: memref<72x256xbf16, #tpu.memory_space<vmem>>, %arg2: memref<256x64xbf16, #tpu.memory_space<vmem>>, %arg3: memref<1x64xf32, #tpu.memory_space<vmem>>, %arg4: memref<72x64xbf16, #tpu.memory_space<vmem>>) attributes {dimension_semantics = [#tpu.dimension_semantics<parallel>], iteration_bounds = array<i64: 1>, scalar_prefetch = 0 : i64, scratch_operands = 0 : i64, tpu.core_type = #tpu.core_type<tc>, window_params = [{transform_indices = @transform_0, window_bounds = array<i64: 72, 256>}, {pipeline_mode = #tpu.pipeline_mode<synchronous>, transform_indices = @transform_1, window_bounds = array<i64: 256, 64>}, {pipeline_mode = #tpu.pipeline_mode<synchronous>, transform_indices = @transform_2, window_bounds = array<i64: 1, 64>}, {transform_indices = @transform_3, window_bounds = array<i64: 72, 64>}]} {
    %c0 = arith.constant 0 : index
    %c0_0 = arith.constant 0 : index
    %0 = vector.load %arg1[%c0, %c0_0] : memref<72x256xbf16, #tpu.memory_space<vmem>>, vector<72x256xbf16>
    %c0_1 = arith.constant 0 : index
    %c0_2 = arith.constant 0 : index
    %1 = vector.load %arg2[%c0_1, %c0_2] : memref<256x64xbf16, #tpu.memory_space<vmem>>, vector<256x64xbf16>
    %cst = arith.constant dense<0.000000e+00> : vector<72x64xf32>
    %2 = tpu.matmul %0, %1, %cst {dimension_numbers = #tpu.dot_dimension_numbers<[1], [0], [0], [1], [0, 0, 1, 1], [], []>} : vector<72x256xbf16>, vector<256x64xbf16>, vector<72x64xf32> -> vector<72x64xf32>
    %c0_3 = arith.constant 0 : index
    %c0_4 = arith.constant 0 : index
    %3 = vector.load %arg3[%c0_3, %c0_4] : memref<1x64xf32, #tpu.memory_space<vmem>>, vector<1x64xf32>
    %4 = vector.broadcast %3 : vector<1x64xf32> to vector<72x64xf32>
    %5 = arith.addf %2, %4 : vector<72x64xf32>
    %cst_5 = arith.constant 0.000000e+00 : f32
    %6 = vector.broadcast %cst_5 : f32 to vector<72x64xf32>
    %7 = arith.maximumf %5, %6 : vector<72x64xf32>
    %8 = arith.truncf %7 : vector<72x64xf32> to vector<72x64xbf16>
    %c0_6 = arith.constant 0 : index
    %c0_7 = arith.constant 0 : index
    %9 = vector.load %arg4[%c0_6, %c0_7] : memref<72x64xbf16, #tpu.memory_space<vmem>>, vector<72x64xbf16>
    tpu.vector_store %arg4[%c0_6, %c0_7], %8 {strides = array<i32>} : memref<72x64xbf16, #tpu.memory_space<vmem>>, vector<72x64xbf16>,
    return
  }
  func.func @transform_0(%arg0: i32) -> (i32, i32) {
    %c0_i32 = arith.constant 0 : i32
    %c0_i32_0 = arith.constant 0 : i32
    return %arg0, %c0_i32 : i32, i32
  }
  func.func @transform_1(%arg0: i32) -> (i32, i32) {
    %c0_i32 = arith.constant 0 : i32
    %c0_i32_0 = arith.constant 0 : i32
    %c0_i32_1 = arith.constant 0 : i32
    return %c0_i32, %c0_i32_0 : i32, i32
  }
  func.func @transform_2(%arg0: i32) -> (i32, i32) {
    %c0_i32 = arith.constant 0 : i32
    %c0_i32_0 = arith.constant 0 : i32
    %c0_i32_1 = arith.constant 0 : i32
    return %c0_i32, %c0_i32_0 : i32, i32
  }
  func.func @transform_3(%arg0: i32) -> (i32, i32) {
    %c0_i32 = arith.constant 0 : i32
    %c0_i32_0 = arith.constant 0 : i32
    return %arg0, %c0_i32 : i32, i32
  }
}

module attributes {stable_mosaic.version = 11 : i64} {
  func.func @_conv_mm_dropout_kernel(%arg0: i32, %arg1: memref<18x256xbf16, #tpu.memory_space<vmem>>, %arg2: memref<256x128xbf16, #tpu.memory_space<vmem>>, %arg3: memref<1x128xf32, #tpu.memory_space<vmem>>, %arg4: memref<18x128xbf16, #tpu.memory_space<vmem>>, %arg5: memref<18x128xbf16, #tpu.memory_space<vmem>>) attributes {dimension_semantics = [#tpu.dimension_semantics<parallel>], iteration_bounds = array<i64: 1>, scalar_prefetch = 0 : i64, scratch_operands = 0 : i64, tpu.core_type = #tpu.core_type<tc>, window_params = [{transform_indices = @transform_0, window_bounds = array<i64: 18, 256>}, {pipeline_mode = #tpu.pipeline_mode<synchronous>, transform_indices = @transform_1, window_bounds = array<i64: 256, 128>}, {pipeline_mode = #tpu.pipeline_mode<synchronous>, transform_indices = @transform_2, window_bounds = array<i64: 1, 128>}, {transform_indices = @transform_3, window_bounds = array<i64: 18, 128>}, {transform_indices = @transform_4, window_bounds = array<i64: 18, 128>}]} {
    %c0 = arith.constant 0 : index
    %c0_0 = arith.constant 0 : index
    %0 = vector.load %arg1[%c0, %c0_0] : memref<18x256xbf16, #tpu.memory_space<vmem>>, vector<18x256xbf16>
    %c0_1 = arith.constant 0 : index
    %c0_2 = arith.constant 0 : index
    %1 = vector.load %arg2[%c0_1, %c0_2] : memref<256x128xbf16, #tpu.memory_space<vmem>>, vector<256x128xbf16>
    %cst = arith.constant dense<0.000000e+00> : vector<18x128xf32>
    %2 = tpu.matmul %0, %1, %cst {dimension_numbers = #tpu.dot_dimension_numbers<[1], [0], [0], [1], [0, 0, 1, 1], [], []>} : vector<18x256xbf16>, vector<256x128xbf16>, vector<18x128xf32> -> vector<18x128xf32>
    %c0_3 = arith.constant 0 : index
    %c0_4 = arith.constant 0 : index
    %3 = vector.load %arg3[%c0_3, %c0_4] : memref<1x128xf32, #tpu.memory_space<vmem>>, vector<1x128xf32>
    %4 = vector.broadcast %3 : vector<1x128xf32> to vector<18x128xf32>
    %5 = arith.addf %2, %4 : vector<18x128xf32>
    %cst_5 = arith.constant 0.000000e+00 : f32
    %6 = vector.broadcast %cst_5 : f32 to vector<18x128xf32>
    %7 = arith.maximumf %5, %6 : vector<18x128xf32>
    %c0_6 = arith.constant 0 : index
    %c0_7 = arith.constant 0 : index
    %8 = vector.load %arg4[%c0_6, %c0_7] : memref<18x128xbf16, #tpu.memory_space<vmem>>, vector<18x128xbf16>
    %9 = arith.extf %8 : vector<18x128xbf16> to vector<18x128xf32>
    %10 = arith.mulf %7, %9 : vector<18x128xf32>
    %11 = arith.truncf %10 : vector<18x128xf32> to vector<18x128xbf16>
    %c0_8 = arith.constant 0 : index
    %c0_9 = arith.constant 0 : index
    %12 = vector.load %arg5[%c0_8, %c0_9] : memref<18x128xbf16, #tpu.memory_space<vmem>>, vector<18x128xbf16>
    tpu.vector_store %arg5[%c0_8, %c0_9], %11 {strides = array<i32>} : memref<18x128xbf16, #tpu.memory_space<vmem>>, vector<18x128xbf16>,
    return
  }
  func.func @transform_0(%arg0: i32) -> (i32, i32) {
    %c0_i32 = arith.constant 0 : i32
    %c0_i32_0 = arith.constant 0 : i32
    return %arg0, %c0_i32 : i32, i32
  }
  func.func @transform_1(%arg0: i32) -> (i32, i32) {
    %c0_i32 = arith.constant 0 : i32
    %c0_i32_0 = arith.constant 0 : i32
    %c0_i32_1 = arith.constant 0 : i32
    return %c0_i32, %c0_i32_0 : i32, i32
  }
  func.func @transform_2(%arg0: i32) -> (i32, i32) {
    %c0_i32 = arith.constant 0 : i32
    %c0_i32_0 = arith.constant 0 : i32
    %c0_i32_1 = arith.constant 0 : i32
    return %c0_i32, %c0_i32_0 : i32, i32
  }
  func.func @transform_3(%arg0: i32) -> (i32, i32) {
    %c0_i32 = arith.constant 0 : i32
    %c0_i32_0 = arith.constant 0 : i32
    return %arg0, %c0_i32 : i32, i32
  }
  func.func @transform_4(%arg0: i32) -> (i32, i32) {
    %c0_i32 = arith.constant 0 : i32
    %c0_i32_0 = arith.constant 0 : i32
    return %arg0, %c0_i32 : i32, i32
  }
}

module attributes {stable_mosaic.version = 11 : i64} {
  func.func @_tail_kernel(%arg0: memref<18x128xbf16, #tpu.memory_space<vmem>>, %arg1: memref<128x128xbf16, #tpu.memory_space<vmem>>, %arg2: memref<1x128xf32, #tpu.memory_space<vmem>>, %arg3: memref<128x128xbf16, #tpu.memory_space<vmem>>, %arg4: memref<1x128xf32, #tpu.memory_space<vmem>>, %arg5: memref<128x128xbf16, #tpu.memory_space<vmem>>, %arg6: memref<1x128xf32, #tpu.memory_space<vmem>>, %arg7: memref<18x128xbf16, #tpu.memory_space<vmem>>, %arg8: memref<2x18xf32, #tpu.memory_space<vmem>>, %arg9: memref<128x5xbf16, #tpu.memory_space<vmem>>, %arg10: memref<1x5xf32, #tpu.memory_space<vmem>>, %arg11: memref<2x5xf32, #tpu.memory_space<vmem>>) attributes {dimension_semantics = [], scalar_prefetch = 0 : i64, scratch_operands = 0 : i64, tpu.core_type = #tpu.core_type<tc>} {
    %c0 = arith.constant 0 : index
    %c0_0 = arith.constant 0 : index
    %0 = vector.load %arg0[%c0, %c0_0] : memref<18x128xbf16, #tpu.memory_space<vmem>>, vector<18x128xbf16>
    %c0_1 = arith.constant 0 : index
    %c0_2 = arith.constant 0 : index
    %1 = vector.load %arg1[%c0_1, %c0_2] : memref<128x128xbf16, #tpu.memory_space<vmem>>, vector<128x128xbf16>
    %cst = arith.constant dense<0.000000e+00> : vector<18x128xf32>
    %2 = tpu.matmul %0, %1, %cst {dimension_numbers = #tpu.dot_dimension_numbers<[1], [0], [0], [1], [0, 0, 1, 1], [], []>} : vector<18x128xbf16>, vector<128x128xbf16>, vector<18x128xf32> -> vector<18x128xf32>
    %c0_3 = arith.constant 0 : index
    %c0_4 = arith.constant 0 : index
    %3 = vector.load %arg2[%c0_3, %c0_4] : memref<1x128xf32, #tpu.memory_space<vmem>>, vector<1x128xf32>
    %4 = vector.broadcast %3 : vector<1x128xf32> to vector<18x128xf32>
    %5 = arith.addf %2, %4 : vector<18x128xf32>
    %cst_5 = arith.constant 0.000000e+00 : f32
    %6 = vector.broadcast %cst_5 : f32 to vector<18x128xf32>
    %7 = arith.maximumf %5, %6 : vector<18x128xf32>
    %8 = arith.truncf %7 : vector<18x128xf32> to vector<18x128xbf16>
    %c0_6 = arith.constant 0 : index
    %c0_7 = arith.constant 0 : index
    %9 = vector.load %arg3[%c0_6, %c0_7] : memref<128x128xbf16, #tpu.memory_space<vmem>>, vector<128x128xbf16>
    %cst_8 = arith.constant dense<0.000000e+00> : vector<18x128xf32>
    %10 = tpu.matmul %8, %9, %cst_8 {dimension_numbers = #tpu.dot_dimension_numbers<[1], [0], [0], [1], [0, 0, 1, 1], [], []>} : vector<18x128xbf16>, vector<128x128xbf16>, vector<18x128xf32> -> vector<18x128xf32>
    %c0_9 = arith.constant 0 : index
    %c0_10 = arith.constant 0 : index
    %11 = vector.load %arg4[%c0_9, %c0_10] : memref<1x128xf32, #tpu.memory_space<vmem>>, vector<1x128xf32>
    %12 = vector.broadcast %11 : vector<1x128xf32> to vector<18x128xf32>
    %13 = arith.addf %10, %12 : vector<18x128xf32>
    %cst_11 = arith.constant 0.000000e+00 : f32
    %14 = vector.broadcast %cst_11 : f32 to vector<18x128xf32>
    %15 = arith.maximumf %13, %14 : vector<18x128xf32>
    %16 = arith.truncf %15 : vector<18x128xf32> to vector<18x128xbf16>
    %c0_12 = arith.constant 0 : index
    %c0_13 = arith.constant 0 : index
    %17 = vector.load %arg5[%c0_12, %c0_13] : memref<128x128xbf16, #tpu.memory_space<vmem>>, vector<128x128xbf16>
    %cst_14 = arith.constant dense<0.000000e+00> : vector<18x128xf32>
    %18 = tpu.matmul %16, %17, %cst_14 {dimension_numbers = #tpu.dot_dimension_numbers<[1], [0], [0], [1], [0, 0, 1, 1], [], []>} : vector<18x128xbf16>, vector<128x128xbf16>, vector<18x128xf32> -> vector<18x128xf32>
    %c0_15 = arith.constant 0 : index
    %c0_16 = arith.constant 0 : index
    %19 = vector.load %arg6[%c0_15, %c0_16] : memref<1x128xf32, #tpu.memory_space<vmem>>, vector<1x128xf32>
    %20 = vector.broadcast %19 : vector<1x128xf32> to vector<18x128xf32>
    %21 = arith.addf %18, %20 : vector<18x128xf32>
    %cst_17 = arith.constant 0.000000e+00 : f32
    %22 = vector.broadcast %cst_17 : f32 to vector<18x128xf32>
    %23 = arith.maximumf %21, %22 : vector<18x128xf32>
    %c0_18 = arith.constant 0 : index
    %c0_19 = arith.constant 0 : index
    %24 = vector.load %arg7[%c0_18, %c0_19] : memref<18x128xbf16, #tpu.memory_space<vmem>>, vector<18x128xbf16>
    %25 = arith.extf %24 : vector<18x128xbf16> to vector<18x128xf32>
    %26 = arith.mulf %23, %25 : vector<18x128xf32>
    %c0_20 = arith.constant 0 : index
    %c0_21 = arith.constant 0 : index
    %27 = vector.load %arg8[%c0_20, %c0_21] : memref<2x18xf32, #tpu.memory_space<vmem>>, vector<2x18xf32>
    %cst_22 = arith.constant dense<0.000000e+00> : vector<2x128xf32>
    %28 = tpu.matmul %27, %26, %cst_22 {dimension_numbers = #tpu.dot_dimension_numbers<[1], [0], [0], [1], [0, 0, 1, 1], [], []>} : vector<2x18xf32>, vector<18x128xf32>, vector<2x128xf32> -> vector<2x128xf32>
    %cst_23 = arith.constant 0.000000e+00 : f32
    %29 = vector.broadcast %cst_23 : f32 to vector<2x128xf32>
    %30 = arith.maximumf %28, %29 : vector<2x128xf32>
    %31 = arith.truncf %30 : vector<2x128xf32> to vector<2x128xbf16>
    %c0_24 = arith.constant 0 : index
    %c0_25 = arith.constant 0 : index
    %32 = vector.load %arg9[%c0_24, %c0_25] : memref<128x5xbf16, #tpu.memory_space<vmem>>, vector<128x5xbf16>
    %cst_26 = arith.constant dense<0.000000e+00> : vector<2x5xf32>
    %33 = tpu.matmul %31, %32, %cst_26 {dimension_numbers = #tpu.dot_dimension_numbers<[1], [0], [0], [1], [0, 0, 1, 1], [], []>} : vector<2x128xbf16>, vector<128x5xbf16>, vector<2x5xf32> -> vector<2x5xf32>
    %c0_27 = arith.constant 0 : index
    %c0_28 = arith.constant 0 : index
    %34 = vector.load %arg10[%c0_27, %c0_28] : memref<1x5xf32, #tpu.memory_space<vmem>>, vector<1x5xf32>
    %35 = vector.broadcast %34 : vector<1x5xf32> to vector<2x5xf32>
    %36 = arith.addf %33, %35 : vector<2x5xf32>
    %c0_29 = arith.constant 0 : index
    %c0_30 = arith.constant 0 : index
    %37 = vector.load %arg11[%c0_29, %c0_30] : memref<2x5xf32, #tpu.memory_space<vmem>>, vector<2x5xf32>
    tpu.vector_store %arg11[%c0_29, %c0_30], %36 {strides = array<i32>} : memref<2x5xf32, #tpu.memory_space<vmem>>, vector<2x5xf32>,
    return
  }
}

</mosaic_0001>

<llo_original>
// kernel: net_forward.13
$region0: #{net_forward.13}
  #allocation0 [shape = 'u32[]', space=smem, size = 0x4, offset = 0x4, fixed_abs, tag = 'smem constant byte address 0x4 - core index']
  #allocation1 [shape = 'u32[144,128]{1,0:T(1,128)}', space=vmem, size = 0x12000, scoped, tag = 'internal scratch']
  %s0 = inlined_call_operand.vmem [shape: bf16[3200,9], index: 0, kind: input, shape index: {}]
  %s1 = inlined_call_operand.vmem [shape: bf16[9,16], index: 1, kind: input, shape index: {}]
  %s2 = inlined_call_operand.vmem [shape: f32[1,16], index: 2, kind: input, shape index: {}]
  %s3 = inlined_call_operand.vmem [shape: bf16[3200,16], index: 3, kind: output, shape index: {}]
  %s4 = sld [smem:[#allocation0]]
  $region89: #{net_forward.13} parent=0
    _
  %s6 = ssub.s32 1, %s4
  %s7 = scalar_select 0, %s6, %s4
  $region1: #{net_forward.13} parent=0
    #allocation2 [shape = 'u8[262144]{0}', space=vmem, size = 0x40000, scoped, tag = 'output window, operand 0']
    loop: start=0, step=1, limit=9
    $region2: #{net_forward.13} parent=1 // loop_pre_header
      _
    $region3: #{net_forward.13} parent=1 // loop_header
      %s9 = sphi 0, %s13
      %p10 = scmp.ge.s32.totalorder %s9, 9
      %s19 = sphi 0, %s21
      %s22 = sphi 0, %s19
      %s23 = sphi 0, %s22
      %s39 = sphi 0, %s23
      %s43 = sphi 0, %s43
      %s45 = sphi 0, %s43
      %s46 = sphi 0, %s45
      %s60 = sphi 0, %s46
      %s64 = sphi 0, %s64
      %s66 = sphi 0, %s64
      %s67 = sphi 0, %s66
      %s81 = sphi 0, %s67
      %s87 = sphi 0, %s89
      %s90 = sphi 0, %s87
      %s91 = sphi 0, %s90
      %s107 = sphi 0, %s91
    $region4: #{net_forward.13} parent=1 // loop_header_branch
      %12 = sbr.rel (%p10) target = $region8
    $region5: #{net_forward.13} parent=1 // loop_body
      %s14 = ssub.s32 %s9, 1
      %s15 = ssub.s32 %s9, 2
      %s16 = sadd.s32 %s9, 1
      %s17 = ssub.s32 %s9, %s16
      %p18 = scmp.eq.s32.totalorder %s17, 0
      %s20 = sadd.s32 %s19, 1
      %s21 = scalar_select %p18, %s19, %s20
      %p24 = pneg %p18
      %p25 = scmp.eq.s32.totalorder %s9, 6
      %p26 = por %p24, %p25
      %p27 = scmp.ne.s32.totalorder %s19, %s22
      %p28 = scmp.eq.s32.totalorder %s9, 0
      %p29 = por %p27, %p28
      %p30 = scmp.ne.s32.totalorder %s19, %s22
      %p31 = scmp.eq.s32.totalorder %s14, 6
      %p32 = por %p30, %p31
      %p33 = scmp.ne.s32.totalorder %s22, %s23
      %p34 = scmp.eq.s32.totalorder %s14, 0
      %p35 = por %p33, %p34
      %p36 = scmp.ne.s32.totalorder %s22, %s23
      %p37 = scmp.eq.s32.totalorder %s15, 6
      %p38 = por %p36, %p37
      %p40 = scmp.ne.s32.totalorder %s23, %s39
      %p41 = scmp.eq.s32.totalorder %s15, 0
      %p42 = por %p40, %p41
      %s44 = sadd.s32 %s43, 1
      %p47 = scmp.eq.s32.totalorder %s9, 6
      %p48 = scmp.ne.s32.totalorder %s43, %s45
      %p49 = scmp.eq.s32.totalorder %s9, 0
      %p50 = por %p48, %p49
      %p51 = scmp.ne.s32.totalorder %s43, %s45
      %p52 = scmp.eq.s32.totalorder %s14, 6
      %p53 = por %p51, %p52
      %p54 = scmp.ne.s32.totalorder %s45, %s46
      %p55 = scmp.eq.s32.totalorder %s14, 0
      %p56 = por %p54, %p55
      %p57 = scmp.ne.s32.totalorder %s45, %s46
      %p58 = scmp.eq.s32.totalorder %s15, 6
      %p59 = por %p57, %p58
      %p61 = scmp.ne.s32.totalorder %s46, %s60
      %p62 = scmp.eq.s32.totalorder %s15, 0
      %p63 = por %p61, %p62
      %s65 = sadd.s32 %s64, 1
      %p68 = scmp.eq.s32.totalorder %s9, 6
      %p69 = scmp.ne.s32.totalorder %s64, %s66
      %p70 = scmp.eq.s32.totalorder %s9, 0
      %p71 = por %p69, %p70
      %p72 = scmp.ne.s32.totalorder %s64, %s66
      %p73 = scmp.eq.s32.totalorder %s14, 6
      %p74 = por %p72, %p73
      %p75 = scmp.ne.s32.totalorder %s66, %s67
      %p76 = scmp.eq.s32.totalorder %s14, 0
      %p77 = por %p75, %p76
      %p78 = scmp.ne.s32.totalorder %s66, %s67
      %p79 = scmp.eq.s32.totalorder %s15, 6
      %p80 = por %p78, %p79
      %p82 = scmp.ne.s32.totalorder %s67, %s81
      %p83 = scmp.eq.s32.totalorder %s15, 0
      %p84 = por %p82, %p83
      %s85 = ssub.s32 %s9, %s16
      %p86 = scmp.eq.s32.totalorder %s85, 0
      %s88 = sadd.s32 %s87, 1
      %s89 = scalar_select %p86, %s87, %s88
      %p92 = pneg %p86
      %p93 = scmp.eq.s32.totalorder %s9, 6
      %p94 = por %p92, %p93
      %p95 = scmp.ne.s32.totalorder %s87, %s90
      %p96 = scmp.eq.s32.totalorder %s9, 0
      %p97 = por %p95, %p96
      %p98 = scmp.ne.s32.totalorder %s87, %s90
      %p99 = scmp.eq.s32.totalorder %s14, 6
      %p100 = por %p98, %p99
      %p101 = scmp.ne.s32.totalorder %s90, %s91
      %p102 = scmp.eq.s32.totalorder %s14, 0
      %p103 = por %p101, %p102
      %p104 = scmp.ne.s32.totalorder %s90, %s91
      %p105 = scmp.eq.s32.totalorder %s15, 6
      %p106 = por %p104, %p105
      %p108 = scmp.ne.s32.totalorder %s91, %s107
      %p109 = scmp.eq.s32.totalorder %s15, 0
      %p110 = por %p108, %p109
      %p111 = scmp.le.s32.totalorder 1, %s9
      %p112 = scmp.lt.s32.totalorder %s9, 8
      %p113 = pnand %p111, %p112
      %p114 = pneg %p113
      // Predicated region
      $region9: #{net_forward.13} parent=5 // pred_check
        _
      $region10: #{net_forward.13} parent=5 // pred_check_branch
        %116 = sbr.rel (%p113) target = $region12
      $region11: #{net_forward.13} parent=5 // pred_region
        %s117 = ssub.s32 %s9, 1
        // Predicated region
        $region13: #{net_forward.13} parent=11 // pred_check
          %p118 = pneg %p56
        $region14: #{net_forward.13} parent=11 // pred_check_branch
          %120 = sbr.rel (%p118) target = $region16
        $region15: #{net_forward.13} parent=11 // pred_region
          _
        $region16: #{net_forward.13} parent=11 // pred_fallthru
          _
        // Predicated region
        $region17: #{net_forward.13} parent=11 // pred_check
          %p121 = pneg %p77
        $region18: #{net_forward.13} parent=11 // pred_check_branch
          %123 = sbr.rel (%p121) target = $region20
        $region19: #{net_forward.13} parent=11 // pred_region
          _
        $region20: #{net_forward.13} parent=11 // pred_fallthru
          _
      $region12: #{net_forward.13} parent=5 // pred_fallthru
        _
      %p124 = scmp.lt.s32.totalorder %s9, 7
      // Predicated region
      $region21: #{net_forward.13} parent=5 // pred_check
        %p125 = pneg %p124
      $region22: #{net_forward.13} parent=5 // pred_check_branch
        %127 = sbr.rel (%p125) target = $region24
      $region23: #{net_forward.13} parent=5 // pred_region
        // Predicated region
        $region25: #{net_forward.13} parent=23 // pred_check
          %p128 = pneg %p29
        $region26: #{net_forward.13} parent=23 // pred_check_branch
          %130 = sbr.rel (%p128) target = $region28
        $region27: #{net_forward.13} parent=23 // pred_region
          %s131 = smul.u32 64, %s9
          %s132 = ssub.s32 400, %s131
          %p133 = scmp.lt.s32.totalorder %s132, 64
          %s134 = scalar_select %p133, %s132, 64
          %s135 = smul.u32 64, %s134
          %p136 = scmp.lt.s32.totalorder %s131, 399
          %s137 = scalar_select %p136, %s131, 399
          %s138 = smul.addr %s137, 4
          %s139 = scalar_lea.vmem %s0, %s138
          %s140 = smul.u32 64, %s9
          %s141 = ssub.s32 400, %s140
          %p142 = scmp.lt.s32.totalorder %s141, 64
          %s143 = scalar_select %p142, %s141, 64
          %s144 = smul.u32 64, %s143
        $region28: #{net_forward.13} parent=23 // pred_fallthru
          _
      $region24: #{net_forward.13} parent=5 // pred_fallthru
        _
      %p145 = scmp.le.s32.totalorder 1, %s9
      %p146 = scmp.lt.s32.totalorder %s9, 8
      %p147 = pnand %p145, %p146
      %p148 = pneg %p147
      // Predicated region
      $region29: #{net_forward.13} parent=5 // pred_check
        _
      $region30: #{net_forward.13} parent=5 // pred_check_branch
        %150 = sbr.rel (%p147) target = $region32
      $region31: #{net_forward.13} parent=5 // pred_region
        %s151 = ssub.s32 %s9, 1
        %s152 = smul.u32 64, %s14
        %s153 = ssub.s32 400, %s152
        %p154 = scmp.lt.s32.totalorder %s153, 64
        %s155 = scalar_select %p154, %s153, 64
        %s156 = smul.u32 64, %s155
        %p157 = scmp.lt.s32.totalorder %s152, 399
        %s158 = scalar_select %p157, %s152, 399
        %s159 = smul.addr %s158, 4
        %s160 = scalar_lea.vmem %s0, %s159
        %p161 = pneg %p35
        %p162 = pneg %p32
        %p163 = pneg %p56
        %p164 = pneg %p53
        %p165 = pneg %p77
        %p166 = pneg %p74
        %p167 = pneg %p103
        %p168 = pneg %p100
        %s169 = sand.u32 %s90, 1
        %s170 = sand.u32 %s90, 1
        %s171 = smul.addr %s170, 256
        %s172 = scalar_lea.vmem [#allocation2], %s171
        %s173 = smul.u32 64, %s14
        %s174 = ssub.s32 400, %s173
        %p175 = scmp.lt.s32.totalorder %s174, 64
        %s176 = scalar_select %p175, %s174, 64
        %s177 = smul.u32 64, %s176
        %p178 = scmp.lt.s32.totalorder %s173, 399
        %s179 = scalar_select %p178, %s173, 399
        %s180 = smul.addr %s179, 4
        %s181 = scalar_lea.vmem %s0, %s180
        %s182 = smul.u32 64, %s14
        %s183 = ssub.s32 400, %s182
        %p184 = scmp.lt.s32.totalorder %s183, 64
        %s185 = scalar_select %p184, %s183, 64
        %s186 = smul.u32 64, %s185
        %s187 = smul.u32 64, %s14
        %s188 = ssub.s32 400, %s187
        %p189 = scmp.lt.s32.totalorder %s188, 64
        %s190 = scalar_select %p189, %s188, 64
        %s191 = smul.u32 64, %s190
        %v193 = vld [vmem:[%s181] sm:$0xf]
        %v194 = vld [vmem:[%s181 + $0x4] sm:$0xf]
        %v195 = vld [vmem:[%s181 + $0x8] sm:$0xf]
        %v196 = vld [vmem:[%s181 + $0xc] sm:$0xf]
        %v197 = vld [vmem:[%s181 + $0x10] sm:$0xf]
        %v198 = vld [vmem:[%s181 + $0x14] sm:$0xf]
        %v199 = vld [vmem:[%s181 + $0x18] sm:$0xf]
        %v200 = vld [vmem:[%s181 + $0x1c] sm:$0xf]
        %v201 = vld [vmem:[%s181 + $0x20] sm:$0xf]
        %v202 = vld [vmem:[%s181 + $0x24] sm:$0xf]
        %v203 = vld [vmem:[%s181 + $0x28] sm:$0xf]
        %v204 = vld [vmem:[%s181 + $0x2c] sm:$0xf]
        %v205 = vld [vmem:[%s181 + $0x30] sm:$0xf]
        %v206 = vld [vmem:[%s181 + $0x34] sm:$0xf]
        %v207 = vld [vmem:[%s181 + $0x38] sm:$0xf]
        %v208 = vld [vmem:[%s181 + $0x3c] sm:$0xf]
        %v209 = vld [vmem:[%s181 + $0x40] sm:$0xf]
        %v210 = vld [vmem:[%s181 + $0x44] sm:$0xf]
        %v211 = vld [vmem:[%s181 + $0x48] sm:$0xf]
        %v212 = vld [vmem:[%s181 + $0x4c] sm:$0xf]
        %v213 = vld [vmem:[%s181 + $0x50] sm:$0xf]
        %v214 = vld [vmem:[%s181 + $0x54] sm:$0xf]
        %v215 = vld [vmem:[%s181 + $0x58] sm:$0xf]
        %v216 = vld [vmem:[%s181 + $0x5c] sm:$0xf]
        %v217 = vld [vmem:[%s181 + $0x60] sm:$0xf]
        %v218 = vld [vmem:[%s181 + $0x64] sm:$0xf]
        %v219 = vld [vmem:[%s181 + $0x68] sm:$0xf]
        %v220 = vld [vmem:[%s181 + $0x6c] sm:$0xf]
        %v221 = vld [vmem:[%s181 + $0x70] sm:$0xf]
        %v222 = vld [vmem:[%s181 + $0x74] sm:$0xf]
        %v223 = vld [vmem:[%s181 + $0x78] sm:$0xf]
        %v224 = vld [vmem:[%s181 + $0x7c] sm:$0xf]
        %v225 = vld [vmem:[%s181 + $0x80] sm:$0xf]
        %v226 = vld [vmem:[%s181 + $0x84] sm:$0xf]
        %v227 = vld [vmem:[%s181 + $0x88] sm:$0xf]
        %v228 = vld [vmem:[%s181 + $0x8c] sm:$0xf]
        %v229 = vld [vmem:[%s181 + $0x90] sm:$0xf]
        %v230 = vld [vmem:[%s181 + $0x94] sm:$0xf]
        %v231 = vld [vmem:[%s181 + $0x98] sm:$0xf]
        %v232 = vld [vmem:[%s181 + $0x9c] sm:$0xf]
        %v233 = vld [vmem:[%s181 + $0xa0] sm:$0xf]
        %v234 = vld [vmem:[%s181 + $0xa4] sm:$0xf]
        %v235 = vld [vmem:[%s181 + $0xa8] sm:$0xf]
        %v236 = vld [vmem:[%s181 + $0xac] sm:$0xf]
        %v237 = vld [vmem:[%s181 + $0xb0] sm:$0xf]
        %v238 = vld [vmem:[%s181 + $0xb4] sm:$0xf]
        %v239 = vld [vmem:[%s181 + $0xb8] sm:$0xf]
        %v240 = vld [vmem:[%s181 + $0xbc] sm:$0xf]
        %v241 = vld [vmem:[%s181 + $0xc0] sm:$0xf]
        %v242 = vld [vmem:[%s181 + $0xc4] sm:$0xf]
        %v243 = vld [vmem:[%s181 + $0xc8] sm:$0xf]
        %v244 = vld [vmem:[%s181 + $0xcc] sm:$0xf]
        %v245 = vld [vmem:[%s181 + $0xd0] sm:$0xf]
        %v246 = vld [vmem:[%s181 + $0xd4] sm:$0xf]
        %v247 = vld [vmem:[%s181 + $0xd8] sm:$0xf]
        %v248 = vld [vmem:[%s181 + $0xdc] sm:$0xf]
        %v249 = vld [vmem:[%s181 + $0xe0] sm:$0xf]
        %v250 = vld [vmem:[%s181 + $0xe4] sm:$0xf]
        %v251 = vld [vmem:[%s181 + $0xe8] sm:$0xf]
        %v252 = vld [vmem:[%s181 + $0xec] sm:$0xf]
        %v253 = vld [vmem:[%s181 + $0xf0] sm:$0xf]
        %v254 = vld [vmem:[%s181 + $0xf4] sm:$0xf]
        %v255 = vld [vmem:[%s181 + $0xf8] sm:$0xf]
        %v256 = vld [vmem:[%s181 + $0xfc] sm:$0xf]
        %v257 = vld [vmem:[%s1] sm:$0xf]
        %v258 = vld [vmem:[%s1 + $0x4] sm:$0x1]
        %v259 = vld [vmem:[%s2] sm:$0x1]
        %v261 = vlaneseq
        %v262 = vshrl.u32 %v261, 7
        %v263 = vsub.s32 0, %v262
        %v264 = vrot.slane %v259, %v263
        %v330 = vunpack.c.l.b16 %v193
        %v331 = vunpack.c.l.b16 %v194
        %v332 = vunpack.c.l.b16 %v195
        %v333 = vunpack.c.l.b16 %v196
        %v334 = vunpack.c.l.b16 %v197
        %v335 = vunpack.c.l.b16 %v198
        %v336 = vunpack.c.l.b16 %v199
        %v337 = vunpack.c.l.b16 %v200
        %v338 = vunpack.c.l.b16 %v201
        %v339 = vunpack.c.l.b16 %v202
        %v340 = vunpack.c.l.b16 %v203
        %v341 = vunpack.c.l.b16 %v204
        %v342 = vunpack.c.l.b16 %v205
        %v343 = vunpack.c.l.b16 %v206
        %v344 = vunpack.c.l.b16 %v207
        %v345 = vunpack.c.l.b16 %v208
        %v346 = vunpack.c.l.b16 %v209
        %v347 = vunpack.c.l.b16 %v210
        %v348 = vunpack.c.l.b16 %v211
        %v349 = vunpack.c.l.b16 %v212
        %v350 = vunpack.c.l.b16 %v213
        %v351 = vunpack.c.l.b16 %v214
        %v352 = vunpack.c.l.b16 %v215
        %v353 = vunpack.c.l.b16 %v216
        %v354 = vunpack.c.l.b16 %v217
        %v355 = vunpack.c.l.b16 %v218
        %v356 = vunpack.c.l.b16 %v219
        %v357 = vunpack.c.l.b16 %v220
        %v358 = vunpack.c.l.b16 %v221
        %v359 = vunpack.c.l.b16 %v222
        %v360 = vunpack.c.l.b16 %v223
        %v361 = vunpack.c.l.b16 %v224
        %v362 = vunpack.c.l.b16 %v225
        %v363 = vunpack.c.l.b16 %v226
        %v364 = vunpack.c.l.b16 %v227
        %v365 = vunpack.c.l.b16 %v228
        %v366 = vunpack.c.l.b16 %v229
        %v367 = vunpack.c.l.b16 %v230
        %v368 = vunpack.c.l.b16 %v231
        %v369 = vunpack.c.l.b16 %v232
        %v370 = vunpack.c.l.b16 %v233
        %v371 = vunpack.c.l.b16 %v234
        %v372 = vunpack.c.l.b16 %v235
        %v373 = vunpack.c.l.b16 %v236
        %v374 = vunpack.c.l.b16 %v237
        %v375 = vunpack.c.l.b16 %v238
        %v376 = vunpack.c.l.b16 %v239
        %v377 = vunpack.c.l.b16 %v240
        %v378 = vunpack.c.l.b16 %v241
        %v379 = vunpack.c.l.b16 %v242
        %v380 = vunpack.c.l.b16 %v243
        %v381 = vunpack.c.l.b16 %v244
        %v382 = vunpack.c.l.b16 %v245
        %v383 = vunpack.c.l.b16 %v246
        %v384 = vunpack.c.l.b16 %v247
        %v385 = vunpack.c.l.b16 %v248
        %v386 = vunpack.c.l.b16 %v249
        %v387 = vunpack.c.l.b16 %v250
        %v388 = vunpack.c.l.b16 %v251
        %v389 = vunpack.c.l.b16 %v252
        %v390 = vunpack.c.l.b16 %v253
        %v391 = vunpack.c.l.b16 %v254
        %v392 = vunpack.c.l.b16 %v255
        %v393 = vunpack.c.l.b16 %v256
        %v394 = vpack.c.b16 %v331, %v330
        %v395 = vpack.c.b16 %v333, %v332
        %v396 = vpack.c.b16 %v335, %v334
        %v397 = vpack.c.b16 %v337, %v336
        %v398 = vpack.c.b16 %v339, %v338
        %v399 = vpack.c.b16 %v341, %v340
        %v400 = vpack.c.b16 %v343, %v342
        %v401 = vpack.c.b16 %v345, %v344
        %v402 = vpack.c.b16 %v347, %v346
        %v403 = vpack.c.b16 %v349, %v348
        %v404 = vpack.c.b16 %v351, %v350
        %v405 = vpack.c.b16 %v353, %v352
        %v406 = vpack.c.b16 %v355, %v354
        %v407 = vpack.c.b16 %v357, %v356
        %v408 = vpack.c.b16 %v359, %v358
        %v409 = vpack.c.b16 %v361, %v360
        %v410 = vpack.c.b16 %v363, %v362
        %v411 = vpack.c.b16 %v365, %v364
        %v412 = vpack.c.b16 %v367, %v366
        %v413 = vpack.c.b16 %v369, %v368
        %v414 = vpack.c.b16 %v371, %v370
        %v415 = vpack.c.b16 %v373, %v372
        %v416 = vpack.c.b16 %v375, %v374
        %v417 = vpack.c.b16 %v377, %v376
        %v418 = vpack.c.b16 %v379, %v378
        %v419 = vpack.c.b16 %v381, %v380
        %v420 = vpack.c.b16 %v383, %v382
        %v421 = vpack.c.b16 %v385, %v384
        %v422 = vpack.c.b16 %v387, %v386
        %v423 = vpack.c.b16 %v389, %v388
        %v424 = vpack.c.b16 %v391, %v390
        %v425 = vpack.c.b16 %v393, %v392
        %v428 = vunpack.c.l.b16 %v257
        %v429 = vunpack.c.l.b16 %v258
        %v430 = vpack.c.b16 %v429, %v428
        %vm431 = vcmask 72704
        %v433 = vsel %vm431, %v394, 0
        %v436 = vsel %vm431, %v395, 0
        %v439 = vsel %vm431, %v396, 0
        %v442 = vsel %vm431, %v397, 0
        %v445 = vsel %vm431, %v398, 0
        %v448 = vsel %vm431, %v399, 0
        %v451 = vsel %vm431, %v400, 0
        %v454 = vsel %vm431, %v401, 0
        %v457 = vsel %vm431, %v402, 0
        %v460 = vsel %vm431, %v403, 0
        %v463 = vsel %vm431, %v404, 0
        %v466 = vsel %vm431, %v405, 0
        %v469 = vsel %vm431, %v406, 0
        %v472 = vsel %vm431, %v407, 0
        %v475 = vsel %vm431, %v408, 0
        %v478 = vsel %vm431, %v409, 0
        %v481 = vsel %vm431, %v410, 0
        %v484 = vsel %vm431, %v411, 0
        %v487 = vsel %vm431, %v412, 0
        %v490 = vsel %vm431, %v413, 0
        %v493 = vsel %vm431, %v414, 0
        %v496 = vsel %vm431, %v415, 0
        %v499 = vsel %vm431, %v416, 0
        %v502 = vsel %vm431, %v417, 0
        %v505 = vsel %vm431, %v418, 0
        %v508 = vsel %vm431, %v419, 0
        %v511 = vsel %vm431, %v420, 0
        %v514 = vsel %vm431, %v421, 0
        %v517 = vsel %vm431, %v422, 0
        %v520 = vsel %vm431, %v423, 0
        %v523 = vsel %vm431, %v424, 0
        %v526 = vsel %vm431, %v425, 0
        %vm528 = vcmask 1043456
        %vm529 = vcmask 1044480
        %v530 = vsel %vm528, 4294967295, 65535
        %v531 = vsel %vm529, %v530, 0
        %v533 = vand.u32 %v430, %v531
        %535 = vmatprep.subr.bf16.mxu0 0
        %536 = vmatpush1.bf16.msra.mxu0 %v533
        %537 = vmatprep.subr.bf16.mxu0 0
        %538 = vmatpush1.bf16.msra.mxu0 0
        %539 = vmatprep.subr.bf16.mxu0 0
        %540 = vmatpush1.bf16.msra.mxu0 0
        %541 = vmatprep.subr.bf16.mxu0 0
        %542 = vmatpush1.bf16.msra.mxu0 0
        %543 = vmatprep.subr.bf16.mxu0 0
        %544 = vmatpush1.bf16.msra.mxu0 0
        %545 = vmatprep.subr.bf16.mxu0 0
        %546 = vmatpush1.bf16.msra.mxu0 0
        %547 = vmatprep.subr.bf16.mxu0 0
        %548 = vmatpush1.bf16.msra.mxu0 0
        %549 = vmatprep.subr.bf16.mxu0 0
        %550 = vmatpush1.bf16.msra.mxu0 0
        %551 = vmatprep.subr.bf16.mxu0 0
        %552 = vmatpush1.bf16.msra.mxu0 0
        %553 = vmatprep.subr.bf16.mxu0 0
        %554 = vmatpush1.bf16.msra.mxu0 0
        %555 = vmatprep.subr.bf16.mxu0 0
        %556 = vmatpush1.bf16.msra.mxu0 0
        %557 = vmatprep.subr.bf16.mxu0 0
        %558 = vmatpush1.bf16.msra.mxu0 0
        %559 = vmatprep.subr.bf16.mxu0 0
        %560 = vmatpush1.bf16.msra.mxu0 0
        %561 = vmatprep.subr.bf16.mxu0 0
        %562 = vmatpush1.bf16.msra.mxu0 0
        %563 = vmatprep.subr.bf16.mxu0 0
        %564 = vmatpush1.bf16.msra.mxu0 0
        %565 = vmatprep.subr.bf16.mxu0 0
        %566 = vmatpush1.bf16.msra.mxu0 0
        %567 = vmatprep.mubr.bf16.mxu0 0
        %568 = vmatmul.mubr.bf16.gmra.mrb[0].mxu0 %v433
        %v569 = vpop.f32.mrb[0].mxu0
        %v570 = vadd.f32 %v264, %v569
        %v571 = vpop.f32.mrb[0].mxu0
        %v572 = vpop.f32.mrb[0].mxu0
        %v573 = vadd.f32 %v264, %v572
        %v574 = vpop.f32.mrb[0].mxu0
        %575 = vmatprep.mubr.bf16.mxu0 0
        %576 = vmatmul.mubr.bf16.gmra.mrb[0].mxu0 %v436
        %v577 = vpop.f32.mrb[0].mxu0
        %v578 = vadd.f32 %v264, %v577
        %v579 = vpop.f32.mrb[0].mxu0
        %v580 = vpop.f32.mrb[0].mxu0
        %v581 = vadd.f32 %v264, %v580
        %v582 = vpop.f32.mrb[0].mxu0
        %583 = vmatprep.mubr.bf16.mxu0 0
        %584 = vmatmul.mubr.bf16.gmra.mrb[0].mxu0 %v439
        %v585 = vpop.f32.mrb[0].mxu0
        %v586 = vadd.f32 %v264, %v585
        %v587 = vpop.f32.mrb[0].mxu0
        %v588 = vpop.f32.mrb[0].mxu0
        %v589 = vadd.f32 %v264, %v588
        %v590 = vpop.f32.mrb[0].mxu0
        %591 = vmatprep.mubr.bf16.mxu0 0
        %592 = vmatmul.mubr.bf16.gmra.mrb[0].mxu0 %v442
        %v593 = vpop.f32.mrb[0].mxu0
        %v594 = vadd.f32 %v264, %v593
        %v595 = vpop.f32.mrb[0].mxu0
        %v596 = vpop.f32.mrb[0].mxu0
        %v597 = vadd.f32 %v264, %v596
        %v598 = vpop.f32.mrb[0].mxu0
        %599 = vmatprep.mubr.bf16.mxu0 0
        %600 = vmatmul.mubr.bf16.gmra.mrb[0].mxu0 %v445
        %v601 = vpop.f32.mrb[0].mxu0
        %v602 = vadd.f32 %v264, %v601
        %v603 = vpop.f32.mrb[0].mxu0
        %v604 = vpop.f32.mrb[0].mxu0
        %v605 = vadd.f32 %v264, %v604
        %v606 = vpop.f32.mrb[0].mxu0
        %607 = vmatprep.mubr.bf16.mxu0 0
        %608 = vmatmul.mubr.bf16.gmra.mrb[0].mxu0 %v448
        %v609 = vpop.f32.mrb[0].mxu0
        %v610 = vadd.f32 %v264, %v609
        %v611 = vpop.f32.mrb[0].mxu0
        %v612 = vpop.f32.mrb[0].mxu0
        %v613 = vadd.f32 %v264, %v612
        %v614 = vpop.f32.mrb[0].mxu0
        %615 = vmatprep.mubr.bf16.mxu0 0
        %616 = vmatmul.mubr.bf16.gmra.mrb[0].mxu0 %v451
        %v617 = vpop.f32.mrb[0].mxu0
        %v618 = vadd.f32 %v264, %v617
        %v619 = vpop.f32.mrb[0].mxu0
        %v620 = vpop.f32.mrb[0].mxu0
        %v621 = vadd.f32 %v264, %v620
        %v622 = vpop.f32.mrb[0].mxu0
        %623 = vmatprep.mubr.bf16.mxu0 0
        %624 = vmatmul.mubr.bf16.gmra.mrb[0].mxu0 %v454
        %v625 = vpop.f32.mrb[0].mxu0
        %v626 = vadd.f32 %v264, %v625
        %v627 = vpop.f32.mrb[0].mxu0
        %v628 = vpop.f32.mrb[0].mxu0
        %v629 = vadd.f32 %v264, %v628
        %v630 = vpop.f32.mrb[0].mxu0
        %631 = vmatprep.mubr.bf16.mxu0 0
        %632 = vmatmul.mubr.bf16.gmra.mrb[0].mxu0 %v457
        %v633 = vpop.f32.mrb[0].mxu0
        %v634 = vadd.f32 %v264, %v633
        %v635 = vpop.f32.mrb[0].mxu0
        %v636 = vpop.f32.mrb[0].mxu0
        %v637 = vadd.f32 %v264, %v636
        %v638 = vpop.f32.mrb[0].mxu0
        %639 = vmatprep.mubr.bf16.mxu0 0
        %640 = vmatmul.mubr.bf16.gmra.mrb[0].mxu0 %v460
        %v641 = vpop.f32.mrb[0].mxu0
        %v642 = vadd.f32 %v264, %v641
        %v643 = vpop.f32.mrb[0].mxu0
        %v644 = vpop.f32.mrb[0].mxu0
        %v645 = vadd.f32 %v264, %v644
        %v646 = vpop.f32.mrb[0].mxu0
        %647 = vmatprep.mubr.bf16.mxu0 0
        %648 = vmatmul.mubr.bf16.gmra.mrb[0].mxu0 %v463
        %v649 = vpop.f32.mrb[0].mxu0
        %v650 = vadd.f32 %v264, %v649
        %v651 = vpop.f32.mrb[0].mxu0
        %v652 = vpop.f32.mrb[0].mxu0
        %v653 = vadd.f32 %v264, %v652
        %v654 = vpop.f32.mrb[0].mxu0
        %655 = vmatprep.mubr.bf16.mxu0 0
        %656 = vmatmul.mubr.bf16.gmra.mrb[0].mxu0 %v466
        %v657 = vpop.f32.mrb[0].mxu0
        %v658 = vadd.f32 %v264, %v657
        %v659 = vpop.f32.mrb[0].mxu0
        %v660 = vpop.f32.mrb[0].mxu0
        %v661 = vadd.f32 %v264, %v660
        %v662 = vpop.f32.mrb[0].mxu0
        %663 = vmatprep.mubr.bf16.mxu0 0
        %664 = vmatmul.mubr.bf16.gmra.mrb[0].mxu0 %v469
        %v665 = vpop.f32.mrb[0].mxu0
        %v666 = vadd.f32 %v264, %v665
        %v667 = vpop.f32.mrb[0].mxu0
        %v668 = vpop.f32.mrb[0].mxu0
        %v669 = vadd.f32 %v264, %v668
        %v670 = vpop.f32.mrb[0].mxu0
        %671 = vmatprep.mubr.bf16.mxu0 0
        %672 = vmatmul.mubr.bf16.gmra.mrb[0].mxu0 %v472
        %v673 = vpop.f32.mrb[0].mxu0
        %v674 = vadd.f32 %v264, %v673
        %v675 = vpop.f32.mrb[0].mxu0
        %v676 = vpop.f32.mrb[0].mxu0
        %v677 = vadd.f32 %v264, %v676
        %v678 = vpop.f32.mrb[0].mxu0
        %679 = vmatprep.mubr.bf16.mxu0 0
        %680 = vmatmul.mubr.bf16.gmra.mrb[0].mxu0 %v475
        %v681 = vpop.f32.mrb[0].mxu0
        %v682 = vadd.f32 %v264, %v681
        %v683 = vpop.f32.mrb[0].mxu0
        %v684 = vpop.f32.mrb[0].mxu0
        %v685 = vadd.f32 %v264, %v684
        %v686 = vpop.f32.mrb[0].mxu0
        %687 = vmatprep.mubr.bf16.mxu0 0
        %688 = vmatmul.mubr.bf16.gmra.mrb[0].mxu0 %v478
        %v689 = vpop.f32.mrb[0].mxu0
        %v690 = vadd.f32 %v264, %v689
        %v691 = vpop.f32.mrb[0].mxu0
        %v692 = vpop.f32.mrb[0].mxu0
        %v693 = vadd.f32 %v264, %v692
        %v694 = vpop.f32.mrb[0].mxu0
        %695 = vmatprep.mubr.bf16.mxu0 0
        %696 = vmatmul.mubr.bf16.gmra.mrb[0].mxu0 %v481
        %v697 = vpop.f32.mrb[0].mxu0
        %v698 = vadd.f32 %v264, %v697
        %v699 = vpop.f32.mrb[0].mxu0
        %v700 = vpop.f32.mrb[0].mxu0
        %v701 = vadd.f32 %v264, %v700
        %v702 = vpop.f32.mrb[0].mxu0
        %703 = vmatprep.mubr.bf16.mxu0 0
        %704 = vmatmul.mubr.bf16.gmra.mrb[0].mxu0 %v484
        %v705 = vpop.f32.mrb[0].mxu0
        %v706 = vadd.f32 %v264, %v705
        %v707 = vpop.f32.mrb[0].mxu0
        %v708 = vpop.f32.mrb[0].mxu0
        %v709 = vadd.f32 %v264, %v708
        %v710 = vpop.f32.mrb[0].mxu0
        %711 = vmatprep.mubr.bf16.mxu0 0
        %712 = vmatmul.mubr.bf16.gmra.mrb[0].mxu0 %v487
        %v713 = vpop.f32.mrb[0].mxu0
        %v714 = vadd.f32 %v264, %v713
        %v715 = vpop.f32.mrb[0].mxu0
        %v716 = vpop.f32.mrb[0].mxu0
        %v717 = vadd.f32 %v264, %v716
        %v718 = vpop.f32.mrb[0].mxu0
        %719 = vmatprep.mubr.bf16.mxu0 0
        %720 = vmatmul.mubr.bf16.gmra.mrb[0].mxu0 %v490
        %v721 = vpop.f32.mrb[0].mxu0
        %v722 = vadd.f32 %v264, %v721
        %v723 = vpop.f32.mrb[0].mxu0
        %v724 = vpop.f32.mrb[0].mxu0
        %v725 = vadd.f32 %v264, %v724
        %v726 = vpop.f32.mrb[0].mxu0
        %727 = vmatprep.mubr.bf16.mxu0 0
        %728 = vmatmul.mubr.bf16.gmra.mrb[0].mxu0 %v493
        %v729 = vpop.f32.mrb[0].mxu0
        %v730 = vadd.f32 %v264, %v729
        %v731 = vpop.f32.mrb[0].mxu0
        %v732 = vpop.f32.mrb[0].mxu0
        %v733 = vadd.f32 %v264, %v732
        %v734 = vpop.f32.mrb[0].mxu0
        %735 = vmatprep.mubr.bf16.mxu0 0
        %736 = vmatmul.mubr.bf16.gmra.mrb[0].mxu0 %v496
        %v737 = vpop.f32.mrb[0].mxu0
        %v738 = vadd.f32 %v264, %v737
        %v739 = vpop.f32.mrb[0].mxu0
        %v740 = vpop.f32.mrb[0].mxu0
        %v741 = vadd.f32 %v264, %v740
        %v742 = vpop.f32.mrb[0].mxu0
        %743 = vmatprep.mubr.bf16.mxu0 0
        %744 = vmatmul.mubr.bf16.gmra.mrb[0].mxu0 %v499
        %v745 = vpop.f32.mrb[0].mxu0
        %v746 = vadd.f32 %v264, %v745
        %v747 = vpop.f32.mrb[0].mxu0
        %v748 = vpop.f32.mrb[0].mxu0
        %v749 = vadd.f32 %v264, %v748
        %v750 = vpop.f32.mrb[0].mxu0
        %751 = vmatprep.mubr.bf16.mxu0 0
        %752 = vmatmul.mubr.bf16.gmra.mrb[0].mxu0 %v502
        %v753 = vpop.f32.mrb[0].mxu0
        %v754 = vadd.f32 %v264, %v753
        %v755 = vpop.f32.mrb[0].mxu0
        %v756 = vpop.f32.mrb[0].mxu0
        %v757 = vadd.f32 %v264, %v756
        %v758 = vpop.f32.mrb[0].mxu0
        %759 = vmatprep.mubr.bf16.mxu0 0
        %760 = vmatmul.mubr.bf16.gmra.mrb[0].mxu0 %v505
        %v761 = vpop.f32.mrb[0].mxu0
        %v762 = vadd.f32 %v264, %v761
        %v763 = vpop.f32.mrb[0].mxu0
        %v764 = vpop.f32.mrb[0].mxu0
        %v765 = vadd.f32 %v264, %v764
        %v766 = vpop.f32.mrb[0].mxu0
        %767 = vmatprep.mubr.bf16.mxu0 0
        %768 = vmatmul.mubr.bf16.gmra.mrb[0].mxu0 %v508
        %v769 = vpop.f32.mrb[0].mxu0
        %v770 = vadd.f32 %v264, %v769
        %v771 = vpop.f32.mrb[0].mxu0
        %v772 = vpop.f32.mrb[0].mxu0
        %v773 = vadd.f32 %v264, %v772
        %v774 = vpop.f32.mrb[0].mxu0
        %775 = vmatprep.mubr.bf16.mxu0 0
        %776 = vmatmul.mubr.bf16.gmra.mrb[0].mxu0 %v511
        %v777 = vpop.f32.mrb[0].mxu0
        %v778 = vadd.f32 %v264, %v777
        %v779 = vpop.f32.mrb[0].mxu0
        %v780 = vpop.f32.mrb[0].mxu0
        %v781 = vadd.f32 %v264, %v780
        %v782 = vpop.f32.mrb[0].mxu0
        %783 = vmatprep.mubr.bf16.mxu0 0
        %784 = vmatmul.mubr.bf16.gmra.mrb[0].mxu0 %v514
        %v785 = vpop.f32.mrb[0].mxu0
        %v786 = vadd.f32 %v264, %v785
        %v787 = vpop.f32.mrb[0].mxu0
        %v788 = vpop.f32.mrb[0].mxu0
        %v789 = vadd.f32 %v264, %v788
        %v790 = vpop.f32.mrb[0].mxu0
        %791 = vmatprep.mubr.bf16.mxu0 0
        %792 = vmatmul.mubr.bf16.gmra.mrb[0].mxu0 %v517
        %v793 = vpop.f32.mrb[0].mxu0
        %v794 = vadd.f32 %v264, %v793
        %v795 = vpop.f32.mrb[0].mxu0
        %v796 = vpop.f32.mrb[0].mxu0
        %v797 = vadd.f32 %v264, %v796
        %v798 = vpop.f32.mrb[0].mxu0
        %799 = vmatprep.mubr.bf16.mxu0 0
        %800 = vmatmul.mubr.bf16.gmra.mrb[0].mxu0 %v520
        %v801 = vpop.f32.mrb[0].mxu0
        %v802 = vadd.f32 %v264, %v801
        %v803 = vpop.f32.mrb[0].mxu0
        %v804 = vpop.f32.mrb[0].mxu0
        %v805 = vadd.f32 %v264, %v804
        %v806 = vpop.f32.mrb[0].mxu0
        %807 = vmatprep.mubr.bf16.mxu0 0
        %808 = vmatmul.mubr.bf16.gmra.mrb[0].mxu0 %v523
        %v809 = vpop.f32.mrb[0].mxu0
        %v810 = vadd.f32 %v264, %v809
        %v811 = vpop.f32.mrb[0].mxu0
        %v812 = vpop.f32.mrb[0].mxu0
        %v813 = vadd.f32 %v264, %v812
        %v814 = vpop.f32.mrb[0].mxu0
        %815 = vmatprep.mubr.bf16.mxu0 0
        %816 = vmatmul.mubr.bf16.gmra.mrb[0].mxu0 %v526
        %v817 = vpop.f32.mrb[0].mxu0
        %v818 = vadd.f32 %v264, %v817
        %v819 = vpop.f32.mrb[0].mxu0
        %v820 = vpop.f32.mrb[0].mxu0
        %v821 = vadd.f32 %v264, %v820
        %v822 = vpop.f32.mrb[0].mxu0
        %823 = vdwg.mxu0
        %v824 = vmax.f32 %v570, 0.0
        %v825 = vmax.f32 %v573, 0.0
        %v826 = vmax.f32 %v578, 0.0
        %v827 = vmax.f32 %v581, 0.0
        %v828 = vmax.f32 %v586, 0.0
        %v829 = vmax.f32 %v589, 0.0
        %v830 = vmax.f32 %v594, 0.0
        %v831 = vmax.f32 %v597, 0.0
        %v832 = vmax.f32 %v602, 0.0
        %v833 = vmax.f32 %v605, 0.0
        %v834 = vmax.f32 %v610, 0.0
        %v835 = vmax.f32 %v613, 0.0
        %v836 = vmax.f32 %v618, 0.0
        %v837 = vmax.f32 %v621, 0.0
        %v838 = vmax.f32 %v626, 0.0
        %v839 = vmax.f32 %v629, 0.0
        %v840 = vmax.f32 %v634, 0.0
        %v841 = vmax.f32 %v637, 0.0
        %v842 = vmax.f32 %v642, 0.0
        %v843 = vmax.f32 %v645, 0.0
        %v844 = vmax.f32 %v650, 0.0
        %v845 = vmax.f32 %v653, 0.0
        %v846 = vmax.f32 %v658, 0.0
        %v847 = vmax.f32 %v661, 0.0
        %v848 = vmax.f32 %v666, 0.0
        %v849 = vmax.f32 %v669, 0.0
        %v850 = vmax.f32 %v674, 0.0
        %v851 = vmax.f32 %v677, 0.0
        %v852 = vmax.f32 %v682, 0.0
        %v853 = vmax.f32 %v685, 0.0
        %v854 = vmax.f32 %v690, 0.0
        %v855 = vmax.f32 %v693, 0.0
        %v856 = vmax.f32 %v698, 0.0
        %v857 = vmax.f32 %v701, 0.0
        %v858 = vmax.f32 %v706, 0.0
        %v859 = vmax.f32 %v709, 0.0
        %v860 = vmax.f32 %v714, 0.0
        %v861 = vmax.f32 %v717, 0.0
        %v862 = vmax.f32 %v722, 0.0
        %v863 = vmax.f32 %v725, 0.0
        %v864 = vmax.f32 %v730, 0.0
        %v865 = vmax.f32 %v733, 0.0
        %v866 = vmax.f32 %v738, 0.0
        %v867 = vmax.f32 %v741, 0.0
        %v868 = vmax.f32 %v746, 0.0
        %v869 = vmax.f32 %v749, 0.0
        %v870 = vmax.f32 %v754, 0.0
        %v871 = vmax.f32 %v757, 0.0
        %v872 = vmax.f32 %v762, 0.0
        %v873 = vmax.f32 %v765, 0.0
        %v874 = vmax.f32 %v770, 0.0
        %v875 = vmax.f32 %v773, 0.0
        %v876 = vmax.f32 %v778, 0.0
        %v877 = vmax.f32 %v781, 0.0
        %v878 = vmax.f32 %v786, 0.0
        %v879 = vmax.f32 %v789, 0.0
        %v880 = vmax.f32 %v794, 0.0
        %v881 = vmax.f32 %v797, 0.0
        %v882 = vmax.f32 %v802, 0.0
        %v883 = vmax.f32 %v805, 0.0
        %v884 = vmax.f32 %v810, 0.0
        %v885 = vmax.f32 %v813, 0.0
        %v886 = vmax.f32 %v818, 0.0
        %v887 = vmax.f32 %v821, 0.0
        %v888 = vpack.c.bf16 %v825, %v824
        %v889 = vpack.c.bf16 %v827, %v826
        %v890 = vpack.c.bf16 %v829, %v828
        %v891 = vpack.c.bf16 %v831, %v830
        %v892 = vpack.c.bf16 %v833, %v832
        %v893 = vpack.c.bf16 %v835, %v834
        %v894 = vpack.c.bf16 %v837, %v836
        %v895 = vpack.c.bf16 %v839, %v838
        %v896 = vpack.c.bf16 %v841, %v840
        %v897 = vpack.c.bf16 %v843, %v842
        %v898 = vpack.c.bf16 %v845, %v844
        %v899 = vpack.c.bf16 %v847, %v846
        %v900 = vpack.c.bf16 %v849, %v848
        %v901 = vpack.c.bf16 %v851, %v850
        %v902 = vpack.c.bf16 %v853, %v852
        %v903 = vpack.c.bf16 %v855, %v854
        %v904 = vpack.c.bf16 %v857, %v856
        %v905 = vpack.c.bf16 %v859, %v858
        %v906 = vpack.c.bf16 %v861, %v860
        %v907 = vpack.c.bf16 %v863, %v862
        %v908 = vpack.c.bf16 %v865, %v864
        %v909 = vpack.c.bf16 %v867, %v866
        %v910 = vpack.c.bf16 %v869, %v868
        %v911 = vpack.c.bf16 %v871, %v870
        %v912 = vpack.c.bf16 %v873, %v872
        %v913 = vpack.c.bf16 %v875, %v874
        %v914 = vpack.c.bf16 %v877, %v876
        %v915 = vpack.c.bf16 %v879, %v878
        %v916 = vpack.c.bf16 %v881, %v880
        %v917 = vpack.c.bf16 %v883, %v882
        %v918 = vpack.c.bf16 %v885, %v884
        %v919 = vpack.c.bf16 %v887, %v886
        %v952 = vunpack.c.l.b16 %v888
        %v953 = vunpack.c.h.b16 %v888
        %v954 = vunpack.c.l.b16 %v889
        %v955 = vunpack.c.h.b16 %v889
        %v956 = vunpack.c.l.b16 %v890
        %v957 = vunpack.c.h.b16 %v890
        %v958 = vunpack.c.l.b16 %v891
        %v959 = vunpack.c.h.b16 %v891
        %v960 = vunpack.c.l.b16 %v892
        %v961 = vunpack.c.h.b16 %v892
        %v962 = vunpack.c.l.b16 %v893
        %v963 = vunpack.c.h.b16 %v893
        %v964 = vunpack.c.l.b16 %v894
        %v965 = vunpack.c.h.b16 %v894
        %v966 = vunpack.c.l.b16 %v895
        %v967 = vunpack.c.h.b16 %v895
        %v968 = vunpack.c.l.b16 %v896
        %v969 = vunpack.c.h.b16 %v896
        %v970 = vunpack.c.l.b16 %v897
        %v971 = vunpack.c.h.b16 %v897
        %v972 = vunpack.c.l.b16 %v898
        %v973 = vunpack.c.h.b16 %v898
        %v974 = vunpack.c.l.b16 %v899
        %v975 = vunpack.c.h.b16 %v899
        %v976 = vunpack.c.l.b16 %v900
        %v977 = vunpack.c.h.b16 %v900
        %v978 = vunpack.c.l.b16 %v901
        %v979 = vunpack.c.h.b16 %v901
        %v980 = vunpack.c.l.b16 %v902
        %v981 = vunpack.c.h.b16 %v902
        %v982 = vunpack.c.l.b16 %v903
        %v983 = vunpack.c.h.b16 %v903
        %v984 = vunpack.c.l.b16 %v904
        %v985 = vunpack.c.h.b16 %v904
        %v986 = vunpack.c.l.b16 %v905
        %v987 = vunpack.c.h.b16 %v905
        %v988 = vunpack.c.l.b16 %v906
        %v989 = vunpack.c.h.b16 %v906
        %v990 = vunpack.c.l.b16 %v907
        %v991 = vunpack.c.h.b16 %v907
        %v992 = vunpack.c.l.b16 %v908
        %v993 = vunpack.c.h.b16 %v908
        %v994 = vunpack.c.l.b16 %v909
        %v995 = vunpack.c.h.b16 %v909
        %v996 = vunpack.c.l.b16 %v910
        %v997 = vunpack.c.h.b16 %v910
        %v998 = vunpack.c.l.b16 %v911
        %v999 = vunpack.c.h.b16 %v911
        %v1000 = vunpack.c.l.b16 %v912
        %v1001 = vunpack.c.h.b16 %v912
        %v1002 = vunpack.c.l.b16 %v913
        %v1003 = vunpack.c.h.b16 %v913
        %v1004 = vunpack.c.l.b16 %v914
        %v1005 = vunpack.c.h.b16 %v914
        %v1006 = vunpack.c.l.b16 %v915
        %v1007 = vunpack.c.h.b16 %v915
        %v1008 = vunpack.c.l.b16 %v916
        %v1009 = vunpack.c.h.b16 %v916
        %v1010 = vunpack.c.l.b16 %v917
        %v1011 = vunpack.c.h.b16 %v917
        %v1012 = vunpack.c.l.b16 %v918
        %v1013 = vunpack.c.h.b16 %v918
        %v1014 = vunpack.c.l.b16 %v919
        %v1015 = vunpack.c.h.b16 %v919
        %v1016 = vpack.c.b16 %v952, %v952
        %v1017 = vpack.c.b16 %v953, %v953
        %v1018 = vpack.c.b16 %v954, %v954
        %v1019 = vpack.c.b16 %v955, %v955
        %v1020 = vpack.c.b16 %v956, %v956
        %v1021 = vpack.c.b16 %v957, %v957
        %v1022 = vpack.c.b16 %v958, %v958
        %v1023 = vpack.c.b16 %v959, %v959
        %v1024 = vpack.c.b16 %v960, %v960
        %v1025 = vpack.c.b16 %v961, %v961
        %v1026 = vpack.c.b16 %v962, %v962
        %v1027 = vpack.c.b16 %v963, %v963
        %v1028 = vpack.c.b16 %v964, %v964
        %v1029 = vpack.c.b16 %v965, %v965
        %v1030 = vpack.c.b16 %v966, %v966
        %v1031 = vpack.c.b16 %v967, %v967
        %v1032 = vpack.c.b16 %v968, %v968
        %v1033 = vpack.c.b16 %v969, %v969
        %v1034 = vpack.c.b16 %v970, %v970
        %v1035 = vpack.c.b16 %v971, %v971
        %v1036 = vpack.c.b16 %v972, %v972
        %v1037 = vpack.c.b16 %v973, %v973
        %v1038 = vpack.c.b16 %v974, %v974
        %v1039 = vpack.c.b16 %v975, %v975
        %v1040 = vpack.c.b16 %v976, %v976
        %v1041 = vpack.c.b16 %v977, %v977
        %v1042 = vpack.c.b16 %v978, %v978
        %v1043 = vpack.c.b16 %v979, %v979
        %v1044 = vpack.c.b16 %v980, %v980
        %v1045 = vpack.c.b16 %v981, %v981
        %v1046 = vpack.c.b16 %v982, %v982
        %v1047 = vpack.c.b16 %v983, %v983
        %v1048 = vpack.c.b16 %v984, %v984
        %v1049 = vpack.c.b16 %v985, %v985
        %v1050 = vpack.c.b16 %v986, %v986
        %v1051 = vpack.c.b16 %v987, %v987
        %v1052 = vpack.c.b16 %v988, %v988
        %v1053 = vpack.c.b16 %v989, %v989
        %v1054 = vpack.c.b16 %v990, %v990
        %v1055 = vpack.c.b16 %v991, %v991
        %v1056 = vpack.c.b16 %v992, %v992
        %v1057 = vpack.c.b16 %v993, %v993
        %v1058 = vpack.c.b16 %v994, %v994
        %v1059 = vpack.c.b16 %v995, %v995
        %v1060 = vpack.c.b16 %v996, %v996
        %v1061 = vpack.c.b16 %v997, %v997
        %v1062 = vpack.c.b16 %v998, %v998
        %v1063 = vpack.c.b16 %v999, %v999
        %v1064 = vpack.c.b16 %v1000, %v1000
        %v1065 = vpack.c.b16 %v1001, %v1001
        %v1066 = vpack.c.b16 %v1002, %v1002
        %v1067 = vpack.c.b16 %v1003, %v1003
        %v1068 = vpack.c.b16 %v1004, %v1004
        %v1069 = vpack.c.b16 %v1005, %v1005
        %v1070 = vpack.c.b16 %v1006, %v1006
        %v1071 = vpack.c.b16 %v1007, %v1007
        %v1072 = vpack.c.b16 %v1008, %v1008
        %v1073 = vpack.c.b16 %v1009, %v1009
        %v1074 = vpack.c.b16 %v1010, %v1010
        %v1075 = vpack.c.b16 %v1011, %v1011
        %v1076 = vpack.c.b16 %v1012, %v1012
        %v1077 = vpack.c.b16 %v1013, %v1013
        %v1078 = vpack.c.b16 %v1014, %v1014
        %v1079 = vpack.c.b16 %v1015, %v1015
        %vm1144 = vcmask 125952
        %1145 = vst.msk [vmem:[%s172] sm:$0xf] %vm1144, %v1016
        %1146 = vst.msk [vmem:[%s172 + $0x4] sm:$0xf] %vm1144, %v1017
        %1147 = vst.msk [vmem:[%s172 + $0x8] sm:$0xf] %vm1144, %v1018
        %1148 = vst.msk [vmem:[%s172 + $0xc] sm:$0xf] %vm1144, %v1019
        %1149 = vst.msk [vmem:[%s172 + $0x10] sm:$0xf] %vm1144, %v1020
        %1150 = vst.msk [vmem:[%s172 + $0x14] sm:$0xf] %vm1144, %v1021
        %1151 = vst.msk [vmem:[%s172 + $0x18] sm:$0xf] %vm1144, %v1022
        %1152 = vst.msk [vmem:[%s172 + $0x1c] sm:$0xf] %vm1144, %v1023
        %1153 = vst.msk [vmem:[%s172 + $0x20] sm:$0xf] %vm1144, %v1024
        %1154 = vst.msk [vmem:[%s172 + $0x24] sm:$0xf] %vm1144, %v1025
        %1155 = vst.msk [vmem:[%s172 + $0x28] sm:$0xf] %vm1144, %v1026
        %1156 = vst.msk [vmem:[%s172 + $0x2c] sm:$0xf] %vm1144, %v1027
        %1157 = vst.msk [vmem:[%s172 + $0x30] sm:$0xf] %vm1144, %v1028
        %1158 = vst.msk [vmem:[%s172 + $0x34] sm:$0xf] %vm1144, %v1029
        %1159 = vst.msk [vmem:[%s172 + $0x38] sm:$0xf] %vm1144, %v1030
        %1160 = vst.msk [vmem:[%s172 + $0x3c] sm:$0xf] %vm1144, %v1031
        %1161 = vst.msk [vmem:[%s172 + $0x40] sm:$0xf] %vm1144, %v1032
        %1162 = vst.msk [vmem:[%s172 + $0x44] sm:$0xf] %vm1144, %v1033
        %1163 = vst.msk [vmem:[%s172 + $0x48] sm:$0xf] %vm1144, %v1034
        %1164 = vst.msk [vmem:[%s172 + $0x4c] sm:$0xf] %vm1144, %v1035
        %1165 = vst.msk [vmem:[%s172 + $0x50] sm:$0xf] %vm1144, %v1036
        %1166 = vst.msk [vmem:[%s172 + $0x54] sm:$0xf] %vm1144, %v1037
        %1167 = vst.msk [vmem:[%s172 + $0x58] sm:$0xf] %vm1144, %v1038
        %1168 = vst.msk [vmem:[%s172 + $0x5c] sm:$0xf] %vm1144, %v1039
        %1169 = vst.msk [vmem:[%s172 + $0x60] sm:$0xf] %vm1144, %v1040
        %1170 = vst.msk [vmem:[%s172 + $0x64] sm:$0xf] %vm1144, %v1041
        %1171 = vst.msk [vmem:[%s172 + $0x68] sm:$0xf] %vm1144, %v1042
        %1172 = vst.msk [vmem:[%s172 + $0x6c] sm:$0xf] %vm1144, %v1043
        %1173 = vst.msk [vmem:[%s172 + $0x70] sm:$0xf] %vm1144, %v1044
        %1174 = vst.msk [vmem:[%s172 + $0x74] sm:$0xf] %vm1144, %v1045
        %1175 = vst.msk [vmem:[%s172 + $0x78] sm:$0xf] %vm1144, %v1046
        %1176 = vst.msk [vmem:[%s172 + $0x7c] sm:$0xf] %vm1144, %v1047
        %1177 = vst.msk [vmem:[%s172 + $0x80] sm:$0xf] %vm1144, %v1048
        %1178 = vst.msk [vmem:[%s172 + $0x84] sm:$0xf] %vm1144, %v1049
        %1179 = vst.msk [vmem:[%s172 + $0x88] sm:$0xf] %vm1144, %v1050
        %1180 = vst.msk [vmem:[%s172 + $0x8c] sm:$0xf] %vm1144, %v1051
        %1181 = vst.msk [vmem:[%s172 + $0x90] sm:$0xf] %vm1144, %v1052
        %1182 = vst.msk [vmem:[%s172 + $0x94] sm:$0xf] %vm1144, %v1053
        %1183 = vst.msk [vmem:[%s172 + $0x98] sm:$0xf] %vm1144, %v1054
        %1184 = vst.msk [vmem:[%s172 + $0x9c] sm:$0xf] %vm1144, %v1055
        %1185 = vst.msk [vmem:[%s172 + $0xa0] sm:$0xf] %vm1144, %v1056
        %1186 = vst.msk [vmem:[%s172 + $0xa4] sm:$0xf] %vm1144, %v1057
        %1187 = vst.msk [vmem:[%s172 + $0xa8] sm:$0xf] %vm1144, %v1058
        %1188 = vst.msk [vmem:[%s172 + $0xac] sm:$0xf] %vm1144, %v1059
        %1189 = vst.msk [vmem:[%s172 + $0xb0] sm:$0xf] %vm1144, %v1060
        %1190 = vst.msk [vmem:[%s172 + $0xb4] sm:$0xf] %vm1144, %v1061
        %1191 = vst.msk [vmem:[%s172 + $0xb8] sm:$0xf] %vm1144, %v1062
        %1192 = vst.msk [vmem:[%s172 + $0xbc] sm:$0xf] %vm1144, %v1063
        %1193 = vst.msk [vmem:[%s172 + $0xc0] sm:$0xf] %vm1144, %v1064
        %1194 = vst.msk [vmem:[%s172 + $0xc4] sm:$0xf] %vm1144, %v1065
        %1195 = vst.msk [vmem:[%s172 + $0xc8] sm:$0xf] %vm1144, %v1066
        %1196 = vst.msk [vmem:[%s172 + $0xcc] sm:$0xf] %vm1144, %v1067
        %1197 = vst.msk [vmem:[%s172 + $0xd0] sm:$0xf] %vm1144, %v1068
        %1198 = vst.msk [vmem:[%s172 + $0xd4] sm:$0xf] %vm1144, %v1069
        %1199 = vst.msk [vmem:[%s172 + $0xd8] sm:$0xf] %vm1144, %v1070
        %1200 = vst.msk [vmem:[%s172 + $0xdc] sm:$0xf] %vm1144, %v1071
        %1201 = vst.msk [vmem:[%s172 + $0xe0] sm:$0xf] %vm1144, %v1072
        %1202 = vst.msk [vmem:[%s172 + $0xe4] sm:$0xf] %vm1144, %v1073
        %1203 = vst.msk [vmem:[%s172 + $0xe8] sm:$0xf] %vm1144, %v1074
        %1204 = vst.msk [vmem:[%s172 + $0xec] sm:$0xf] %vm1144, %v1075
        %1205 = vst.msk [vmem:[%s172 + $0xf0] sm:$0xf] %vm1144, %v1076
        %1206 = vst.msk [vmem:[%s172 + $0xf4] sm:$0xf] %vm1144, %v1077
        %1207 = vst.msk [vmem:[%s172 + $0xf8] sm:$0xf] %vm1144, %v1078
        %1208 = vst.msk [vmem:[%s172 + $0xfc] sm:$0xf] %vm1144, %v1079
        %s1209 = sand.u32 %s90, 1
        %s1210 = sand.u32 %s90, 1
        %s1211 = smul.addr %s1210, 256
        %s1212 = scalar_lea.vmem [#allocation2], %s1211
        // Predicated region
        $region33: #{net_forward.13} parent=31 // pred_check
          %p1213 = pneg %p100
        $region34: #{net_forward.13} parent=31 // pred_check_branch
          %1215 = sbr.rel (%p1213) target = $region36
        $region35: #{net_forward.13} parent=31 // pred_region
          %s1216 = smul.u32 64, %s14
          %s1217 = ssub.s32 400, %s1216
          %p1218 = scmp.lt.s32.totalorder %s1217, 64
          %s1219 = scalar_select %p1218, %s1217, 64
          %s1220 = smul.u32 64, %s1219
          %p1221 = scmp.ne.s32.totalorder 0, %s1220
          %s1222 = smul.addr %s1216, 4
          %s1223 = scalar_lea.vmem %s3, %s1222
          // Predicated region
          $region37: #{net_forward.13} parent=35 // pred_check
            %p1224 = pneg %p1221
          $region38: #{net_forward.13} parent=35 // pred_check_branch
            %1226 = sbr.rel (%p1224) target = $region40
          $region39: #{net_forward.13} parent=35 // pred_region
            // Predicated region
            $region41: #{net_forward.13} parent=39 // pred_check
              _
            $region42: #{net_forward.13} parent=39 // pred_check_branch
              %1228 = sbr.rel target = $region44
            $region43: #{net_forward.13} parent=39 // pred_region
              // Predicated region
              $region63: #{net_forward.13} parent=43 // pred_check
                _
              $region64: #{net_forward.13} parent=43 // pred_check_branch
                %1403 = sbr.rel (0) target = $region66
              $region65: #{net_forward.13} parent=43 // pred_region
                %s1405 = sshrl.u32 %s1219, 6
                // While loop
                $region67: #{net_forward.13} parent=65 // loop_pre_header
                  _
                $region68: #{net_forward.13} parent=65 // loop_header
                  %s1407 = sphi 0, %s1409
                  %p1408 = scmp.ge.s32.totalorder %s1407, %s1405
                  %s1412 = sphi 0, %s1545
                  %s1413 = sphi %s1212, %s1548
                  %s1414 = sphi %s1223, %s1549
                $region69: #{net_forward.13} parent=65 // loop_header_branch
                  %1411 = sbr.rel (%p1408) target = $region73
                $region70: #{net_forward.13} parent=65 // loop_body
                  %v1415 = vld [vmem:[%s1413] sm:$0xf]
                  %1416 = vst [vmem:[%s1414] sm:$0xf] %v1415
                  %v1417 = vld [vmem:[%s1413 + $0x4] sm:$0xf]
                  %1418 = vst [vmem:[%s1414 + $0x4] sm:$0xf] %v1417
                  %v1419 = vld [vmem:[%s1413 + $0x8] sm:$0xf]
                  %1420 = vst [vmem:[%s1414 + $0x8] sm:$0xf] %v1419
                  %v1421 = vld [vmem:[%s1413 + $0xc] sm:$0xf]
                  %1422 = vst [vmem:[%s1414 + $0xc] sm:$0xf] %v1421
                  %v1423 = vld [vmem:[%s1413 + $0x10] sm:$0xf]
                  %1424 = vst [vmem:[%s1414 + $0x10] sm:$0xf] %v1423
                  %v1425 = vld [vmem:[%s1413 + $0x14] sm:$0xf]
                  %1426 = vst [vmem:[%s1414 + $0x14] sm:$0xf] %v1425
                  %v1427 = vld [vmem:[%s1413 + $0x18] sm:$0xf]
                  %1428 = vst [vmem:[%s1414 + $0x18] sm:$0xf] %v1427
                  %v1429 = vld [vmem:[%s1413 + $0x1c] sm:$0xf]
                  %1430 = vst [vmem:[%s1414 + $0x1c] sm:$0xf] %v1429
                  %v1431 = vld [vmem:[%s1413 + $0x20] sm:$0xf]
                  %1432 = vst [vmem:[%s1414 + $0x20] sm:$0xf] %v1431
                  %v1433 = vld [vmem:[%s1413 + $0x24] sm:$0xf]
                  %1434 = vst [vmem:[%s1414 + $0x24] sm:$0xf] %v1433
                  %v1435 = vld [vmem:[%s1413 + $0x28] sm:$0xf]
                  %1436 = vst [vmem:[%s1414 + $0x28] sm:$0xf] %v1435
                  %v1437 = vld [vmem:[%s1413 + $0x2c] sm:$0xf]
                  %1438 = vst [vmem:[%s1414 + $0x2c] sm:$0xf] %v1437
                  %v1439 = vld [vmem:[%s1413 + $0x30] sm:$0xf]
                  %1440 = vst [vmem:[%s1414 + $0x30] sm:$0xf] %v1439
                  %v1441 = vld [vmem:[%s1413 + $0x34] sm:$0xf]
                  %1442 = vst [vmem:[%s1414 + $0x34] sm:$0xf] %v1441
                  %v1443 = vld [vmem:[%s1413 + $0x38] sm:$0xf]
                  %1444 = vst [vmem:[%s1414 + $0x38] sm:$0xf] %v1443
                  %v1445 = vld [vmem:[%s1413 + $0x3c] sm:$0xf]
                  %1446 = vst [vmem:[%s1414 + $0x3c] sm:$0xf] %v1445
                  %v1447 = vld [vmem:[%s1413 + $0x40] sm:$0xf]
                  %1448 = vst [vmem:[%s1414 + $0x40] sm:$0xf] %v1447
                  %v1449 = vld [vmem:[%s1413 + $0x44] sm:$0xf]
                  %1450 = vst [vmem:[%s1414 + $0x44] sm:$0xf] %v1449
                  %v1451 = vld [vmem:[%s1413 + $0x48] sm:$0xf]
                  %1452 = vst [vmem:[%s1414 + $0x48] sm:$0xf] %v1451
                  %v1453 = vld [vmem:[%s1413 + $0x4c] sm:$0xf]
                  %1454 = vst [vmem:[%s1414 + $0x4c] sm:$0xf] %v1453
                  %v1455 = vld [vmem:[%s1413 + $0x50] sm:$0xf]
                  %1456 = vst [vmem:[%s1414 + $0x50] sm:$0xf] %v1455
                  %v1457 = vld [vmem:[%s1413 + $0x54] sm:$0xf]
                  %1458 = vst [vmem:[%s1414 + $0x54] sm:$0xf] %v1457
                  %v1459 = vld [vmem:[%s1413 + $0x58] sm:$0xf]
                  %1460 = vst [vmem:[%s1414 + $0x58] sm:$0xf] %v1459
                  %v1461 = vld [vmem:[%s1413 + $0x5c] sm:$0xf]
                  %1462 = vst [vmem:[%s1414 + $0x5c] sm:$0xf] %v1461
                  %v1463 = vld [vmem:[%s1413 + $0x60] sm:$0xf]
                  %1464 = vst [vmem:[%s1414 + $0x60] sm:$0xf] %v1463
                  %v1465 = vld [vmem:[%s1413 + $0x64] sm:$0xf]
                  %1466 = vst [vmem:[%s1414 + $0x64] sm:$0xf] %v1465
                  %v1467 = vld [vmem:[%s1413 + $0x68] sm:$0xf]
                  %1468 = vst [vmem:[%s1414 + $0x68] sm:$0xf] %v1467
                  %v1469 = vld [vmem:[%s1413 + $0x6c] sm:$0xf]
                  %1470 = vst [vmem:[%s1414 + $0x6c] sm:$0xf] %v1469
                  %v1471 = vld [vmem:[%s1413 + $0x70] sm:$0xf]
                  %1472 = vst [vmem:[%s1414 + $0x70] sm:$0xf] %v1471
                  %v1473 = vld [vmem:[%s1413 + $0x74] sm:$0xf]
                  %1474 = vst [vmem:[%s1414 + $0x74] sm:$0xf] %v1473
                  %v1475 = vld [vmem:[%s1413 + $0x78] sm:$0xf]
                  %1476 = vst [vmem:[%s1414 + $0x78] sm:$0xf] %v1475
                  %v1477 = vld [vmem:[%s1413 + $0x7c] sm:$0xf]
                  %1478 = vst [vmem:[%s1414 + $0x7c] sm:$0xf] %v1477
                  %v1479 = vld [vmem:[%s1413 + $0x80] sm:$0xf]
                  %1480 = vst [vmem:[%s1414 + $0x80] sm:$0xf] %v1479
                  %v1481 = vld [vmem:[%s1413 + $0x84] sm:$0xf]
                  %1482 = vst [vmem:[%s1414 + $0x84] sm:$0xf] %v1481
                  %v1483 = vld [vmem:[%s1413 + $0x88] sm:$0xf]
                  %1484 = vst [vmem:[%s1414 + $0x88] sm:$0xf] %v1483
                  %v1485 = vld [vmem:[%s1413 + $0x8c] sm:$0xf]
                  %1486 = vst [vmem:[%s1414 + $0x8c] sm:$0xf] %v1485
                  %v1487 = vld [vmem:[%s1413 + $0x90] sm:$0xf]
                  %1488 = vst [vmem:[%s1414 + $0x90] sm:$0xf] %v1487
                  %v1489 = vld [vmem:[%s1413 + $0x94] sm:$0xf]
                  %1490 = vst [vmem:[%s1414 + $0x94] sm:$0xf] %v1489
                  %v1491 = vld [vmem:[%s1413 + $0x98] sm:$0xf]
                  %1492 = vst [vmem:[%s1414 + $0x98] sm:$0xf] %v1491
                  %v1493 = vld [vmem:[%s1413 + $0x9c] sm:$0xf]
                  %1494 = vst [vmem:[%s1414 + $0x9c] sm:$0xf] %v1493
                  %v1495 = vld [vmem:[%s1413 + $0xa0] sm:$0xf]
                  %1496 = vst [vmem:[%s1414 + $0xa0] sm:$0xf] %v1495
                  %v1497 = vld [vmem:[%s1413 + $0xa4] sm:$0xf]
                  %1498 = vst [vmem:[%s1414 + $0xa4] sm:$0xf] %v1497
                  %v1499 = vld [vmem:[%s1413 + $0xa8] sm:$0xf]
                  %1500 = vst [vmem:[%s1414 + $0xa8] sm:$0xf] %v1499
                  %v1501 = vld [vmem:[%s1413 + $0xac] sm:$0xf]
                  %1502 = vst [vmem:[%s1414 + $0xac] sm:$0xf] %v1501
                  %v1503 = vld [vmem:[%s1413 + $0xb0] sm:$0xf]
                  %1504 = vst [vmem:[%s1414 + $0xb0] sm:$0xf] %v1503
                  %v1505 = vld [vmem:[%s1413 + $0xb4] sm:$0xf]
                  %1506 = vst [vmem:[%s1414 + $0xb4] sm:$0xf] %v1505
                  %v1507 = vld [vmem:[%s1413 + $0xb8] sm:$0xf]
                  %1508 = vst [vmem:[%s1414 + $0xb8] sm:$0xf] %v1507
                  %v1509 = vld [vmem:[%s1413 + $0xbc] sm:$0xf]
                  %1510 = vst [vmem:[%s1414 + $0xbc] sm:$0xf] %v1509
                  %v1511 = vld [vmem:[%s1413 + $0xc0] sm:$0xf]
                  %1512 = vst [vmem:[%s1414 + $0xc0] sm:$0xf] %v1511
                  %v1513 = vld [vmem:[%s1413 + $0xc4] sm:$0xf]
                  %1514 = vst [vmem:[%s1414 + $0xc4] sm:$0xf] %v1513
                  %v1515 = vld [vmem:[%s1413 + $0xc8] sm:$0xf]
                  %1516 = vst [vmem:[%s1414 + $0xc8] sm:$0xf] %v1515
                  %v1517 = vld [vmem:[%s1413 + $0xcc] sm:$0xf]
                  %1518 = vst [vmem:[%s1414 + $0xcc] sm:$0xf] %v1517
                  %v1519 = vld [vmem:[%s1413 + $0xd0] sm:$0xf]
                  %1520 = vst [vmem:[%s1414 + $0xd0] sm:$0xf] %v1519
                  %v1521 = vld [vmem:[%s1413 + $0xd4] sm:$0xf]
                  %1522 = vst [vmem:[%s1414 + $0xd4] sm:$0xf] %v1521
                  %v1523 = vld [vmem:[%s1413 + $0xd8] sm:$0xf]
                  %1524 = vst [vmem:[%s1414 + $0xd8] sm:$0xf] %v1523
                  %v1525 = vld [vmem:[%s1413 + $0xdc] sm:$0xf]
                  %1526 = vst [vmem:[%s1414 + $0xdc] sm:$0xf] %v1525
                  %v1527 = vld [vmem:[%s1413 + $0xe0] sm:$0xf]
                  %1528 = vst [vmem:[%s1414 + $0xe0] sm:$0xf] %v1527
                  %v1529 = vld [vmem:[%s1413 + $0xe4] sm:$0xf]
                  %1530 = vst [vmem:[%s1414 + $0xe4] sm:$0xf] %v1529
                  %v1531 = vld [vmem:[%s1413 + $0xe8] sm:$0xf]
                  %1532 = vst [vmem:[%s1414 + $0xe8] sm:$0xf] %v1531
                  %v1533 = vld [vmem:[%s1413 + $0xec] sm:$0xf]
                  %1534 = vst [vmem:[%s1414 + $0xec] sm:$0xf] %v1533
                  %v1535 = vld [vmem:[%s1413 + $0xf0] sm:$0xf]
                  %1536 = vst [vmem:[%s1414 + $0xf0] sm:$0xf] %v1535
                  %v1537 = vld [vmem:[%s1413 + $0xf4] sm:$0xf]
                  %1538 = vst [vmem:[%s1414 + $0xf4] sm:$0xf] %v1537
                  %v1539 = vld [vmem:[%s1413 + $0xf8] sm:$0xf]
                  %1540 = vst [vmem:[%s1414 + $0xf8] sm:$0xf] %v1539
                  %v1541 = vld [vmem:[%s1413 + $0xfc] sm:$0xf]
                  %1542 = vst [vmem:[%s1414 + $0xfc] sm:$0xf] %v1541
                  %s1543 = sadd.s32 1, %s1412
                  %p1544 = scmp.ge.s32.totalorder %s1543, %s1405
                  %s1545 = scalar_select %p1544, 0, %s1543
                  %s1546 = smul.u32 %s1545, 256
                  %s1547 = smul.u32 %s1545, 256
                  %s1548 = scalar_lea.vmem %s1212, %s1546 [#allocation2]
                  %s1549 = scalar_lea.vmem %s1223, %s1547
                $region71: #{net_forward.13} parent=65 // loop_footer
                  %s1409 = sadd.s32 %s1407, 1
                $region72: #{net_forward.13} parent=65 // loop_footer_branch
                  %1406 = sbr.rel target = $region68
                $region73: #{net_forward.13} parent=65 // loop_exit
                  _
                %s1550 = sshrl.u32 %s1219, 6
                %s1551 = sand.u32 %s1219, 63
                %s1552 = smul.u32 %s1550, 64
                %s1553 = smul.u32 4, %s1552
                %s1554 = scalar_lea.vmem %s1212, %s1553 [#allocation2]
                %s1555 = smul.u32 4, %s1552
                %s1556 = scalar_lea.vmem %s1223, %s1555
                // While loop
                $region74: #{net_forward.13} parent=65 // loop_pre_header
                  _
                $region75: #{net_forward.13} parent=65 // loop_header
                  %s1558 = sphi 0, %s1560
                  %p1559 = scmp.ge.s32.totalorder %s1558, %s1551
                  %s1563 = sphi 0, %s1570
                  %s1564 = sphi %s1554, %s1573
                  %s1565 = sphi %s1556, %s1574
                $region76: #{net_forward.13} parent=65 // loop_header_branch
                  %1562 = sbr.rel (%p1559) target = $region80
                $region77: #{net_forward.13} parent=65 // loop_body
                  %v1566 = vld [vmem:[%s1564] sm:$0xf]
                  %1567 = vst [vmem:[%s1565] sm:$0xf] %v1566
                  %s1568 = sadd.s32 1, %s1563
                  %p1569 = scmp.ge.s32.totalorder %s1568, %s1551
                  %s1570 = scalar_select %p1569, 0, %s1568
                  %s1571 = smul.u32 %s1570, 4
                  %s1572 = smul.u32 %s1570, 4
                  %s1573 = scalar_lea.vmem %s1554, %s1571 [#allocation2]
                  %s1574 = scalar_lea.vmem %s1556, %s1572
                $region78: #{net_forward.13} parent=65 // loop_footer
                  %s1560 = sadd.s32 %s1558, 1
                $region79: #{net_forward.13} parent=65 // loop_footer_branch
                  %1557 = sbr.rel target = $region75
                $region80: #{net_forward.13} parent=65 // loop_exit
                  _
              $region66: #{net_forward.13} parent=43 // pred_fallthru
                _
            $region44: #{net_forward.13} parent=39 // pred_fallthru
              _
            // Predicated region
            $region45: #{net_forward.13} parent=39 // pred_check
              _
            $region46: #{net_forward.13} parent=39 // pred_check_branch
              %1230 = sbr.rel (0) target = $region48
            $region47: #{net_forward.13} parent=39 // pred_region
              %s1232 = sshrl.u32 %s1219, 6
              // While loop
              $region49: #{net_forward.13} parent=47 // loop_pre_header
                _
              $region50: #{net_forward.13} parent=47 // loop_header
                %s1234 = sphi 0, %s1236
                %p1235 = scmp.ge.s32.totalorder %s1234, %s1232
                %s1239 = sphi 0, %s1372
                %s1240 = sphi %s1212, %s1375
                %s1241 = sphi %s1223, %s1376
              $region51: #{net_forward.13} parent=47 // loop_header_branch
                %1238 = sbr.rel (%p1235) target = $region55
              $region52: #{net_forward.13} parent=47 // loop_body
                %v1242 = vld [vmem:[%s1240] sm:$0xf]
                %1243 = vst [vmem:[%s1241] sm:$0xf] %v1242
                %v1244 = vld [vmem:[%s1240 + $0x4] sm:$0xf]
                %1245 = vst [vmem:[%s1241 + $0x4] sm:$0xf] %v1244
                %v1246 = vld [vmem:[%s1240 + $0x8] sm:$0xf]
                %1247 = vst [vmem:[%s1241 + $0x8] sm:$0xf] %v1246
                %v1248 = vld [vmem:[%s1240 + $0xc] sm:$0xf]
                %1249 = vst [vmem:[%s1241 + $0xc] sm:$0xf] %v1248
                %v1250 = vld [vmem:[%s1240 + $0x10] sm:$0xf]
                %1251 = vst [vmem:[%s1241 + $0x10] sm:$0xf] %v1250
                %v1252 = vld [vmem:[%s1240 + $0x14] sm:$0xf]
                %1253 = vst [vmem:[%s1241 + $0x14] sm:$0xf] %v1252
                %v1254 = vld [vmem:[%s1240 + $0x18] sm:$0xf]
                %1255 = vst [vmem:[%s1241 + $0x18] sm:$0xf] %v1254
                %v1256 = vld [vmem:[%s1240 + $0x1c] sm:$0xf]
                %1257 = vst [vmem:[%s1241 + $0x1c] sm:$0xf] %v1256
                %v1258 = vld [vmem:[%s1240 + $0x20] sm:$0xf]
                %1259 = vst [vmem:[%s1241 + $0x20] sm:$0xf] %v1258
                %v1260 = vld [vmem:[%s1240 + $0x24] sm:$0xf]
                %1261 = vst [vmem:[%s1241 + $0x24] sm:$0xf] %v1260
                %v1262 = vld [vmem:[%s1240 + $0x28] sm:$0xf]
                %1263 = vst [vmem:[%s1241 + $0x28] sm:$0xf] %v1262
                %v1264 = vld [vmem:[%s1240 + $0x2c] sm:$0xf]
                %1265 = vst [vmem:[%s1241 + $0x2c] sm:$0xf] %v1264
                %v1266 = vld [vmem:[%s1240 + $0x30] sm:$0xf]
                %1267 = vst [vmem:[%s1241 + $0x30] sm:$0xf] %v1266
                %v1268 = vld [vmem:[%s1240 + $0x34] sm:$0xf]
                %1269 = vst [vmem:[%s1241 + $0x34] sm:$0xf] %v1268
                %v1270 = vld [vmem:[%s1240 + $0x38] sm:$0xf]
                %1271 = vst [vmem:[%s1241 + $0x38] sm:$0xf] %v1270
                %v1272 = vld [vmem:[%s1240 + $0x3c] sm:$0xf]
                %1273 = vst [vmem:[%s1241 + $0x3c] sm:$0xf] %v1272
                %v1274 = vld [vmem:[%s1240 + $0x40] sm:$0xf]
                %1275 = vst [vmem:[%s1241 + $0x40] sm:$0xf] %v1274
                %v1276 = vld [vmem:[%s1240 + $0x44] sm:$0xf]
                %1277 = vst [vmem:[%s1241 + $0x44] sm:$0xf] %v1276
                %v1278 = vld [vmem:[%s1240 + $0x48] sm:$0xf]
                %1279 = vst [vmem:[%s1241 + $0x48] sm:$0xf] %v1278
                %v1280 = vld [vmem:[%s1240 + $0x4c] sm:$0xf]
                %1281 = vst [vmem:[%s1241 + $0x4c] sm:$0xf] %v1280
                %v1282 = vld [vmem:[%s1240 + $0x50] sm:$0xf]
                %1283 = vst [vmem:[%s1241 + $0x50] sm:$0xf] %v1282
                %v1284 = vld [vmem:[%s1240 + $0x54] sm:$0xf]
                %1285 = vst [vmem:[%s1241 + $0x54] sm:$0xf] %v1284
                %v1286 = vld [vmem:[%s1240 + $0x58] sm:$0xf]
                %1287 = vst [vmem:[%s1241 + $0x58] sm:$0xf] %v1286
                %v1288 = vld [vmem:[%s1240 + $0x5c] sm:$0xf]
                %1289 = vst [vmem:[%s1241 + $0x5c] sm:$0xf] %v1288
                %v1290 = vld [vmem:[%s1240 + $0x60] sm:$0xf]
                %1291 = vst [vmem:[%s1241 + $0x60] sm:$0xf] %v1290
                %v1292 = vld [vmem:[%s1240 + $0x64] sm:$0xf]
                %1293 = vst [vmem:[%s1241 + $0x64] sm:$0xf] %v1292
                %v1294 = vld [vmem:[%s1240 + $0x68] sm:$0xf]
                %1295 = vst [vmem:[%s1241 + $0x68] sm:$0xf] %v1294
                %v1296 = vld [vmem:[%s1240 + $0x6c] sm:$0xf]
                %1297 = vst [vmem:[%s1241 + $0x6c] sm:$0xf] %v1296
                %v1298 = vld [vmem:[%s1240 + $0x70] sm:$0xf]
                %1299 = vst [vmem:[%s1241 + $0x70] sm:$0xf] %v1298
                %v1300 = vld [vmem:[%s1240 + $0x74] sm:$0xf]
                %1301 = vst [vmem:[%s1241 + $0x74] sm:$0xf] %v1300
                %v1302 = vld [vmem:[%s1240 + $0x78] sm:$0xf]
                %1303 = vst [vmem:[%s1241 + $0x78] sm:$0xf] %v1302
                %v1304 = vld [vmem:[%s1240 + $0x7c] sm:$0xf]
                %1305 = vst [vmem:[%s1241 + $0x7c] sm:$0xf] %v1304
                %v1306 = vld [vmem:[%s1240 + $0x80] sm:$0xf]
                %1307 = vst [vmem:[%s1241 + $0x80] sm:$0xf] %v1306
                %v1308 = vld [vmem:[%s1240 + $0x84] sm:$0xf]
                %1309 = vst [vmem:[%s1241 + $0x84] sm:$0xf] %v1308
                %v1310 = vld [vmem:[%s1240 + $0x88] sm:$0xf]
                %1311 = vst [vmem:[%s1241 + $0x88] sm:$0xf] %v1310
                %v1312 = vld [vmem:[%s1240 + $0x8c] sm:$0xf]
                %1313 = vst [vmem:[%s1241 + $0x8c] sm:$0xf] %v1312
                %v1314 = vld [vmem:[%s1240 + $0x90] sm:$0xf]
                %1315 = vst [vmem:[%s1241 + $0x90] sm:$0xf] %v1314
                %v1316 = vld [vmem:[%s1240 + $0x94] sm:$0xf]
                %1317 = vst [vmem:[%s1241 + $0x94] sm:$0xf] %v1316
                %v1318 = vld [vmem:[%s1240 + $0x98] sm:$0xf]
                %1319 = vst [vmem:[%s1241 + $0x98] sm:$0xf] %v1318
                %v1320 = vld [vmem:[%s1240 + $0x9c] sm:$0xf]
                %1321 = vst [vmem:[%s1241 + $0x9c] sm:$0xf] %v1320
                %v1322 = vld [vmem:[%s1240 + $0xa0] sm:$0xf]
                %1323 = vst [vmem:[%s1241 + $0xa0] sm:$0xf] %v1322
                %v1324 = vld [vmem:[%s1240 + $0xa4] sm:$0xf]
                %1325 = vst [vmem:[%s1241 + $0xa4] sm:$0xf] %v1324
                %v1326 = vld [vmem:[%s1240 + $0xa8] sm:$0xf]
                %1327 = vst [vmem:[%s1241 + $0xa8] sm:$0xf] %v1326
                %v1328 = vld [vmem:[%s1240 + $0xac] sm:$0xf]
                %1329 = vst [vmem:[%s1241 + $0xac] sm:$0xf] %v1328
                %v1330 = vld [vmem:[%s1240 + $0xb0] sm:$0xf]
                %1331 = vst [vmem:[%s1241 + $0xb0] sm:$0xf] %v1330
                %v1332 = vld [vmem:[%s1240 + $0xb4] sm:$0xf]
                %1333 = vst [vmem:[%s1241 + $0xb4] sm:$0xf] %v1332
                %v1334 = vld [vmem:[%s1240 + $0xb8] sm:$0xf]
                %1335 = vst [vmem:[%s1241 + $0xb8] sm:$0xf] %v1334
                %v1336 = vld [vmem:[%s1240 + $0xbc] sm:$0xf]
                %1337 = vst [vmem:[%s1241 + $0xbc] sm:$0xf] %v1336
                %v1338 = vld [vmem:[%s1240 + $0xc0] sm:$0xf]
                %1339 = vst [vmem:[%s1241 + $0xc0] sm:$0xf] %v1338
                %v1340 = vld [vmem:[%s1240 + $0xc4] sm:$0xf]
                %1341 = vst [vmem:[%s1241 + $0xc4] sm:$0xf] %v1340
                %v1342 = vld [vmem:[%s1240 + $0xc8] sm:$0xf]
                %1343 = vst [vmem:[%s1241 + $0xc8] sm:$0xf] %v1342
                %v1344 = vld [vmem:[%s1240 + $0xcc] sm:$0xf]
                %1345 = vst [vmem:[%s1241 + $0xcc] sm:$0xf] %v1344
                %v1346 = vld [vmem:[%s1240 + $0xd0] sm:$0xf]
                %1347 = vst [vmem:[%s1241 + $0xd0] sm:$0xf] %v1346
                %v1348 = vld [vmem:[%s1240 + $0xd4] sm:$0xf]
                %1349 = vst [vmem:[%s1241 + $0xd4] sm:$0xf] %v1348
                %v1350 = vld [vmem:[%s1240 + $0xd8] sm:$0xf]
                %1351 = vst [vmem:[%s1241 + $0xd8] sm:$0xf] %v1350
                %v1352 = vld [vmem:[%s1240 + $0xdc] sm:$0xf]
                %1353 = vst [vmem:[%s1241 + $0xdc] sm:$0xf] %v1352
                %v1354 = vld [vmem:[%s1240 + $0xe0] sm:$0xf]
                %1355 = vst [vmem:[%s1241 + $0xe0] sm:$0xf] %v1354
                %v1356 = vld [vmem:[%s1240 + $0xe4] sm:$0xf]
                %1357 = vst [vmem:[%s1241 + $0xe4] sm:$0xf] %v1356
                %v1358 = vld [vmem:[%s1240 + $0xe8] sm:$0xf]
                %1359 = vst [vmem:[%s1241 + $0xe8] sm:$0xf] %v1358
                %v1360 = vld [vmem:[%s1240 + $0xec] sm:$0xf]
                %1361 = vst [vmem:[%s1241 + $0xec] sm:$0xf] %v1360
                %v1362 = vld [vmem:[%s1240 + $0xf0] sm:$0xf]
                %1363 = vst [vmem:[%s1241 + $0xf0] sm:$0xf] %v1362
                %v1364 = vld [vmem:[%s1240 + $0xf4] sm:$0xf]
                %1365 = vst [vmem:[%s1241 + $0xf4] sm:$0xf] %v1364
                %v1366 = vld [vmem:[%s1240 + $0xf8] sm:$0xf]
                %1367 = vst [vmem:[%s1241 + $0xf8] sm:$0xf] %v1366
                %v1368 = vld [vmem:[%s1240 + $0xfc] sm:$0xf]
                %1369 = vst [vmem:[%s1241 + $0xfc] sm:$0xf] %v1368
                %s1370 = sadd.s32 1, %s1239
                %p1371 = scmp.ge.s32.totalorder %s1370, %s1232
                %s1372 = scalar_select %p1371, 0, %s1370
                %s1373 = smul.u32 %s1372, 256
                %s1374 = smul.u32 %s1372, 256
                %s1375 = scalar_lea.vmem %s1212, %s1373 [#allocation2]
                %s1376 = scalar_lea.vmem %s1223, %s1374
              $region53: #{net_forward.13} parent=47 // loop_footer
                %s1236 = sadd.s32 %s1234, 1
              $region54: #{net_forward.13} parent=47 // loop_footer_branch
                %1233 = sbr.rel target = $region50
              $region55: #{net_forward.13} parent=47 // loop_exit
                _
              %s1377 = sshrl.u32 %s1219, 6
              %s1378 = sand.u32 %s1219, 63
              %s1379 = smul.u32 %s1377, 64
              %s1380 = smul.u32 4, %s1379
              %s1381 = scalar_lea.vmem %s1212, %s1380 [#allocation2]
              %s1382 = smul.u32 4, %s1379
              %s1383 = scalar_lea.vmem %s1223, %s1382
              // While loop
              $region56: #{net_forward.13} parent=47 // loop_pre_header
                _
              $region57: #{net_forward.13} parent=47 // loop_header
                %s1385 = sphi 0, %s1387
                %p1386 = scmp.ge.s32.totalorder %s1385, %s1378
                %s1390 = sphi 0, %s1397
                %s1391 = sphi %s1381, %s1400
                %s1392 = sphi %s1383, %s1401
              $region58: #{net_forward.13} parent=47 // loop_header_branch
                %1389 = sbr.rel (%p1386) target = $region62
              $region59: #{net_forward.13} parent=47 // loop_body
                %v1393 = vld [vmem:[%s1391] sm:$0xf]
                %1394 = vst [vmem:[%s1392] sm:$0xf] %v1393
                %s1395 = sadd.s32 1, %s1390
                %p1396 = scmp.ge.s32.totalorder %s1395, %s1378
                %s1397 = scalar_select %p1396, 0, %s1395
                %s1398 = smul.u32 %s1397, 4
                %s1399 = smul.u32 %s1397, 4
                %s1400 = scalar_lea.vmem %s1381, %s1398 [#allocation2]
                %s1401 = scalar_lea.vmem %s1383, %s1399
              $region60: #{net_forward.13} parent=47 // loop_footer
                %s1387 = sadd.s32 %s1385, 1
              $region61: #{net_forward.13} parent=47 // loop_footer_branch
                %1384 = sbr.rel target = $region57
              $region62: #{net_forward.13} parent=47 // loop_exit
                _
            $region48: #{net_forward.13} parent=39 // pred_fallthru
              _
          $region40: #{net_forward.13} parent=35 // pred_fallthru
            _
          %1575 = vnop
        $region36: #{net_forward.13} parent=31 // pred_fallthru
          _
      $region32: #{net_forward.13} parent=5 // pred_fallthru
        _
      %p1576 = scmp.le.s32.totalorder 2, %s9
      // Predicated region
      $region81: #{net_forward.13} parent=5 // pred_check
        %p1577 = pneg %p1576
      $region82: #{net_forward.13} parent=5 // pred_check_branch
        %1579 = sbr.rel (%p1577) target = $region84
      $region83: #{net_forward.13} parent=5 // pred_region
        %s1580 = ssub.s32 %s9, 2
        // Predicated region
        $region85: #{net_forward.13} parent=83 // pred_check
          %p1581 = pneg %p106
        $region86: #{net_forward.13} parent=83 // pred_check_branch
          %1583 = sbr.rel (%p1581) target = $region88
        $region87: #{net_forward.13} parent=83 // pred_region
          %s1584 = sand.u32 %s91, 1
          %s1585 = sand.u32 %s91, 1
          %s1586 = smul.addr %s1585, 256
          %s1587 = scalar_lea.vmem [#allocation2], %s1586
        $region88: #{net_forward.13} parent=83 // pred_fallthru
          _
      $region84: #{net_forward.13} parent=5 // pred_fallthru
        _
    $region6: #{net_forward.13} parent=1 // loop_footer
      %s13 = sadd.s32 1, %s9
    $region7: #{net_forward.13} parent=1 // loop_footer_branch
      %8 = sbr.rel target = $region3
    $region8: #{net_forward.13} parent=1 // loop_exit
      _

// kernel: net_forward.14
$region0: #{net_forward.14}
  #allocation0 [shape = 'u32[]', space=smem, size = 0x4, offset = 0x4, fixed_abs, tag = 'smem constant byte address 0x4 - core index']
  #allocation1 [shape = 'u32[144,128]{1,0:T(1,128)}', space=vmem, size = 0x12000, scoped, tag = 'internal scratch']
  %s0 = inlined_call_operand.vmem [shape: bf16[3200,144], index: 0, kind: input, shape index: {}]
  %s1 = inlined_call_operand.vmem [shape: bf16[144,16], index: 1, kind: input, shape index: {}]
  %s2 = inlined_call_operand.vmem [shape: f32[1,16], index: 2, kind: input, shape index: {}]
  %s3 = inlined_call_operand.vmem [shape: bf16[3200,16], index: 3, kind: output, shape index: {}]
  %s4 = sld [smem:[#allocation0]]
  $region89: #{net_forward.14} parent=0
    _
  %s6 = ssub.s32 1, %s4
  %s7 = scalar_select 0, %s6, %s4
  $region1: #{net_forward.14} parent=0
    #allocation2 [shape = 'u8[262144]{0}', space=vmem, size = 0x40000, scoped, tag = 'output window, operand 0']
    loop: start=0, step=1, limit=9
    $region2: #{net_forward.14} parent=1 // loop_pre_header
      _
    $region3: #{net_forward.14} parent=1 // loop_header
      %s9 = sphi 0, %s13
      %p10 = scmp.ge.s32.totalorder %s9, 9
      %s19 = sphi 0, %s21
      %s22 = sphi 0, %s19
      %s23 = sphi 0, %s22
      %s39 = sphi 0, %s23
      %s43 = sphi 0, %s43
      %s45 = sphi 0, %s43
      %s46 = sphi 0, %s45
      %s60 = sphi 0, %s46
      %s64 = sphi 0, %s64
      %s66 = sphi 0, %s64
      %s67 = sphi 0, %s66
      %s81 = sphi 0, %s67
      %s87 = sphi 0, %s89
      %s90 = sphi 0, %s87
      %s91 = sphi 0, %s90
      %s107 = sphi 0, %s91
    $region4: #{net_forward.14} parent=1 // loop_header_branch
      %12 = sbr.rel (%p10) target = $region8
    $region5: #{net_forward.14} parent=1 // loop_body
      %s14 = ssub.s32 %s9, 1
      %s15 = ssub.s32 %s9, 2
      %s16 = sadd.s32 %s9, 1
      %s17 = ssub.s32 %s9, %s16
      %p18 = scmp.eq.s32.totalorder %s17, 0
      %s20 = sadd.s32 %s19, 1
      %s21 = scalar_select %p18, %s19, %s20
      %p24 = pneg %p18
      %p25 = scmp.eq.s32.totalorder %s9, 6
      %p26 = por %p24, %p25
      %p27 = scmp.ne.s32.totalorder %s19, %s22
      %p28 = scmp.eq.s32.totalorder %s9, 0
      %p29 = por %p27, %p28
      %p30 = scmp.ne.s32.totalorder %s19, %s22
      %p31 = scmp.eq.s32.totalorder %s14, 6
      %p32 = por %p30, %p31
      %p33 = scmp.ne.s32.totalorder %s22, %s23
      %p34 = scmp.eq.s32.totalorder %s14, 0
      %p35 = por %p33, %p34
      %p36 = scmp.ne.s32.totalorder %s22, %s23
      %p37 = scmp.eq.s32.totalorder %s15, 6
      %p38 = por %p36, %p37
      %p40 = scmp.ne.s32.totalorder %s23, %s39
      %p41 = scmp.eq.s32.totalorder %s15, 0
      %p42 = por %p40, %p41
      %s44 = sadd.s32 %s43, 1
      %p47 = scmp.eq.s32.totalorder %s9, 6
      %p48 = scmp.ne.s32.totalorder %s43, %s45
      %p49 = scmp.eq.s32.totalorder %s9, 0
      %p50 = por %p48, %p49
      %p51 = scmp.ne.s32.totalorder %s43, %s45
      %p52 = scmp.eq.s32.totalorder %s14, 6
      %p53 = por %p51, %p52
      %p54 = scmp.ne.s32.totalorder %s45, %s46
      %p55 = scmp.eq.s32.totalorder %s14, 0
      %p56 = por %p54, %p55
      %p57 = scmp.ne.s32.totalorder %s45, %s46
      %p58 = scmp.eq.s32.totalorder %s15, 6
      %p59 = por %p57, %p58
      %p61 = scmp.ne.s32.totalorder %s46, %s60
      %p62 = scmp.eq.s32.totalorder %s15, 0
      %p63 = por %p61, %p62
      %s65 = sadd.s32 %s64, 1
      %p68 = scmp.eq.s32.totalorder %s9, 6
      %p69 = scmp.ne.s32.totalorder %s64, %s66
      %p70 = scmp.eq.s32.totalorder %s9, 0
      %p71 = por %p69, %p70
      %p72 = scmp.ne.s32.totalorder %s64, %s66
      %p73 = scmp.eq.s32.totalorder %s14, 6
      %p74 = por %p72, %p73
      %p75 = scmp.ne.s32.totalorder %s66, %s67
      %p76 = scmp.eq.s32.totalorder %s14, 0
      %p77 = por %p75, %p76
      %p78 = scmp.ne.s32.totalorder %s66, %s67
      %p79 = scmp.eq.s32.totalorder %s15, 6
      %p80 = por %p78, %p79
      %p82 = scmp.ne.s32.totalorder %s67, %s81
      %p83 = scmp.eq.s32.totalorder %s15, 0
      %p84 = por %p82, %p83
      %s85 = ssub.s32 %s9, %s16
      %p86 = scmp.eq.s32.totalorder %s85, 0
      %s88 = sadd.s32 %s87, 1
      %s89 = scalar_select %p86, %s87, %s88
      %p92 = pneg %p86
      %p93 = scmp.eq.s32.totalorder %s9, 6
      %p94 = por %p92, %p93
      %p95 = scmp.ne.s32.totalorder %s87, %s90
      %p96 = scmp.eq.s32.totalorder %s9, 0
      %p97 = por %p95, %p96
      %p98 = scmp.ne.s32.totalorder %s87, %s90
      %p99 = scmp.eq.s32.totalorder %s14, 6
      %p100 = por %p98, %p99
      %p101 = scmp.ne.s32.totalorder %s90, %s91
      %p102 = scmp.eq.s32.totalorder %s14, 0
      %p103 = por %p101, %p102
      %p104 = scmp.ne.s32.totalorder %s90, %s91
      %p105 = scmp.eq.s32.totalorder %s15, 6
      %p106 = por %p104, %p105
      %p108 = scmp.ne.s32.totalorder %s91, %s107
      %p109 = scmp.eq.s32.totalorder %s15, 0
      %p110 = por %p108, %p109
      %p111 = scmp.le.s32.totalorder 1, %s9
      %p112 = scmp.lt.s32.totalorder %s9, 8
      %p113 = pnand %p111, %p112
      %p114 = pneg %p113
      // Predicated region
      $region9: #{net_forward.14} parent=5 // pred_check
        _
      $region10: #{net_forward.14} parent=5 // pred_check_branch
        %116 = sbr.rel (%p113) target = $region12
      $region11: #{net_forward.14} parent=5 // pred_region
        %s117 = ssub.s32 %s9, 1
        // Predicated region
        $region13: #{net_forward.14} parent=11 // pred_check
          %p118 = pneg %p56
        $region14: #{net_forward.14} parent=11 // pred_check_branch
          %120 = sbr.rel (%p118) target = $region16
        $region15: #{net_forward.14} parent=11 // pred_region
          _
        $region16: #{net_forward.14} parent=11 // pred_fallthru
          _
        // Predicated region
        $region17: #{net_forward.14} parent=11 // pred_check
          %p121 = pneg %p77
        $region18: #{net_forward.14} parent=11 // pred_check_branch
          %123 = sbr.rel (%p121) target = $region20
        $region19: #{net_forward.14} parent=11 // pred_region
          _
        $region20: #{net_forward.14} parent=11 // pred_fallthru
          _
      $region12: #{net_forward.14} parent=5 // pred_fallthru
        _
      %p124 = scmp.lt.s32.totalorder %s9, 7
      // Predicated region
      $region21: #{net_forward.14} parent=5 // pred_check
        %p125 = pneg %p124
      $region22: #{net_forward.14} parent=5 // pred_check_branch
        %127 = sbr.rel (%p125) target = $region24
      $region23: #{net_forward.14} parent=5 // pred_region
        // Predicated region
        $region25: #{net_forward.14} parent=23 // pred_check
          %p128 = pneg %p29
        $region26: #{net_forward.14} parent=23 // pred_check_branch
          %130 = sbr.rel (%p128) target = $region28
        $region27: #{net_forward.14} parent=23 // pred_region
          %s131 = smul.u32 64, %s9
          %s132 = ssub.s32 400, %s131
          %p133 = scmp.lt.s32.totalorder %s132, 64
          %s134 = scalar_select %p133, %s132, 64
          %s135 = smul.u32 64, %s134
          %s136 = smul.u32 %s135, 2
          %p137 = scmp.lt.s32.totalorder %s131, 399
          %s138 = scalar_select %p137, %s131, 399
          %s139 = smul.addr %s138, 2
          %s140 = smul.addr %s139, 4
          %s141 = scalar_lea.vmem %s0, %s140
          %s142 = smul.u32 64, %s9
          %s143 = ssub.s32 400, %s142
          %p144 = scmp.lt.s32.totalorder %s143, 64
          %s145 = scalar_select %p144, %s143, 64
          %s146 = smul.u32 64, %s145
          %s147 = smul.u32 %s146, 2
        $region28: #{net_forward.14} parent=23 // pred_fallthru
          _
      $region24: #{net_forward.14} parent=5 // pred_fallthru
        _
      %p148 = scmp.le.s32.totalorder 1, %s9
      %p149 = scmp.lt.s32.totalorder %s9, 8
      %p150 = pnand %p148, %p149
      %p151 = pneg %p150
      // Predicated region
      $region29: #{net_forward.14} parent=5 // pred_check
        _
      $region30: #{net_forward.14} parent=5 // pred_check_branch
        %153 = sbr.rel (%p150) target = $region32
      $region31: #{net_forward.14} parent=5 // pred_region
        %s154 = ssub.s32 %s9, 1
        %s155 = smul.u32 64, %s14
        %s156 = ssub.s32 400, %s155
        %p157 = scmp.lt.s32.totalorder %s156, 64
        %s158 = scalar_select %p157, %s156, 64
        %s159 = smul.u32 64, %s158
        %s160 = smul.u32 %s159, 2
        %p161 = scmp.lt.s32.totalorder %s155, 399
        %s162 = scalar_select %p161, %s155, 399
        %s163 = smul.addr %s162, 2
        %s164 = smul.addr %s163, 4
        %s165 = scalar_lea.vmem %s0, %s164
        %p166 = pneg %p35
        %p167 = pneg %p32
        %p168 = pneg %p56
        %p169 = pneg %p53
        %p170 = pneg %p77
        %p171 = pneg %p74
        %p172 = pneg %p103
        %p173 = pneg %p100
        %s174 = sand.u32 %s90, 1
        %s175 = sand.u32 %s90, 1
        %s176 = smul.addr %s175, 256
        %s177 = scalar_lea.vmem [#allocation2], %s176
        %s178 = smul.u32 64, %s14
        %s179 = ssub.s32 400, %s178
        %p180 = scmp.lt.s32.totalorder %s179, 64
        %s181 = scalar_select %p180, %s179, 64
        %s182 = smul.u32 64, %s181
        %s183 = smul.u32 %s182, 2
        %p184 = scmp.lt.s32.totalorder %s178, 399
        %s185 = scalar_select %p184, %s178, 399
        %s186 = smul.addr %s185, 2
        %s187 = smul.addr %s186, 4
        %s188 = scalar_lea.vmem %s0, %s187
        %s189 = smul.u32 64, %s14
        %s190 = ssub.s32 400, %s189
        %p191 = scmp.lt.s32.totalorder %s190, 64
        %s192 = scalar_select %p191, %s190, 64
        %s193 = smul.u32 64, %s192
        %s194 = smul.u32 %s193, 2
        %s195 = smul.u32 64, %s14
        %s196 = ssub.s32 400, %s195
        %p197 = scmp.lt.s32.totalorder %s196, 64
        %s198 = scalar_select %p197, %s196, 64
        %s199 = smul.u32 64, %s198
        %v201 = vld [vmem:[%s188] sm:$0xff]
        %v202 = vld [vmem:[%s188 + $0x8] sm:$0xff]
        %v203 = vld [vmem:[%s188 + $0x10] sm:$0xff]
        %v204 = vld [vmem:[%s188 + $0x18] sm:$0xff]
        %v205 = vld [vmem:[%s188 + $0x20] sm:$0xff]
        %v206 = vld [vmem:[%s188 + $0x28] sm:$0xff]
        %v207 = vld [vmem:[%s188 + $0x30] sm:$0xff]
        %v208 = vld [vmem:[%s188 + $0x38] sm:$0xff]
        %v209 = vld [vmem:[%s188 + $0x40] sm:$0xff]
        %v210 = vld [vmem:[%s188 + $0x48] sm:$0xff]
        %v211 = vld [vmem:[%s188 + $0x50] sm:$0xff]
        %v212 = vld [vmem:[%s188 + $0x58] sm:$0xff]
        %v213 = vld [vmem:[%s188 + $0x60] sm:$0xff]
        %v214 = vld [vmem:[%s188 + $0x68] sm:$0xff]
        %v215 = vld [vmem:[%s188 + $0x70] sm:$0xff]
        %v216 = vld [vmem:[%s188 + $0x78] sm:$0xff]
        %v217 = vld [vmem:[%s188 + $0x80] sm:$0xff]
        %v218 = vld [vmem:[%s188 + $0x88] sm:$0xff]
        %v219 = vld [vmem:[%s188 + $0x90] sm:$0xff]
        %v220 = vld [vmem:[%s188 + $0x98] sm:$0xff]
        %v221 = vld [vmem:[%s188 + $0xa0] sm:$0xff]
        %v222 = vld [vmem:[%s188 + $0xa8] sm:$0xff]
        %v223 = vld [vmem:[%s188 + $0xb0] sm:$0xff]
        %v224 = vld [vmem:[%s188 + $0xb8] sm:$0xff]
        %v225 = vld [vmem:[%s188 + $0xc0] sm:$0xff]
        %v226 = vld [vmem:[%s188 + $0xc8] sm:$0xff]
        %v227 = vld [vmem:[%s188 + $0xd0] sm:$0xff]
        %v228 = vld [vmem:[%s188 + $0xd8] sm:$0xff]
        %v229 = vld [vmem:[%s188 + $0xe0] sm:$0xff]
        %v230 = vld [vmem:[%s188 + $0xe8] sm:$0xff]
        %v231 = vld [vmem:[%s188 + $0xf0] sm:$0xff]
        %v232 = vld [vmem:[%s188 + $0xf8] sm:$0xff]
        %v233 = vld [vmem:[%s188 + $0x100] sm:$0xff]
        %v234 = vld [vmem:[%s188 + $0x108] sm:$0xff]
        %v235 = vld [vmem:[%s188 + $0x110] sm:$0xff]
        %v236 = vld [vmem:[%s188 + $0x118] sm:$0xff]
        %v237 = vld [vmem:[%s188 + $0x120] sm:$0xff]
        %v238 = vld [vmem:[%s188 + $0x128] sm:$0xff]
        %v239 = vld [vmem:[%s188 + $0x130] sm:$0xff]
        %v240 = vld [vmem:[%s188 + $0x138] sm:$0xff]
        %v241 = vld [vmem:[%s188 + $0x140] sm:$0xff]
        %v242 = vld [vmem:[%s188 + $0x148] sm:$0xff]
        %v243 = vld [vmem:[%s188 + $0x150] sm:$0xff]
        %v244 = vld [vmem:[%s188 + $0x158] sm:$0xff]
        %v245 = vld [vmem:[%s188 + $0x160] sm:$0xff]
        %v246 = vld [vmem:[%s188 + $0x168] sm:$0xff]
        %v247 = vld [vmem:[%s188 + $0x170] sm:$0xff]
        %v248 = vld [vmem:[%s188 + $0x178] sm:$0xff]
        %v249 = vld [vmem:[%s188 + $0x180] sm:$0xff]
        %v250 = vld [vmem:[%s188 + $0x188] sm:$0xff]
        %v251 = vld [vmem:[%s188 + $0x190] sm:$0xff]
        %v252 = vld [vmem:[%s188 + $0x198] sm:$0xff]
        %v253 = vld [vmem:[%s188 + $0x1a0] sm:$0xff]
        %v254 = vld [vmem:[%s188 + $0x1a8] sm:$0xff]
        %v255 = vld [vmem:[%s188 + $0x1b0] sm:$0xff]
        %v256 = vld [vmem:[%s188 + $0x1b8] sm:$0xff]
        %v257 = vld [vmem:[%s188 + $0x1c0] sm:$0xff]
        %v258 = vld [vmem:[%s188 + $0x1c8] sm:$0xff]
        %v259 = vld [vmem:[%s188 + $0x1d0] sm:$0xff]
        %v260 = vld [vmem:[%s188 + $0x1d8] sm:$0xff]
        %v261 = vld [vmem:[%s188 + $0x1e0] sm:$0xff]
        %v262 = vld [vmem:[%s188 + $0x1e8] sm:$0xff]
        %v263 = vld [vmem:[%s188 + $0x1f0] sm:$0xff]
        %v264 = vld [vmem:[%s188 + $0x1f8] sm:$0xff]
        %v265 = vld [vmem:[%s1] sm:$0xf]
        %v266 = vld [vmem:[%s1 + $0x4] sm:$0xf]
        %v267 = vld [vmem:[%s1 + $0x8] sm:$0xf]
        %v268 = vld [vmem:[%s1 + $0xc] sm:$0xf]
        %v269 = vld [vmem:[%s1 + $0x10] sm:$0xf]
        %v270 = vld [vmem:[%s1 + $0x14] sm:$0xf]
        %v271 = vld [vmem:[%s1 + $0x18] sm:$0xf]
        %v272 = vld [vmem:[%s1 + $0x1c] sm:$0xf]
        %v273 = vld [vmem:[%s1 + $0x20] sm:$0xf]
        %v274 = vld [vmem:[%s1 + $0x24] sm:$0xf]
        %v275 = vld [vmem:[%s1 + $0x28] sm:$0xf]
        %v276 = vld [vmem:[%s1 + $0x2c] sm:$0xf]
        %v277 = vld [vmem:[%s1 + $0x30] sm:$0xf]
        %v278 = vld [vmem:[%s1 + $0x34] sm:$0xf]
        %v279 = vld [vmem:[%s1 + $0x38] sm:$0xf]
        %v280 = vld [vmem:[%s1 + $0x3c] sm:$0xf]
        %v281 = vld [vmem:[%s1 + $0x40] sm:$0xf]
        %v282 = vld [vmem:[%s1 + $0x44] sm:$0xf]
        %v283 = vld [vmem:[%s2] sm:$0x1]
        %v285 = vlaneseq
        %v286 = vshrl.u32 %v285, 7
        %v287 = vsub.s32 0, %v286
        %v288 = vrot.slane %v283, %v287
        %v354 = vunpack.c.l.b16 %v201
        %v355 = vunpack.c.h.b16 %v201
        %v356 = vunpack.c.l.b16 %v202
        %v357 = vunpack.c.h.b16 %v202
        %v358 = vunpack.c.l.b16 %v203
        %v359 = vunpack.c.h.b16 %v203
        %v360 = vunpack.c.l.b16 %v204
        %v361 = vunpack.c.h.b16 %v204
        %v362 = vunpack.c.l.b16 %v205
        %v363 = vunpack.c.h.b16 %v205
        %v364 = vunpack.c.l.b16 %v206
        %v365 = vunpack.c.h.b16 %v206
        %v366 = vunpack.c.l.b16 %v207
        %v367 = vunpack.c.h.b16 %v207
        %v368 = vunpack.c.l.b16 %v208
        %v369 = vunpack.c.h.b16 %v208
        %v370 = vunpack.c.l.b16 %v209
        %v371 = vunpack.c.h.b16 %v209
        %v372 = vunpack.c.l.b16 %v210
        %v373 = vunpack.c.h.b16 %v210
        %v374 = vunpack.c.l.b16 %v211
        %v375 = vunpack.c.h.b16 %v211
        %v376 = vunpack.c.l.b16 %v212
        %v377 = vunpack.c.h.b16 %v212
        %v378 = vunpack.c.l.b16 %v213
        %v379 = vunpack.c.h.b16 %v213
        %v380 = vunpack.c.l.b16 %v214
        %v381 = vunpack.c.h.b16 %v214
        %v382 = vunpack.c.l.b16 %v215
        %v383 = vunpack.c.h.b16 %v215
        %v384 = vunpack.c.l.b16 %v216
        %v385 = vunpack.c.h.b16 %v216
        %v386 = vunpack.c.l.b16 %v217
        %v387 = vunpack.c.h.b16 %v217
        %v388 = vunpack.c.l.b16 %v218
        %v389 = vunpack.c.h.b16 %v218
        %v390 = vunpack.c.l.b16 %v219
        %v391 = vunpack.c.h.b16 %v219
        %v392 = vunpack.c.l.b16 %v220
        %v393 = vunpack.c.h.b16 %v220
        %v394 = vunpack.c.l.b16 %v221
        %v395 = vunpack.c.h.b16 %v221
        %v396 = vunpack.c.l.b16 %v222
        %v397 = vunpack.c.h.b16 %v222
        %v398 = vunpack.c.l.b16 %v223
        %v399 = vunpack.c.h.b16 %v223
        %v400 = vunpack.c.l.b16 %v224
        %v401 = vunpack.c.h.b16 %v224
        %v402 = vunpack.c.l.b16 %v225
        %v403 = vunpack.c.h.b16 %v225
        %v404 = vunpack.c.l.b16 %v226
        %v405 = vunpack.c.h.b16 %v226
        %v406 = vunpack.c.l.b16 %v227
        %v407 = vunpack.c.h.b16 %v227
        %v408 = vunpack.c.l.b16 %v228
        %v409 = vunpack.c.h.b16 %v228
        %v410 = vunpack.c.l.b16 %v229
        %v411 = vunpack.c.h.b16 %v229
        %v412 = vunpack.c.l.b16 %v230
        %v413 = vunpack.c.h.b16 %v230
        %v414 = vunpack.c.l.b16 %v231
        %v415 = vunpack.c.h.b16 %v231
        %v416 = vunpack.c.l.b16 %v232
        %v417 = vunpack.c.h.b16 %v232
        %v418 = vunpack.c.l.b16 %v233
        %v419 = vunpack.c.h.b16 %v233
        %v420 = vunpack.c.l.b16 %v234
        %v421 = vunpack.c.h.b16 %v234
        %v422 = vunpack.c.l.b16 %v235
        %v423 = vunpack.c.h.b16 %v235
        %v424 = vunpack.c.l.b16 %v236
        %v425 = vunpack.c.h.b16 %v236
        %v426 = vunpack.c.l.b16 %v237
        %v427 = vunpack.c.h.b16 %v237
        %v428 = vunpack.c.l.b16 %v238
        %v429 = vunpack.c.h.b16 %v238
        %v430 = vunpack.c.l.b16 %v239
        %v431 = vunpack.c.h.b16 %v239
        %v432 = vunpack.c.l.b16 %v240
        %v433 = vunpack.c.h.b16 %v240
        %v434 = vunpack.c.l.b16 %v241
        %v435 = vunpack.c.h.b16 %v241
        %v436 = vunpack.c.l.b16 %v242
        %v437 = vunpack.c.h.b16 %v242
        %v438 = vunpack.c.l.b16 %v243
        %v439 = vunpack.c.h.b16 %v243
        %v440 = vunpack.c.l.b16 %v244
        %v441 = vunpack.c.h.b16 %v244
        %v442 = vunpack.c.l.b16 %v245
        %v443 = vunpack.c.h.b16 %v245
        %v444 = vunpack.c.l.b16 %v246
        %v445 = vunpack.c.h.b16 %v246
        %v446 = vunpack.c.l.b16 %v247
        %v447 = vunpack.c.h.b16 %v247
        %v448 = vunpack.c.l.b16 %v248
        %v449 = vunpack.c.h.b16 %v248
        %v450 = vunpack.c.l.b16 %v249
        %v451 = vunpack.c.h.b16 %v249
        %v452 = vunpack.c.l.b16 %v250
        %v453 = vunpack.c.h.b16 %v250
        %v454 = vunpack.c.l.b16 %v251
        %v455 = vunpack.c.h.b16 %v251
        %v456 = vunpack.c.l.b16 %v252
        %v457 = vunpack.c.h.b16 %v252
        %v458 = vunpack.c.l.b16 %v253
        %v459 = vunpack.c.h.b16 %v253
        %v460 = vunpack.c.l.b16 %v254
        %v461 = vunpack.c.h.b16 %v254
        %v462 = vunpack.c.l.b16 %v255
        %v463 = vunpack.c.h.b16 %v255
        %v464 = vunpack.c.l.b16 %v256
        %v465 = vunpack.c.h.b16 %v256
        %v466 = vunpack.c.l.b16 %v257
        %v467 = vunpack.c.h.b16 %v257
        %v468 = vunpack.c.l.b16 %v258
        %v469 = vunpack.c.h.b16 %v258
        %v470 = vunpack.c.l.b16 %v259
        %v471 = vunpack.c.h.b16 %v259
        %v472 = vunpack.c.l.b16 %v260
        %v473 = vunpack.c.h.b16 %v260
        %v474 = vunpack.c.l.b16 %v261
        %v475 = vunpack.c.h.b16 %v261
        %v476 = vunpack.c.l.b16 %v262
        %v477 = vunpack.c.h.b16 %v262
        %v478 = vunpack.c.l.b16 %v263
        %v479 = vunpack.c.h.b16 %v263
        %v480 = vunpack.c.l.b16 %v264
        %v481 = vunpack.c.h.b16 %v264
        %v482 = vpack.c.b16 %v356, %v354
        %v483 = vpack.c.b16 %v357, %v355
        %v484 = vpack.c.b16 %v360, %v358
        %v485 = vpack.c.b16 %v361, %v359
        %v486 = vpack.c.b16 %v364, %v362
        %v487 = vpack.c.b16 %v365, %v363
        %v488 = vpack.c.b16 %v368, %v366
        %v489 = vpack.c.b16 %v369, %v367
        %v490 = vpack.c.b16 %v372, %v370
        %v491 = vpack.c.b16 %v373, %v371
        %v492 = vpack.c.b16 %v376, %v374
        %v493 = vpack.c.b16 %v377, %v375
        %v494 = vpack.c.b16 %v380, %v378
        %v495 = vpack.c.b16 %v381, %v379
        %v496 = vpack.c.b16 %v384, %v382
        %v497 = vpack.c.b16 %v385, %v383
        %v498 = vpack.c.b16 %v388, %v386
        %v499 = vpack.c.b16 %v389, %v387
        %v500 = vpack.c.b16 %v392, %v390
        %v501 = vpack.c.b16 %v393, %v391
        %v502 = vpack.c.b16 %v396, %v394
        %v503 = vpack.c.b16 %v397, %v395
        %v504 = vpack.c.b16 %v400, %v398
        %v505 = vpack.c.b16 %v401, %v399
        %v506 = vpack.c.b16 %v404, %v402
        %v507 = vpack.c.b16 %v405, %v403
        %v508 = vpack.c.b16 %v408, %v406
        %v509 = vpack.c.b16 %v409, %v407
        %v510 = vpack.c.b16 %v412, %v410
        %v511 = vpack.c.b16 %v413, %v411
        %v512 = vpack.c.b16 %v416, %v414
        %v513 = vpack.c.b16 %v417, %v415
        %v514 = vpack.c.b16 %v420, %v418
        %v515 = vpack.c.b16 %v421, %v419
        %v516 = vpack.c.b16 %v424, %v422
        %v517 = vpack.c.b16 %v425, %v423
        %v518 = vpack.c.b16 %v428, %v426
        %v519 = vpack.c.b16 %v429, %v427
        %v520 = vpack.c.b16 %v432, %v430
        %v521 = vpack.c.b16 %v433, %v431
        %v522 = vpack.c.b16 %v436, %v434
        %v523 = vpack.c.b16 %v437, %v435
        %v524 = vpack.c.b16 %v440, %v438
        %v525 = vpack.c.b16 %v441, %v439
        %v526 = vpack.c.b16 %v444, %v442
        %v527 = vpack.c.b16 %v445, %v443
        %v528 = vpack.c.b16 %v448, %v446
        %v529 = vpack.c.b16 %v449, %v447
        %v530 = vpack.c.b16 %v452, %v450
        %v531 = vpack.c.b16 %v453, %v451
        %v532 = vpack.c.b16 %v456, %v454
        %v533 = vpack.c.b16 %v457, %v455
        %v534 = vpack.c.b16 %v460, %v458
        %v535 = vpack.c.b16 %v461, %v459
        %v536 = vpack.c.b16 %v464, %v462
        %v537 = vpack.c.b16 %v465, %v463
        %v538 = vpack.c.b16 %v468, %v466
        %v539 = vpack.c.b16 %v469, %v467
        %v540 = vpack.c.b16 %v472, %v470
        %v541 = vpack.c.b16 %v473, %v471
        %v542 = vpack.c.b16 %v476, %v474
        %v543 = vpack.c.b16 %v477, %v475
        %v544 = vpack.c.b16 %v480, %v478
        %v545 = vpack.c.b16 %v481, %v479
        %v596 = vunpack.c.l.b16 %v265
        %v597 = vunpack.c.l.b16 %v266
        %v598 = vunpack.c.l.b16 %v267
        %v599 = vunpack.c.l.b16 %v268
        %v600 = vunpack.c.l.b16 %v269
        %v601 = vunpack.c.l.b16 %v270
        %v602 = vunpack.c.l.b16 %v271
        %v603 = vunpack.c.l.b16 %v272
        %v604 = vunpack.c.l.b16 %v273
        %v605 = vunpack.c.l.b16 %v274
        %v606 = vunpack.c.l.b16 %v275
        %v607 = vunpack.c.l.b16 %v276
        %v608 = vunpack.c.l.b16 %v277
        %v609 = vunpack.c.l.b16 %v278
        %v610 = vunpack.c.l.b16 %v279
        %v611 = vunpack.c.l.b16 %v280
        %v612 = vunpack.c.l.b16 %v281
        %v613 = vunpack.c.l.b16 %v282
        %v614 = vpack.c.b16 %v597, %v596
        %v615 = vpack.c.b16 %v599, %v598
        %v616 = vpack.c.b16 %v601, %v600
        %v617 = vpack.c.b16 %v603, %v602
        %v618 = vpack.c.b16 %v605, %v604
        %v619 = vpack.c.b16 %v607, %v606
        %v620 = vpack.c.b16 %v609, %v608
        %v621 = vpack.c.b16 %v611, %v610
        %v622 = vpack.c.b16 %v613, %v612
        %vm632 = vcmask 130048
        %v634 = vsel %vm632, %v483, 0
        %v637 = vsel %vm632, %v485, 0
        %v640 = vsel %vm632, %v487, 0
        %v643 = vsel %vm632, %v489, 0
        %v646 = vsel %vm632, %v491, 0
        %v649 = vsel %vm632, %v493, 0
        %v652 = vsel %vm632, %v495, 0
        %v655 = vsel %vm632, %v497, 0
        %v658 = vsel %vm632, %v499, 0
        %v661 = vsel %vm632, %v501, 0
        %v664 = vsel %vm632, %v503, 0
        %v667 = vsel %vm632, %v505, 0
        %v670 = vsel %vm632, %v507, 0
        %v673 = vsel %vm632, %v509, 0
        %v676 = vsel %vm632, %v511, 0
        %v679 = vsel %vm632, %v513, 0
        %v682 = vsel %vm632, %v515, 0
        %v685 = vsel %vm632, %v517, 0
        %v688 = vsel %vm632, %v519, 0
        %v691 = vsel %vm632, %v521, 0
        %v694 = vsel %vm632, %v523, 0
        %v697 = vsel %vm632, %v525, 0
        %v700 = vsel %vm632, %v527, 0
        %v703 = vsel %vm632, %v529, 0
        %v706 = vsel %vm632, %v531, 0
        %v709 = vsel %vm632, %v533, 0
        %v712 = vsel %vm632, %v535, 0
        %v715 = vsel %vm632, %v537, 0
        %v718 = vsel %vm632, %v539, 0
        %v721 = vsel %vm632, %v541, 0
        %v724 = vsel %vm632, %v543, 0
        %v727 = vsel %vm632, %v545, 0
        %729 = vmatprep.subr.bf16.mxu0 0
        %730 = vmatpush1.bf16.msra.mxu0 %v614
        %731 = vmatprep.subr.bf16.mxu0 0
        %732 = vmatpush1.bf16.msra.mxu0 %v615
        %733 = vmatprep.subr.bf16.mxu0 0
        %734 = vmatpush1.bf16.msra.mxu0 %v616
        %735 = vmatprep.subr.bf16.mxu0 0
        %736 = vmatpush1.bf16.msra.mxu0 %v617
        %737 = vmatprep.subr.bf16.mxu0 0
        %738 = vmatpush1.bf16.msra.mxu0 %v618
        %739 = vmatprep.subr.bf16.mxu0 0
        %740 = vmatpush1.bf16.msra.mxu0 %v619
        %741 = vmatprep.subr.bf16.mxu0 0
        %742 = vmatpush1.bf16.msra.mxu0 %v620
        %743 = vmatprep.subr.bf16.mxu0 0
        %744 = vmatpush1.bf16.msra.mxu0 %v621
        %745 = vmatprep.subr.bf16.mxu0 0
        %746 = vmatpush1.bf16.msra.mxu0 %v622
        %747 = vmatprep.subr.bf16.mxu0 0
        %748 = vmatpush1.bf16.msra.mxu0 0
        %749 = vmatprep.subr.bf16.mxu0 0
        %750 = vmatpush1.bf16.msra.mxu0 0
        %751 = vmatprep.subr.bf16.mxu0 0
        %752 = vmatpush1.bf16.msra.mxu0 0
        %753 = vmatprep.subr.bf16.mxu0 0
        %754 = vmatpush1.bf16.msra.mxu0 0
        %755 = vmatprep.subr.bf16.mxu0 0
        %756 = vmatpush1.bf16.msra.mxu0 0
        %757 = vmatprep.subr.bf16.mxu0 0
        %758 = vmatpush1.bf16.msra.mxu0 0
        %759 = vmatprep.subr.bf16.mxu0 0
        %760 = vmatpush1.bf16.msra.mxu0 0
        %761 = vmatprep.mubr.bf16.mxu0 %v634
        %762 = vmatmul.mubr.bf16.gmra.mrb[0].mxu0 %v482
        %v763 = vpop.f32.mrb[0].mxu0
        %v764 = vadd.f32 %v288, %v763
        %v765 = vpop.f32.mrb[0].mxu0
        %v766 = vpop.f32.mrb[0].mxu0
        %v767 = vadd.f32 %v288, %v766
        %v768 = vpop.f32.mrb[0].mxu0
        %769 = vmatprep.mubr.bf16.mxu0 %v637
        %770 = vmatmul.mubr.bf16.gmra.mrb[0].mxu0 %v484
        %v771 = vpop.f32.mrb[0].mxu0
        %v772 = vadd.f32 %v288, %v771
        %v773 = vpop.f32.mrb[0].mxu0
        %v774 = vpop.f32.mrb[0].mxu0
        %v775 = vadd.f32 %v288, %v774
        %v776 = vpop.f32.mrb[0].mxu0
        %777 = vmatprep.mubr.bf16.mxu0 %v640
        %778 = vmatmul.mubr.bf16.gmra.mrb[0].mxu0 %v486
        %v779 = vpop.f32.mrb[0].mxu0
        %v780 = vadd.f32 %v288, %v779
        %v781 = vpop.f32.mrb[0].mxu0
        %v782 = vpop.f32.mrb[0].mxu0
        %v783 = vadd.f32 %v288, %v782
        %v784 = vpop.f32.mrb[0].mxu0
        %785 = vmatprep.mubr.bf16.mxu0 %v643
        %786 = vmatmul.mubr.bf16.gmra.mrb[0].mxu0 %v488
        %v787 = vpop.f32.mrb[0].mxu0
        %v788 = vadd.f32 %v288, %v787
        %v789 = vpop.f32.mrb[0].mxu0
        %v790 = vpop.f32.mrb[0].mxu0
        %v791 = vadd.f32 %v288, %v790
        %v792 = vpop.f32.mrb[0].mxu0
        %793 = vmatprep.mubr.bf16.mxu0 %v646
        %794 = vmatmul.mubr.bf16.gmra.mrb[0].mxu0 %v490
        %v795 = vpop.f32.mrb[0].mxu0
        %v796 = vadd.f32 %v288, %v795
        %v797 = vpop.f32.mrb[0].mxu0
        %v798 = vpop.f32.mrb[0].mxu0
        %v799 = vadd.f32 %v288, %v798
        %v800 = vpop.f32.mrb[0].mxu0
        %801 = vmatprep.mubr.bf16.mxu0 %v649
        %802 = vmatmul.mubr.bf16.gmra.mrb[0].mxu0 %v492
        %v803 = vpop.f32.mrb[0].mxu0
        %v804 = vadd.f32 %v288, %v803
        %v805 = vpop.f32.mrb[0].mxu0
        %v806 = vpop.f32.mrb[0].mxu0
        %v807 = vadd.f32 %v288, %v806
        %v808 = vpop.f32.mrb[0].mxu0
        %809 = vmatprep.mubr.bf16.mxu0 %v652
        %810 = vmatmul.mubr.bf16.gmra.mrb[0].mxu0 %v494
        %v811 = vpop.f32.mrb[0].mxu0
        %v812 = vadd.f32 %v288, %v811
        %v813 = vpop.f32.mrb[0].mxu0
        %v814 = vpop.f32.mrb[0].mxu0
        %v815 = vadd.f32 %v288, %v814
        %v816 = vpop.f32.mrb[0].mxu0
        %817 = vmatprep.mubr.bf16.mxu0 %v655
        %818 = vmatmul.mubr.bf16.gmra.mrb[0].mxu0 %v496
        %v819 = vpop.f32.mrb[0].mxu0
        %v820 = vadd.f32 %v288, %v819
        %v821 = vpop.f32.mrb[0].mxu0
        %v822 = vpop.f32.mrb[0].mxu0
        %v823 = vadd.f32 %v288, %v822
        %v824 = vpop.f32.mrb[0].mxu0
        %825 = vmatprep.mubr.bf16.mxu0 %v658
        %826 = vmatmul.mubr.bf16.gmra.mrb[0].mxu0 %v498
        %v827 = vpop.f32.mrb[0].mxu0
        %v828 = vadd.f32 %v288, %v827
        %v829 = vpop.f32.mrb[0].mxu0
        %v830 = vpop.f32.mrb[0].mxu0
        %v831 = vadd.f32 %v288, %v830
        %v832 = vpop.f32.mrb[0].mxu0
        %833 = vmatprep.mubr.bf16.mxu0 %v661
        %834 = vmatmul.mubr.bf16.gmra.mrb[0].mxu0 %v500
        %v835 = vpop.f32.mrb[0].mxu0
        %v836 = vadd.f32 %v288, %v835
        %v837 = vpop.f32.mrb[0].mxu0
        %v838 = vpop.f32.mrb[0].mxu0
        %v839 = vadd.f32 %v288, %v838
        %v840 = vpop.f32.mrb[0].mxu0
        %841 = vmatprep.mubr.bf16.mxu0 %v664
        %842 = vmatmul.mubr.bf16.gmra.mrb[0].mxu0 %v502
        %v843 = vpop.f32.mrb[0].mxu0
        %v844 = vadd.f32 %v288, %v843
        %v845 = vpop.f32.mrb[0].mxu0
        %v846 = vpop.f32.mrb[0].mxu0
        %v847 = vadd.f32 %v288, %v846
        %v848 = vpop.f32.mrb[0].mxu0
        %849 = vmatprep.mubr.bf16.mxu0 %v667
        %850 = vmatmul.mubr.bf16.gmra.mrb[0].mxu0 %v504
        %v851 = vpop.f32.mrb[0].mxu0
        %v852 = vadd.f32 %v288, %v851
        %v853 = vpop.f32.mrb[0].mxu0
        %v854 = vpop.f32.mrb[0].mxu0
        %v855 = vadd.f32 %v288, %v854
        %v856 = vpop.f32.mrb[0].mxu0
        %857 = vmatprep.mubr.bf16.mxu0 %v670
        %858 = vmatmul.mubr.bf16.gmra.mrb[0].mxu0 %v506
        %v859 = vpop.f32.mrb[0].mxu0
        %v860 = vadd.f32 %v288, %v859
        %v861 = vpop.f32.mrb[0].mxu0
        %v862 = vpop.f32.mrb[0].mxu0
        %v863 = vadd.f32 %v288, %v862
        %v864 = vpop.f32.mrb[0].mxu0
        %865 = vmatprep.mubr.bf16.mxu0 %v673
        %866 = vmatmul.mubr.bf16.gmra.mrb[0].mxu0 %v508
        %v867 = vpop.f32.mrb[0].mxu0
        %v868 = vadd.f32 %v288, %v867
        %v869 = vpop.f32.mrb[0].mxu0
        %v870 = vpop.f32.mrb[0].mxu0
        %v871 = vadd.f32 %v288, %v870
        %v872 = vpop.f32.mrb[0].mxu0
        %873 = vmatprep.mubr.bf16.mxu0 %v676
        %874 = vmatmul.mubr.bf16.gmra.mrb[0].mxu0 %v510
        %v875 = vpop.f32.mrb[0].mxu0
        %v876 = vadd.f32 %v288, %v875
        %v877 = vpop.f32.mrb[0].mxu0
        %v878 = vpop.f32.mrb[0].mxu0
        %v879 = vadd.f32 %v288, %v878
        %v880 = vpop.f32.mrb[0].mxu0
        %881 = vmatprep.mubr.bf16.mxu0 %v679
        %882 = vmatmul.mubr.bf16.gmra.mrb[0].mxu0 %v512
        %v883 = vpop.f32.mrb[0].mxu0
        %v884 = vadd.f32 %v288, %v883
        %v885 = vpop.f32.mrb[0].mxu0
        %v886 = vpop.f32.mrb[0].mxu0
        %v887 = vadd.f32 %v288, %v886
        %v888 = vpop.f32.mrb[0].mxu0
        %889 = vmatprep.mubr.bf16.mxu0 %v682
        %890 = vmatmul.mubr.bf16.gmra.mrb[0].mxu0 %v514
        %v891 = vpop.f32.mrb[0].mxu0
        %v892 = vadd.f32 %v288, %v891
        %v893 = vpop.f32.mrb[0].mxu0
        %v894 = vpop.f32.mrb[0].mxu0
        %v895 = vadd.f32 %v288, %v894
        %v896 = vpop.f32.mrb[0].mxu0
        %897 = vmatprep.mubr.bf16.mxu0 %v685
        %898 = vmatmul.mubr.bf16.gmra.mrb[0].mxu0 %v516
        %v899 = vpop.f32.mrb[0].mxu0
        %v900 = vadd.f32 %v288, %v899
        %v901 = vpop.f32.mrb[0].mxu0
        %v902 = vpop.f32.mrb[0].mxu0
        %v903 = vadd.f32 %v288, %v902
        %v904 = vpop.f32.mrb[0].mxu0
        %905 = vmatprep.mubr.bf16.mxu0 %v688
        %906 = vmatmul.mubr.bf16.gmra.mrb[0].mxu0 %v518
        %v907 = vpop.f32.mrb[0].mxu0
        %v908 = vadd.f32 %v288, %v907
        %v909 = vpop.f32.mrb[0].mxu0
        %v910 = vpop.f32.mrb[0].mxu0
        %v911 = vadd.f32 %v288, %v910
        %v912 = vpop.f32.mrb[0].mxu0
        %913 = vmatprep.mubr.bf16.mxu0 %v691
        %914 = vmatmul.mubr.bf16.gmra.mrb[0].mxu0 %v520
        %v915 = vpop.f32.mrb[0].mxu0
        %v916 = vadd.f32 %v288, %v915
        %v917 = vpop.f32.mrb[0].mxu0
        %v918 = vpop.f32.mrb[0].mxu0
        %v919 = vadd.f32 %v288, %v918
        %v920 = vpop.f32.mrb[0].mxu0
        %921 = vmatprep.mubr.bf16.mxu0 %v694
        %922 = vmatmul.mubr.bf16.gmra.mrb[0].mxu0 %v522
        %v923 = vpop.f32.mrb[0].mxu0
        %v924 = vadd.f32 %v288, %v923
        %v925 = vpop.f32.mrb[0].mxu0
        %v926 = vpop.f32.mrb[0].mxu0
        %v927 = vadd.f32 %v288, %v926
        %v928 = vpop.f32.mrb[0].mxu0
        %929 = vmatprep.mubr.bf16.mxu0 %v697
        %930 = vmatmul.mubr.bf16.gmra.mrb[0].mxu0 %v524
        %v931 = vpop.f32.mrb[0].mxu0
        %v932 = vadd.f32 %v288, %v931
        %v933 = vpop.f32.mrb[0].mxu0
        %v934 = vpop.f32.mrb[0].mxu0
        %v935 = vadd.f32 %v288, %v934
        %v936 = vpop.f32.mrb[0].mxu0
        %937 = vmatprep.mubr.bf16.mxu0 %v700
        %938 = vmatmul.mubr.bf16.gmra.mrb[0].mxu0 %v526
        %v939 = vpop.f32.mrb[0].mxu0
        %v940 = vadd.f32 %v288, %v939
        %v941 = vpop.f32.mrb[0].mxu0
        %v942 = vpop.f32.mrb[0].mxu0
        %v943 = vadd.f32 %v288, %v942
        %v944 = vpop.f32.mrb[0].mxu0
        %945 = vmatprep.mubr.bf16.mxu0 %v703
        %946 = vmatmul.mubr.bf16.gmra.mrb[0].mxu0 %v528
        %v947 = vpop.f32.mrb[0].mxu0
        %v948 = vadd.f32 %v288, %v947
        %v949 = vpop.f32.mrb[0].mxu0
        %v950 = vpop.f32.mrb[0].mxu0
        %v951 = vadd.f32 %v288, %v950
        %v952 = vpop.f32.mrb[0].mxu0
        %953 = vmatprep.mubr.bf16.mxu0 %v706
        %954 = vmatmul.mubr.bf16.gmra.mrb[0].mxu0 %v530
        %v955 = vpop.f32.mrb[0].mxu0
        %v956 = vadd.f32 %v288, %v955
        %v957 = vpop.f32.mrb[0].mxu0
        %v958 = vpop.f32.mrb[0].mxu0
        %v959 = vadd.f32 %v288, %v958
        %v960 = vpop.f32.mrb[0].mxu0
        %961 = vmatprep.mubr.bf16.mxu0 %v709
        %962 = vmatmul.mubr.bf16.gmra.mrb[0].mxu0 %v532
        %v963 = vpop.f32.mrb[0].mxu0
        %v964 = vadd.f32 %v288, %v963
        %v965 = vpop.f32.mrb[0].mxu0
        %v966 = vpop.f32.mrb[0].mxu0
        %v967 = vadd.f32 %v288, %v966
        %v968 = vpop.f32.mrb[0].mxu0
        %969 = vmatprep.mubr.bf16.mxu0 %v712
        %970 = vmatmul.mubr.bf16.gmra.mrb[0].mxu0 %v534
        %v971 = vpop.f32.mrb[0].mxu0
        %v972 = vadd.f32 %v288, %v971
        %v973 = vpop.f32.mrb[0].mxu0
        %v974 = vpop.f32.mrb[0].mxu0
        %v975 = vadd.f32 %v288, %v974
        %v976 = vpop.f32.mrb[0].mxu0
        %977 = vmatprep.mubr.bf16.mxu0 %v715
        %978 = vmatmul.mubr.bf16.gmra.mrb[0].mxu0 %v536
        %v979 = vpop.f32.mrb[0].mxu0
        %v980 = vadd.f32 %v288, %v979
        %v981 = vpop.f32.mrb[0].mxu0
        %v982 = vpop.f32.mrb[0].mxu0
        %v983 = vadd.f32 %v288, %v982
        %v984 = vpop.f32.mrb[0].mxu0
        %985 = vmatprep.mubr.bf16.mxu0 %v718
        %986 = vmatmul.mubr.bf16.gmra.mrb[0].mxu0 %v538
        %v987 = vpop.f32.mrb[0].mxu0
        %v988 = vadd.f32 %v288, %v987
        %v989 = vpop.f32.mrb[0].mxu0
        %v990 = vpop.f32.mrb[0].mxu0
        %v991 = vadd.f32 %v288, %v990
        %v992 = vpop.f32.mrb[0].mxu0
        %993 = vmatprep.mubr.bf16.mxu0 %v721
        %994 = vmatmul.mubr.bf16.gmra.mrb[0].mxu0 %v540
        %v995 = vpop.f32.mrb[0].mxu0
        %v996 = vadd.f32 %v288, %v995
        %v997 = vpop.f32.mrb[0].mxu0
        %v998 = vpop.f32.mrb[0].mxu0
        %v999 = vadd.f32 %v288, %v998
        %v1000 = vpop.f32.mrb[0].mxu0
        %1001 = vmatprep.mubr.bf16.mxu0 %v724
        %1002 = vmatmul.mubr.bf16.gmra.mrb[0].mxu0 %v542
        %v1003 = vpop.f32.mrb[0].mxu0
        %v1004 = vadd.f32 %v288, %v1003
        %v1005 = vpop.f32.mrb[0].mxu0
        %v1006 = vpop.f32.mrb[0].mxu0
        %v1007 = vadd.f32 %v288, %v1006
        %v1008 = vpop.f32.mrb[0].mxu0
        %1009 = vmatprep.mubr.bf16.mxu0 %v727
        %1010 = vmatmul.mubr.bf16.gmra.mrb[0].mxu0 %v544
        %v1011 = vpop.f32.mrb[0].mxu0
        %v1012 = vadd.f32 %v288, %v1011
        %v1013 = vpop.f32.mrb[0].mxu0
        %v1014 = vpop.f32.mrb[0].mxu0
        %v1015 = vadd.f32 %v288, %v1014
        %v1016 = vpop.f32.mrb[0].mxu0
        %1017 = vdwg.mxu0
        %v1018 = vmax.f32 %v764, 0.0
        %v1019 = vmax.f32 %v767, 0.0
        %v1020 = vmax.f32 %v772, 0.0
        %v1021 = vmax.f32 %v775, 0.0
        %v1022 = vmax.f32 %v780, 0.0
        %v1023 = vmax.f32 %v783, 0.0
        %v1024 = vmax.f32 %v788, 0.0
        %v1025 = vmax.f32 %v791, 0.0
        %v1026 = vmax.f32 %v796, 0.0
        %v1027 = vmax.f32 %v799, 0.0
        %v1028 = vmax.f32 %v804, 0.0
        %v1029 = vmax.f32 %v807, 0.0
        %v1030 = vmax.f32 %v812, 0.0
        %v1031 = vmax.f32 %v815, 0.0
        %v1032 = vmax.f32 %v820, 0.0
        %v1033 = vmax.f32 %v823, 0.0
        %v1034 = vmax.f32 %v828, 0.0
        %v1035 = vmax.f32 %v831, 0.0
        %v1036 = vmax.f32 %v836, 0.0
        %v1037 = vmax.f32 %v839, 0.0
        %v1038 = vmax.f32 %v844, 0.0
        %v1039 = vmax.f32 %v847, 0.0
        %v1040 = vmax.f32 %v852, 0.0
        %v1041 = vmax.f32 %v855, 0.0
        %v1042 = vmax.f32 %v860, 0.0
        %v1043 = vmax.f32 %v863, 0.0
        %v1044 = vmax.f32 %v868, 0.0
        %v1045 = vmax.f32 %v871, 0.0
        %v1046 = vmax.f32 %v876, 0.0
        %v1047 = vmax.f32 %v879, 0.0
        %v1048 = vmax.f32 %v884, 0.0
        %v1049 = vmax.f32 %v887, 0.0
        %v1050 = vmax.f32 %v892, 0.0
        %v1051 = vmax.f32 %v895, 0.0
        %v1052 = vmax.f32 %v900, 0.0
        %v1053 = vmax.f32 %v903, 0.0
        %v1054 = vmax.f32 %v908, 0.0
        %v1055 = vmax.f32 %v911, 0.0
        %v1056 = vmax.f32 %v916, 0.0
        %v1057 = vmax.f32 %v919, 0.0
        %v1058 = vmax.f32 %v924, 0.0
        %v1059 = vmax.f32 %v927, 0.0
        %v1060 = vmax.f32 %v932, 0.0
        %v1061 = vmax.f32 %v935, 0.0
        %v1062 = vmax.f32 %v940, 0.0
        %v1063 = vmax.f32 %v943, 0.0
        %v1064 = vmax.f32 %v948, 0.0
        %v1065 = vmax.f32 %v951, 0.0
        %v1066 = vmax.f32 %v956, 0.0
        %v1067 = vmax.f32 %v959, 0.0
        %v1068 = vmax.f32 %v964, 0.0
        %v1069 = vmax.f32 %v967, 0.0
        %v1070 = vmax.f32 %v972, 0.0
        %v1071 = vmax.f32 %v975, 0.0
        %v1072 = vmax.f32 %v980, 0.0
        %v1073 = vmax.f32 %v983, 0.0
        %v1074 = vmax.f32 %v988, 0.0
        %v1075 = vmax.f32 %v991, 0.0
        %v1076 = vmax.f32 %v996, 0.0
        %v1077 = vmax.f32 %v999, 0.0
        %v1078 = vmax.f32 %v1004, 0.0
        %v1079 = vmax.f32 %v1007, 0.0
        %v1080 = vmax.f32 %v1012, 0.0
        %v1081 = vmax.f32 %v1015, 0.0
        %v1082 = vpack.c.bf16 %v1019, %v1018
        %v1083 = vpack.c.bf16 %v1021, %v1020
        %v1084 = vpack.c.bf16 %v1023, %v1022
        %v1085 = vpack.c.bf16 %v1025, %v1024
        %v1086 = vpack.c.bf16 %v1027, %v1026
        %v1087 = vpack.c.bf16 %v1029, %v1028
        %v1088 = vpack.c.bf16 %v1031, %v1030
        %v1089 = vpack.c.bf16 %v1033, %v1032
        %v1090 = vpack.c.bf16 %v1035, %v1034
        %v1091 = vpack.c.bf16 %v1037, %v1036
        %v1092 = vpack.c.bf16 %v1039, %v1038
        %v1093 = vpack.c.bf16 %v1041, %v1040
        %v1094 = vpack.c.bf16 %v1043, %v1042
        %v1095 = vpack.c.bf16 %v1045, %v1044
        %v1096 = vpack.c.bf16 %v1047, %v1046
        %v1097 = vpack.c.bf16 %v1049, %v1048
        %v1098 = vpack.c.bf16 %v1051, %v1050
        %v1099 = vpack.c.bf16 %v1053, %v1052
        %v1100 = vpack.c.bf16 %v1055, %v1054
        %v1101 = vpack.c.bf16 %v1057, %v1056
        %v1102 = vpack.c.bf16 %v1059, %v1058
        %v1103 = vpack.c.bf16 %v1061, %v1060
        %v1104 = vpack.c.bf16 %v1063, %v1062
        %v1105 = vpack.c.bf16 %v1065, %v1064
        %v1106 = vpack.c.bf16 %v1067, %v1066
        %v1107 = vpack.c.bf16 %v1069, %v1068
        %v1108 = vpack.c.bf16 %v1071, %v1070
        %v1109 = vpack.c.bf16 %v1073, %v1072
        %v1110 = vpack.c.bf16 %v1075, %v1074
        %v1111 = vpack.c.bf16 %v1077, %v1076
        %v1112 = vpack.c.bf16 %v1079, %v1078
        %v1113 = vpack.c.bf16 %v1081, %v1080
        %v1146 = vunpack.c.l.b16 %v1082
        %v1147 = vunpack.c.h.b16 %v1082
        %v1148 = vunpack.c.l.b16 %v1083
        %v1149 = vunpack.c.h.b16 %v1083
        %v1150 = vunpack.c.l.b16 %v1084
        %v1151 = vunpack.c.h.b16 %v1084
        %v1152 = vunpack.c.l.b16 %v1085
        %v1153 = vunpack.c.h.b16 %v1085
        %v1154 = vunpack.c.l.b16 %v1086
        %v1155 = vunpack.c.h.b16 %v1086
        %v1156 = vunpack.c.l.b16 %v1087
        %v1157 = vunpack.c.h.b16 %v1087
        %v1158 = vunpack.c.l.b16 %v1088
        %v1159 = vunpack.c.h.b16 %v1088
        %v1160 = vunpack.c.l.b16 %v1089
        %v1161 = vunpack.c.h.b16 %v1089
        %v1162 = vunpack.c.l.b16 %v1090
        %v1163 = vunpack.c.h.b16 %v1090
        %v1164 = vunpack.c.l.b16 %v1091
        %v1165 = vunpack.c.h.b16 %v1091
        %v1166 = vunpack.c.l.b16 %v1092
        %v1167 = vunpack.c.h.b16 %v1092
        %v1168 = vunpack.c.l.b16 %v1093
        %v1169 = vunpack.c.h.b16 %v1093
        %v1170 = vunpack.c.l.b16 %v1094
        %v1171 = vunpack.c.h.b16 %v1094
        %v1172 = vunpack.c.l.b16 %v1095
        %v1173 = vunpack.c.h.b16 %v1095
        %v1174 = vunpack.c.l.b16 %v1096
        %v1175 = vunpack.c.h.b16 %v1096
        %v1176 = vunpack.c.l.b16 %v1097
        %v1177 = vunpack.c.h.b16 %v1097
        %v1178 = vunpack.c.l.b16 %v1098
        %v1179 = vunpack.c.h.b16 %v1098
        %v1180 = vunpack.c.l.b16 %v1099
        %v1181 = vunpack.c.h.b16 %v1099
        %v1182 = vunpack.c.l.b16 %v1100
        %v1183 = vunpack.c.h.b16 %v1100
        %v1184 = vunpack.c.l.b16 %v1101
        %v1185 = vunpack.c.h.b16 %v1101
        %v1186 = vunpack.c.l.b16 %v1102
        %v1187 = vunpack.c.h.b16 %v1102
        %v1188 = vunpack.c.l.b16 %v1103
        %v1189 = vunpack.c.h.b16 %v1103
        %v1190 = vunpack.c.l.b16 %v1104
        %v1191 = vunpack.c.h.b16 %v1104
        %v1192 = vunpack.c.l.b16 %v1105
        %v1193 = vunpack.c.h.b16 %v1105
        %v1194 = vunpack.c.l.b16 %v1106
        %v1195 = vunpack.c.h.b16 %v1106
        %v1196 = vunpack.c.l.b16 %v1107
        %v1197 = vunpack.c.h.b16 %v1107
        %v1198 = vunpack.c.l.b16 %v1108
        %v1199 = vunpack.c.h.b16 %v1108
        %v1200 = vunpack.c.l.b16 %v1109
        %v1201 = vunpack.c.h.b16 %v1109
        %v1202 = vunpack.c.l.b16 %v1110
        %v1203 = vunpack.c.h.b16 %v1110
        %v1204 = vunpack.c.l.b16 %v1111
        %v1205 = vunpack.c.h.b16 %v1111
        %v1206 = vunpack.c.l.b16 %v1112
        %v1207 = vunpack.c.h.b16 %v1112
        %v1208 = vunpack.c.l.b16 %v1113
        %v1209 = vunpack.c.h.b16 %v1113
        %v1210 = vpack.c.b16 %v1146, %v1146
        %v1211 = vpack.c.b16 %v1147, %v1147
        %v1212 = vpack.c.b16 %v1148, %v1148
        %v1213 = vpack.c.b16 %v1149, %v1149
        %v1214 = vpack.c.b16 %v1150, %v1150
        %v1215 = vpack.c.b16 %v1151, %v1151
        %v1216 = vpack.c.b16 %v1152, %v1152
        %v1217 = vpack.c.b16 %v1153, %v1153
        %v1218 = vpack.c.b16 %v1154, %v1154
        %v1219 = vpack.c.b16 %v1155, %v1155
        %v1220 = vpack.c.b16 %v1156, %v1156
        %v1221 = vpack.c.b16 %v1157, %v1157
        %v1222 = vpack.c.b16 %v1158, %v1158
        %v1223 = vpack.c.b16 %v1159, %v1159
        %v1224 = vpack.c.b16 %v1160, %v1160
        %v1225 = vpack.c.b16 %v1161, %v1161
        %v1226 = vpack.c.b16 %v1162, %v1162
        %v1227 = vpack.c.b16 %v1163, %v1163
        %v1228 = vpack.c.b16 %v1164, %v1164
        %v1229 = vpack.c.b16 %v1165, %v1165
        %v1230 = vpack.c.b16 %v1166, %v1166
        %v1231 = vpack.c.b16 %v1167, %v1167
        %v1232 = vpack.c.b16 %v1168, %v1168
        %v1233 = vpack.c.b16 %v1169, %v1169
        %v1234 = vpack.c.b16 %v1170, %v1170
        %v1235 = vpack.c.b16 %v1171, %v1171
        %v1236 = vpack.c.b16 %v1172, %v1172
        %v1237 = vpack.c.b16 %v1173, %v1173
        %v1238 = vpack.c.b16 %v1174, %v1174
        %v1239 = vpack.c.b16 %v1175, %v1175
        %v1240 = vpack.c.b16 %v1176, %v1176
        %v1241 = vpack.c.b16 %v1177, %v1177
        %v1242 = vpack.c.b16 %v1178, %v1178
        %v1243 = vpack.c.b16 %v1179, %v1179
        %v1244 = vpack.c.b16 %v1180, %v1180
        %v1245 = vpack.c.b16 %v1181, %v1181
        %v1246 = vpack.c.b16 %v1182, %v1182
        %v1247 = vpack.c.b16 %v1183, %v1183
        %v1248 = vpack.c.b16 %v1184, %v1184
        %v1249 = vpack.c.b16 %v1185, %v1185
        %v1250 = vpack.c.b16 %v1186, %v1186
        %v1251 = vpack.c.b16 %v1187, %v1187
        %v1252 = vpack.c.b16 %v1188, %v1188
        %v1253 = vpack.c.b16 %v1189, %v1189
        %v1254 = vpack.c.b16 %v1190, %v1190
        %v1255 = vpack.c.b16 %v1191, %v1191
        %v1256 = vpack.c.b16 %v1192, %v1192
        %v1257 = vpack.c.b16 %v1193, %v1193
        %v1258 = vpack.c.b16 %v1194, %v1194
        %v1259 = vpack.c.b16 %v1195, %v1195
        %v1260 = vpack.c.b16 %v1196, %v1196
        %v1261 = vpack.c.b16 %v1197, %v1197
        %v1262 = vpack.c.b16 %v1198, %v1198
        %v1263 = vpack.c.b16 %v1199, %v1199
        %v1264 = vpack.c.b16 %v1200, %v1200
        %v1265 = vpack.c.b16 %v1201, %v1201
        %v1266 = vpack.c.b16 %v1202, %v1202
        %v1267 = vpack.c.b16 %v1203, %v1203
        %v1268 = vpack.c.b16 %v1204, %v1204
        %v1269 = vpack.c.b16 %v1205, %v1205
        %v1270 = vpack.c.b16 %v1206, %v1206
        %v1271 = vpack.c.b16 %v1207, %v1207
        %v1272 = vpack.c.b16 %v1208, %v1208
        %v1273 = vpack.c.b16 %v1209, %v1209
        %vm1338 = vcmask 125952
        %1339 = vst.msk [vmem:[%s177] sm:$0xf] %vm1338, %v1210
        %1340 = vst.msk [vmem:[%s177 + $0x4] sm:$0xf] %vm1338, %v1211
        %1341 = vst.msk [vmem:[%s177 + $0x8] sm:$0xf] %vm1338, %v1212
        %1342 = vst.msk [vmem:[%s177 + $0xc] sm:$0xf] %vm1338, %v1213
        %1343 = vst.msk [vmem:[%s177 + $0x10] sm:$0xf] %vm1338, %v1214
        %1344 = vst.msk [vmem:[%s177 + $0x14] sm:$0xf] %vm1338, %v1215
        %1345 = vst.msk [vmem:[%s177 + $0x18] sm:$0xf] %vm1338, %v1216
        %1346 = vst.msk [vmem:[%s177 + $0x1c] sm:$0xf] %vm1338, %v1217
        %1347 = vst.msk [vmem:[%s177 + $0x20] sm:$0xf] %vm1338, %v1218
        %1348 = vst.msk [vmem:[%s177 + $0x24] sm:$0xf] %vm1338, %v1219
        %1349 = vst.msk [vmem:[%s177 + $0x28] sm:$0xf] %vm1338, %v1220
        %1350 = vst.msk [vmem:[%s177 + $0x2c] sm:$0xf] %vm1338, %v1221
        %1351 = vst.msk [vmem:[%s177 + $0x30] sm:$0xf] %vm1338, %v1222
        %1352 = vst.msk [vmem:[%s177 + $0x34] sm:$0xf] %vm1338, %v1223
        %1353 = vst.msk [vmem:[%s177 + $0x38] sm:$0xf] %vm1338, %v1224
        %1354 = vst.msk [vmem:[%s177 + $0x3c] sm:$0xf] %vm1338, %v1225
        %1355 = vst.msk [vmem:[%s177 + $0x40] sm:$0xf] %vm1338, %v1226
        %1356 = vst.msk [vmem:[%s177 + $0x44] sm:$0xf] %vm1338, %v1227
        %1357 = vst.msk [vmem:[%s177 + $0x48] sm:$0xf] %vm1338, %v1228
        %1358 = vst.msk [vmem:[%s177 + $0x4c] sm:$0xf] %vm1338, %v1229
        %1359 = vst.msk [vmem:[%s177 + $0x50] sm:$0xf] %vm1338, %v1230
        %1360 = vst.msk [vmem:[%s177 + $0x54] sm:$0xf] %vm1338, %v1231
        %1361 = vst.msk [vmem:[%s177 + $0x58] sm:$0xf] %vm1338, %v1232
        %1362 = vst.msk [vmem:[%s177 + $0x5c] sm:$0xf] %vm1338, %v1233
        %1363 = vst.msk [vmem:[%s177 + $0x60] sm:$0xf] %vm1338, %v1234
        %1364 = vst.msk [vmem:[%s177 + $0x64] sm:$0xf] %vm1338, %v1235
        %1365 = vst.msk [vmem:[%s177 + $0x68] sm:$0xf] %vm1338, %v1236
        %1366 = vst.msk [vmem:[%s177 + $0x6c] sm:$0xf] %vm1338, %v1237
        %1367 = vst.msk [vmem:[%s177 + $0x70] sm:$0xf] %vm1338, %v1238
        %1368 = vst.msk [vmem:[%s177 + $0x74] sm:$0xf] %vm1338, %v1239
        %1369 = vst.msk [vmem:[%s177 + $0x78] sm:$0xf] %vm1338, %v1240
        %1370 = vst.msk [vmem:[%s177 + $0x7c] sm:$0xf] %vm1338, %v1241
        %1371 = vst.msk [vmem:[%s177 + $0x80] sm:$0xf] %vm1338, %v1242
        %1372 = vst.msk [vmem:[%s177 + $0x84] sm:$0xf] %vm1338, %v1243
        %1373 = vst.msk [vmem:[%s177 + $0x88] sm:$0xf] %vm1338, %v1244
        %1374 = vst.msk [vmem:[%s177 + $0x8c] sm:$0xf] %vm1338, %v1245
        %1375 = vst.msk [vmem:[%s177 + $0x90] sm:$0xf] %vm1338, %v1246
        %1376 = vst.msk [vmem:[%s177 + $0x94] sm:$0xf] %vm1338, %v1247
        %1377 = vst.msk [vmem:[%s177 + $0x98] sm:$0xf] %vm1338, %v1248
        %1378 = vst.msk [vmem:[%s177 + $0x9c] sm:$0xf] %vm1338, %v1249
        %1379 = vst.msk [vmem:[%s177 + $0xa0] sm:$0xf] %vm1338, %v1250
        %1380 = vst.msk [vmem:[%s177 + $0xa4] sm:$0xf] %vm1338, %v1251
        %1381 = vst.msk [vmem:[%s177 + $0xa8] sm:$0xf] %vm1338, %v1252
        %1382 = vst.msk [vmem:[%s177 + $0xac] sm:$0xf] %vm1338, %v1253
        %1383 = vst.msk [vmem:[%s177 + $0xb0] sm:$0xf] %vm1338, %v1254
        %1384 = vst.msk [vmem:[%s177 + $0xb4] sm:$0xf] %vm1338, %v1255
        %1385 = vst.msk [vmem:[%s177 + $0xb8] sm:$0xf] %vm1338, %v1256
        %1386 = vst.msk [vmem:[%s177 + $0xbc] sm:$0xf] %vm1338, %v1257
        %1387 = vst.msk [vmem:[%s177 + $0xc0] sm:$0xf] %vm1338, %v1258
        %1388 = vst.msk [vmem:[%s177 + $0xc4] sm:$0xf] %vm1338, %v1259
        %1389 = vst.msk [vmem:[%s177 + $0xc8] sm:$0xf] %vm1338, %v1260
        %1390 = vst.msk [vmem:[%s177 + $0xcc] sm:$0xf] %vm1338, %v1261
        %1391 = vst.msk [vmem:[%s177 + $0xd0] sm:$0xf] %vm1338, %v1262
        %1392 = vst.msk [vmem:[%s177 + $0xd4] sm:$0xf] %vm1338, %v1263
        %1393 = vst.msk [vmem:[%s177 + $0xd8] sm:$0xf] %vm1338, %v1264
        %1394 = vst.msk [vmem:[%s177 + $0xdc] sm:$0xf] %vm1338, %v1265
        %1395 = vst.msk [vmem:[%s177 + $0xe0] sm:$0xf] %vm1338, %v1266
        %1396 = vst.msk [vmem:[%s177 + $0xe4] sm:$0xf] %vm1338, %v1267
        %1397 = vst.msk [vmem:[%s177 + $0xe8] sm:$0xf] %vm1338, %v1268
        %1398 = vst.msk [vmem:[%s177 + $0xec] sm:$0xf] %vm1338, %v1269
        %1399 = vst.msk [vmem:[%s177 + $0xf0] sm:$0xf] %vm1338, %v1270
        %1400 = vst.msk [vmem:[%s177 + $0xf4] sm:$0xf] %vm1338, %v1271
        %1401 = vst.msk [vmem:[%s177 + $0xf8] sm:$0xf] %vm1338, %v1272
        %1402 = vst.msk [vmem:[%s177 + $0xfc] sm:$0xf] %vm1338, %v1273
        %s1403 = sand.u32 %s90, 1
        %s1404 = sand.u32 %s90, 1
        %s1405 = smul.addr %s1404, 256
        %s1406 = scalar_lea.vmem [#allocation2], %s1405
        // Predicated region
        $region33: #{net_forward.14} parent=31 // pred_check
          %p1407 = pneg %p100
        $region34: #{net_forward.14} parent=31 // pred_check_branch
          %1409 = sbr.rel (%p1407) target = $region36
        $region35: #{net_forward.14} parent=31 // pred_region
          %s1410 = smul.u32 64, %s14
          %s1411 = ssub.s32 400, %s1410
          %p1412 = scmp.lt.s32.totalorder %s1411, 64
          %s1413 = scalar_select %p1412, %s1411, 64
          %s1414 = smul.u32 64, %s1413
          %p1415 = scmp.ne.s32.totalorder 0, %s1414
          %s1416 = smul.addr %s1410, 4
          %s1417 = scalar_lea.vmem %s3, %s1416
          // Predicated region
          $region37: #{net_forward.14} parent=35 // pred_check
            %p1418 = pneg %p1415
          $region38: #{net_forward.14} parent=35 // pred_check_branch
            %1420 = sbr.rel (%p1418) target = $region40
          $region39: #{net_forward.14} parent=35 // pred_region
            // Predicated region
            $region41: #{net_forward.14} parent=39 // pred_check
              _
            $region42: #{net_forward.14} parent=39 // pred_check_branch
              %1422 = sbr.rel target = $region44
            $region43: #{net_forward.14} parent=39 // pred_region
              // Predicated region
              $region63: #{net_forward.14} parent=43 // pred_check
                _
              $region64: #{net_forward.14} parent=43 // pred_check_branch
                %1597 = sbr.rel (0) target = $region66
              $region65: #{net_forward.14} parent=43 // pred_region
                %s1599 = sshrl.u32 %s1413, 6
                // While loop
                $region67: #{net_forward.14} parent=65 // loop_pre_header
                  _
                $region68: #{net_forward.14} parent=65 // loop_header
                  %s1601 = sphi 0, %s1603
                  %p1602 = scmp.ge.s32.totalorder %s1601, %s1599
                  %s1606 = sphi 0, %s1739
                  %s1607 = sphi %s1406, %s1742
                  %s1608 = sphi %s1417, %s1743
                $region69: #{net_forward.14} parent=65 // loop_header_branch
                  %1605 = sbr.rel (%p1602) target = $region73
                $region70: #{net_forward.14} parent=65 // loop_body
                  %v1609 = vld [vmem:[%s1607] sm:$0xf]
                  %1610 = vst [vmem:[%s1608] sm:$0xf] %v1609
                  %v1611 = vld [vmem:[%s1607 + $0x4] sm:$0xf]
                  %1612 = vst [vmem:[%s1608 + $0x4] sm:$0xf] %v1611
                  %v1613 = vld [vmem:[%s1607 + $0x8] sm:$0xf]
                  %1614 = vst [vmem:[%s1608 + $0x8] sm:$0xf] %v1613
                  %v1615 = vld [vmem:[%s1607 + $0xc] sm:$0xf]
                  %1616 = vst [vmem:[%s1608 + $0xc] sm:$0xf] %v1615
                  %v1617 = vld [vmem:[%s1607 + $0x10] sm:$0xf]
                  %1618 = vst [vmem:[%s1608 + $0x10] sm:$0xf] %v1617
                  %v1619 = vld [vmem:[%s1607 + $0x14] sm:$0xf]
                  %1620 = vst [vmem:[%s1608 + $0x14] sm:$0xf] %v1619
                  %v1621 = vld [vmem:[%s1607 + $0x18] sm:$0xf]
                  %1622 = vst [vmem:[%s1608 + $0x18] sm:$0xf] %v1621
                  %v1623 = vld [vmem:[%s1607 + $0x1c] sm:$0xf]
                  %1624 = vst [vmem:[%s1608 + $0x1c] sm:$0xf] %v1623
                  %v1625 = vld [vmem:[%s1607 + $0x20] sm:$0xf]
                  %1626 = vst [vmem:[%s1608 + $0x20] sm:$0xf] %v1625
                  %v1627 = vld [vmem:[%s1607 + $0x24] sm:$0xf]
                  %1628 = vst [vmem:[%s1608 + $0x24] sm:$0xf] %v1627
                  %v1629 = vld [vmem:[%s1607 + $0x28] sm:$0xf]
                  %1630 = vst [vmem:[%s1608 + $0x28] sm:$0xf] %v1629
                  %v1631 = vld [vmem:[%s1607 + $0x2c] sm:$0xf]
                  %1632 = vst [vmem:[%s1608 + $0x2c] sm:$0xf] %v1631
                  %v1633 = vld [vmem:[%s1607 + $0x30] sm:$0xf]
                  %1634 = vst [vmem:[%s1608 + $0x30] sm:$0xf] %v1633
                  %v1635 = vld [vmem:[%s1607 + $0x34] sm:$0xf]
                  %1636 = vst [vmem:[%s1608 + $0x34] sm:$0xf] %v1635
                  %v1637 = vld [vmem:[%s1607 + $0x38] sm:$0xf]
                  %1638 = vst [vmem:[%s1608 + $0x38] sm:$0xf] %v1637
                  %v1639 = vld [vmem:[%s1607 + $0x3c] sm:$0xf]
                  %1640 = vst [vmem:[%s1608 + $0x3c] sm:$0xf] %v1639
                  %v1641 = vld [vmem:[%s1607 + $0x40] sm:$0xf]
                  %1642 = vst [vmem:[%s1608 + $0x40] sm:$0xf] %v1641
                  %v1643 = vld [vmem:[%s1607 + $0x44] sm:$0xf]
                  %1644 = vst [vmem:[%s1608 + $0x44] sm:$0xf] %v1643
                  %v1645 = vld [vmem:[%s1607 + $0x48] sm:$0xf]
                  %1646 = vst [vmem:[%s1608 + $0x48] sm:$0xf] %v1645
                  %v1647 = vld [vmem:[%s1607 + $0x4c] sm:$0xf]
                  %1648 = vst [vmem:[%s1608 + $0x4c] sm:$0xf] %v1647
                  %v1649 = vld [vmem:[%s1607 + $0x50] sm:$0xf]
                  %1650 = vst [vmem:[%s1608 + $0x50] sm:$0xf] %v1649
                  %v1651 = vld [vmem:[%s1607 + $0x54] sm:$0xf]
                  %1652 = vst [vmem:[%s1608 + $0x54] sm:$0xf] %v1651
                  %v1653 = vld [vmem:[%s1607 + $0x58] sm:$0xf]
                  %1654 = vst [vmem:[%s1608 + $0x58] sm:$0xf] %v1653
                  %v1655 = vld [vmem:[%s1607 + $0x5c] sm:$0xf]
                  %1656 = vst [vmem:[%s1608 + $0x5c] sm:$0xf] %v1655
                  %v1657 = vld [vmem:[%s1607 + $0x60] sm:$0xf]
                  %1658 = vst [vmem:[%s1608 + $0x60] sm:$0xf] %v1657
                  %v1659 = vld [vmem:[%s1607 + $0x64] sm:$0xf]
                  %1660 = vst [vmem:[%s1608 + $0x64] sm:$0xf] %v1659
                  %v1661 = vld [vmem:[%s1607 + $0x68] sm:$0xf]
                  %1662 = vst [vmem:[%s1608 + $0x68] sm:$0xf] %v1661
                  %v1663 = vld [vmem:[%s1607 + $0x6c] sm:$0xf]
                  %1664 = vst [vmem:[%s1608 + $0x6c] sm:$0xf] %v1663
                  %v1665 = vld [vmem:[%s1607 + $0x70] sm:$0xf]
                  %1666 = vst [vmem:[%s1608 + $0x70] sm:$0xf] %v1665
                  %v1667 = vld [vmem:[%s1607 + $0x74] sm:$0xf]
                  %1668 = vst [vmem:[%s1608 + $0x74] sm:$0xf] %v1667
                  %v1669 = vld [vmem:[%s1607 + $0x78] sm:$0xf]
                  %1670 = vst [vmem:[%s1608 + $0x78] sm:$0xf] %v1669
                  %v1671 = vld [vmem:[%s1607 + $0x7c] sm:$0xf]
                  %1672 = vst [vmem:[%s1608 + $0x7c] sm:$0xf] %v1671
                  %v1673 = vld [vmem:[%s1607 + $0x80] sm:$0xf]
                  %1674 = vst [vmem:[%s1608 + $0x80] sm:$0xf] %v1673
                  %v1675 = vld [vmem:[%s1607 + $0x84] sm:$0xf]
                  %1676 = vst [vmem:[%s1608 + $0x84] sm:$0xf] %v1675
                  %v1677 = vld [vmem:[%s1607 + $0x88] sm:$0xf]
                  %1678 = vst [vmem:[%s1608 + $0x88] sm:$0xf] %v1677
                  %v1679 = vld [vmem:[%s1607 + $0x8c] sm:$0xf]
                  %1680 = vst [vmem:[%s1608 + $0x8c] sm:$0xf] %v1679
                  %v1681 = vld [vmem:[%s1607 + $0x90] sm:$0xf]
                  %1682 = vst [vmem:[%s1608 + $0x90] sm:$0xf] %v1681
                  %v1683 = vld [vmem:[%s1607 + $0x94] sm:$0xf]
                  %1684 = vst [vmem:[%s1608 + $0x94] sm:$0xf] %v1683
                  %v1685 = vld [vmem:[%s1607 + $0x98] sm:$0xf]
                  %1686 = vst [vmem:[%s1608 + $0x98] sm:$0xf] %v1685
                  %v1687 = vld [vmem:[%s1607 + $0x9c] sm:$0xf]
                  %1688 = vst [vmem:[%s1608 + $0x9c] sm:$0xf] %v1687
                  %v1689 = vld [vmem:[%s1607 + $0xa0] sm:$0xf]
                  %1690 = vst [vmem:[%s1608 + $0xa0] sm:$0xf] %v1689
                  %v1691 = vld [vmem:[%s1607 + $0xa4] sm:$0xf]
                  %1692 = vst [vmem:[%s1608 + $0xa4] sm:$0xf] %v1691
                  %v1693 = vld [vmem:[%s1607 + $0xa8] sm:$0xf]
                  %1694 = vst [vmem:[%s1608 + $0xa8] sm:$0xf] %v1693
                  %v1695 = vld [vmem:[%s1607 + $0xac] sm:$0xf]
                  %1696 = vst [vmem:[%s1608 + $0xac] sm:$0xf] %v1695
                  %v1697 = vld [vmem:[%s1607 + $0xb0] sm:$0xf]
                  %1698 = vst [vmem:[%s1608 + $0xb0] sm:$0xf] %v1697
                  %v1699 = vld [vmem:[%s1607 + $0xb4] sm:$0xf]
                  %1700 = vst [vmem:[%s1608 + $0xb4] sm:$0xf] %v1699
                  %v1701 = vld [vmem:[%s1607 + $0xb8] sm:$0xf]
                  %1702 = vst [vmem:[%s1608 + $0xb8] sm:$0xf] %v1701
                  %v1703 = vld [vmem:[%s1607 + $0xbc] sm:$0xf]
                  %1704 = vst [vmem:[%s1608 + $0xbc] sm:$0xf] %v1703
                  %v1705 = vld [vmem:[%s1607 + $0xc0] sm:$0xf]
                  %1706 = vst [vmem:[%s1608 + $0xc0] sm:$0xf] %v1705
                  %v1707 = vld [vmem:[%s1607 + $0xc4] sm:$0xf]
                  %1708 = vst [vmem:[%s1608 + $0xc4] sm:$0xf] %v1707
                  %v1709 = vld [vmem:[%s1607 + $0xc8] sm:$0xf]
                  %1710 = vst [vmem:[%s1608 + $0xc8] sm:$0xf] %v1709
                  %v1711 = vld [vmem:[%s1607 + $0xcc] sm:$0xf]
                  %1712 = vst [vmem:[%s1608 + $0xcc] sm:$0xf] %v1711
                  %v1713 = vld [vmem:[%s1607 + $0xd0] sm:$0xf]
                  %1714 = vst [vmem:[%s1608 + $0xd0] sm:$0xf] %v1713
                  %v1715 = vld [vmem:[%s1607 + $0xd4] sm:$0xf]
                  %1716 = vst [vmem:[%s1608 + $0xd4] sm:$0xf] %v1715
                  %v1717 = vld [vmem:[%s1607 + $0xd8] sm:$0xf]
                  %1718 = vst [vmem:[%s1608 + $0xd8] sm:$0xf] %v1717
                  %v1719 = vld [vmem:[%s1607 + $0xdc] sm:$0xf]
                  %1720 = vst [vmem:[%s1608 + $0xdc] sm:$0xf] %v1719
                  %v1721 = vld [vmem:[%s1607 + $0xe0] sm:$0xf]
                  %1722 = vst [vmem:[%s1608 + $0xe0] sm:$0xf] %v1721
                  %v1723 = vld [vmem:[%s1607 + $0xe4] sm:$0xf]
                  %1724 = vst [vmem:[%s1608 + $0xe4] sm:$0xf] %v1723
                  %v1725 = vld [vmem:[%s1607 + $0xe8] sm:$0xf]
                  %1726 = vst [vmem:[%s1608 + $0xe8] sm:$0xf] %v1725
                  %v1727 = vld [vmem:[%s1607 + $0xec] sm:$0xf]
                  %1728 = vst [vmem:[%s1608 + $0xec] sm:$0xf] %v1727
                  %v1729 = vld [vmem:[%s1607 + $0xf0] sm:$0xf]
                  %1730 = vst [vmem:[%s1608 + $0xf0] sm:$0xf] %v1729
                  %v1731 = vld [vmem:[%s1607 + $0xf4] sm:$0xf]
                  %1732 = vst [vmem:[%s1608 + $0xf4] sm:$0xf] %v1731
                  %v1733 = vld [vmem:[%s1607 + $0xf8] sm:$0xf]
                  %1734 = vst [vmem:[%s1608 + $0xf8] sm:$0xf] %v1733
                  %v1735 = vld [vmem:[%s1607 + $0xfc] sm:$0xf]
                  %1736 = vst [vmem:[%s1608 + $0xfc] sm:$0xf] %v1735
                  %s1737 = sadd.s32 1, %s1606
                  %p1738 = scmp.ge.s32.totalorder %s1737, %s1599
                  %s1739 = scalar_select %p1738, 0, %s1737
                  %s1740 = smul.u32 %s1739, 256
                  %s1741 = smul.u32 %s1739, 256
                  %s1742 = scalar_lea.vmem %s1406, %s1740 [#allocation2]
                  %s1743 = scalar_lea.vmem %s1417, %s1741
                $region71: #{net_forward.14} parent=65 // loop_footer
                  %s1603 = sadd.s32 %s1601, 1
                $region72: #{net_forward.14} parent=65 // loop_footer_branch
                  %1600 = sbr.rel target = $region68
                $region73: #{net_forward.14} parent=65 // loop_exit
                  _
                %s1744 = sshrl.u32 %s1413, 6
                %s1745 = sand.u32 %s1413, 63
                %s1746 = smul.u32 %s1744, 64
                %s1747 = smul.u32 4, %s1746
                %s1748 = scalar_lea.vmem %s1406, %s1747 [#allocation2]
                %s1749 = smul.u32 4, %s1746
                %s1750 = scalar_lea.vmem %s1417, %s1749
                // While loop
                $region74: #{net_forward.14} parent=65 // loop_pre_header
                  _
                $region75: #{net_forward.14} parent=65 // loop_header
                  %s1752 = sphi 0, %s1754
                  %p1753 = scmp.ge.s32.totalorder %s1752, %s1745
                  %s1757 = sphi 0, %s1764
                  %s1758 = sphi %s1748, %s1767
                  %s1759 = sphi %s1750, %s1768
                $region76: #{net_forward.14} parent=65 // loop_header_branch
                  %1756 = sbr.rel (%p1753) target = $region80
                $region77: #{net_forward.14} parent=65 // loop_body
                  %v1760 = vld [vmem:[%s1758] sm:$0xf]
                  %1761 = vst [vmem:[%s1759] sm:$0xf] %v1760
                  %s1762 = sadd.s32 1, %s1757
                  %p1763 = scmp.ge.s32.totalorder %s1762, %s1745
                  %s1764 = scalar_select %p1763, 0, %s1762
                  %s1765 = smul.u32 %s1764, 4
                  %s1766 = smul.u32 %s1764, 4
                  %s1767 = scalar_lea.vmem %s1748, %s1765 [#allocation2]
                  %s1768 = scalar_lea.vmem %s1750, %s1766
                $region78: #{net_forward.14} parent=65 // loop_footer
                  %s1754 = sadd.s32 %s1752, 1
                $region79: #{net_forward.14} parent=65 // loop_footer_branch
                  %1751 = sbr.rel target = $region75
                $region80: #{net_forward.14} parent=65 // loop_exit
                  _
              $region66: #{net_forward.14} parent=43 // pred_fallthru
                _
            $region44: #{net_forward.14} parent=39 // pred_fallthru
              _
            // Predicated region
            $region45: #{net_forward.14} parent=39 // pred_check
              _
            $region46: #{net_forward.14} parent=39 // pred_check_branch
              %1424 = sbr.rel (0) target = $region48
            $region47: #{net_forward.14} parent=39 // pred_region
              %s1426 = sshrl.u32 %s1413, 6
              // While loop
              $region49: #{net_forward.14} parent=47 // loop_pre_header
                _
              $region50: #{net_forward.14} parent=47 // loop_header
                %s1428 = sphi 0, %s1430
                %p1429 = scmp.ge.s32.totalorder %s1428, %s1426
                %s1433 = sphi 0, %s1566
                %s1434 = sphi %s1406, %s1569
                %s1435 = sphi %s1417, %s1570
              $region51: #{net_forward.14} parent=47 // loop_header_branch
                %1432 = sbr.rel (%p1429) target = $region55
              $region52: #{net_forward.14} parent=47 // loop_body
                %v1436 = vld [vmem:[%s1434] sm:$0xf]
                %1437 = vst [vmem:[%s1435] sm:$0xf] %v1436
                %v1438 = vld [vmem:[%s1434 + $0x4] sm:$0xf]
                %1439 = vst [vmem:[%s1435 + $0x4] sm:$0xf] %v1438
                %v1440 = vld [vmem:[%s1434 + $0x8] sm:$0xf]
                %1441 = vst [vmem:[%s1435 + $0x8] sm:$0xf] %v1440
                %v1442 = vld [vmem:[%s1434 + $0xc] sm:$0xf]
                %1443 = vst [vmem:[%s1435 + $0xc] sm:$0xf] %v1442
                %v1444 = vld [vmem:[%s1434 + $0x10] sm:$0xf]
                %1445 = vst [vmem:[%s1435 + $0x10] sm:$0xf] %v1444
                %v1446 = vld [vmem:[%s1434 + $0x14] sm:$0xf]
                %1447 = vst [vmem:[%s1435 + $0x14] sm:$0xf] %v1446
                %v1448 = vld [vmem:[%s1434 + $0x18] sm:$0xf]
                %1449 = vst [vmem:[%s1435 + $0x18] sm:$0xf] %v1448
                %v1450 = vld [vmem:[%s1434 + $0x1c] sm:$0xf]
                %1451 = vst [vmem:[%s1435 + $0x1c] sm:$0xf] %v1450
                %v1452 = vld [vmem:[%s1434 + $0x20] sm:$0xf]
                %1453 = vst [vmem:[%s1435 + $0x20] sm:$0xf] %v1452
                %v1454 = vld [vmem:[%s1434 + $0x24] sm:$0xf]
                %1455 = vst [vmem:[%s1435 + $0x24] sm:$0xf] %v1454
                %v1456 = vld [vmem:[%s1434 + $0x28] sm:$0xf]
                %1457 = vst [vmem:[%s1435 + $0x28] sm:$0xf] %v1456
                %v1458 = vld [vmem:[%s1434 + $0x2c] sm:$0xf]
                %1459 = vst [vmem:[%s1435 + $0x2c] sm:$0xf] %v1458
                %v1460 = vld [vmem:[%s1434 + $0x30] sm:$0xf]
                %1461 = vst [vmem:[%s1435 + $0x30] sm:$0xf] %v1460
                %v1462 = vld [vmem:[%s1434 + $0x34] sm:$0xf]
                %1463 = vst [vmem:[%s1435 + $0x34] sm:$0xf] %v1462
                %v1464 = vld [vmem:[%s1434 + $0x38] sm:$0xf]
                %1465 = vst [vmem:[%s1435 + $0x38] sm:$0xf] %v1464
                %v1466 = vld [vmem:[%s1434 + $0x3c] sm:$0xf]
                %1467 = vst [vmem:[%s1435 + $0x3c] sm:$0xf] %v1466
                %v1468 = vld [vmem:[%s1434 + $0x40] sm:$0xf]
                %1469 = vst [vmem:[%s1435 + $0x40] sm:$0xf] %v1468
                %v1470 = vld [vmem:[%s1434 + $0x44] sm:$0xf]
                %1471 = vst [vmem:[%s1435 + $0x44] sm:$0xf] %v1470
                %v1472 = vld [vmem:[%s1434 + $0x48] sm:$0xf]
                %1473 = vst [vmem:[%s1435 + $0x48] sm:$0xf] %v1472
                %v1474 = vld [vmem:[%s1434 + $0x4c] sm:$0xf]
                %1475 = vst [vmem:[%s1435 + $0x4c] sm:$0xf] %v1474
                %v1476 = vld [vmem:[%s1434 + $0x50] sm:$0xf]
                %1477 = vst [vmem:[%s1435 + $0x50] sm:$0xf] %v1476
                %v1478 = vld [vmem:[%s1434 + $0x54] sm:$0xf]
                %1479 = vst [vmem:[%s1435 + $0x54] sm:$0xf] %v1478
                %v1480 = vld [vmem:[%s1434 + $0x58] sm:$0xf]
                %1481 = vst [vmem:[%s1435 + $0x58] sm:$0xf] %v1480
                %v1482 = vld [vmem:[%s1434 + $0x5c] sm:$0xf]
                %1483 = vst [vmem:[%s1435 + $0x5c] sm:$0xf] %v1482
                %v1484 = vld [vmem:[%s1434 + $0x60] sm:$0xf]
                %1485 = vst [vmem:[%s1435 + $0x60] sm:$0xf] %v1484
                %v1486 = vld [vmem:[%s1434 + $0x64] sm:$0xf]
                %1487 = vst [vmem:[%s1435 + $0x64] sm:$0xf] %v1486
                %v1488 = vld [vmem:[%s1434 + $0x68] sm:$0xf]
                %1489 = vst [vmem:[%s1435 + $0x68] sm:$0xf] %v1488
                %v1490 = vld [vmem:[%s1434 + $0x6c] sm:$0xf]
                %1491 = vst [vmem:[%s1435 + $0x6c] sm:$0xf] %v1490
                %v1492 = vld [vmem:[%s1434 + $0x70] sm:$0xf]
                %1493 = vst [vmem:[%s1435 + $0x70] sm:$0xf] %v1492
                %v1494 = vld [vmem:[%s1434 + $0x74] sm:$0xf]
                %1495 = vst [vmem:[%s1435 + $0x74] sm:$0xf] %v1494
                %v1496 = vld [vmem:[%s1434 + $0x78] sm:$0xf]
                %1497 = vst [vmem:[%s1435 + $0x78] sm:$0xf] %v1496
                %v1498 = vld [vmem:[%s1434 + $0x7c] sm:$0xf]
                %1499 = vst [vmem:[%s1435 + $0x7c] sm:$0xf] %v1498
                %v1500 = vld [vmem:[%s1434 + $0x80] sm:$0xf]
                %1501 = vst [vmem:[%s1435 + $0x80] sm:$0xf] %v1500
                %v1502 = vld [vmem:[%s1434 + $0x84] sm:$0xf]
                %1503 = vst [vmem:[%s1435 + $0x84] sm:$0xf] %v1502
                %v1504 = vld [vmem:[%s1434 + $0x88] sm:$0xf]
                %1505 = vst [vmem:[%s1435 + $0x88] sm:$0xf] %v1504
                %v1506 = vld [vmem:[%s1434 + $0x8c] sm:$0xf]
                %1507 = vst [vmem:[%s1435 + $0x8c] sm:$0xf] %v1506
                %v1508 = vld [vmem:[%s1434 + $0x90] sm:$0xf]
                %1509 = vst [vmem:[%s1435 + $0x90] sm:$0xf] %v1508
                %v1510 = vld [vmem:[%s1434 + $0x94] sm:$0xf]
                %1511 = vst [vmem:[%s1435 + $0x94] sm:$0xf] %v1510
                %v1512 = vld [vmem:[%s1434 + $0x98] sm:$0xf]
                %1513 = vst [vmem:[%s1435 + $0x98] sm:$0xf] %v1512
                %v1514 = vld [vmem:[%s1434 + $0x9c] sm:$0xf]
                %1515 = vst [vmem:[%s1435 + $0x9c] sm:$0xf] %v1514
                %v1516 = vld [vmem:[%s1434 + $0xa0] sm:$0xf]
                %1517 = vst [vmem:[%s1435 + $0xa0] sm:$0xf] %v1516
                %v1518 = vld [vmem:[%s1434 + $0xa4] sm:$0xf]
                %1519 = vst [vmem:[%s1435 + $0xa4] sm:$0xf] %v1518
                %v1520 = vld [vmem:[%s1434 + $0xa8] sm:$0xf]
                %1521 = vst [vmem:[%s1435 + $0xa8] sm:$0xf] %v1520
                %v1522 = vld [vmem:[%s1434 + $0xac] sm:$0xf]
                %1523 = vst [vmem:[%s1435 + $0xac] sm:$0xf] %v1522
                %v1524 = vld [vmem:[%s1434 + $0xb0] sm:$0xf]
                %1525 = vst [vmem:[%s1435 + $0xb0] sm:$0xf] %v1524
                %v1526 = vld [vmem:[%s1434 + $0xb4] sm:$0xf]
                %1527 = vst [vmem:[%s1435 + $0xb4] sm:$0xf] %v1526
                %v1528 = vld [vmem:[%s1434 + $0xb8] sm:$0xf]
                %1529 = vst [vmem:[%s1435 + $0xb8] sm:$0xf] %v1528
                %v1530 = vld [vmem:[%s1434 + $0xbc] sm:$0xf]
                %1531 = vst [vmem:[%s1435 + $0xbc] sm:$0xf] %v1530
                %v1532 = vld [vmem:[%s1434 + $0xc0] sm:$0xf]
                %1533 = vst [vmem:[%s1435 + $0xc0] sm:$0xf] %v1532
                %v1534 = vld [vmem:[%s1434 + $0xc4] sm:$0xf]
                %1535 = vst [vmem:[%s1435 + $0xc4] sm:$0xf] %v1534
                %v1536 = vld [vmem:[%s1434 + $0xc8] sm:$0xf]
                %1537 = vst [vmem:[%s1435 + $0xc8] sm:$0xf] %v1536
                %v1538 = vld [vmem:[%s1434 + $0xcc] sm:$0xf]
                %1539 = vst [vmem:[%s1435 + $0xcc] sm:$0xf] %v1538
                %v1540 = vld [vmem:[%s1434 + $0xd0] sm:$0xf]
                %1541 = vst [vmem:[%s1435 + $0xd0] sm:$0xf] %v1540
                %v1542 = vld [vmem:[%s1434 + $0xd4] sm:$0xf]
                %1543 = vst [vmem:[%s1435 + $0xd4] sm:$0xf] %v1542
                %v1544 = vld [vmem:[%s1434 + $0xd8] sm:$0xf]
                %1545 = vst [vmem:[%s1435 + $0xd8] sm:$0xf] %v1544
                %v1546 = vld [vmem:[%s1434 + $0xdc] sm:$0xf]
                %1547 = vst [vmem:[%s1435 + $0xdc] sm:$0xf] %v1546
                %v1548 = vld [vmem:[%s1434 + $0xe0] sm:$0xf]
                %1549 = vst [vmem:[%s1435 + $0xe0] sm:$0xf] %v1548
                %v1550 = vld [vmem:[%s1434 + $0xe4] sm:$0xf]
                %1551 = vst [vmem:[%s1435 + $0xe4] sm:$0xf] %v1550
                %v1552 = vld [vmem:[%s1434 + $0xe8] sm:$0xf]
                %1553 = vst [vmem:[%s1435 + $0xe8] sm:$0xf] %v1552
                %v1554 = vld [vmem:[%s1434 + $0xec] sm:$0xf]
                %1555 = vst [vmem:[%s1435 + $0xec] sm:$0xf] %v1554
                %v1556 = vld [vmem:[%s1434 + $0xf0] sm:$0xf]
                %1557 = vst [vmem:[%s1435 + $0xf0] sm:$0xf] %v1556
                %v1558 = vld [vmem:[%s1434 + $0xf4] sm:$0xf]
                %1559 = vst [vmem:[%s1435 + $0xf4] sm:$0xf] %v1558
                %v1560 = vld [vmem:[%s1434 + $0xf8] sm:$0xf]
                %1561 = vst [vmem:[%s1435 + $0xf8] sm:$0xf] %v1560
                %v1562 = vld [vmem:[%s1434 + $0xfc] sm:$0xf]
                %1563 = vst [vmem:[%s1435 + $0xfc] sm:$0xf] %v1562
                %s1564 = sadd.s32 1, %s1433
                %p1565 = scmp.ge.s32.totalorder %s1564, %s1426
                %s1566 = scalar_select %p1565, 0, %s1564
                %s1567 = smul.u32 %s1566, 256
                %s1568 = smul.u32 %s1566, 256
                %s1569 = scalar_lea.vmem %s1406, %s1567 [#allocation2]
                %s1570 = scalar_lea.vmem %s1417, %s1568
              $region53: #{net_forward.14} parent=47 // loop_footer
                %s1430 = sadd.s32 %s1428, 1
              $region54: #{net_forward.14} parent=47 // loop_footer_branch
                %1427 = sbr.rel target = $region50
              $region55: #{net_forward.14} parent=47 // loop_exit
                _
              %s1571 = sshrl.u32 %s1413, 6
              %s1572 = sand.u32 %s1413, 63
              %s1573 = smul.u32 %s1571, 64
              %s1574 = smul.u32 4, %s1573
              %s1575 = scalar_lea.vmem %s1406, %s1574 [#allocation2]
              %s1576 = smul.u32 4, %s1573
              %s1577 = scalar_lea.vmem %s1417, %s1576
              // While loop
              $region56: #{net_forward.14} parent=47 // loop_pre_header
                _
              $region57: #{net_forward.14} parent=47 // loop_header
                %s1579 = sphi 0, %s1581
                %p1580 = scmp.ge.s32.totalorder %s1579, %s1572
                %s1584 = sphi 0, %s1591
                %s1585 = sphi %s1575, %s1594
                %s1586 = sphi %s1577, %s1595
              $region58: #{net_forward.14} parent=47 // loop_header_branch
                %1583 = sbr.rel (%p1580) target = $region62
              $region59: #{net_forward.14} parent=47 // loop_body
                %v1587 = vld [vmem:[%s1585] sm:$0xf]
                %1588 = vst [vmem:[%s1586] sm:$0xf] %v1587
                %s1589 = sadd.s32 1, %s1584
                %p1590 = scmp.ge.s32.totalorder %s1589, %s1572
                %s1591 = scalar_select %p1590, 0, %s1589
                %s1592 = smul.u32 %s1591, 4
                %s1593 = smul.u32 %s1591, 4
                %s1594 = scalar_lea.vmem %s1575, %s1592 [#allocation2]
                %s1595 = scalar_lea.vmem %s1577, %s1593
              $region60: #{net_forward.14} parent=47 // loop_footer
                %s1581 = sadd.s32 %s1579, 1
              $region61: #{net_forward.14} parent=47 // loop_footer_branch
                %1578 = sbr.rel target = $region57
              $region62: #{net_forward.14} parent=47 // loop_exit
                _
            $region48: #{net_forward.14} parent=39 // pred_fallthru
              _
          $region40: #{net_forward.14} parent=35 // pred_fallthru
            _
          %1769 = vnop
        $region36: #{net_forward.14} parent=31 // pred_fallthru
          _
      $region32: #{net_forward.14} parent=5 // pred_fallthru
        _
      %p1770 = scmp.le.s32.totalorder 2, %s9
      // Predicated region
      $region81: #{net_forward.14} parent=5 // pred_check
        %p1771 = pneg %p1770
      $region82: #{net_forward.14} parent=5 // pred_check_branch
        %1773 = sbr.rel (%p1771) target = $region84
      $region83: #{net_forward.14} parent=5 // pred_region
        %s1774 = ssub.s32 %s9, 2
        // Predicated region
        $region85: #{net_forward.14} parent=83 // pred_check
          %p1775 = pneg %p106
        $region86: #{net_forward.14} parent=83 // pred_check_branch
          %1777 = sbr.rel (%p1775) target = $region88
        $region87: #{net_forward.14} parent=83 // pred_region
          %s1778 = sand.u32 %s91, 1
          %s1779 = sand.u32 %s91, 1
          %s1780 = smul.addr %s1779, 256
          %s1781 = scalar_lea.vmem [#allocation2], %s1780
        $region88: #{net_forward.14} parent=83 // pred_fallthru
          _
      $region84: #{net_forward.14} parent=5 // pred_fallthru
        _
    $region6: #{net_forward.14} parent=1 // loop_footer
      %s13 = sadd.s32 1, %s9
    $region7: #{net_forward.14} parent=1 // loop_footer_branch
      %8 = sbr.rel target = $region3
    $region8: #{net_forward.14} parent=1 // loop_exit
      _

// kernel: net_forward.15
$region0: #{net_forward.15}
  #allocation0 [shape = 'u32[]', space=smem, size = 0x4, offset = 0x4, fixed_abs, tag = 'smem constant byte address 0x4 - core index']
  #allocation1 [shape = 'u32[144,128]{1,0:T(1,128)}', space=vmem, size = 0x12000, scoped, tag = 'internal scratch']
  %s0 = inlined_call_operand.vmem [shape: bf16[722,144], index: 0, kind: input, shape index: {}]
  %s1 = inlined_call_operand.vmem [shape: bf16[144,16], index: 1, kind: input, shape index: {}]
  %s2 = inlined_call_operand.vmem [shape: f32[1,16], index: 2, kind: input, shape index: {}]
  %s3 = inlined_call_operand.vmem [shape: bf16[722,16], index: 3, kind: output, shape index: {}]
  %s4 = sld [smem:[#allocation0]]
  $region89: #{net_forward.15} parent=0
    _
  %s6 = ssub.s32 1, %s4
  %s7 = scalar_select 0, %s6, %s4
  $region1: #{net_forward.15} parent=0
    #allocation2 [shape = 'u8[262144]{0}', space=vmem, size = 0x40000, scoped, tag = 'output window, operand 0']
    loop: start=0, step=1, limit=4
    $region2: #{net_forward.15} parent=1 // loop_pre_header
      _
    $region3: #{net_forward.15} parent=1 // loop_header
      %s9 = sphi 0, %s13
      %p10 = scmp.ge.s32.totalorder %s9, 4
      %s19 = sphi 0, %s21
      %s22 = sphi 0, %s19
      %s23 = sphi 0, %s22
      %s39 = sphi 0, %s23
      %s43 = sphi 0, %s43
      %s45 = sphi 0, %s43
      %s46 = sphi 0, %s45
      %s60 = sphi 0, %s46
      %s64 = sphi 0, %s64
      %s66 = sphi 0, %s64
      %s67 = sphi 0, %s66
      %s81 = sphi 0, %s67
      %s87 = sphi 0, %s89
      %s90 = sphi 0, %s87
      %s91 = sphi 0, %s90
      %s107 = sphi 0, %s91
    $region4: #{net_forward.15} parent=1 // loop_header_branch
      %12 = sbr.rel (%p10) target = $region8
    $region5: #{net_forward.15} parent=1 // loop_body
      %s14 = ssub.s32 %s9, 1
      %s15 = ssub.s32 %s9, 2
      %s16 = sadd.s32 %s9, 1
      %s17 = ssub.s32 %s9, %s16
      %p18 = scmp.eq.s32.totalorder %s17, 0
      %s20 = sadd.s32 %s19, 1
      %s21 = scalar_select %p18, %s19, %s20
      %p24 = pneg %p18
      %p25 = scmp.eq.s32.totalorder %s9, 1
      %p26 = por %p24, %p25
      %p27 = scmp.ne.s32.totalorder %s19, %s22
      %p28 = scmp.eq.s32.totalorder %s9, 0
      %p29 = por %p27, %p28
      %p30 = scmp.ne.s32.totalorder %s19, %s22
      %p31 = scmp.eq.s32.totalorder %s14, 1
      %p32 = por %p30, %p31
      %p33 = scmp.ne.s32.totalorder %s22, %s23
      %p34 = scmp.eq.s32.totalorder %s14, 0
      %p35 = por %p33, %p34
      %p36 = scmp.ne.s32.totalorder %s22, %s23
      %p37 = scmp.eq.s32.totalorder %s15, 1
      %p38 = por %p36, %p37
      %p40 = scmp.ne.s32.totalorder %s23, %s39
      %p41 = scmp.eq.s32.totalorder %s15, 0
      %p42 = por %p40, %p41
      %s44 = sadd.s32 %s43, 1
      %p47 = scmp.eq.s32.totalorder %s9, 1
      %p48 = scmp.ne.s32.totalorder %s43, %s45
      %p49 = scmp.eq.s32.totalorder %s9, 0
      %p50 = por %p48, %p49
      %p51 = scmp.ne.s32.totalorder %s43, %s45
      %p52 = scmp.eq.s32.totalorder %s14, 1
      %p53 = por %p51, %p52
      %p54 = scmp.ne.s32.totalorder %s45, %s46
      %p55 = scmp.eq.s32.totalorder %s14, 0
      %p56 = por %p54, %p55
      %p57 = scmp.ne.s32.totalorder %s45, %s46
      %p58 = scmp.eq.s32.totalorder %s15, 1
      %p59 = por %p57, %p58
      %p61 = scmp.ne.s32.totalorder %s46, %s60
      %p62 = scmp.eq.s32.totalorder %s15, 0
      %p63 = por %p61, %p62
      %s65 = sadd.s32 %s64, 1
      %p68 = scmp.eq.s32.totalorder %s9, 1
      %p69 = scmp.ne.s32.totalorder %s64, %s66
      %p70 = scmp.eq.s32.totalorder %s9, 0
      %p71 = por %p69, %p70
      %p72 = scmp.ne.s32.totalorder %s64, %s66
      %p73 = scmp.eq.s32.totalorder %s14, 1
      %p74 = por %p72, %p73
      %p75 = scmp.ne.s32.totalorder %s66, %s67
      %p76 = scmp.eq.s32.totalorder %s14, 0
      %p77 = por %p75, %p76
      %p78 = scmp.ne.s32.totalorder %s66, %s67
      %p79 = scmp.eq.s32.totalorder %s15, 1
      %p80 = por %p78, %p79
      %p82 = scmp.ne.s32.totalorder %s67, %s81
      %p83 = scmp.eq.s32.totalorder %s15, 0
      %p84 = por %p82, %p83
      %s85 = ssub.s32 %s9, %s16
      %p86 = scmp.eq.s32.totalorder %s85, 0
      %s88 = sadd.s32 %s87, 1
      %s89 = scalar_select %p86, %s87, %s88
      %p92 = pneg %p86
      %p93 = scmp.eq.s32.totalorder %s9, 1
      %p94 = por %p92, %p93
      %p95 = scmp.ne.s32.totalorder %s87, %s90
      %p96 = scmp.eq.s32.totalorder %s9, 0
      %p97 = por %p95, %p96
      %p98 = scmp.ne.s32.totalorder %s87, %s90
      %p99 = scmp.eq.s32.totalorder %s14, 1
      %p100 = por %p98, %p99
      %p101 = scmp.ne.s32.totalorder %s90, %s91
      %p102 = scmp.eq.s32.totalorder %s14, 0
      %p103 = por %p101, %p102
      %p104 = scmp.ne.s32.totalorder %s90, %s91
      %p105 = scmp.eq.s32.totalorder %s15, 1
      %p106 = por %p104, %p105
      %p108 = scmp.ne.s32.totalorder %s91, %s107
      %p109 = scmp.eq.s32.totalorder %s15, 0
      %p110 = por %p108, %p109
      %p111 = scmp.le.s32.totalorder 1, %s9
      %p112 = scmp.lt.s32.totalorder %s9, 3
      %p113 = pnand %p111, %p112
      %p114 = pneg %p113
      // Predicated region
      $region9: #{net_forward.15} parent=5 // pred_check
        _
      $region10: #{net_forward.15} parent=5 // pred_check_branch
        %116 = sbr.rel (%p113) target = $region12
      $region11: #{net_forward.15} parent=5 // pred_region
        %s117 = ssub.s32 %s9, 1
        // Predicated region
        $region13: #{net_forward.15} parent=11 // pred_check
          %p118 = pneg %p56
        $region14: #{net_forward.15} parent=11 // pred_check_branch
          %120 = sbr.rel (%p118) target = $region16
        $region15: #{net_forward.15} parent=11 // pred_region
          _
        $region16: #{net_forward.15} parent=11 // pred_fallthru
          _
        // Predicated region
        $region17: #{net_forward.15} parent=11 // pred_check
          %p121 = pneg %p77
        $region18: #{net_forward.15} parent=11 // pred_check_branch
          %123 = sbr.rel (%p121) target = $region20
        $region19: #{net_forward.15} parent=11 // pred_region
          _
        $region20: #{net_forward.15} parent=11 // pred_fallthru
          _
      $region12: #{net_forward.15} parent=5 // pred_fallthru
        _
      %p124 = scmp.lt.s32.totalorder %s9, 2
      // Predicated region
      $region21: #{net_forward.15} parent=5 // pred_check
        %p125 = pneg %p124
      $region22: #{net_forward.15} parent=5 // pred_check_branch
        %127 = sbr.rel (%p125) target = $region24
      $region23: #{net_forward.15} parent=5 // pred_region
        // Predicated region
        $region25: #{net_forward.15} parent=23 // pred_check
          %p128 = pneg %p29
        $region26: #{net_forward.15} parent=23 // pred_check_branch
          %130 = sbr.rel (%p128) target = $region28
        $region27: #{net_forward.15} parent=23 // pred_region
          %s131 = smul.u32 64, %s9
          %s132 = ssub.s32 91, %s131
          %p133 = scmp.lt.s32.totalorder %s132, 64
          %s134 = scalar_select %p133, %s132, 64
          %s135 = smul.u32 64, %s134
          %s136 = smul.u32 %s135, 2
          %p137 = scmp.lt.s32.totalorder %s131, 90
          %s138 = scalar_select %p137, %s131, 90
          %s139 = smul.addr %s138, 2
          %s140 = smul.addr %s139, 4
          %s141 = scalar_lea.vmem %s0, %s140
          %s142 = smul.u32 64, %s9
          %s143 = ssub.s32 91, %s142
          %p144 = scmp.lt.s32.totalorder %s143, 64
          %s145 = scalar_select %p144, %s143, 64
          %s146 = smul.u32 64, %s145
          %s147 = smul.u32 %s146, 2
        $region28: #{net_forward.15} parent=23 // pred_fallthru
          _
      $region24: #{net_forward.15} parent=5 // pred_fallthru
        _
      %p148 = scmp.le.s32.totalorder 1, %s9
      %p149 = scmp.lt.s32.totalorder %s9, 3
      %p150 = pnand %p148, %p149
      %p151 = pneg %p150
      // Predicated region
      $region29: #{net_forward.15} parent=5 // pred_check
        _
      $region30: #{net_forward.15} parent=5 // pred_check_branch
        %153 = sbr.rel (%p150) target = $region32
      $region31: #{net_forward.15} parent=5 // pred_region
        %s154 = ssub.s32 %s9, 1
        %s155 = smul.u32 64, %s14
        %s156 = ssub.s32 91, %s155
        %p157 = scmp.lt.s32.totalorder %s156, 64
        %s158 = scalar_select %p157, %s156, 64
        %s159 = smul.u32 64, %s158
        %s160 = smul.u32 %s159, 2
        %p161 = scmp.lt.s32.totalorder %s155, 90
        %s162 = scalar_select %p161, %s155, 90
        %s163 = smul.addr %s162, 2
        %s164 = smul.addr %s163, 4
        %s165 = scalar_lea.vmem %s0, %s164
        %p166 = pneg %p35
        %p167 = pneg %p32
        %p168 = pneg %p56
        %p169 = pneg %p53
        %p170 = pneg %p77
        %p171 = pneg %p74
        %p172 = pneg %p103
        %p173 = pneg %p100
        %s174 = sand.u32 %s90, 1
        %s175 = sand.u32 %s90, 1
        %s176 = smul.addr %s175, 256
        %s177 = scalar_lea.vmem [#allocation2], %s176
        %s178 = smul.u32 64, %s14
        %s179 = ssub.s32 91, %s178
        %p180 = scmp.lt.s32.totalorder %s179, 64
        %s181 = scalar_select %p180, %s179, 64
        %s182 = smul.u32 64, %s181
        %s183 = smul.u32 %s182, 2
        %p184 = scmp.lt.s32.totalorder %s178, 90
        %s185 = scalar_select %p184, %s178, 90
        %s186 = smul.addr %s185, 2
        %s187 = smul.addr %s186, 4
        %s188 = scalar_lea.vmem %s0, %s187
        %s189 = smul.u32 64, %s14
        %s190 = ssub.s32 91, %s189
        %p191 = scmp.lt.s32.totalorder %s190, 64
        %s192 = scalar_select %p191, %s190, 64
        %s193 = smul.u32 64, %s192
        %s194 = smul.u32 %s193, 2
        %s195 = smul.u32 64, %s14
        %s196 = ssub.s32 91, %s195
        %p197 = scmp.lt.s32.totalorder %s196, 64
        %s198 = scalar_select %p197, %s196, 64
        %s199 = smul.u32 64, %s198
        %v201 = vld [vmem:[%s188] sm:$0xff]
        %v202 = vld [vmem:[%s188 + $0x8] sm:$0xff]
        %v203 = vld [vmem:[%s188 + $0x10] sm:$0xff]
        %v204 = vld [vmem:[%s188 + $0x18] sm:$0xff]
        %v205 = vld [vmem:[%s188 + $0x20] sm:$0xff]
        %v206 = vld [vmem:[%s188 + $0x28] sm:$0xff]
        %v207 = vld [vmem:[%s188 + $0x30] sm:$0xff]
        %v208 = vld [vmem:[%s188 + $0x38] sm:$0xff]
        %v209 = vld [vmem:[%s188 + $0x40] sm:$0xff]
        %v210 = vld [vmem:[%s188 + $0x48] sm:$0xff]
        %v211 = vld [vmem:[%s188 + $0x50] sm:$0xff]
        %v212 = vld [vmem:[%s188 + $0x58] sm:$0xff]
        %v213 = vld [vmem:[%s188 + $0x60] sm:$0xff]
        %v214 = vld [vmem:[%s188 + $0x68] sm:$0xff]
        %v215 = vld [vmem:[%s188 + $0x70] sm:$0xff]
        %v216 = vld [vmem:[%s188 + $0x78] sm:$0xff]
        %v217 = vld [vmem:[%s188 + $0x80] sm:$0xff]
        %v218 = vld [vmem:[%s188 + $0x88] sm:$0xff]
        %v219 = vld [vmem:[%s188 + $0x90] sm:$0xff]
        %v220 = vld [vmem:[%s188 + $0x98] sm:$0xff]
        %v221 = vld [vmem:[%s188 + $0xa0] sm:$0xff]
        %v222 = vld [vmem:[%s188 + $0xa8] sm:$0xff]
        %v223 = vld [vmem:[%s188 + $0xb0] sm:$0xff]
        %v224 = vld [vmem:[%s188 + $0xb8] sm:$0xff]
        %v225 = vld [vmem:[%s188 + $0xc0] sm:$0xff]
        %v226 = vld [vmem:[%s188 + $0xc8] sm:$0xff]
        %v227 = vld [vmem:[%s188 + $0xd0] sm:$0xff]
        %v228 = vld [vmem:[%s188 + $0xd8] sm:$0xff]
        %v229 = vld [vmem:[%s188 + $0xe0] sm:$0xff]
        %v230 = vld [vmem:[%s188 + $0xe8] sm:$0xff]
        %v231 = vld [vmem:[%s188 + $0xf0] sm:$0xff]
        %v232 = vld [vmem:[%s188 + $0xf8] sm:$0xff]
        %v233 = vld [vmem:[%s188 + $0x100] sm:$0xff]
        %v234 = vld [vmem:[%s188 + $0x108] sm:$0xff]
        %v235 = vld [vmem:[%s188 + $0x110] sm:$0xff]
        %v236 = vld [vmem:[%s188 + $0x118] sm:$0xff]
        %v237 = vld [vmem:[%s188 + $0x120] sm:$0xff]
        %v238 = vld [vmem:[%s188 + $0x128] sm:$0xff]
        %v239 = vld [vmem:[%s188 + $0x130] sm:$0xff]
        %v240 = vld [vmem:[%s188 + $0x138] sm:$0xff]
        %v241 = vld [vmem:[%s188 + $0x140] sm:$0xff]
        %v242 = vld [vmem:[%s188 + $0x148] sm:$0xff]
        %v243 = vld [vmem:[%s188 + $0x150] sm:$0xff]
        %v244 = vld [vmem:[%s188 + $0x158] sm:$0xff]
        %v245 = vld [vmem:[%s188 + $0x160] sm:$0xff]
        %v246 = vld [vmem:[%s188 + $0x168] sm:$0xff]
        %v247 = vld [vmem:[%s188 + $0x170] sm:$0xff]
        %v248 = vld [vmem:[%s188 + $0x178] sm:$0xff]
        %v249 = vld [vmem:[%s188 + $0x180] sm:$0xff]
        %v250 = vld [vmem:[%s188 + $0x188] sm:$0xff]
        %v251 = vld [vmem:[%s188 + $0x190] sm:$0xff]
        %v252 = vld [vmem:[%s188 + $0x198] sm:$0xff]
        %v253 = vld [vmem:[%s188 + $0x1a0] sm:$0xff]
        %v254 = vld [vmem:[%s188 + $0x1a8] sm:$0xff]
        %v255 = vld [vmem:[%s188 + $0x1b0] sm:$0xff]
        %v256 = vld [vmem:[%s188 + $0x1b8] sm:$0xff]
        %v257 = vld [vmem:[%s188 + $0x1c0] sm:$0xff]
        %v258 = vld [vmem:[%s188 + $0x1c8] sm:$0xff]
        %v259 = vld [vmem:[%s188 + $0x1d0] sm:$0xff]
        %v260 = vld [vmem:[%s188 + $0x1d8] sm:$0xff]
        %v261 = vld [vmem:[%s188 + $0x1e0] sm:$0xff]
        %v262 = vld [vmem:[%s188 + $0x1e8] sm:$0xff]
        %v263 = vld [vmem:[%s188 + $0x1f0] sm:$0xff]
        %v264 = vld [vmem:[%s188 + $0x1f8] sm:$0xff]
        %v265 = vld [vmem:[%s1] sm:$0xf]
        %v266 = vld [vmem:[%s1 + $0x4] sm:$0xf]
        %v267 = vld [vmem:[%s1 + $0x8] sm:$0xf]
        %v268 = vld [vmem:[%s1 + $0xc] sm:$0xf]
        %v269 = vld [vmem:[%s1 + $0x10] sm:$0xf]
        %v270 = vld [vmem:[%s1 + $0x14] sm:$0xf]
        %v271 = vld [vmem:[%s1 + $0x18] sm:$0xf]
        %v272 = vld [vmem:[%s1 + $0x1c] sm:$0xf]
        %v273 = vld [vmem:[%s1 + $0x20] sm:$0xf]
        %v274 = vld [vmem:[%s1 + $0x24] sm:$0xf]
        %v275 = vld [vmem:[%s1 + $0x28] sm:$0xf]
        %v276 = vld [vmem:[%s1 + $0x2c] sm:$0xf]
        %v277 = vld [vmem:[%s1 + $0x30] sm:$0xf]
        %v278 = vld [vmem:[%s1 + $0x34] sm:$0xf]
        %v279 = vld [vmem:[%s1 + $0x38] sm:$0xf]
        %v280 = vld [vmem:[%s1 + $0x3c] sm:$0xf]
        %v281 = vld [vmem:[%s1 + $0x40] sm:$0xf]
        %v282 = vld [vmem:[%s1 + $0x44] sm:$0xf]
        %v283 = vld [vmem:[%s2] sm:$0x1]
        %v285 = vlaneseq
        %v286 = vshrl.u32 %v285, 7
        %v287 = vsub.s32 0, %v286
        %v288 = vrot.slane %v283, %v287
        %v354 = vunpack.c.l.b16 %v201
        %v355 = vunpack.c.h.b16 %v201
        %v356 = vunpack.c.l.b16 %v202
        %v357 = vunpack.c.h.b16 %v202
        %v358 = vunpack.c.l.b16 %v203
        %v359 = vunpack.c.h.b16 %v203
        %v360 = vunpack.c.l.b16 %v204
        %v361 = vunpack.c.h.b16 %v204
        %v362 = vunpack.c.l.b16 %v205
        %v363 = vunpack.c.h.b16 %v205
        %v364 = vunpack.c.l.b16 %v206
        %v365 = vunpack.c.h.b16 %v206
        %v366 = vunpack.c.l.b16 %v207
        %v367 = vunpack.c.h.b16 %v207
        %v368 = vunpack.c.l.b16 %v208
        %v369 = vunpack.c.h.b16 %v208
        %v370 = vunpack.c.l.b16 %v209
        %v371 = vunpack.c.h.b16 %v209
        %v372 = vunpack.c.l.b16 %v210
        %v373 = vunpack.c.h.b16 %v210
        %v374 = vunpack.c.l.b16 %v211
        %v375 = vunpack.c.h.b16 %v211
        %v376 = vunpack.c.l.b16 %v212
        %v377 = vunpack.c.h.b16 %v212
        %v378 = vunpack.c.l.b16 %v213
        %v379 = vunpack.c.h.b16 %v213
        %v380 = vunpack.c.l.b16 %v214
        %v381 = vunpack.c.h.b16 %v214
        %v382 = vunpack.c.l.b16 %v215
        %v383 = vunpack.c.h.b16 %v215
        %v384 = vunpack.c.l.b16 %v216
        %v385 = vunpack.c.h.b16 %v216
        %v386 = vunpack.c.l.b16 %v217
        %v387 = vunpack.c.h.b16 %v217
        %v388 = vunpack.c.l.b16 %v218
        %v389 = vunpack.c.h.b16 %v218
        %v390 = vunpack.c.l.b16 %v219
        %v391 = vunpack.c.h.b16 %v219
        %v392 = vunpack.c.l.b16 %v220
        %v393 = vunpack.c.h.b16 %v220
        %v394 = vunpack.c.l.b16 %v221
        %v395 = vunpack.c.h.b16 %v221
        %v396 = vunpack.c.l.b16 %v222
        %v397 = vunpack.c.h.b16 %v222
        %v398 = vunpack.c.l.b16 %v223
        %v399 = vunpack.c.h.b16 %v223
        %v400 = vunpack.c.l.b16 %v224
        %v401 = vunpack.c.h.b16 %v224
        %v402 = vunpack.c.l.b16 %v225
        %v403 = vunpack.c.h.b16 %v225
        %v404 = vunpack.c.l.b16 %v226
        %v405 = vunpack.c.h.b16 %v226
        %v406 = vunpack.c.l.b16 %v227
        %v407 = vunpack.c.h.b16 %v227
        %v408 = vunpack.c.l.b16 %v228
        %v409 = vunpack.c.h.b16 %v228
        %v410 = vunpack.c.l.b16 %v229
        %v411 = vunpack.c.h.b16 %v229
        %v412 = vunpack.c.l.b16 %v230
        %v413 = vunpack.c.h.b16 %v230
        %v414 = vunpack.c.l.b16 %v231
        %v415 = vunpack.c.h.b16 %v231
        %v416 = vunpack.c.l.b16 %v232
        %v417 = vunpack.c.h.b16 %v232
        %v418 = vunpack.c.l.b16 %v233
        %v419 = vunpack.c.h.b16 %v233
        %v420 = vunpack.c.l.b16 %v234
        %v421 = vunpack.c.h.b16 %v234
        %v422 = vunpack.c.l.b16 %v235
        %v423 = vunpack.c.h.b16 %v235
        %v424 = vunpack.c.l.b16 %v236
        %v425 = vunpack.c.h.b16 %v236
        %v426 = vunpack.c.l.b16 %v237
        %v427 = vunpack.c.h.b16 %v237
        %v428 = vunpack.c.l.b16 %v238
        %v429 = vunpack.c.h.b16 %v238
        %v430 = vunpack.c.l.b16 %v239
        %v431 = vunpack.c.h.b16 %v239
        %v432 = vunpack.c.l.b16 %v240
        %v433 = vunpack.c.h.b16 %v240
        %v434 = vunpack.c.l.b16 %v241
        %v435 = vunpack.c.h.b16 %v241
        %v436 = vunpack.c.l.b16 %v242
        %v437 = vunpack.c.h.b16 %v242
        %v438 = vunpack.c.l.b16 %v243
        %v439 = vunpack.c.h.b16 %v243
        %v440 = vunpack.c.l.b16 %v244
        %v441 = vunpack.c.h.b16 %v244
        %v442 = vunpack.c.l.b16 %v245
        %v443 = vunpack.c.h.b16 %v245
        %v444 = vunpack.c.l.b16 %v246
        %v445 = vunpack.c.h.b16 %v246
        %v446 = vunpack.c.l.b16 %v247
        %v447 = vunpack.c.h.b16 %v247
        %v448 = vunpack.c.l.b16 %v248
        %v449 = vunpack.c.h.b16 %v248
        %v450 = vunpack.c.l.b16 %v249
        %v451 = vunpack.c.h.b16 %v249
        %v452 = vunpack.c.l.b16 %v250
        %v453 = vunpack.c.h.b16 %v250
        %v454 = vunpack.c.l.b16 %v251
        %v455 = vunpack.c.h.b16 %v251
        %v456 = vunpack.c.l.b16 %v252
        %v457 = vunpack.c.h.b16 %v252
        %v458 = vunpack.c.l.b16 %v253
        %v459 = vunpack.c.h.b16 %v253
        %v460 = vunpack.c.l.b16 %v254
        %v461 = vunpack.c.h.b16 %v254
        %v462 = vunpack.c.l.b16 %v255
        %v463 = vunpack.c.h.b16 %v255
        %v464 = vunpack.c.l.b16 %v256
        %v465 = vunpack.c.h.b16 %v256
        %v466 = vunpack.c.l.b16 %v257
        %v467 = vunpack.c.h.b16 %v257
        %v468 = vunpack.c.l.b16 %v258
        %v469 = vunpack.c.h.b16 %v258
        %v470 = vunpack.c.l.b16 %v259
        %v471 = vunpack.c.h.b16 %v259
        %v472 = vunpack.c.l.b16 %v260
        %v473 = vunpack.c.h.b16 %v260
        %v474 = vunpack.c.l.b16 %v261
        %v475 = vunpack.c.h.b16 %v261
        %v476 = vunpack.c.l.b16 %v262
        %v477 = vunpack.c.h.b16 %v262
        %v478 = vunpack.c.l.b16 %v263
        %v479 = vunpack.c.h.b16 %v263
        %v480 = vunpack.c.l.b16 %v264
        %v481 = vunpack.c.h.b16 %v264
        %v482 = vpack.c.b16 %v356, %v354
        %v483 = vpack.c.b16 %v357, %v355
        %v484 = vpack.c.b16 %v360, %v358
        %v485 = vpack.c.b16 %v361, %v359
        %v486 = vpack.c.b16 %v364, %v362
        %v487 = vpack.c.b16 %v365, %v363
        %v488 = vpack.c.b16 %v368, %v366
        %v489 = vpack.c.b16 %v369, %v367
        %v490 = vpack.c.b16 %v372, %v370
        %v491 = vpack.c.b16 %v373, %v371
        %v492 = vpack.c.b16 %v376, %v374
        %v493 = vpack.c.b16 %v377, %v375
        %v494 = vpack.c.b16 %v380, %v378
        %v495 = vpack.c.b16 %v381, %v379
        %v496 = vpack.c.b16 %v384, %v382
        %v497 = vpack.c.b16 %v385, %v383
        %v498 = vpack.c.b16 %v388, %v386
        %v499 = vpack.c.b16 %v389, %v387
        %v500 = vpack.c.b16 %v392, %v390
        %v501 = vpack.c.b16 %v393, %v391
        %v502 = vpack.c.b16 %v396, %v394
        %v503 = vpack.c.b16 %v397, %v395
        %v504 = vpack.c.b16 %v400, %v398
        %v505 = vpack.c.b16 %v401, %v399
        %v506 = vpack.c.b16 %v404, %v402
        %v507 = vpack.c.b16 %v405, %v403
        %v508 = vpack.c.b16 %v408, %v406
        %v509 = vpack.c.b16 %v409, %v407
        %v510 = vpack.c.b16 %v412, %v410
        %v511 = vpack.c.b16 %v413, %v411
        %v512 = vpack.c.b16 %v416, %v414
        %v513 = vpack.c.b16 %v417, %v415
        %v514 = vpack.c.b16 %v420, %v418
        %v515 = vpack.c.b16 %v421, %v419
        %v516 = vpack.c.b16 %v424, %v422
        %v517 = vpack.c.b16 %v425, %v423
        %v518 = vpack.c.b16 %v428, %v426
        %v519 = vpack.c.b16 %v429, %v427
        %v520 = vpack.c.b16 %v432, %v430
        %v521 = vpack.c.b16 %v433, %v431
        %v522 = vpack.c.b16 %v436, %v434
        %v523 = vpack.c.b16 %v437, %v435
        %v524 = vpack.c.b16 %v440, %v438
        %v525 = vpack.c.b16 %v441, %v439
        %v526 = vpack.c.b16 %v444, %v442
        %v527 = vpack.c.b16 %v445, %v443
        %v528 = vpack.c.b16 %v448, %v446
        %v529 = vpack.c.b16 %v449, %v447
        %v530 = vpack.c.b16 %v452, %v450
        %v531 = vpack.c.b16 %v453, %v451
        %v532 = vpack.c.b16 %v456, %v454
        %v533 = vpack.c.b16 %v457, %v455
        %v534 = vpack.c.b16 %v460, %v458
        %v535 = vpack.c.b16 %v461, %v459
        %v536 = vpack.c.b16 %v464, %v462
        %v537 = vpack.c.b16 %v465, %v463
        %v538 = vpack.c.b16 %v468, %v466
        %v539 = vpack.c.b16 %v469, %v467
        %v540 = vpack.c.b16 %v472, %v470
        %v541 = vpack.c.b16 %v473, %v471
        %v542 = vpack.c.b16 %v476, %v474
        %v543 = vpack.c.b16 %v477, %v475
        %v544 = vpack.c.b16 %v480, %v478
        %v545 = vpack.c.b16 %v481, %v479
        %v596 = vunpack.c.l.b16 %v265
        %v597 = vunpack.c.l.b16 %v266
        %v598 = vunpack.c.l.b16 %v267
        %v599 = vunpack.c.l.b16 %v268
        %v600 = vunpack.c.l.b16 %v269
        %v601 = vunpack.c.l.b16 %v270
        %v602 = vunpack.c.l.b16 %v271
        %v603 = vunpack.c.l.b16 %v272
        %v604 = vunpack.c.l.b16 %v273
        %v605 = vunpack.c.l.b16 %v274
        %v606 = vunpack.c.l.b16 %v275
        %v607 = vunpack.c.l.b16 %v276
        %v608 = vunpack.c.l.b16 %v277
        %v609 = vunpack.c.l.b16 %v278
        %v610 = vunpack.c.l.b16 %v279
        %v611 = vunpack.c.l.b16 %v280
        %v612 = vunpack.c.l.b16 %v281
        %v613 = vunpack.c.l.b16 %v282
        %v614 = vpack.c.b16 %v597, %v596
        %v615 = vpack.c.b16 %v599, %v598
        %v616 = vpack.c.b16 %v601, %v600
        %v617 = vpack.c.b16 %v603, %v602
        %v618 = vpack.c.b16 %v605, %v604
        %v619 = vpack.c.b16 %v607, %v606
        %v620 = vpack.c.b16 %v609, %v608
        %v621 = vpack.c.b16 %v611, %v610
        %v622 = vpack.c.b16 %v613, %v612
        %vm632 = vcmask 130048
        %v634 = vsel %vm632, %v483, 0
        %v637 = vsel %vm632, %v485, 0
        %v640 = vsel %vm632, %v487, 0
        %v643 = vsel %vm632, %v489, 0
        %v646 = vsel %vm632, %v491, 0
        %v649 = vsel %vm632, %v493, 0
        %v652 = vsel %vm632, %v495, 0
        %v655 = vsel %vm632, %v497, 0
        %v658 = vsel %vm632, %v499, 0
        %v661 = vsel %vm632, %v501, 0
        %v664 = vsel %vm632, %v503, 0
        %v667 = vsel %vm632, %v505, 0
        %v670 = vsel %vm632, %v507, 0
        %v673 = vsel %vm632, %v509, 0
        %v676 = vsel %vm632, %v511, 0
        %v679 = vsel %vm632, %v513, 0
        %v682 = vsel %vm632, %v515, 0
        %v685 = vsel %vm632, %v517, 0
        %v688 = vsel %vm632, %v519, 0
        %v691 = vsel %vm632, %v521, 0
        %v694 = vsel %vm632, %v523, 0
        %v697 = vsel %vm632, %v525, 0
        %v700 = vsel %vm632, %v527, 0
        %v703 = vsel %vm632, %v529, 0
        %v706 = vsel %vm632, %v531, 0
        %v709 = vsel %vm632, %v533, 0
        %v712 = vsel %vm632, %v535, 0
        %v715 = vsel %vm632, %v537, 0
        %v718 = vsel %vm632, %v539, 0
        %v721 = vsel %vm632, %v541, 0
        %v724 = vsel %vm632, %v543, 0
        %v727 = vsel %vm632, %v545, 0
        %729 = vmatprep.subr.bf16.mxu0 0
        %730 = vmatpush1.bf16.msra.mxu0 %v614
        %731 = vmatprep.subr.bf16.mxu0 0
        %732 = vmatpush1.bf16.msra.mxu0 %v615
        %733 = vmatprep.subr.bf16.mxu0 0
        %734 = vmatpush1.bf16.msra.mxu0 %v616
        %735 = vmatprep.subr.bf16.mxu0 0
        %736 = vmatpush1.bf16.msra.mxu0 %v617
        %737 = vmatprep.subr.bf16.mxu0 0
        %738 = vmatpush1.bf16.msra.mxu0 %v618
        %739 = vmatprep.subr.bf16.mxu0 0
        %740 = vmatpush1.bf16.msra.mxu0 %v619
        %741 = vmatprep.subr.bf16.mxu0 0
        %742 = vmatpush1.bf16.msra.mxu0 %v620
        %743 = vmatprep.subr.bf16.mxu0 0
        %744 = vmatpush1.bf16.msra.mxu0 %v621
        %745 = vmatprep.subr.bf16.mxu0 0
        %746 = vmatpush1.bf16.msra.mxu0 %v622
        %747 = vmatprep.subr.bf16.mxu0 0
        %748 = vmatpush1.bf16.msra.mxu0 0
        %749 = vmatprep.subr.bf16.mxu0 0
        %750 = vmatpush1.bf16.msra.mxu0 0
        %751 = vmatprep.subr.bf16.mxu0 0
        %752 = vmatpush1.bf16.msra.mxu0 0
        %753 = vmatprep.subr.bf16.mxu0 0
        %754 = vmatpush1.bf16.msra.mxu0 0
        %755 = vmatprep.subr.bf16.mxu0 0
        %756 = vmatpush1.bf16.msra.mxu0 0
        %757 = vmatprep.subr.bf16.mxu0 0
        %758 = vmatpush1.bf16.msra.mxu0 0
        %759 = vmatprep.subr.bf16.mxu0 0
        %760 = vmatpush1.bf16.msra.mxu0 0
        %761 = vmatprep.mubr.bf16.mxu0 %v634
        %762 = vmatmul.mubr.bf16.gmra.mrb[0].mxu0 %v482
        %v763 = vpop.f32.mrb[0].mxu0
        %v764 = vadd.f32 %v288, %v763
        %v765 = vpop.f32.mrb[0].mxu0
        %v766 = vpop.f32.mrb[0].mxu0
        %v767 = vadd.f32 %v288, %v766
        %v768 = vpop.f32.mrb[0].mxu0
        %769 = vmatprep.mubr.bf16.mxu0 %v637
        %770 = vmatmul.mubr.bf16.gmra.mrb[0].mxu0 %v484
        %v771 = vpop.f32.mrb[0].mxu0
        %v772 = vadd.f32 %v288, %v771
        %v773 = vpop.f32.mrb[0].mxu0
        %v774 = vpop.f32.mrb[0].mxu0
        %v775 = vadd.f32 %v288, %v774
        %v776 = vpop.f32.mrb[0].mxu0
        %777 = vmatprep.mubr.bf16.mxu0 %v640
        %778 = vmatmul.mubr.bf16.gmra.mrb[0].mxu0 %v486
        %v779 = vpop.f32.mrb[0].mxu0
        %v780 = vadd.f32 %v288, %v779
        %v781 = vpop.f32.mrb[0].mxu0
        %v782 = vpop.f32.mrb[0].mxu0
        %v783 = vadd.f32 %v288, %v782
        %v784 = vpop.f32.mrb[0].mxu0
        %785 = vmatprep.mubr.bf16.mxu0 %v643
        %786 = vmatmul.mubr.bf16.gmra.mrb[0].mxu0 %v488
        %v787 = vpop.f32.mrb[0].mxu0
        %v788 = vadd.f32 %v288, %v787
        %v789 = vpop.f32.mrb[0].mxu0
        %v790 = vpop.f32.mrb[0].mxu0
        %v791 = vadd.f32 %v288, %v790
        %v792 = vpop.f32.mrb[0].mxu0
        %793 = vmatprep.mubr.bf16.mxu0 %v646
        %794 = vmatmul.mubr.bf16.gmra.mrb[0].mxu0 %v490
        %v795 = vpop.f32.mrb[0].mxu0
        %v796 = vadd.f32 %v288, %v795
        %v797 = vpop.f32.mrb[0].mxu0
        %v798 = vpop.f32.mrb[0].mxu0
        %v799 = vadd.f32 %v288, %v798
        %v800 = vpop.f32.mrb[0].mxu0
        %801 = vmatprep.mubr.bf16.mxu0 %v649
        %802 = vmatmul.mubr.bf16.gmra.mrb[0].mxu0 %v492
        %v803 = vpop.f32.mrb[0].mxu0
        %v804 = vadd.f32 %v288, %v803
        %v805 = vpop.f32.mrb[0].mxu0
        %v806 = vpop.f32.mrb[0].mxu0
        %v807 = vadd.f32 %v288, %v806
        %v808 = vpop.f32.mrb[0].mxu0
        %809 = vmatprep.mubr.bf16.mxu0 %v652
        %810 = vmatmul.mubr.bf16.gmra.mrb[0].mxu0 %v494
        %v811 = vpop.f32.mrb[0].mxu0
        %v812 = vadd.f32 %v288, %v811
        %v813 = vpop.f32.mrb[0].mxu0
        %v814 = vpop.f32.mrb[0].mxu0
        %v815 = vadd.f32 %v288, %v814
        %v816 = vpop.f32.mrb[0].mxu0
        %817 = vmatprep.mubr.bf16.mxu0 %v655
        %818 = vmatmul.mubr.bf16.gmra.mrb[0].mxu0 %v496
        %v819 = vpop.f32.mrb[0].mxu0
        %v820 = vadd.f32 %v288, %v819
        %v821 = vpop.f32.mrb[0].mxu0
        %v822 = vpop.f32.mrb[0].mxu0
        %v823 = vadd.f32 %v288, %v822
        %v824 = vpop.f32.mrb[0].mxu0
        %825 = vmatprep.mubr.bf16.mxu0 %v658
        %826 = vmatmul.mubr.bf16.gmra.mrb[0].mxu0 %v498
        %v827 = vpop.f32.mrb[0].mxu0
        %v828 = vadd.f32 %v288, %v827
        %v829 = vpop.f32.mrb[0].mxu0
        %v830 = vpop.f32.mrb[0].mxu0
        %v831 = vadd.f32 %v288, %v830
        %v832 = vpop.f32.mrb[0].mxu0
        %833 = vmatprep.mubr.bf16.mxu0 %v661
        %834 = vmatmul.mubr.bf16.gmra.mrb[0].mxu0 %v500
        %v835 = vpop.f32.mrb[0].mxu0
        %v836 = vadd.f32 %v288, %v835
        %v837 = vpop.f32.mrb[0].mxu0
        %v838 = vpop.f32.mrb[0].mxu0
        %v839 = vadd.f32 %v288, %v838
        %v840 = vpop.f32.mrb[0].mxu0
        %841 = vmatprep.mubr.bf16.mxu0 %v664
        %842 = vmatmul.mubr.bf16.gmra.mrb[0].mxu0 %v502
        %v843 = vpop.f32.mrb[0].mxu0
        %v844 = vadd.f32 %v288, %v843
        %v845 = vpop.f32.mrb[0].mxu0
        %v846 = vpop.f32.mrb[0].mxu0
        %v847 = vadd.f32 %v288, %v846
        %v848 = vpop.f32.mrb[0].mxu0
        %849 = vmatprep.mubr.bf16.mxu0 %v667
        %850 = vmatmul.mubr.bf16.gmra.mrb[0].mxu0 %v504
        %v851 = vpop.f32.mrb[0].mxu0
        %v852 = vadd.f32 %v288, %v851
        %v853 = vpop.f32.mrb[0].mxu0
        %v854 = vpop.f32.mrb[0].mxu0
        %v855 = vadd.f32 %v288, %v854
        %v856 = vpop.f32.mrb[0].mxu0
        %857 = vmatprep.mubr.bf16.mxu0 %v670
        %858 = vmatmul.mubr.bf16.gmra.mrb[0].mxu0 %v506
        %v859 = vpop.f32.mrb[0].mxu0
        %v860 = vadd.f32 %v288, %v859
        %v861 = vpop.f32.mrb[0].mxu0
        %v862 = vpop.f32.mrb[0].mxu0
        %v863 = vadd.f32 %v288, %v862
        %v864 = vpop.f32.mrb[0].mxu0
        %865 = vmatprep.mubr.bf16.mxu0 %v673
        %866 = vmatmul.mubr.bf16.gmra.mrb[0].mxu0 %v508
        %v867 = vpop.f32.mrb[0].mxu0
        %v868 = vadd.f32 %v288, %v867
        %v869 = vpop.f32.mrb[0].mxu0
        %v870 = vpop.f32.mrb[0].mxu0
        %v871 = vadd.f32 %v288, %v870
        %v872 = vpop.f32.mrb[0].mxu0
        %873 = vmatprep.mubr.bf16.mxu0 %v676
        %874 = vmatmul.mubr.bf16.gmra.mrb[0].mxu0 %v510
        %v875 = vpop.f32.mrb[0].mxu0
        %v876 = vadd.f32 %v288, %v875
        %v877 = vpop.f32.mrb[0].mxu0
        %v878 = vpop.f32.mrb[0].mxu0
        %v879 = vadd.f32 %v288, %v878
        %v880 = vpop.f32.mrb[0].mxu0
        %881 = vmatprep.mubr.bf16.mxu0 %v679
        %882 = vmatmul.mubr.bf16.gmra.mrb[0].mxu0 %v512
        %v883 = vpop.f32.mrb[0].mxu0
        %v884 = vadd.f32 %v288, %v883
        %v885 = vpop.f32.mrb[0].mxu0
        %v886 = vpop.f32.mrb[0].mxu0
        %v887 = vadd.f32 %v288, %v886
        %v888 = vpop.f32.mrb[0].mxu0
        %889 = vmatprep.mubr.bf16.mxu0 %v682
        %890 = vmatmul.mubr.bf16.gmra.mrb[0].mxu0 %v514
        %v891 = vpop.f32.mrb[0].mxu0
        %v892 = vadd.f32 %v288, %v891
        %v893 = vpop.f32.mrb[0].mxu0
        %v894 = vpop.f32.mrb[0].mxu0
        %v895 = vadd.f32 %v288, %v894
        %v896 = vpop.f32.mrb[0].mxu0
        %897 = vmatprep.mubr.bf16.mxu0 %v685
        %898 = vmatmul.mubr.bf16.gmra.mrb[0].mxu0 %v516
        %v899 = vpop.f32.mrb[0].mxu0
        %v900 = vadd.f32 %v288, %v899
        %v901 = vpop.f32.mrb[0].mxu0
        %v902 = vpop.f32.mrb[0].mxu0
        %v903 = vadd.f32 %v288, %v902
        %v904 = vpop.f32.mrb[0].mxu0
        %905 = vmatprep.mubr.bf16.mxu0 %v688
        %906 = vmatmul.mubr.bf16.gmra.mrb[0].mxu0 %v518
        %v907 = vpop.f32.mrb[0].mxu0
        %v908 = vadd.f32 %v288, %v907
        %v909 = vpop.f32.mrb[0].mxu0
        %v910 = vpop.f32.mrb[0].mxu0
        %v911 = vadd.f32 %v288, %v910
        %v912 = vpop.f32.mrb[0].mxu0
        %913 = vmatprep.mubr.bf16.mxu0 %v691
        %914 = vmatmul.mubr.bf16.gmra.mrb[0].mxu0 %v520
        %v915 = vpop.f32.mrb[0].mxu0
        %v916 = vadd.f32 %v288, %v915
        %v917 = vpop.f32.mrb[0].mxu0
        %v918 = vpop.f32.mrb[0].mxu0
        %v919 = vadd.f32 %v288, %v918
        %v920 = vpop.f32.mrb[0].mxu0
        %921 = vmatprep.mubr.bf16.mxu0 %v694
        %922 = vmatmul.mubr.bf16.gmra.mrb[0].mxu0 %v522
        %v923 = vpop.f32.mrb[0].mxu0
        %v924 = vadd.f32 %v288, %v923
        %v925 = vpop.f32.mrb[0].mxu0
        %v926 = vpop.f32.mrb[0].mxu0
        %v927 = vadd.f32 %v288, %v926
        %v928 = vpop.f32.mrb[0].mxu0
        %929 = vmatprep.mubr.bf16.mxu0 %v697
        %930 = vmatmul.mubr.bf16.gmra.mrb[0].mxu0 %v524
        %v931 = vpop.f32.mrb[0].mxu0
        %v932 = vadd.f32 %v288, %v931
        %v933 = vpop.f32.mrb[0].mxu0
        %v934 = vpop.f32.mrb[0].mxu0
        %v935 = vadd.f32 %v288, %v934
        %v936 = vpop.f32.mrb[0].mxu0
        %937 = vmatprep.mubr.bf16.mxu0 %v700
        %938 = vmatmul.mubr.bf16.gmra.mrb[0].mxu0 %v526
        %v939 = vpop.f32.mrb[0].mxu0
        %v940 = vadd.f32 %v288, %v939
        %v941 = vpop.f32.mrb[0].mxu0
        %v942 = vpop.f32.mrb[0].mxu0
        %v943 = vadd.f32 %v288, %v942
        %v944 = vpop.f32.mrb[0].mxu0
        %945 = vmatprep.mubr.bf16.mxu0 %v703
        %946 = vmatmul.mubr.bf16.gmra.mrb[0].mxu0 %v528
        %v947 = vpop.f32.mrb[0].mxu0
        %v948 = vadd.f32 %v288, %v947
        %v949 = vpop.f32.mrb[0].mxu0
        %v950 = vpop.f32.mrb[0].mxu0
        %v951 = vadd.f32 %v288, %v950
        %v952 = vpop.f32.mrb[0].mxu0
        %953 = vmatprep.mubr.bf16.mxu0 %v706
        %954 = vmatmul.mubr.bf16.gmra.mrb[0].mxu0 %v530
        %v955 = vpop.f32.mrb[0].mxu0
        %v956 = vadd.f32 %v288, %v955
        %v957 = vpop.f32.mrb[0].mxu0
        %v958 = vpop.f32.mrb[0].mxu0
        %v959 = vadd.f32 %v288, %v958
        %v960 = vpop.f32.mrb[0].mxu0
        %961 = vmatprep.mubr.bf16.mxu0 %v709
        %962 = vmatmul.mubr.bf16.gmra.mrb[0].mxu0 %v532
        %v963 = vpop.f32.mrb[0].mxu0
        %v964 = vadd.f32 %v288, %v963
        %v965 = vpop.f32.mrb[0].mxu0
        %v966 = vpop.f32.mrb[0].mxu0
        %v967 = vadd.f32 %v288, %v966
        %v968 = vpop.f32.mrb[0].mxu0
        %969 = vmatprep.mubr.bf16.mxu0 %v712
        %970 = vmatmul.mubr.bf16.gmra.mrb[0].mxu0 %v534
        %v971 = vpop.f32.mrb[0].mxu0
        %v972 = vadd.f32 %v288, %v971
        %v973 = vpop.f32.mrb[0].mxu0
        %v974 = vpop.f32.mrb[0].mxu0
        %v975 = vadd.f32 %v288, %v974
        %v976 = vpop.f32.mrb[0].mxu0
        %977 = vmatprep.mubr.bf16.mxu0 %v715
        %978 = vmatmul.mubr.bf16.gmra.mrb[0].mxu0 %v536
        %v979 = vpop.f32.mrb[0].mxu0
        %v980 = vadd.f32 %v288, %v979
        %v981 = vpop.f32.mrb[0].mxu0
        %v982 = vpop.f32.mrb[0].mxu0
        %v983 = vadd.f32 %v288, %v982
        %v984 = vpop.f32.mrb[0].mxu0
        %985 = vmatprep.mubr.bf16.mxu0 %v718
        %986 = vmatmul.mubr.bf16.gmra.mrb[0].mxu0 %v538
        %v987 = vpop.f32.mrb[0].mxu0
        %v988 = vadd.f32 %v288, %v987
        %v989 = vpop.f32.mrb[0].mxu0
        %v990 = vpop.f32.mrb[0].mxu0
        %v991 = vadd.f32 %v288, %v990
        %v992 = vpop.f32.mrb[0].mxu0
        %993 = vmatprep.mubr.bf16.mxu0 %v721
        %994 = vmatmul.mubr.bf16.gmra.mrb[0].mxu0 %v540
        %v995 = vpop.f32.mrb[0].mxu0
        %v996 = vadd.f32 %v288, %v995
        %v997 = vpop.f32.mrb[0].mxu0
        %v998 = vpop.f32.mrb[0].mxu0
        %v999 = vadd.f32 %v288, %v998
        %v1000 = vpop.f32.mrb[0].mxu0
        %1001 = vmatprep.mubr.bf16.mxu0 %v724
        %1002 = vmatmul.mubr.bf16.gmra.mrb[0].mxu0 %v542
        %v1003 = vpop.f32.mrb[0].mxu0
        %v1004 = vadd.f32 %v288, %v1003
        %v1005 = vpop.f32.mrb[0].mxu0
        %v1006 = vpop.f32.mrb[0].mxu0
        %v1007 = vadd.f32 %v288, %v1006
        %v1008 = vpop.f32.mrb[0].mxu0
        %1009 = vmatprep.mubr.bf16.mxu0 %v727
        %1010 = vmatmul.mubr.bf16.gmra.mrb[0].mxu0 %v544
        %v1011 = vpop.f32.mrb[0].mxu0
        %v1012 = vadd.f32 %v288, %v1011
        %v1013 = vpop.f32.mrb[0].mxu0
        %v1014 = vpop.f32.mrb[0].mxu0
        %v1015 = vadd.f32 %v288, %v1014
        %v1016 = vpop.f32.mrb[0].mxu0
        %1017 = vdwg.mxu0
        %v1018 = vmax.f32 %v764, 0.0
        %v1019 = vmax.f32 %v767, 0.0
        %v1020 = vmax.f32 %v772, 0.0
        %v1021 = vmax.f32 %v775, 0.0
        %v1022 = vmax.f32 %v780, 0.0
        %v1023 = vmax.f32 %v783, 0.0
        %v1024 = vmax.f32 %v788, 0.0
        %v1025 = vmax.f32 %v791, 0.0
        %v1026 = vmax.f32 %v796, 0.0
        %v1027 = vmax.f32 %v799, 0.0
        %v1028 = vmax.f32 %v804, 0.0
        %v1029 = vmax.f32 %v807, 0.0
        %v1030 = vmax.f32 %v812, 0.0
        %v1031 = vmax.f32 %v815, 0.0
        %v1032 = vmax.f32 %v820, 0.0
        %v1033 = vmax.f32 %v823, 0.0
        %v1034 = vmax.f32 %v828, 0.0
        %v1035 = vmax.f32 %v831, 0.0
        %v1036 = vmax.f32 %v836, 0.0
        %v1037 = vmax.f32 %v839, 0.0
        %v1038 = vmax.f32 %v844, 0.0
        %v1039 = vmax.f32 %v847, 0.0
        %v1040 = vmax.f32 %v852, 0.0
        %v1041 = vmax.f32 %v855, 0.0
        %v1042 = vmax.f32 %v860, 0.0
        %v1043 = vmax.f32 %v863, 0.0
        %v1044 = vmax.f32 %v868, 0.0
        %v1045 = vmax.f32 %v871, 0.0
        %v1046 = vmax.f32 %v876, 0.0
        %v1047 = vmax.f32 %v879, 0.0
        %v1048 = vmax.f32 %v884, 0.0
        %v1049 = vmax.f32 %v887, 0.0
        %v1050 = vmax.f32 %v892, 0.0
        %v1051 = vmax.f32 %v895, 0.0
        %v1052 = vmax.f32 %v900, 0.0
        %v1053 = vmax.f32 %v903, 0.0
        %v1054 = vmax.f32 %v908, 0.0
        %v1055 = vmax.f32 %v911, 0.0
        %v1056 = vmax.f32 %v916, 0.0
        %v1057 = vmax.f32 %v919, 0.0
        %v1058 = vmax.f32 %v924, 0.0
        %v1059 = vmax.f32 %v927, 0.0
        %v1060 = vmax.f32 %v932, 0.0
        %v1061 = vmax.f32 %v935, 0.0
        %v1062 = vmax.f32 %v940, 0.0
        %v1063 = vmax.f32 %v943, 0.0
        %v1064 = vmax.f32 %v948, 0.0
        %v1065 = vmax.f32 %v951, 0.0
        %v1066 = vmax.f32 %v956, 0.0
        %v1067 = vmax.f32 %v959, 0.0
        %v1068 = vmax.f32 %v964, 0.0
        %v1069 = vmax.f32 %v967, 0.0
        %v1070 = vmax.f32 %v972, 0.0
        %v1071 = vmax.f32 %v975, 0.0
        %v1072 = vmax.f32 %v980, 0.0
        %v1073 = vmax.f32 %v983, 0.0
        %v1074 = vmax.f32 %v988, 0.0
        %v1075 = vmax.f32 %v991, 0.0
        %v1076 = vmax.f32 %v996, 0.0
        %v1077 = vmax.f32 %v999, 0.0
        %v1078 = vmax.f32 %v1004, 0.0
        %v1079 = vmax.f32 %v1007, 0.0
        %v1080 = vmax.f32 %v1012, 0.0
        %v1081 = vmax.f32 %v1015, 0.0
        %v1082 = vpack.c.bf16 %v1019, %v1018
        %v1083 = vpack.c.bf16 %v1021, %v1020
        %v1084 = vpack.c.bf16 %v1023, %v1022
        %v1085 = vpack.c.bf16 %v1025, %v1024
        %v1086 = vpack.c.bf16 %v1027, %v1026
        %v1087 = vpack.c.bf16 %v1029, %v1028
        %v1088 = vpack.c.bf16 %v1031, %v1030
        %v1089 = vpack.c.bf16 %v1033, %v1032
        %v1090 = vpack.c.bf16 %v1035, %v1034
        %v1091 = vpack.c.bf16 %v1037, %v1036
        %v1092 = vpack.c.bf16 %v1039, %v1038
        %v1093 = vpack.c.bf16 %v1041, %v1040
        %v1094 = vpack.c.bf16 %v1043, %v1042
        %v1095 = vpack.c.bf16 %v1045, %v1044
        %v1096 = vpack.c.bf16 %v1047, %v1046
        %v1097 = vpack.c.bf16 %v1049, %v1048
        %v1098 = vpack.c.bf16 %v1051, %v1050
        %v1099 = vpack.c.bf16 %v1053, %v1052
        %v1100 = vpack.c.bf16 %v1055, %v1054
        %v1101 = vpack.c.bf16 %v1057, %v1056
        %v1102 = vpack.c.bf16 %v1059, %v1058
        %v1103 = vpack.c.bf16 %v1061, %v1060
        %v1104 = vpack.c.bf16 %v1063, %v1062
        %v1105 = vpack.c.bf16 %v1065, %v1064
        %v1106 = vpack.c.bf16 %v1067, %v1066
        %v1107 = vpack.c.bf16 %v1069, %v1068
        %v1108 = vpack.c.bf16 %v1071, %v1070
        %v1109 = vpack.c.bf16 %v1073, %v1072
        %v1110 = vpack.c.bf16 %v1075, %v1074
        %v1111 = vpack.c.bf16 %v1077, %v1076
        %v1112 = vpack.c.bf16 %v1079, %v1078
        %v1113 = vpack.c.bf16 %v1081, %v1080
        %v1146 = vunpack.c.l.b16 %v1082
        %v1147 = vunpack.c.h.b16 %v1082
        %v1148 = vunpack.c.l.b16 %v1083
        %v1149 = vunpack.c.h.b16 %v1083
        %v1150 = vunpack.c.l.b16 %v1084
        %v1151 = vunpack.c.h.b16 %v1084
        %v1152 = vunpack.c.l.b16 %v1085
        %v1153 = vunpack.c.h.b16 %v1085
        %v1154 = vunpack.c.l.b16 %v1086
        %v1155 = vunpack.c.h.b16 %v1086
        %v1156 = vunpack.c.l.b16 %v1087
        %v1157 = vunpack.c.h.b16 %v1087
        %v1158 = vunpack.c.l.b16 %v1088
        %v1159 = vunpack.c.h.b16 %v1088
        %v1160 = vunpack.c.l.b16 %v1089
        %v1161 = vunpack.c.h.b16 %v1089
        %v1162 = vunpack.c.l.b16 %v1090
        %v1163 = vunpack.c.h.b16 %v1090
        %v1164 = vunpack.c.l.b16 %v1091
        %v1165 = vunpack.c.h.b16 %v1091
        %v1166 = vunpack.c.l.b16 %v1092
        %v1167 = vunpack.c.h.b16 %v1092
        %v1168 = vunpack.c.l.b16 %v1093
        %v1169 = vunpack.c.h.b16 %v1093
        %v1170 = vunpack.c.l.b16 %v1094
        %v1171 = vunpack.c.h.b16 %v1094
        %v1172 = vunpack.c.l.b16 %v1095
        %v1173 = vunpack.c.h.b16 %v1095
        %v1174 = vunpack.c.l.b16 %v1096
        %v1175 = vunpack.c.h.b16 %v1096
        %v1176 = vunpack.c.l.b16 %v1097
        %v1177 = vunpack.c.h.b16 %v1097
        %v1178 = vunpack.c.l.b16 %v1098
        %v1179 = vunpack.c.h.b16 %v1098
        %v1180 = vunpack.c.l.b16 %v1099
        %v1181 = vunpack.c.h.b16 %v1099
        %v1182 = vunpack.c.l.b16 %v1100
        %v1183 = vunpack.c.h.b16 %v1100
        %v1184 = vunpack.c.l.b16 %v1101
        %v1185 = vunpack.c.h.b16 %v1101
        %v1186 = vunpack.c.l.b16 %v1102
        %v1187 = vunpack.c.h.b16 %v1102
        %v1188 = vunpack.c.l.b16 %v1103
        %v1189 = vunpack.c.h.b16 %v1103
        %v1190 = vunpack.c.l.b16 %v1104
        %v1191 = vunpack.c.h.b16 %v1104
        %v1192 = vunpack.c.l.b16 %v1105
        %v1193 = vunpack.c.h.b16 %v1105
        %v1194 = vunpack.c.l.b16 %v1106
        %v1195 = vunpack.c.h.b16 %v1106
        %v1196 = vunpack.c.l.b16 %v1107
        %v1197 = vunpack.c.h.b16 %v1107
        %v1198 = vunpack.c.l.b16 %v1108
        %v1199 = vunpack.c.h.b16 %v1108
        %v1200 = vunpack.c.l.b16 %v1109
        %v1201 = vunpack.c.h.b16 %v1109
        %v1202 = vunpack.c.l.b16 %v1110
        %v1203 = vunpack.c.h.b16 %v1110
        %v1204 = vunpack.c.l.b16 %v1111
        %v1205 = vunpack.c.h.b16 %v1111
        %v1206 = vunpack.c.l.b16 %v1112
        %v1207 = vunpack.c.h.b16 %v1112
        %v1208 = vunpack.c.l.b16 %v1113
        %v1209 = vunpack.c.h.b16 %v1113
        %v1210 = vpack.c.b16 %v1146, %v1146
        %v1211 = vpack.c.b16 %v1147, %v1147
        %v1212 = vpack.c.b16 %v1148, %v1148
        %v1213 = vpack.c.b16 %v1149, %v1149
        %v1214 = vpack.c.b16 %v1150, %v1150
        %v1215 = vpack.c.b16 %v1151, %v1151
        %v1216 = vpack.c.b16 %v1152, %v1152
        %v1217 = vpack.c.b16 %v1153, %v1153
        %v1218 = vpack.c.b16 %v1154, %v1154
        %v1219 = vpack.c.b16 %v1155, %v1155
        %v1220 = vpack.c.b16 %v1156, %v1156
        %v1221 = vpack.c.b16 %v1157, %v1157
        %v1222 = vpack.c.b16 %v1158, %v1158
        %v1223 = vpack.c.b16 %v1159, %v1159
        %v1224 = vpack.c.b16 %v1160, %v1160
        %v1225 = vpack.c.b16 %v1161, %v1161
        %v1226 = vpack.c.b16 %v1162, %v1162
        %v1227 = vpack.c.b16 %v1163, %v1163
        %v1228 = vpack.c.b16 %v1164, %v1164
        %v1229 = vpack.c.b16 %v1165, %v1165
        %v1230 = vpack.c.b16 %v1166, %v1166
        %v1231 = vpack.c.b16 %v1167, %v1167
        %v1232 = vpack.c.b16 %v1168, %v1168
        %v1233 = vpack.c.b16 %v1169, %v1169
        %v1234 = vpack.c.b16 %v1170, %v1170
        %v1235 = vpack.c.b16 %v1171, %v1171
        %v1236 = vpack.c.b16 %v1172, %v1172
        %v1237 = vpack.c.b16 %v1173, %v1173
        %v1238 = vpack.c.b16 %v1174, %v1174
        %v1239 = vpack.c.b16 %v1175, %v1175
        %v1240 = vpack.c.b16 %v1176, %v1176
        %v1241 = vpack.c.b16 %v1177, %v1177
        %v1242 = vpack.c.b16 %v1178, %v1178
        %v1243 = vpack.c.b16 %v1179, %v1179
        %v1244 = vpack.c.b16 %v1180, %v1180
        %v1245 = vpack.c.b16 %v1181, %v1181
        %v1246 = vpack.c.b16 %v1182, %v1182
        %v1247 = vpack.c.b16 %v1183, %v1183
        %v1248 = vpack.c.b16 %v1184, %v1184
        %v1249 = vpack.c.b16 %v1185, %v1185
        %v1250 = vpack.c.b16 %v1186, %v1186
        %v1251 = vpack.c.b16 %v1187, %v1187
        %v1252 = vpack.c.b16 %v1188, %v1188
        %v1253 = vpack.c.b16 %v1189, %v1189
        %v1254 = vpack.c.b16 %v1190, %v1190
        %v1255 = vpack.c.b16 %v1191, %v1191
        %v1256 = vpack.c.b16 %v1192, %v1192
        %v1257 = vpack.c.b16 %v1193, %v1193
        %v1258 = vpack.c.b16 %v1194, %v1194
        %v1259 = vpack.c.b16 %v1195, %v1195
        %v1260 = vpack.c.b16 %v1196, %v1196
        %v1261 = vpack.c.b16 %v1197, %v1197
        %v1262 = vpack.c.b16 %v1198, %v1198
        %v1263 = vpack.c.b16 %v1199, %v1199
        %v1264 = vpack.c.b16 %v1200, %v1200
        %v1265 = vpack.c.b16 %v1201, %v1201
        %v1266 = vpack.c.b16 %v1202, %v1202
        %v1267 = vpack.c.b16 %v1203, %v1203
        %v1268 = vpack.c.b16 %v1204, %v1204
        %v1269 = vpack.c.b16 %v1205, %v1205
        %v1270 = vpack.c.b16 %v1206, %v1206
        %v1271 = vpack.c.b16 %v1207, %v1207
        %v1272 = vpack.c.b16 %v1208, %v1208
        %v1273 = vpack.c.b16 %v1209, %v1209
        %vm1338 = vcmask 125952
        %1339 = vst.msk [vmem:[%s177] sm:$0xf] %vm1338, %v1210
        %1340 = vst.msk [vmem:[%s177 + $0x4] sm:$0xf] %vm1338, %v1211
        %1341 = vst.msk [vmem:[%s177 + $0x8] sm:$0xf] %vm1338, %v1212
        %1342 = vst.msk [vmem:[%s177 + $0xc] sm:$0xf] %vm1338, %v1213
        %1343 = vst.msk [vmem:[%s177 + $0x10] sm:$0xf] %vm1338, %v1214
        %1344 = vst.msk [vmem:[%s177 + $0x14] sm:$0xf] %vm1338, %v1215
        %1345 = vst.msk [vmem:[%s177 + $0x18] sm:$0xf] %vm1338, %v1216
        %1346 = vst.msk [vmem:[%s177 + $0x1c] sm:$0xf] %vm1338, %v1217
        %1347 = vst.msk [vmem:[%s177 + $0x20] sm:$0xf] %vm1338, %v1218
        %1348 = vst.msk [vmem:[%s177 + $0x24] sm:$0xf] %vm1338, %v1219
        %1349 = vst.msk [vmem:[%s177 + $0x28] sm:$0xf] %vm1338, %v1220
        %1350 = vst.msk [vmem:[%s177 + $0x2c] sm:$0xf] %vm1338, %v1221
        %1351 = vst.msk [vmem:[%s177 + $0x30] sm:$0xf] %vm1338, %v1222
        %1352 = vst.msk [vmem:[%s177 + $0x34] sm:$0xf] %vm1338, %v1223
        %1353 = vst.msk [vmem:[%s177 + $0x38] sm:$0xf] %vm1338, %v1224
        %1354 = vst.msk [vmem:[%s177 + $0x3c] sm:$0xf] %vm1338, %v1225
        %1355 = vst.msk [vmem:[%s177 + $0x40] sm:$0xf] %vm1338, %v1226
        %1356 = vst.msk [vmem:[%s177 + $0x44] sm:$0xf] %vm1338, %v1227
        %1357 = vst.msk [vmem:[%s177 + $0x48] sm:$0xf] %vm1338, %v1228
        %1358 = vst.msk [vmem:[%s177 + $0x4c] sm:$0xf] %vm1338, %v1229
        %1359 = vst.msk [vmem:[%s177 + $0x50] sm:$0xf] %vm1338, %v1230
        %1360 = vst.msk [vmem:[%s177 + $0x54] sm:$0xf] %vm1338, %v1231
        %1361 = vst.msk [vmem:[%s177 + $0x58] sm:$0xf] %vm1338, %v1232
        %1362 = vst.msk [vmem:[%s177 + $0x5c] sm:$0xf] %vm1338, %v1233
        %1363 = vst.msk [vmem:[%s177 + $0x60] sm:$0xf] %vm1338, %v1234
        %1364 = vst.msk [vmem:[%s177 + $0x64] sm:$0xf] %vm1338, %v1235
        %1365 = vst.msk [vmem:[%s177 + $0x68] sm:$0xf] %vm1338, %v1236
        %1366 = vst.msk [vmem:[%s177 + $0x6c] sm:$0xf] %vm1338, %v1237
        %1367 = vst.msk [vmem:[%s177 + $0x70] sm:$0xf] %vm1338, %v1238
        %1368 = vst.msk [vmem:[%s177 + $0x74] sm:$0xf] %vm1338, %v1239
        %1369 = vst.msk [vmem:[%s177 + $0x78] sm:$0xf] %vm1338, %v1240
        %1370 = vst.msk [vmem:[%s177 + $0x7c] sm:$0xf] %vm1338, %v1241
        %1371 = vst.msk [vmem:[%s177 + $0x80] sm:$0xf] %vm1338, %v1242
        %1372 = vst.msk [vmem:[%s177 + $0x84] sm:$0xf] %vm1338, %v1243
        %1373 = vst.msk [vmem:[%s177 + $0x88] sm:$0xf] %vm1338, %v1244
        %1374 = vst.msk [vmem:[%s177 + $0x8c] sm:$0xf] %vm1338, %v1245
        %1375 = vst.msk [vmem:[%s177 + $0x90] sm:$0xf] %vm1338, %v1246
        %1376 = vst.msk [vmem:[%s177 + $0x94] sm:$0xf] %vm1338, %v1247
        %1377 = vst.msk [vmem:[%s177 + $0x98] sm:$0xf] %vm1338, %v1248
        %1378 = vst.msk [vmem:[%s177 + $0x9c] sm:$0xf] %vm1338, %v1249
        %1379 = vst.msk [vmem:[%s177 + $0xa0] sm:$0xf] %vm1338, %v1250
        %1380 = vst.msk [vmem:[%s177 + $0xa4] sm:$0xf] %vm1338, %v1251
        %1381 = vst.msk [vmem:[%s177 + $0xa8] sm:$0xf] %vm1338, %v1252
        %1382 = vst.msk [vmem:[%s177 + $0xac] sm:$0xf] %vm1338, %v1253
        %1383 = vst.msk [vmem:[%s177 + $0xb0] sm:$0xf] %vm1338, %v1254
        %1384 = vst.msk [vmem:[%s177 + $0xb4] sm:$0xf] %vm1338, %v1255
        %1385 = vst.msk [vmem:[%s177 + $0xb8] sm:$0xf] %vm1338, %v1256
        %1386 = vst.msk [vmem:[%s177 + $0xbc] sm:$0xf] %vm1338, %v1257
        %1387 = vst.msk [vmem:[%s177 + $0xc0] sm:$0xf] %vm1338, %v1258
        %1388 = vst.msk [vmem:[%s177 + $0xc4] sm:$0xf] %vm1338, %v1259
        %1389 = vst.msk [vmem:[%s177 + $0xc8] sm:$0xf] %vm1338, %v1260
        %1390 = vst.msk [vmem:[%s177 + $0xcc] sm:$0xf] %vm1338, %v1261
        %1391 = vst.msk [vmem:[%s177 + $0xd0] sm:$0xf] %vm1338, %v1262
        %1392 = vst.msk [vmem:[%s177 + $0xd4] sm:$0xf] %vm1338, %v1263
        %1393 = vst.msk [vmem:[%s177 + $0xd8] sm:$0xf] %vm1338, %v1264
        %1394 = vst.msk [vmem:[%s177 + $0xdc] sm:$0xf] %vm1338, %v1265
        %1395 = vst.msk [vmem:[%s177 + $0xe0] sm:$0xf] %vm1338, %v1266
        %1396 = vst.msk [vmem:[%s177 + $0xe4] sm:$0xf] %vm1338, %v1267
        %1397 = vst.msk [vmem:[%s177 + $0xe8] sm:$0xf] %vm1338, %v1268
        %1398 = vst.msk [vmem:[%s177 + $0xec] sm:$0xf] %vm1338, %v1269
        %1399 = vst.msk [vmem:[%s177 + $0xf0] sm:$0xf] %vm1338, %v1270
        %1400 = vst.msk [vmem:[%s177 + $0xf4] sm:$0xf] %vm1338, %v1271
        %1401 = vst.msk [vmem:[%s177 + $0xf8] sm:$0xf] %vm1338, %v1272
        %1402 = vst.msk [vmem:[%s177 + $0xfc] sm:$0xf] %vm1338, %v1273
        %s1403 = sand.u32 %s90, 1
        %s1404 = sand.u32 %s90, 1
        %s1405 = smul.addr %s1404, 256
        %s1406 = scalar_lea.vmem [#allocation2], %s1405
        // Predicated region
        $region33: #{net_forward.15} parent=31 // pred_check
          %p1407 = pneg %p100
        $region34: #{net_forward.15} parent=31 // pred_check_branch
          %1409 = sbr.rel (%p1407) target = $region36
        $region35: #{net_forward.15} parent=31 // pred_region
          %s1410 = smul.u32 64, %s14
          %s1411 = ssub.s32 91, %s1410
          %p1412 = scmp.lt.s32.totalorder %s1411, 64
          %s1413 = scalar_select %p1412, %s1411, 64
          %s1414 = smul.u32 64, %s1413
          %p1415 = scmp.ne.s32.totalorder 0, %s1414
          %s1416 = smul.addr %s1410, 4
          %s1417 = scalar_lea.vmem %s3, %s1416
          // Predicated region
          $region37: #{net_forward.15} parent=35 // pred_check
            %p1418 = pneg %p1415
          $region38: #{net_forward.15} parent=35 // pred_check_branch
            %1420 = sbr.rel (%p1418) target = $region40
          $region39: #{net_forward.15} parent=35 // pred_region
            // Predicated region
            $region41: #{net_forward.15} parent=39 // pred_check
              _
            $region42: #{net_forward.15} parent=39 // pred_check_branch
              %1422 = sbr.rel target = $region44
            $region43: #{net_forward.15} parent=39 // pred_region
              // Predicated region
              $region63: #{net_forward.15} parent=43 // pred_check
                _
              $region64: #{net_forward.15} parent=43 // pred_check_branch
                %1597 = sbr.rel (0) target = $region66
              $region65: #{net_forward.15} parent=43 // pred_region
                %s1599 = sshrl.u32 %s1413, 6
                // While loop
                $region67: #{net_forward.15} parent=65 // loop_pre_header
                  _
                $region68: #{net_forward.15} parent=65 // loop_header
                  %s1601 = sphi 0, %s1603
                  %p1602 = scmp.ge.s32.totalorder %s1601, %s1599
                  %s1606 = sphi 0, %s1739
                  %s1607 = sphi %s1406, %s1742
                  %s1608 = sphi %s1417, %s1743
                $region69: #{net_forward.15} parent=65 // loop_header_branch
                  %1605 = sbr.rel (%p1602) target = $region73
                $region70: #{net_forward.15} parent=65 // loop_body
                  %v1609 = vld [vmem:[%s1607] sm:$0xf]
                  %1610 = vst [vmem:[%s1608] sm:$0xf] %v1609
                  %v1611 = vld [vmem:[%s1607 + $0x4] sm:$0xf]
                  %1612 = vst [vmem:[%s1608 + $0x4] sm:$0xf] %v1611
                  %v1613 = vld [vmem:[%s1607 + $0x8] sm:$0xf]
                  %1614 = vst [vmem:[%s1608 + $0x8] sm:$0xf] %v1613
                  %v1615 = vld [vmem:[%s1607 + $0xc] sm:$0xf]
                  %1616 = vst [vmem:[%s1608 + $0xc] sm:$0xf] %v1615
                  %v1617 = vld [vmem:[%s1607 + $0x10] sm:$0xf]
                  %1618 = vst [vmem:[%s1608 + $0x10] sm:$0xf] %v1617
                  %v1619 = vld [vmem:[%s1607 + $0x14] sm:$0xf]
                  %1620 = vst [vmem:[%s1608 + $0x14] sm:$0xf] %v1619
                  %v1621 = vld [vmem:[%s1607 + $0x18] sm:$0xf]
                  %1622 = vst [vmem:[%s1608 + $0x18] sm:$0xf] %v1621
                  %v1623 = vld [vmem:[%s1607 + $0x1c] sm:$0xf]
                  %1624 = vst [vmem:[%s1608 + $0x1c] sm:$0xf] %v1623
                  %v1625 = vld [vmem:[%s1607 + $0x20] sm:$0xf]
                  %1626 = vst [vmem:[%s1608 + $0x20] sm:$0xf] %v1625
                  %v1627 = vld [vmem:[%s1607 + $0x24] sm:$0xf]
                  %1628 = vst [vmem:[%s1608 + $0x24] sm:$0xf] %v1627
                  %v1629 = vld [vmem:[%s1607 + $0x28] sm:$0xf]
                  %1630 = vst [vmem:[%s1608 + $0x28] sm:$0xf] %v1629
                  %v1631 = vld [vmem:[%s1607 + $0x2c] sm:$0xf]
                  %1632 = vst [vmem:[%s1608 + $0x2c] sm:$0xf] %v1631
                  %v1633 = vld [vmem:[%s1607 + $0x30] sm:$0xf]
                  %1634 = vst [vmem:[%s1608 + $0x30] sm:$0xf] %v1633
                  %v1635 = vld [vmem:[%s1607 + $0x34] sm:$0xf]
                  %1636 = vst [vmem:[%s1608 + $0x34] sm:$0xf] %v1635
                  %v1637 = vld [vmem:[%s1607 + $0x38] sm:$0xf]
                  %1638 = vst [vmem:[%s1608 + $0x38] sm:$0xf] %v1637
                  %v1639 = vld [vmem:[%s1607 + $0x3c] sm:$0xf]
                  %1640 = vst [vmem:[%s1608 + $0x3c] sm:$0xf] %v1639
                  %v1641 = vld [vmem:[%s1607 + $0x40] sm:$0xf]
                  %1642 = vst [vmem:[%s1608 + $0x40] sm:$0xf] %v1641
                  %v1643 = vld [vmem:[%s1607 + $0x44] sm:$0xf]
                  %1644 = vst [vmem:[%s1608 + $0x44] sm:$0xf] %v1643
                  %v1645 = vld [vmem:[%s1607 + $0x48] sm:$0xf]
                  %1646 = vst [vmem:[%s1608 + $0x48] sm:$0xf] %v1645
                  %v1647 = vld [vmem:[%s1607 + $0x4c] sm:$0xf]
                  %1648 = vst [vmem:[%s1608 + $0x4c] sm:$0xf] %v1647
                  %v1649 = vld [vmem:[%s1607 + $0x50] sm:$0xf]
                  %1650 = vst [vmem:[%s1608 + $0x50] sm:$0xf] %v1649
                  %v1651 = vld [vmem:[%s1607 + $0x54] sm:$0xf]
                  %1652 = vst [vmem:[%s1608 + $0x54] sm:$0xf] %v1651
                  %v1653 = vld [vmem:[%s1607 + $0x58] sm:$0xf]
                  %1654 = vst [vmem:[%s1608 + $0x58] sm:$0xf] %v1653
                  %v1655 = vld [vmem:[%s1607 + $0x5c] sm:$0xf]
                  %1656 = vst [vmem:[%s1608 + $0x5c] sm:$0xf] %v1655
                  %v1657 = vld [vmem:[%s1607 + $0x60] sm:$0xf]
                  %1658 = vst [vmem:[%s1608 + $0x60] sm:$0xf] %v1657
                  %v1659 = vld [vmem:[%s1607 + $0x64] sm:$0xf]
                  %1660 = vst [vmem:[%s1608 + $0x64] sm:$0xf] %v1659
                  %v1661 = vld [vmem:[%s1607 + $0x68] sm:$0xf]
                  %1662 = vst [vmem:[%s1608 + $0x68] sm:$0xf] %v1661
                  %v1663 = vld [vmem:[%s1607 + $0x6c] sm:$0xf]
                  %1664 = vst [vmem:[%s1608 + $0x6c] sm:$0xf] %v1663
                  %v1665 = vld [vmem:[%s1607 + $0x70] sm:$0xf]
                  %1666 = vst [vmem:[%s1608 + $0x70] sm:$0xf] %v1665
                  %v1667 = vld [vmem:[%s1607 + $0x74] sm:$0xf]
                  %1668 = vst [vmem:[%s1608 + $0x74] sm:$0xf] %v1667
                  %v1669 = vld [vmem:[%s1607 + $0x78] sm:$0xf]
                  %1670 = vst [vmem:[%s1608 + $0x78] sm:$0xf] %v1669
                  %v1671 = vld [vmem:[%s1607 + $0x7c] sm:$0xf]
                  %1672 = vst [vmem:[%s1608 + $0x7c] sm:$0xf] %v1671
                  %v1673 = vld [vmem:[%s1607 + $0x80] sm:$0xf]
                  %1674 = vst [vmem:[%s1608 + $0x80] sm:$0xf] %v1673
                  %v1675 = vld [vmem:[%s1607 + $0x84] sm:$0xf]
                  %1676 = vst [vmem:[%s1608 + $0x84] sm:$0xf] %v1675
                  %v1677 = vld [vmem:[%s1607 + $0x88] sm:$0xf]
                  %1678 = vst [vmem:[%s1608 + $0x88] sm:$0xf] %v1677
                  %v1679 = vld [vmem:[%s1607 + $0x8c] sm:$0xf]
                  %1680 = vst [vmem:[%s1608 + $0x8c] sm:$0xf] %v1679
                  %v1681 = vld [vmem:[%s1607 + $0x90] sm:$0xf]
                  %1682 = vst [vmem:[%s1608 + $0x90] sm:$0xf] %v1681
                  %v1683 = vld [vmem:[%s1607 + $0x94] sm:$0xf]
                  %1684 = vst [vmem:[%s1608 + $0x94] sm:$0xf] %v1683
                  %v1685 = vld [vmem:[%s1607 + $0x98] sm:$0xf]
                  %1686 = vst [vmem:[%s1608 + $0x98] sm:$0xf] %v1685
                  %v1687 = vld [vmem:[%s1607 + $0x9c] sm:$0xf]
                  %1688 = vst [vmem:[%s1608 + $0x9c] sm:$0xf] %v1687
                  %v1689 = vld [vmem:[%s1607 + $0xa0] sm:$0xf]
                  %1690 = vst [vmem:[%s1608 + $0xa0] sm:$0xf] %v1689
                  %v1691 = vld [vmem:[%s1607 + $0xa4] sm:$0xf]
                  %1692 = vst [vmem:[%s1608 + $0xa4] sm:$0xf] %v1691
                  %v1693 = vld [vmem:[%s1607 + $0xa8] sm:$0xf]
                  %1694 = vst [vmem:[%s1608 + $0xa8] sm:$0xf] %v1693
                  %v1695 = vld [vmem:[%s1607 + $0xac] sm:$0xf]
                  %1696 = vst [vmem:[%s1608 + $0xac] sm:$0xf] %v1695
                  %v1697 = vld [vmem:[%s1607 + $0xb0] sm:$0xf]
                  %1698 = vst [vmem:[%s1608 + $0xb0] sm:$0xf] %v1697
                  %v1699 = vld [vmem:[%s1607 + $0xb4] sm:$0xf]
                  %1700 = vst [vmem:[%s1608 + $0xb4] sm:$0xf] %v1699
                  %v1701 = vld [vmem:[%s1607 + $0xb8] sm:$0xf]
                  %1702 = vst [vmem:[%s1608 + $0xb8] sm:$0xf] %v1701
                  %v1703 = vld [vmem:[%s1607 + $0xbc] sm:$0xf]
                  %1704 = vst [vmem:[%s1608 + $0xbc] sm:$0xf] %v1703
                  %v1705 = vld [vmem:[%s1607 + $0xc0] sm:$0xf]
                  %1706 = vst [vmem:[%s1608 + $0xc0] sm:$0xf] %v1705
                  %v1707 = vld [vmem:[%s1607 + $0xc4] sm:$0xf]
                  %1708 = vst [vmem:[%s1608 + $0xc4] sm:$0xf] %v1707
                  %v1709 = vld [vmem:[%s1607 + $0xc8] sm:$0xf]
                  %1710 = vst [vmem:[%s1608 + $0xc8] sm:$0xf] %v1709
                  %v1711 = vld [vmem:[%s1607 + $0xcc] sm:$0xf]
                  %1712 = vst [vmem:[%s1608 + $0xcc] sm:$0xf] %v1711
                  %v1713 = vld [vmem:[%s1607 + $0xd0] sm:$0xf]
                  %1714 = vst [vmem:[%s1608 + $0xd0] sm:$0xf] %v1713
                  %v1715 = vld [vmem:[%s1607 + $0xd4] sm:$0xf]
                  %1716 = vst [vmem:[%s1608 + $0xd4] sm:$0xf] %v1715
                  %v1717 = vld [vmem:[%s1607 + $0xd8] sm:$0xf]
                  %1718 = vst [vmem:[%s1608 + $0xd8] sm:$0xf] %v1717
                  %v1719 = vld [vmem:[%s1607 + $0xdc] sm:$0xf]
                  %1720 = vst [vmem:[%s1608 + $0xdc] sm:$0xf] %v1719
                  %v1721 = vld [vmem:[%s1607 + $0xe0] sm:$0xf]
                  %1722 = vst [vmem:[%s1608 + $0xe0] sm:$0xf] %v1721
                  %v1723 = vld [vmem:[%s1607 + $0xe4] sm:$0xf]
                  %1724 = vst [vmem:[%s1608 + $0xe4] sm:$0xf] %v1723
                  %v1725 = vld [vmem:[%s1607 + $0xe8] sm:$0xf]
                  %1726 = vst [vmem:[%s1608 + $0xe8] sm:$0xf] %v1725
                  %v1727 = vld [vmem:[%s1607 + $0xec] sm:$0xf]
                  %1728 = vst [vmem:[%s1608 + $0xec] sm:$0xf] %v1727
                  %v1729 = vld [vmem:[%s1607 + $0xf0] sm:$0xf]
                  %1730 = vst [vmem:[%s1608 + $0xf0] sm:$0xf] %v1729
                  %v1731 = vld [vmem:[%s1607 + $0xf4] sm:$0xf]
                  %1732 = vst [vmem:[%s1608 + $0xf4] sm:$0xf] %v1731
                  %v1733 = vld [vmem:[%s1607 + $0xf8] sm:$0xf]
                  %1734 = vst [vmem:[%s1608 + $0xf8] sm:$0xf] %v1733
                  %v1735 = vld [vmem:[%s1607 + $0xfc] sm:$0xf]
                  %1736 = vst [vmem:[%s1608 + $0xfc] sm:$0xf] %v1735
                  %s1737 = sadd.s32 1, %s1606
                  %p1738 = scmp.ge.s32.totalorder %s1737, %s1599
                  %s1739 = scalar_select %p1738, 0, %s1737
                  %s1740 = smul.u32 %s1739, 256
                  %s1741 = smul.u32 %s1739, 256
                  %s1742 = scalar_lea.vmem %s1406, %s1740 [#allocation2]
                  %s1743 = scalar_lea.vmem %s1417, %s1741
                $region71: #{net_forward.15} parent=65 // loop_footer
                  %s1603 = sadd.s32 %s1601, 1
                $region72: #{net_forward.15} parent=65 // loop_footer_branch
                  %1600 = sbr.rel target = $region68
                $region73: #{net_forward.15} parent=65 // loop_exit
                  _
                %s1744 = sshrl.u32 %s1413, 6
                %s1745 = sand.u32 %s1413, 63
                %s1746 = smul.u32 %s1744, 64
                %s1747 = smul.u32 4, %s1746
                %s1748 = scalar_lea.vmem %s1406, %s1747 [#allocation2]
                %s1749 = smul.u32 4, %s1746
                %s1750 = scalar_lea.vmem %s1417, %s1749
                // While loop
                $region74: #{net_forward.15} parent=65 // loop_pre_header
                  _
                $region75: #{net_forward.15} parent=65 // loop_header
                  %s1752 = sphi 0, %s1754
                  %p1753 = scmp.ge.s32.totalorder %s1752, %s1745
                  %s1757 = sphi 0, %s1764
                  %s1758 = sphi %s1748, %s1767
                  %s1759 = sphi %s1750, %s1768
                $region76: #{net_forward.15} parent=65 // loop_header_branch
                  %1756 = sbr.rel (%p1753) target = $region80
                $region77: #{net_forward.15} parent=65 // loop_body
                  %v1760 = vld [vmem:[%s1758] sm:$0xf]
                  %1761 = vst [vmem:[%s1759] sm:$0xf] %v1760
                  %s1762 = sadd.s32 1, %s1757
                  %p1763 = scmp.ge.s32.totalorder %s1762, %s1745
                  %s1764 = scalar_select %p1763, 0, %s1762
                  %s1765 = smul.u32 %s1764, 4
                  %s1766 = smul.u32 %s1764, 4
                  %s1767 = scalar_lea.vmem %s1748, %s1765 [#allocation2]
                  %s1768 = scalar_lea.vmem %s1750, %s1766
                $region78: #{net_forward.15} parent=65 // loop_footer
                  %s1754 = sadd.s32 %s1752, 1
                $region79: #{net_forward.15} parent=65 // loop_footer_branch
                  %1751 = sbr.rel target = $region75
                $region80: #{net_forward.15} parent=65 // loop_exit
                  _
              $region66: #{net_forward.15} parent=43 // pred_fallthru
                _
            $region44: #{net_forward.15} parent=39 // pred_fallthru
              _
            // Predicated region
            $region45: #{net_forward.15} parent=39 // pred_check
              _
            $region46: #{net_forward.15} parent=39 // pred_check_branch
              %1424 = sbr.rel (0) target = $region48
            $region47: #{net_forward.15} parent=39 // pred_region
              %s1426 = sshrl.u32 %s1413, 6
              // While loop
              $region49: #{net_forward.15} parent=47 // loop_pre_header
                _
              $region50: #{net_forward.15} parent=47 // loop_header
                %s1428 = sphi 0, %s1430
                %p1429 = scmp.ge.s32.totalorder %s1428, %s1426
                %s1433 = sphi 0, %s1566
                %s1434 = sphi %s1406, %s1569
                %s1435 = sphi %s1417, %s1570
              $region51: #{net_forward.15} parent=47 // loop_header_branch
                %1432 = sbr.rel (%p1429) target = $region55
              $region52: #{net_forward.15} parent=47 // loop_body
                %v1436 = vld [vmem:[%s1434] sm:$0xf]
                %1437 = vst [vmem:[%s1435] sm:$0xf] %v1436
                %v1438 = vld [vmem:[%s1434 + $0x4] sm:$0xf]
                %1439 = vst [vmem:[%s1435 + $0x4] sm:$0xf] %v1438
                %v1440 = vld [vmem:[%s1434 + $0x8] sm:$0xf]
                %1441 = vst [vmem:[%s1435 + $0x8] sm:$0xf] %v1440
                %v1442 = vld [vmem:[%s1434 + $0xc] sm:$0xf]
                %1443 = vst [vmem:[%s1435 + $0xc] sm:$0xf] %v1442
                %v1444 = vld [vmem:[%s1434 + $0x10] sm:$0xf]
                %1445 = vst [vmem:[%s1435 + $0x10] sm:$0xf] %v1444
                %v1446 = vld [vmem:[%s1434 + $0x14] sm:$0xf]
                %1447 = vst [vmem:[%s1435 + $0x14] sm:$0xf] %v1446
                %v1448 = vld [vmem:[%s1434 + $0x18] sm:$0xf]
                %1449 = vst [vmem:[%s1435 + $0x18] sm:$0xf] %v1448
                %v1450 = vld [vmem:[%s1434 + $0x1c] sm:$0xf]
                %1451 = vst [vmem:[%s1435 + $0x1c] sm:$0xf] %v1450
                %v1452 = vld [vmem:[%s1434 + $0x20] sm:$0xf]
                %1453 = vst [vmem:[%s1435 + $0x20] sm:$0xf] %v1452
                %v1454 = vld [vmem:[%s1434 + $0x24] sm:$0xf]
                %1455 = vst [vmem:[%s1435 + $0x24] sm:$0xf] %v1454
                %v1456 = vld [vmem:[%s1434 + $0x28] sm:$0xf]
                %1457 = vst [vmem:[%s1435 + $0x28] sm:$0xf] %v1456
                %v1458 = vld [vmem:[%s1434 + $0x2c] sm:$0xf]
                %1459 = vst [vmem:[%s1435 + $0x2c] sm:$0xf] %v1458
                %v1460 = vld [vmem:[%s1434 + $0x30] sm:$0xf]
                %1461 = vst [vmem:[%s1435 + $0x30] sm:$0xf] %v1460
                %v1462 = vld [vmem:[%s1434 + $0x34] sm:$0xf]
                %1463 = vst [vmem:[%s1435 + $0x34] sm:$0xf] %v1462
                %v1464 = vld [vmem:[%s1434 + $0x38] sm:$0xf]
                %1465 = vst [vmem:[%s1435 + $0x38] sm:$0xf] %v1464
                %v1466 = vld [vmem:[%s1434 + $0x3c] sm:$0xf]
                %1467 = vst [vmem:[%s1435 + $0x3c] sm:$0xf] %v1466
                %v1468 = vld [vmem:[%s1434 + $0x40] sm:$0xf]
                %1469 = vst [vmem:[%s1435 + $0x40] sm:$0xf] %v1468
                %v1470 = vld [vmem:[%s1434 + $0x44] sm:$0xf]
                %1471 = vst [vmem:[%s1435 + $0x44] sm:$0xf] %v1470
                %v1472 = vld [vmem:[%s1434 + $0x48] sm:$0xf]
                %1473 = vst [vmem:[%s1435 + $0x48] sm:$0xf] %v1472
                %v1474 = vld [vmem:[%s1434 + $0x4c] sm:$0xf]
                %1475 = vst [vmem:[%s1435 + $0x4c] sm:$0xf] %v1474
                %v1476 = vld [vmem:[%s1434 + $0x50] sm:$0xf]
                %1477 = vst [vmem:[%s1435 + $0x50] sm:$0xf] %v1476
                %v1478 = vld [vmem:[%s1434 + $0x54] sm:$0xf]
                %1479 = vst [vmem:[%s1435 + $0x54] sm:$0xf] %v1478
                %v1480 = vld [vmem:[%s1434 + $0x58] sm:$0xf]
                %1481 = vst [vmem:[%s1435 + $0x58] sm:$0xf] %v1480
                %v1482 = vld [vmem:[%s1434 + $0x5c] sm:$0xf]
                %1483 = vst [vmem:[%s1435 + $0x5c] sm:$0xf] %v1482
                %v1484 = vld [vmem:[%s1434 + $0x60] sm:$0xf]
                %1485 = vst [vmem:[%s1435 + $0x60] sm:$0xf] %v1484
                %v1486 = vld [vmem:[%s1434 + $0x64] sm:$0xf]
                %1487 = vst [vmem:[%s1435 + $0x64] sm:$0xf] %v1486
                %v1488 = vld [vmem:[%s1434 + $0x68] sm:$0xf]
                %1489 = vst [vmem:[%s1435 + $0x68] sm:$0xf] %v1488
                %v1490 = vld [vmem:[%s1434 + $0x6c] sm:$0xf]
                %1491 = vst [vmem:[%s1435 + $0x6c] sm:$0xf] %v1490
                %v1492 = vld [vmem:[%s1434 + $0x70] sm:$0xf]
                %1493 = vst [vmem:[%s1435 + $0x70] sm:$0xf] %v1492
                %v1494 = vld [vmem:[%s1434 + $0x74] sm:$0xf]
                %1495 = vst [vmem:[%s1435 + $0x74] sm:$0xf] %v1494
                %v1496 = vld [vmem:[%s1434 + $0x78] sm:$0xf]
                %1497 = vst [vmem:[%s1435 + $0x78] sm:$0xf] %v1496
                %v1498 = vld [vmem:[%s1434 + $0x7c] sm:$0xf]
                %1499 = vst [vmem:[%s1435 + $0x7c] sm:$0xf] %v1498
                %v1500 = vld [vmem:[%s1434 + $0x80] sm:$0xf]
                %1501 = vst [vmem:[%s1435 + $0x80] sm:$0xf] %v1500
                %v1502 = vld [vmem:[%s1434 + $0x84] sm:$0xf]
                %1503 = vst [vmem:[%s1435 + $0x84] sm:$0xf] %v1502
                %v1504 = vld [vmem:[%s1434 + $0x88] sm:$0xf]
                %1505 = vst [vmem:[%s1435 + $0x88] sm:$0xf] %v1504
                %v1506 = vld [vmem:[%s1434 + $0x8c] sm:$0xf]
                %1507 = vst [vmem:[%s1435 + $0x8c] sm:$0xf] %v1506
                %v1508 = vld [vmem:[%s1434 + $0x90] sm:$0xf]
                %1509 = vst [vmem:[%s1435 + $0x90] sm:$0xf] %v1508
                %v1510 = vld [vmem:[%s1434 + $0x94] sm:$0xf]
                %1511 = vst [vmem:[%s1435 + $0x94] sm:$0xf] %v1510
                %v1512 = vld [vmem:[%s1434 + $0x98] sm:$0xf]
                %1513 = vst [vmem:[%s1435 + $0x98] sm:$0xf] %v1512
                %v1514 = vld [vmem:[%s1434 + $0x9c] sm:$0xf]
                %1515 = vst [vmem:[%s1435 + $0x9c] sm:$0xf] %v1514
                %v1516 = vld [vmem:[%s1434 + $0xa0] sm:$0xf]
                %1517 = vst [vmem:[%s1435 + $0xa0] sm:$0xf] %v1516
                %v1518 = vld [vmem:[%s1434 + $0xa4] sm:$0xf]
                %1519 = vst [vmem:[%s1435 + $0xa4] sm:$0xf] %v1518
                %v1520 = vld [vmem:[%s1434 + $0xa8] sm:$0xf]
                %1521 = vst [vmem:[%s1435 + $0xa8] sm:$0xf] %v1520
                %v1522 = vld [vmem:[%s1434 + $0xac] sm:$0xf]
                %1523 = vst [vmem:[%s1435 + $0xac] sm:$0xf] %v1522
                %v1524 = vld [vmem:[%s1434 + $0xb0] sm:$0xf]
                %1525 = vst [vmem:[%s1435 + $0xb0] sm:$0xf] %v1524
                %v1526 = vld [vmem:[%s1434 + $0xb4] sm:$0xf]
                %1527 = vst [vmem:[%s1435 + $0xb4] sm:$0xf] %v1526
                %v1528 = vld [vmem:[%s1434 + $0xb8] sm:$0xf]
                %1529 = vst [vmem:[%s1435 + $0xb8] sm:$0xf] %v1528
                %v1530 = vld [vmem:[%s1434 + $0xbc] sm:$0xf]
                %1531 = vst [vmem:[%s1435 + $0xbc] sm:$0xf] %v1530
                %v1532 = vld [vmem:[%s1434 + $0xc0] sm:$0xf]
                %1533 = vst [vmem:[%s1435 + $0xc0] sm:$0xf] %v1532
                %v1534 = vld [vmem:[%s1434 + $0xc4] sm:$0xf]
                %1535 = vst [vmem:[%s1435 + $0xc4] sm:$0xf] %v1534
                %v1536 = vld [vmem:[%s1434 + $0xc8] sm:$0xf]
                %1537 = vst [vmem:[%s1435 + $0xc8] sm:$0xf] %v1536
                %v1538 = vld [vmem:[%s1434 + $0xcc] sm:$0xf]
                %1539 = vst [vmem:[%s1435 + $0xcc] sm:$0xf] %v1538
                %v1540 = vld [vmem:[%s1434 + $0xd0] sm:$0xf]
                %1541 = vst [vmem:[%s1435 + $0xd0] sm:$0xf] %v1540
                %v1542 = vld [vmem:[%s1434 + $0xd4] sm:$0xf]
                %1543 = vst [vmem:[%s1435 + $0xd4] sm:$0xf] %v1542
                %v1544 = vld [vmem:[%s1434 + $0xd8] sm:$0xf]
                %1545 = vst [vmem:[%s1435 + $0xd8] sm:$0xf] %v1544
                %v1546 = vld [vmem:[%s1434 + $0xdc] sm:$0xf]
                %1547 = vst [vmem:[%s1435 + $0xdc] sm:$0xf] %v1546
                %v1548 = vld [vmem:[%s1434 + $0xe0] sm:$0xf]
                %1549 = vst [vmem:[%s1435 + $0xe0] sm:$0xf] %v1548
                %v1550 = vld [vmem:[%s1434 + $0xe4] sm:$0xf]
                %1551 = vst [vmem:[%s1435 + $0xe4] sm:$0xf] %v1550
                %v1552 = vld [vmem:[%s1434 + $0xe8] sm:$0xf]
                %1553 = vst [vmem:[%s1435 + $0xe8] sm:$0xf] %v1552
                %v1554 = vld [vmem:[%s1434 + $0xec] sm:$0xf]
                %1555 = vst [vmem:[%s1435 + $0xec] sm:$0xf] %v1554
                %v1556 = vld [vmem:[%s1434 + $0xf0] sm:$0xf]
                %1557 = vst [vmem:[%s1435 + $0xf0] sm:$0xf] %v1556
                %v1558 = vld [vmem:[%s1434 + $0xf4] sm:$0xf]
                %1559 = vst [vmem:[%s1435 + $0xf4] sm:$0xf] %v1558
                %v1560 = vld [vmem:[%s1434 + $0xf8] sm:$0xf]
                %1561 = vst [vmem:[%s1435 + $0xf8] sm:$0xf] %v1560
                %v1562 = vld [vmem:[%s1434 + $0xfc] sm:$0xf]
                %1563 = vst [vmem:[%s1435 + $0xfc] sm:$0xf] %v1562
                %s1564 = sadd.s32 1, %s1433
                %p1565 = scmp.ge.s32.totalorder %s1564, %s1426
                %s1566 = scalar_select %p1565, 0, %s1564
                %s1567 = smul.u32 %s1566, 256
                %s1568 = smul.u32 %s1566, 256
                %s1569 = scalar_lea.vmem %s1406, %s1567 [#allocation2]
                %s1570 = scalar_lea.vmem %s1417, %s1568
              $region53: #{net_forward.15} parent=47 // loop_footer
                %s1430 = sadd.s32 %s1428, 1
              $region54: #{net_forward.15} parent=47 // loop_footer_branch
                %1427 = sbr.rel target = $region50
              $region55: #{net_forward.15} parent=47 // loop_exit
                _
              %s1571 = sshrl.u32 %s1413, 6
              %s1572 = sand.u32 %s1413, 63
              %s1573 = smul.u32 %s1571, 64
              %s1574 = smul.u32 4, %s1573
              %s1575 = scalar_lea.vmem %s1406, %s1574 [#allocation2]
              %s1576 = smul.u32 4, %s1573
              %s1577 = scalar_lea.vmem %s1417, %s1576
              // While loop
              $region56: #{net_forward.15} parent=47 // loop_pre_header
                _
              $region57: #{net_forward.15} parent=47 // loop_header
                %s1579 = sphi 0, %s1581
                %p1580 = scmp.ge.s32.totalorder %s1579, %s1572
                %s1584 = sphi 0, %s1591
                %s1585 = sphi %s1575, %s1594
                %s1586 = sphi %s1577, %s1595
              $region58: #{net_forward.15} parent=47 // loop_header_branch
                %1583 = sbr.rel (%p1580) target = $region62
              $region59: #{net_forward.15} parent=47 // loop_body
                %v1587 = vld [vmem:[%s1585] sm:$0xf]
                %1588 = vst [vmem:[%s1586] sm:$0xf] %v1587
                %s1589 = sadd.s32 1, %s1584
                %p1590 = scmp.ge.s32.totalorder %s1589, %s1572
                %s1591 = scalar_select %p1590, 0, %s1589
                %s1592 = smul.u32 %s1591, 4
                %s1593 = smul.u32 %s1591, 4
                %s1594 = scalar_lea.vmem %s1575, %s1592 [#allocation2]
                %s1595 = scalar_lea.vmem %s1577, %s1593
              $region60: #{net_forward.15} parent=47 // loop_footer
                %s1581 = sadd.s32 %s1579, 1
              $region61: #{net_forward.15} parent=47 // loop_footer_branch
                %1578 = sbr.rel target = $region57
              $region62: #{net_forward.15} parent=47 // loop_exit
                _
            $region48: #{net_forward.15} parent=39 // pred_fallthru
              _
          $region40: #{net_forward.15} parent=35 // pred_fallthru
            _
          %1769 = vnop
        $region36: #{net_forward.15} parent=31 // pred_fallthru
          _
      $region32: #{net_forward.15} parent=5 // pred_fallthru
        _
      %p1770 = scmp.le.s32.totalorder 2, %s9
      // Predicated region
      $region81: #{net_forward.15} parent=5 // pred_check
        %p1771 = pneg %p1770
      $region82: #{net_forward.15} parent=5 // pred_check_branch
        %1773 = sbr.rel (%p1771) target = $region84
      $region83: #{net_forward.15} parent=5 // pred_region
        %s1774 = ssub.s32 %s9, 2
        // Predicated region
        $region85: #{net_forward.15} parent=83 // pred_check
          %p1775 = pneg %p106
        $region86: #{net_forward.15} parent=83 // pred_check_branch
          %1777 = sbr.rel (%p1775) target = $region88
        $region87: #{net_forward.15} parent=83 // pred_region
          %s1778 = sand.u32 %s91, 1
          %s1779 = sand.u32 %s91, 1
          %s1780 = smul.addr %s1779, 256
          %s1781 = scalar_lea.vmem [#allocation2], %s1780
        $region88: #{net_forward.15} parent=83 // pred_fallthru
          _
      $region84: #{net_forward.15} parent=5 // pred_fallthru
        _
    $region6: #{net_forward.15} parent=1 // loop_footer
      %s13 = sadd.s32 1, %s9
    $region7: #{net_forward.15} parent=1 // loop_footer_branch
      %8 = sbr.rel target = $region3
    $region8: #{net_forward.15} parent=1 // loop_exit
      _

// kernel: net_forward.16
$region0: #{net_forward.16}
  #allocation0 [shape = 'u32[]', space=smem, size = 0x4, offset = 0x4, fixed_abs, tag = 'smem constant byte address 0x4 - core index']
  #allocation1 [shape = 'u32[144,128]{1,0:T(1,128)}', space=vmem, size = 0x12000, scoped, tag = 'internal scratch']
  %s0 = inlined_call_operand.vmem [shape: bf16[162,144], index: 0, kind: input, shape index: {}]
  %s1 = inlined_call_operand.vmem [shape: bf16[144,32], index: 1, kind: input, shape index: {}]
  %s2 = inlined_call_operand.vmem [shape: f32[1,32], index: 2, kind: input, shape index: {}]
  %s3 = inlined_call_operand.vmem [shape: bf16[162,32], index: 3, kind: input, shape index: {}]
  %s4 = inlined_call_operand.vmem [shape: bf16[162,32], index: 4, kind: output, shape index: {}]
  %s5 = sld [smem:[#allocation0]]
  $region26: #{net_forward.16} parent=0
    _
  %s7 = ssub.s32 1, %s5
  %s8 = scalar_select 0, %s7, %s5
  // Predicated region
  $region2: #{net_forward.16} parent=0 // pred_check
    _
  $region3: #{net_forward.16} parent=0 // pred_check_branch
    %10 = sbr.rel (0) target = $region5
  $region4: #{net_forward.16} parent=0 // pred_region
    _
  $region5: #{net_forward.16} parent=0 // pred_fallthru
    _
  // Predicated region
  $region6: #{net_forward.16} parent=0 // pred_check
    _
  $region7: #{net_forward.16} parent=0 // pred_check_branch
    %12 = sbr.rel (0) target = $region9
  $region8: #{net_forward.16} parent=0 // pred_region
    _
  $region9: #{net_forward.16} parent=0 // pred_fallthru
    _
  // Predicated region
  $region10: #{net_forward.16} parent=0 // pred_check
    _
  $region11: #{net_forward.16} parent=0 // pred_check_branch
    %14 = sbr.rel (0) target = $region13
  $region12: #{net_forward.16} parent=0 // pred_region
    _
  $region13: #{net_forward.16} parent=0 // pred_fallthru
    _
  // Predicated region
  $region14: #{net_forward.16} parent=0 // pred_check
    _
  $region15: #{net_forward.16} parent=0 // pred_check_branch
    %16 = sbr.rel (0) target = $region17
  $region16: #{net_forward.16} parent=0 // pred_region
    _
  $region17: #{net_forward.16} parent=0 // pred_fallthru
    _
  %v18 = vld [vmem:[%s0] sm:$0xff]
  %v19 = vld [vmem:[%s0 + $0x8] sm:$0xff]
  %v20 = vld [vmem:[%s0 + $0x10] sm:$0xff]
  %v21 = vld [vmem:[%s0 + $0x18] sm:$0xff]
  %v22 = vld [vmem:[%s0 + $0x20] sm:$0xff]
  %v23 = vld [vmem:[%s0 + $0x28] sm:$0xff]
  %v24 = vld [vmem:[%s0 + $0x30] sm:$0xff]
  %v25 = vld [vmem:[%s0 + $0x38] sm:$0xff]
  %v26 = vld [vmem:[%s0 + $0x40] sm:$0xff]
  %v27 = vld [vmem:[%s0 + $0x48] sm:$0xff]
  %v28 = vld [vmem:[%s0 + $0x50] sm:$0xff]
  %v29 = vld [vmem:[%s0 + $0x58] sm:$0xff]
  %v30 = vld [vmem:[%s0 + $0x60] sm:$0xff]
  %v31 = vld [vmem:[%s0 + $0x68] sm:$0xff]
  %v32 = vld [vmem:[%s0 + $0x70] sm:$0xff]
  %v33 = vld [vmem:[%s0 + $0x78] sm:$0xff]
  %v34 = vld [vmem:[%s0 + $0x80] sm:$0xff]
  %v35 = vld [vmem:[%s0 + $0x88] sm:$0xff]
  %v36 = vld [vmem:[%s0 + $0x90] sm:$0xff]
  %v37 = vld [vmem:[%s0 + $0x98] sm:$0xff]
  %v38 = vld [vmem:[%s0 + $0xa0] sm:$0x11]
  %v39 = vld [vmem:[%s1] sm:$0xf]
  %v40 = vld [vmem:[%s1 + $0x4] sm:$0xf]
  %v41 = vld [vmem:[%s1 + $0x8] sm:$0xf]
  %v42 = vld [vmem:[%s1 + $0xc] sm:$0xf]
  %v43 = vld [vmem:[%s1 + $0x10] sm:$0xf]
  %v44 = vld [vmem:[%s1 + $0x14] sm:$0xf]
  %v45 = vld [vmem:[%s1 + $0x18] sm:$0xf]
  %v46 = vld [vmem:[%s1 + $0x1c] sm:$0xf]
  %v47 = vld [vmem:[%s1 + $0x20] sm:$0xf]
  %v48 = vld [vmem:[%s1 + $0x24] sm:$0xf]
  %v49 = vld [vmem:[%s1 + $0x28] sm:$0xf]
  %v50 = vld [vmem:[%s1 + $0x2c] sm:$0xf]
  %v51 = vld [vmem:[%s1 + $0x30] sm:$0xf]
  %v52 = vld [vmem:[%s1 + $0x34] sm:$0xf]
  %v53 = vld [vmem:[%s1 + $0x38] sm:$0xf]
  %v54 = vld [vmem:[%s1 + $0x3c] sm:$0xf]
  %v55 = vld [vmem:[%s1 + $0x40] sm:$0xf]
  %v56 = vld [vmem:[%s1 + $0x44] sm:$0xf]
  %v57 = vld [vmem:[%s2] sm:$0x1]
  %v59 = vlaneseq
  %v60 = vshrl.u32 %v59, 7
  %v61 = vsub.s32 0, %v60
  %v62 = vrot.slane %v57, %v61
  %v85 = vunpack.c.l.b16 %v18
  %v86 = vunpack.c.h.b16 %v18
  %v87 = vunpack.c.l.b16 %v19
  %v88 = vunpack.c.h.b16 %v19
  %v89 = vunpack.c.l.b16 %v20
  %v90 = vunpack.c.h.b16 %v20
  %v91 = vunpack.c.l.b16 %v21
  %v92 = vunpack.c.h.b16 %v21
  %v93 = vunpack.c.l.b16 %v22
  %v94 = vunpack.c.h.b16 %v22
  %v95 = vunpack.c.l.b16 %v23
  %v96 = vunpack.c.h.b16 %v23
  %v97 = vunpack.c.l.b16 %v24
  %v98 = vunpack.c.h.b16 %v24
  %v99 = vunpack.c.l.b16 %v25
  %v100 = vunpack.c.h.b16 %v25
  %v101 = vunpack.c.l.b16 %v26
  %v102 = vunpack.c.h.b16 %v26
  %v103 = vunpack.c.l.b16 %v27
  %v104 = vunpack.c.h.b16 %v27
  %v105 = vunpack.c.l.b16 %v28
  %v106 = vunpack.c.h.b16 %v28
  %v107 = vunpack.c.l.b16 %v29
  %v108 = vunpack.c.h.b16 %v29
  %v109 = vunpack.c.l.b16 %v30
  %v110 = vunpack.c.h.b16 %v30
  %v111 = vunpack.c.l.b16 %v31
  %v112 = vunpack.c.h.b16 %v31
  %v113 = vunpack.c.l.b16 %v32
  %v114 = vunpack.c.h.b16 %v32
  %v115 = vunpack.c.l.b16 %v33
  %v116 = vunpack.c.h.b16 %v33
  %v117 = vunpack.c.l.b16 %v34
  %v118 = vunpack.c.h.b16 %v34
  %v119 = vunpack.c.l.b16 %v35
  %v120 = vunpack.c.h.b16 %v35
  %v121 = vunpack.c.l.b16 %v36
  %v122 = vunpack.c.h.b16 %v36
  %v123 = vunpack.c.l.b16 %v37
  %v124 = vunpack.c.h.b16 %v37
  %v125 = vunpack.c.l.b16 %v38
  %v126 = vunpack.c.h.b16 %v38
  %v127 = vpack.c.b16 %v87, %v85
  %v128 = vpack.c.b16 %v88, %v86
  %v129 = vpack.c.b16 %v91, %v89
  %v130 = vpack.c.b16 %v92, %v90
  %v131 = vpack.c.b16 %v95, %v93
  %v132 = vpack.c.b16 %v96, %v94
  %v133 = vpack.c.b16 %v99, %v97
  %v134 = vpack.c.b16 %v100, %v98
  %v135 = vpack.c.b16 %v103, %v101
  %v136 = vpack.c.b16 %v104, %v102
  %v137 = vpack.c.b16 %v107, %v105
  %v138 = vpack.c.b16 %v108, %v106
  %v139 = vpack.c.b16 %v111, %v109
  %v140 = vpack.c.b16 %v112, %v110
  %v141 = vpack.c.b16 %v115, %v113
  %v142 = vpack.c.b16 %v116, %v114
  %v143 = vpack.c.b16 %v119, %v117
  %v144 = vpack.c.b16 %v120, %v118
  %v145 = vpack.c.b16 %v123, %v121
  %v146 = vpack.c.b16 %v124, %v122
  %v147 = vpack.c.b16 %v125, %v125
  %v148 = vpack.c.b16 %v126, %v126
  %v178 = vunpack.c.l.b16 %v39
  %v179 = vunpack.c.l.b16 %v40
  %v180 = vunpack.c.l.b16 %v41
  %v181 = vunpack.c.l.b16 %v42
  %v182 = vunpack.c.l.b16 %v43
  %v183 = vunpack.c.l.b16 %v44
  %v184 = vunpack.c.l.b16 %v45
  %v185 = vunpack.c.l.b16 %v46
  %v186 = vunpack.c.l.b16 %v47
  %v187 = vunpack.c.l.b16 %v48
  %v188 = vunpack.c.l.b16 %v49
  %v189 = vunpack.c.l.b16 %v50
  %v190 = vunpack.c.l.b16 %v51
  %v191 = vunpack.c.l.b16 %v52
  %v192 = vunpack.c.l.b16 %v53
  %v193 = vunpack.c.l.b16 %v54
  %v194 = vunpack.c.l.b16 %v55
  %v195 = vunpack.c.l.b16 %v56
  %v196 = vpack.c.b16 %v179, %v178
  %v197 = vpack.c.b16 %v181, %v180
  %v198 = vpack.c.b16 %v183, %v182
  %v199 = vpack.c.b16 %v185, %v184
  %v200 = vpack.c.b16 %v187, %v186
  %v201 = vpack.c.b16 %v189, %v188
  %v202 = vpack.c.b16 %v191, %v190
  %v203 = vpack.c.b16 %v193, %v192
  %v204 = vpack.c.b16 %v195, %v194
  %vm214 = vcmask 130048
  %v216 = vsel %vm214, %v128, 0
  %v219 = vsel %vm214, %v130, 0
  %v222 = vsel %vm214, %v132, 0
  %v225 = vsel %vm214, %v134, 0
  %v228 = vsel %vm214, %v136, 0
  %v231 = vsel %vm214, %v138, 0
  %v234 = vsel %vm214, %v140, 0
  %v237 = vsel %vm214, %v142, 0
  %v240 = vsel %vm214, %v144, 0
  %v243 = vsel %vm214, %v146, 0
  %v246 = vsel %vm214, %v148, 0
  %248 = vmatprep.subr.bf16.mxu0 0
  %249 = vmatpush1.bf16.msra.mxu0 %v196
  %250 = vmatprep.subr.bf16.mxu0 0
  %251 = vmatpush1.bf16.msra.mxu0 %v197
  %252 = vmatprep.subr.bf16.mxu0 0
  %253 = vmatpush1.bf16.msra.mxu0 %v198
  %254 = vmatprep.subr.bf16.mxu0 0
  %255 = vmatpush1.bf16.msra.mxu0 %v199
  %256 = vmatprep.subr.bf16.mxu0 0
  %257 = vmatpush1.bf16.msra.mxu0 %v200
  %258 = vmatprep.subr.bf16.mxu0 0
  %259 = vmatpush1.bf16.msra.mxu0 %v201
  %260 = vmatprep.subr.bf16.mxu0 0
  %261 = vmatpush1.bf16.msra.mxu0 %v202
  %262 = vmatprep.subr.bf16.mxu0 0
  %263 = vmatpush1.bf16.msra.mxu0 %v203
  %264 = vmatprep.subr.bf16.mxu0 0
  %265 = vmatpush1.bf16.msra.mxu0 %v204
  %266 = vmatprep.subr.bf16.mxu0 0
  %267 = vmatpush1.bf16.msra.mxu0 0
  %268 = vmatprep.subr.bf16.mxu0 0
  %269 = vmatpush1.bf16.msra.mxu0 0
  %270 = vmatprep.subr.bf16.mxu0 0
  %271 = vmatpush1.bf16.msra.mxu0 0
  %272 = vmatprep.subr.bf16.mxu0 0
  %273 = vmatpush1.bf16.msra.mxu0 0
  %274 = vmatprep.subr.bf16.mxu0 0
  %275 = vmatpush1.bf16.msra.mxu0 0
  %276 = vmatprep.subr.bf16.mxu0 0
  %277 = vmatpush1.bf16.msra.mxu0 0
  %278 = vmatprep.subr.bf16.mxu0 0
  %279 = vmatpush1.bf16.msra.mxu0 0
  %280 = vmatprep.mubr.bf16.mxu0 %v216
  %281 = vmatmul.mubr.bf16.gmra.mrb[0].mxu0 %v127
  %v282 = vpop.f32.mrb[0].mxu0
  %v283 = vadd.f32 %v62, %v282
  %v284 = vpop.f32.mrb[0].mxu0
  %v285 = vpop.f32.mrb[0].mxu0
  %v286 = vadd.f32 %v62, %v285
  %v287 = vpop.f32.mrb[0].mxu0
  %288 = vmatprep.mubr.bf16.mxu0 %v219
  %289 = vmatmul.mubr.bf16.gmra.mrb[0].mxu0 %v129
  %v290 = vpop.f32.mrb[0].mxu0
  %v291 = vadd.f32 %v62, %v290
  %v292 = vpop.f32.mrb[0].mxu0
  %v293 = vpop.f32.mrb[0].mxu0
  %v294 = vadd.f32 %v62, %v293
  %v295 = vpop.f32.mrb[0].mxu0
  %296 = vmatprep.mubr.bf16.mxu0 %v222
  %297 = vmatmul.mubr.bf16.gmra.mrb[0].mxu0 %v131
  %v298 = vpop.f32.mrb[0].mxu0
  %v299 = vadd.f32 %v62, %v298
  %v300 = vpop.f32.mrb[0].mxu0
  %v301 = vpop.f32.mrb[0].mxu0
  %v302 = vadd.f32 %v62, %v301
  %v303 = vpop.f32.mrb[0].mxu0
  %304 = vmatprep.mubr.bf16.mxu0 %v225
  %305 = vmatmul.mubr.bf16.gmra.mrb[0].mxu0 %v133
  %v306 = vpop.f32.mrb[0].mxu0
  %v307 = vadd.f32 %v62, %v306
  %v308 = vpop.f32.mrb[0].mxu0
  %v309 = vpop.f32.mrb[0].mxu0
  %v310 = vadd.f32 %v62, %v309
  %v311 = vpop.f32.mrb[0].mxu0
  %312 = vmatprep.mubr.bf16.mxu0 %v228
  %313 = vmatmul.mubr.bf16.gmra.mrb[0].mxu0 %v135
  %v314 = vpop.f32.mrb[0].mxu0
  %v315 = vadd.f32 %v62, %v314
  %v316 = vpop.f32.mrb[0].mxu0
  %v317 = vpop.f32.mrb[0].mxu0
  %v318 = vadd.f32 %v62, %v317
  %v319 = vpop.f32.mrb[0].mxu0
  %320 = vmatprep.mubr.bf16.mxu0 %v231
  %321 = vmatmul.mubr.bf16.gmra.mrb[0].mxu0 %v137
  %v322 = vpop.f32.mrb[0].mxu0
  %v323 = vadd.f32 %v62, %v322
  %v324 = vpop.f32.mrb[0].mxu0
  %v325 = vpop.f32.mrb[0].mxu0
  %v326 = vadd.f32 %v62, %v325
  %v327 = vpop.f32.mrb[0].mxu0
  %328 = vmatprep.mubr.bf16.mxu0 %v234
  %329 = vmatmul.mubr.bf16.gmra.mrb[0].mxu0 %v139
  %v330 = vpop.f32.mrb[0].mxu0
  %v331 = vadd.f32 %v62, %v330
  %v332 = vpop.f32.mrb[0].mxu0
  %v333 = vpop.f32.mrb[0].mxu0
  %v334 = vadd.f32 %v62, %v333
  %v335 = vpop.f32.mrb[0].mxu0
  %336 = vmatprep.mubr.bf16.mxu0 %v237
  %337 = vmatmul.mubr.bf16.gmra.mrb[0].mxu0 %v141
  %v338 = vpop.f32.mrb[0].mxu0
  %v339 = vadd.f32 %v62, %v338
  %v340 = vpop.f32.mrb[0].mxu0
  %v341 = vpop.f32.mrb[0].mxu0
  %v342 = vadd.f32 %v62, %v341
  %v343 = vpop.f32.mrb[0].mxu0
  %344 = vmatprep.mubr.bf16.mxu0 %v240
  %345 = vmatmul.mubr.bf16.gmra.mrb[0].mxu0 %v143
  %v346 = vpop.f32.mrb[0].mxu0
  %v347 = vadd.f32 %v62, %v346
  %v348 = vpop.f32.mrb[0].mxu0
  %v349 = vpop.f32.mrb[0].mxu0
  %v350 = vadd.f32 %v62, %v349
  %v351 = vpop.f32.mrb[0].mxu0
  %352 = vmatprep.mubr.bf16.mxu0 %v243
  %353 = vmatmul.mubr.bf16.gmra.mrb[0].mxu0 %v145
  %v354 = vpop.f32.mrb[0].mxu0
  %v355 = vadd.f32 %v62, %v354
  %v356 = vpop.f32.mrb[0].mxu0
  %v357 = vpop.f32.mrb[0].mxu0
  %v358 = vadd.f32 %v62, %v357
  %v359 = vpop.f32.mrb[0].mxu0
  %360 = vmatprep.mubr.bf16.mxu0 %v246
  %361 = vmatmul.mubr.bf16.gmra.mrb[0].mxu0 %v147
  %v362 = vpop.f32.mrb[0].mxu0
  %v363 = vadd.f32 %v62, %v362
  %v364 = vpop.f32.mrb[0].mxu0
  %v365 = vpop.f32.mrb[0].mxu0
  %v366 = vpop.f32.mrb[0].mxu0
  %367 = vdwg.mxu0
  %v368 = vmax.f32 %v283, 0.0
  %v369 = vmax.f32 %v286, 0.0
  %v370 = vmax.f32 %v291, 0.0
  %v371 = vmax.f32 %v294, 0.0
  %v372 = vmax.f32 %v299, 0.0
  %v373 = vmax.f32 %v302, 0.0
  %v374 = vmax.f32 %v307, 0.0
  %v375 = vmax.f32 %v310, 0.0
  %v376 = vmax.f32 %v315, 0.0
  %v377 = vmax.f32 %v318, 0.0
  %v378 = vmax.f32 %v323, 0.0
  %v379 = vmax.f32 %v326, 0.0
  %v380 = vmax.f32 %v331, 0.0
  %v381 = vmax.f32 %v334, 0.0
  %v382 = vmax.f32 %v339, 0.0
  %v383 = vmax.f32 %v342, 0.0
  %v384 = vmax.f32 %v347, 0.0
  %v385 = vmax.f32 %v350, 0.0
  %v386 = vmax.f32 %v355, 0.0
  %v387 = vmax.f32 %v358, 0.0
  %v388 = vmax.f32 %v363, 0.0
  %v389 = vld [vmem:[%s3] sm:$0xf]
  %v390 = vld [vmem:[%s3 + $0x4] sm:$0xf]
  %v391 = vld [vmem:[%s3 + $0x8] sm:$0xf]
  %v392 = vld [vmem:[%s3 + $0xc] sm:$0xf]
  %v393 = vld [vmem:[%s3 + $0x10] sm:$0xf]
  %v394 = vld [vmem:[%s3 + $0x14] sm:$0xf]
  %v395 = vld [vmem:[%s3 + $0x18] sm:$0xf]
  %v396 = vld [vmem:[%s3 + $0x1c] sm:$0xf]
  %v397 = vld [vmem:[%s3 + $0x20] sm:$0xf]
  %v398 = vld [vmem:[%s3 + $0x24] sm:$0xf]
  %v399 = vld [vmem:[%s3 + $0x28] sm:$0xf]
  %v400 = vld [vmem:[%s3 + $0x2c] sm:$0xf]
  %v401 = vld [vmem:[%s3 + $0x30] sm:$0xf]
  %v402 = vld [vmem:[%s3 + $0x34] sm:$0xf]
  %v403 = vld [vmem:[%s3 + $0x38] sm:$0xf]
  %v404 = vld [vmem:[%s3 + $0x3c] sm:$0xf]
  %v405 = vld [vmem:[%s3 + $0x40] sm:$0xf]
  %v406 = vld [vmem:[%s3 + $0x44] sm:$0xf]
  %v407 = vld [vmem:[%s3 + $0x48] sm:$0xf]
  %v408 = vld [vmem:[%s3 + $0x4c] sm:$0xf]
  %v409 = vld [vmem:[%s3 + $0x50] sm:$0x1]
  %v410 = vunpack.c.l.bf16 %v389
  %v411 = vunpack.c.l.bf16 %v390
  %v412 = vunpack.c.l.bf16 %v391
  %v413 = vunpack.c.l.bf16 %v392
  %v414 = vunpack.c.l.bf16 %v393
  %v415 = vunpack.c.l.bf16 %v394
  %v416 = vunpack.c.l.bf16 %v395
  %v417 = vunpack.c.l.bf16 %v396
  %v418 = vunpack.c.l.bf16 %v397
  %v419 = vunpack.c.l.bf16 %v398
  %v420 = vunpack.c.l.bf16 %v399
  %v421 = vunpack.c.l.bf16 %v400
  %v422 = vunpack.c.l.bf16 %v401
  %v423 = vunpack.c.l.bf16 %v402
  %v424 = vunpack.c.l.bf16 %v403
  %v425 = vunpack.c.l.bf16 %v404
  %v426 = vunpack.c.l.bf16 %v405
  %v427 = vunpack.c.l.bf16 %v406
  %v428 = vunpack.c.l.bf16 %v407
  %v429 = vunpack.c.l.bf16 %v408
  %v430 = vunpack.c.l.bf16 %v409
  %v431 = vmul.f32 %v368, %v410
  %v432 = vmul.f32 %v369, %v411
  %v433 = vmul.f32 %v370, %v412
  %v434 = vmul.f32 %v371, %v413
  %v435 = vmul.f32 %v372, %v414
  %v436 = vmul.f32 %v373, %v415
  %v437 = vmul.f32 %v374, %v416
  %v438 = vmul.f32 %v375, %v417
  %v439 = vmul.f32 %v376, %v418
  %v440 = vmul.f32 %v377, %v419
  %v441 = vmul.f32 %v378, %v420
  %v442 = vmul.f32 %v379, %v421
  %v443 = vmul.f32 %v380, %v422
  %v444 = vmul.f32 %v381, %v423
  %v445 = vmul.f32 %v382, %v424
  %v446 = vmul.f32 %v383, %v425
  %v447 = vmul.f32 %v384, %v426
  %v448 = vmul.f32 %v385, %v427
  %v449 = vmul.f32 %v386, %v428
  %v450 = vmul.f32 %v387, %v429
  %v451 = vmul.f32 %v388, %v430
  %v452 = vpack.c.bf16 %v432, %v431
  %v453 = vpack.c.bf16 %v434, %v433
  %v454 = vpack.c.bf16 %v436, %v435
  %v455 = vpack.c.bf16 %v438, %v437
  %v456 = vpack.c.bf16 %v440, %v439
  %v457 = vpack.c.bf16 %v442, %v441
  %v458 = vpack.c.bf16 %v444, %v443
  %v459 = vpack.c.bf16 %v446, %v445
  %v460 = vpack.c.bf16 %v448, %v447
  %v461 = vpack.c.bf16 %v450, %v449
  %v462 = vpack.c.bf16 %v451, %v451
  %v474 = vunpack.c.l.b16 %v452
  %v475 = vunpack.c.h.b16 %v452
  %v476 = vunpack.c.l.b16 %v453
  %v477 = vunpack.c.h.b16 %v453
  %v478 = vunpack.c.l.b16 %v454
  %v479 = vunpack.c.h.b16 %v454
  %v480 = vunpack.c.l.b16 %v455
  %v481 = vunpack.c.h.b16 %v455
  %v482 = vunpack.c.l.b16 %v456
  %v483 = vunpack.c.h.b16 %v456
  %v484 = vunpack.c.l.b16 %v457
  %v485 = vunpack.c.h.b16 %v457
  %v486 = vunpack.c.l.b16 %v458
  %v487 = vunpack.c.h.b16 %v458
  %v488 = vunpack.c.l.b16 %v459
  %v489 = vunpack.c.h.b16 %v459
  %v490 = vunpack.c.l.b16 %v460
  %v491 = vunpack.c.h.b16 %v460
  %v492 = vunpack.c.l.b16 %v461
  %v493 = vunpack.c.h.b16 %v461
  %v494 = vunpack.c.l.b16 %v462
  %v495 = vpack.c.b16 %v474, %v474
  %v496 = vpack.c.b16 %v475, %v475
  %v497 = vpack.c.b16 %v476, %v476
  %v498 = vpack.c.b16 %v477, %v477
  %v499 = vpack.c.b16 %v478, %v478
  %v500 = vpack.c.b16 %v479, %v479
  %v501 = vpack.c.b16 %v480, %v480
  %v502 = vpack.c.b16 %v481, %v481
  %v503 = vpack.c.b16 %v482, %v482
  %v504 = vpack.c.b16 %v483, %v483
  %v505 = vpack.c.b16 %v484, %v484
  %v506 = vpack.c.b16 %v485, %v485
  %v507 = vpack.c.b16 %v486, %v486
  %v508 = vpack.c.b16 %v487, %v487
  %v509 = vpack.c.b16 %v488, %v488
  %v510 = vpack.c.b16 %v489, %v489
  %v511 = vpack.c.b16 %v490, %v490
  %v512 = vpack.c.b16 %v491, %v491
  %v513 = vpack.c.b16 %v492, %v492
  %v514 = vpack.c.b16 %v493, %v493
  %v515 = vpack.c.b16 %v494, %v494
  %vm537 = vcmask 257024
  %538 = vst.msk [vmem:[%s4] sm:$0xf] %vm537, %v495
  %539 = vst.msk [vmem:[%s4 + $0x4] sm:$0xf] %vm537, %v496
  %540 = vst.msk [vmem:[%s4 + $0x8] sm:$0xf] %vm537, %v497
  %541 = vst.msk [vmem:[%s4 + $0xc] sm:$0xf] %vm537, %v498
  %542 = vst.msk [vmem:[%s4 + $0x10] sm:$0xf] %vm537, %v499
  %543 = vst.msk [vmem:[%s4 + $0x14] sm:$0xf] %vm537, %v500
  %544 = vst.msk [vmem:[%s4 + $0x18] sm:$0xf] %vm537, %v501
  %545 = vst.msk [vmem:[%s4 + $0x1c] sm:$0xf] %vm537, %v502
  %546 = vst.msk [vmem:[%s4 + $0x20] sm:$0xf] %vm537, %v503
  %547 = vst.msk [vmem:[%s4 + $0x24] sm:$0xf] %vm537, %v504
  %548 = vst.msk [vmem:[%s4 + $0x28] sm:$0xf] %vm537, %v505
  %549 = vst.msk [vmem:[%s4 + $0x2c] sm:$0xf] %vm537, %v506
  %550 = vst.msk [vmem:[%s4 + $0x30] sm:$0xf] %vm537, %v507
  %551 = vst.msk [vmem:[%s4 + $0x34] sm:$0xf] %vm537, %v508
  %552 = vst.msk [vmem:[%s4 + $0x38] sm:$0xf] %vm537, %v509
  %553 = vst.msk [vmem:[%s4 + $0x3c] sm:$0xf] %vm537, %v510
  %554 = vst.msk [vmem:[%s4 + $0x40] sm:$0xf] %vm537, %v511
  %555 = vst.msk [vmem:[%s4 + $0x44] sm:$0xf] %vm537, %v512
  %556 = vst.msk [vmem:[%s4 + $0x48] sm:$0xf] %vm537, %v513
  %557 = vst.msk [vmem:[%s4 + $0x4c] sm:$0xf] %vm537, %v514
  %vm558 = vcmask 253952
  %559 = vst.msk [vmem:[%s4 + $0x50] sm:$0x1] %vm558, %v515
  // Predicated region
  $region18: #{net_forward.16} parent=0 // pred_check
    _
  $region19: #{net_forward.16} parent=0 // pred_check_branch
    %561 = sbr.rel (0) target = $region21
  $region20: #{net_forward.16} parent=0 // pred_region
    _
  $region21: #{net_forward.16} parent=0 // pred_fallthru
    _
  // Predicated region
  $region22: #{net_forward.16} parent=0 // pred_check
    _
  $region23: #{net_forward.16} parent=0 // pred_check_branch
    %563 = sbr.rel (0) target = $region25
  $region24: #{net_forward.16} parent=0 // pred_region
    _
  $region25: #{net_forward.16} parent=0 // pred_fallthru
    _

// kernel: net_forward.17
$region0: #{net_forward.17}
  #allocation0 [shape = 'u32[]', space=smem, size = 0x4, offset = 0x4, fixed_abs, tag = 'smem constant byte address 0x4 - core index']
  #allocation1 [shape = 'u32[144,128]{1,0:T(1,128)}', space=vmem, size = 0x12000, scoped, tag = 'internal scratch']
  %s0 = inlined_call_operand.vmem [shape: bf16[162,288], index: 0, kind: input, shape index: {}]
  %s1 = inlined_call_operand.vmem [shape: bf16[288,32], index: 1, kind: input, shape index: {}]
  %s2 = inlined_call_operand.vmem [shape: f32[1,32], index: 2, kind: input, shape index: {}]
  %s3 = inlined_call_operand.vmem [shape: bf16[162,32], index: 3, kind: output, shape index: {}]
  %s4 = sld [smem:[#allocation0]]
  $region22: #{net_forward.17} parent=0
    _
  %s6 = ssub.s32 1, %s4
  %s7 = scalar_select 0, %s6, %s4
  // Predicated region
  $region2: #{net_forward.17} parent=0 // pred_check
    _
  $region3: #{net_forward.17} parent=0 // pred_check_branch
    %9 = sbr.rel (0) target = $region5
  $region4: #{net_forward.17} parent=0 // pred_region
    _
  $region5: #{net_forward.17} parent=0 // pred_fallthru
    _
  // Predicated region
  $region6: #{net_forward.17} parent=0 // pred_check
    _
  $region7: #{net_forward.17} parent=0 // pred_check_branch
    %11 = sbr.rel (0) target = $region9
  $region8: #{net_forward.17} parent=0 // pred_region
    _
  $region9: #{net_forward.17} parent=0 // pred_fallthru
    _
  // Predicated region
  $region10: #{net_forward.17} parent=0 // pred_check
    _
  $region11: #{net_forward.17} parent=0 // pred_check_branch
    %13 = sbr.rel (0) target = $region13
  $region12: #{net_forward.17} parent=0 // pred_region
    _
  $region13: #{net_forward.17} parent=0 // pred_fallthru
    _
  %v15 = vld [vmem:[%s0] sm:$0xff]
  %v16 = vld [vmem:[%s0 + $0x8] sm:$0xf]
  %v17 = vld [vmem:[%s0 + $0xc] sm:$0xff]
  %v18 = vld [vmem:[%s0 + $0x14] sm:$0xf]
  %v19 = vld [vmem:[%s0 + $0x18] sm:$0xff]
  %v20 = vld [vmem:[%s0 + $0x20] sm:$0xf]
  %v21 = vld [vmem:[%s0 + $0x24] sm:$0xff]
  %v22 = vld [vmem:[%s0 + $0x2c] sm:$0xf]
  %v23 = vld [vmem:[%s0 + $0x30] sm:$0xff]
  %v24 = vld [vmem:[%s0 + $0x38] sm:$0xf]
  %v25 = vld [vmem:[%s0 + $0x3c] sm:$0xff]
  %v26 = vld [vmem:[%s0 + $0x44] sm:$0xf]
  %v27 = vld [vmem:[%s0 + $0x48] sm:$0xff]
  %v28 = vld [vmem:[%s0 + $0x50] sm:$0xf]
  %v29 = vld [vmem:[%s0 + $0x54] sm:$0xff]
  %v30 = vld [vmem:[%s0 + $0x5c] sm:$0xf]
  %v31 = vld [vmem:[%s0 + $0x60] sm:$0xff]
  %v32 = vld [vmem:[%s0 + $0x68] sm:$0xf]
  %v33 = vld [vmem:[%s0 + $0x6c] sm:$0xff]
  %v34 = vld [vmem:[%s0 + $0x74] sm:$0xf]
  %v35 = vld [vmem:[%s0 + $0x78] sm:$0xff]
  %v36 = vld [vmem:[%s0 + $0x80] sm:$0xf]
  %v37 = vld [vmem:[%s0 + $0x84] sm:$0xff]
  %v38 = vld [vmem:[%s0 + $0x8c] sm:$0xf]
  %v39 = vld [vmem:[%s0 + $0x90] sm:$0xff]
  %v40 = vld [vmem:[%s0 + $0x98] sm:$0xf]
  %v41 = vld [vmem:[%s0 + $0x9c] sm:$0xff]
  %v42 = vld [vmem:[%s0 + $0xa4] sm:$0xf]
  %v43 = vld [vmem:[%s0 + $0xa8] sm:$0xff]
  %v44 = vld [vmem:[%s0 + $0xb0] sm:$0xf]
  %v45 = vld [vmem:[%s0 + $0xb4] sm:$0xff]
  %v46 = vld [vmem:[%s0 + $0xbc] sm:$0xf]
  %v47 = vld [vmem:[%s0 + $0xc0] sm:$0xff]
  %v48 = vld [vmem:[%s0 + $0xc8] sm:$0xf]
  %v49 = vld [vmem:[%s0 + $0xcc] sm:$0xff]
  %v50 = vld [vmem:[%s0 + $0xd4] sm:$0xf]
  %v51 = vld [vmem:[%s0 + $0xd8] sm:$0xff]
  %v52 = vld [vmem:[%s0 + $0xe0] sm:$0xf]
  %v53 = vld [vmem:[%s0 + $0xe4] sm:$0xff]
  %v54 = vld [vmem:[%s0 + $0xec] sm:$0xf]
  %v55 = vld [vmem:[%s0 + $0xf0] sm:$0x11]
  %v56 = vld [vmem:[%s0 + $0xf8] sm:$0x1]
  %v57 = vld [vmem:[%s1] sm:$0xf]
  %v58 = vld [vmem:[%s1 + $0x4] sm:$0xf]
  %v59 = vld [vmem:[%s1 + $0x8] sm:$0xf]
  %v60 = vld [vmem:[%s1 + $0xc] sm:$0xf]
  %v61 = vld [vmem:[%s1 + $0x10] sm:$0xf]
  %v62 = vld [vmem:[%s1 + $0x14] sm:$0xf]
  %v63 = vld [vmem:[%s1 + $0x18] sm:$0xf]
  %v64 = vld [vmem:[%s1 + $0x1c] sm:$0xf]
  %v65 = vld [vmem:[%s1 + $0x20] sm:$0xf]
  %v66 = vld [vmem:[%s1 + $0x24] sm:$0xf]
  %v67 = vld [vmem:[%s1 + $0x28] sm:$0xf]
  %v68 = vld [vmem:[%s1 + $0x2c] sm:$0xf]
  %v69 = vld [vmem:[%s1 + $0x30] sm:$0xf]
  %v70 = vld [vmem:[%s1 + $0x34] sm:$0xf]
  %v71 = vld [vmem:[%s1 + $0x38] sm:$0xf]
  %v72 = vld [vmem:[%s1 + $0x3c] sm:$0xf]
  %v73 = vld [vmem:[%s1 + $0x40] sm:$0xf]
  %v74 = vld [vmem:[%s1 + $0x44] sm:$0xf]
  %v75 = vld [vmem:[%s1 + $0x48] sm:$0xf]
  %v76 = vld [vmem:[%s1 + $0x4c] sm:$0xf]
  %v77 = vld [vmem:[%s1 + $0x50] sm:$0xf]
  %v78 = vld [vmem:[%s1 + $0x54] sm:$0xf]
  %v79 = vld [vmem:[%s1 + $0x58] sm:$0xf]
  %v80 = vld [vmem:[%s1 + $0x5c] sm:$0xf]
  %v81 = vld [vmem:[%s1 + $0x60] sm:$0xf]
  %v82 = vld [vmem:[%s1 + $0x64] sm:$0xf]
  %v83 = vld [vmem:[%s1 + $0x68] sm:$0xf]
  %v84 = vld [vmem:[%s1 + $0x6c] sm:$0xf]
  %v85 = vld [vmem:[%s1 + $0x70] sm:$0xf]
  %v86 = vld [vmem:[%s1 + $0x74] sm:$0xf]
  %v87 = vld [vmem:[%s1 + $0x78] sm:$0xf]
  %v88 = vld [vmem:[%s1 + $0x7c] sm:$0xf]
  %v89 = vld [vmem:[%s1 + $0x80] sm:$0xf]
  %v90 = vld [vmem:[%s1 + $0x84] sm:$0xf]
  %v91 = vld [vmem:[%s1 + $0x88] sm:$0xf]
  %v92 = vld [vmem:[%s1 + $0x8c] sm:$0xf]
  %v93 = vld [vmem:[%s2] sm:$0x1]
  %v95 = vlaneseq
  %v96 = vshrl.u32 %v95, 7
  %v97 = vsub.s32 0, %v96
  %v98 = vrot.slane %v93, %v97
  %v142 = vunpack.c.l.b16 %v15
  %v143 = vunpack.c.h.b16 %v15
  %v144 = vunpack.c.l.b16 %v16
  %v145 = vunpack.c.l.b16 %v17
  %v146 = vunpack.c.h.b16 %v17
  %v147 = vunpack.c.l.b16 %v18
  %v148 = vunpack.c.l.b16 %v19
  %v149 = vunpack.c.h.b16 %v19
  %v150 = vunpack.c.l.b16 %v20
  %v151 = vunpack.c.l.b16 %v21
  %v152 = vunpack.c.h.b16 %v21
  %v153 = vunpack.c.l.b16 %v22
  %v154 = vunpack.c.l.b16 %v23
  %v155 = vunpack.c.h.b16 %v23
  %v156 = vunpack.c.l.b16 %v24
  %v157 = vunpack.c.l.b16 %v25
  %v158 = vunpack.c.h.b16 %v25
  %v159 = vunpack.c.l.b16 %v26
  %v160 = vunpack.c.l.b16 %v27
  %v161 = vunpack.c.h.b16 %v27
  %v162 = vunpack.c.l.b16 %v28
  %v163 = vunpack.c.l.b16 %v29
  %v164 = vunpack.c.h.b16 %v29
  %v165 = vunpack.c.l.b16 %v30
  %v166 = vunpack.c.l.b16 %v31
  %v167 = vunpack.c.h.b16 %v31
  %v168 = vunpack.c.l.b16 %v32
  %v169 = vunpack.c.l.b16 %v33
  %v170 = vunpack.c.h.b16 %v33
  %v171 = vunpack.c.l.b16 %v34
  %v172 = vunpack.c.l.b16 %v35
  %v173 = vunpack.c.h.b16 %v35
  %v174 = vunpack.c.l.b16 %v36
  %v175 = vunpack.c.l.b16 %v37
  %v176 = vunpack.c.h.b16 %v37
  %v177 = vunpack.c.l.b16 %v38
  %v178 = vunpack.c.l.b16 %v39
  %v179 = vunpack.c.h.b16 %v39
  %v180 = vunpack.c.l.b16 %v40
  %v181 = vunpack.c.l.b16 %v41
  %v182 = vunpack.c.h.b16 %v41
  %v183 = vunpack.c.l.b16 %v42
  %v184 = vunpack.c.l.b16 %v43
  %v185 = vunpack.c.h.b16 %v43
  %v186 = vunpack.c.l.b16 %v44
  %v187 = vunpack.c.l.b16 %v45
  %v188 = vunpack.c.h.b16 %v45
  %v189 = vunpack.c.l.b16 %v46
  %v190 = vunpack.c.l.b16 %v47
  %v191 = vunpack.c.h.b16 %v47
  %v192 = vunpack.c.l.b16 %v48
  %v193 = vunpack.c.l.b16 %v49
  %v194 = vunpack.c.h.b16 %v49
  %v195 = vunpack.c.l.b16 %v50
  %v196 = vunpack.c.l.b16 %v51
  %v197 = vunpack.c.h.b16 %v51
  %v198 = vunpack.c.l.b16 %v52
  %v199 = vunpack.c.l.b16 %v53
  %v200 = vunpack.c.h.b16 %v53
  %v201 = vunpack.c.l.b16 %v54
  %v202 = vunpack.c.l.b16 %v55
  %v203 = vunpack.c.h.b16 %v55
  %v204 = vunpack.c.l.b16 %v56
  %v205 = vpack.c.b16 %v145, %v142
  %v206 = vpack.c.b16 %v146, %v143
  %v207 = vpack.c.b16 %v147, %v144
  %v208 = vpack.c.b16 %v151, %v148
  %v209 = vpack.c.b16 %v152, %v149
  %v210 = vpack.c.b16 %v153, %v150
  %v211 = vpack.c.b16 %v157, %v154
  %v212 = vpack.c.b16 %v158, %v155
  %v213 = vpack.c.b16 %v159, %v156
  %v214 = vpack.c.b16 %v163, %v160
  %v215 = vpack.c.b16 %v164, %v161
  %v216 = vpack.c.b16 %v165, %v162
  %v217 = vpack.c.b16 %v169, %v166
  %v218 = vpack.c.b16 %v170, %v167
  %v219 = vpack.c.b16 %v171, %v168
  %v220 = vpack.c.b16 %v175, %v172
  %v221 = vpack.c.b16 %v176, %v173
  %v222 = vpack.c.b16 %v177, %v174
  %v223 = vpack.c.b16 %v181, %v178
  %v224 = vpack.c.b16 %v182, %v179
  %v225 = vpack.c.b16 %v183, %v180
  %v226 = vpack.c.b16 %v187, %v184
  %v227 = vpack.c.b16 %v188, %v185
  %v228 = vpack.c.b16 %v189, %v186
  %v229 = vpack.c.b16 %v193, %v190
  %v230 = vpack.c.b16 %v194, %v191
  %v231 = vpack.c.b16 %v195, %v192
  %v232 = vpack.c.b16 %v199, %v196
  %v233 = vpack.c.b16 %v200, %v197
  %v234 = vpack.c.b16 %v201, %v198
  %v235 = vpack.c.b16 %v202, %v202
  %v236 = vpack.c.b16 %v203, %v203
  %v237 = vpack.c.b16 %v204, %v204
  %v296 = vunpack.c.l.b16 %v57
  %v297 = vunpack.c.l.b16 %v58
  %v298 = vunpack.c.l.b16 %v59
  %v299 = vunpack.c.l.b16 %v60
  %v300 = vunpack.c.l.b16 %v61
  %v301 = vunpack.c.l.b16 %v62
  %v302 = vunpack.c.l.b16 %v63
  %v303 = vunpack.c.l.b16 %v64
  %v304 = vunpack.c.l.b16 %v65
  %v305 = vunpack.c.l.b16 %v66
  %v306 = vunpack.c.l.b16 %v67
  %v307 = vunpack.c.l.b16 %v68
  %v308 = vunpack.c.l.b16 %v69
  %v309 = vunpack.c.l.b16 %v70
  %v310 = vunpack.c.l.b16 %v71
  %v311 = vunpack.c.l.b16 %v72
  %v312 = vunpack.c.l.b16 %v73
  %v313 = vunpack.c.l.b16 %v74
  %v314 = vunpack.c.l.b16 %v75
  %v315 = vunpack.c.l.b16 %v76
  %v316 = vunpack.c.l.b16 %v77
  %v317 = vunpack.c.l.b16 %v78
  %v318 = vunpack.c.l.b16 %v79
  %v319 = vunpack.c.l.b16 %v80
  %v320 = vunpack.c.l.b16 %v81
  %v321 = vunpack.c.l.b16 %v82
  %v322 = vunpack.c.l.b16 %v83
  %v323 = vunpack.c.l.b16 %v84
  %v324 = vunpack.c.l.b16 %v85
  %v325 = vunpack.c.l.b16 %v86
  %v326 = vunpack.c.l.b16 %v87
  %v327 = vunpack.c.l.b16 %v88
  %v328 = vunpack.c.l.b16 %v89
  %v329 = vunpack.c.l.b16 %v90
  %v330 = vunpack.c.l.b16 %v91
  %v331 = vunpack.c.l.b16 %v92
  %v332 = vpack.c.b16 %v297, %v296
  %v333 = vpack.c.b16 %v299, %v298
  %v334 = vpack.c.b16 %v301, %v300
  %v335 = vpack.c.b16 %v303, %v302
  %v336 = vpack.c.b16 %v305, %v304
  %v337 = vpack.c.b16 %v307, %v306
  %v338 = vpack.c.b16 %v309, %v308
  %v339 = vpack.c.b16 %v311, %v310
  %v340 = vpack.c.b16 %v313, %v312
  %v341 = vpack.c.b16 %v315, %v314
  %v342 = vpack.c.b16 %v317, %v316
  %v343 = vpack.c.b16 %v319, %v318
  %v344 = vpack.c.b16 %v321, %v320
  %v345 = vpack.c.b16 %v323, %v322
  %v346 = vpack.c.b16 %v325, %v324
  %v347 = vpack.c.b16 %v327, %v326
  %v348 = vpack.c.b16 %v329, %v328
  %v349 = vpack.c.b16 %v331, %v330
  %vm368 = vcmask 261120
  %v370 = vsel %vm368, %v207, 0
  %v373 = vsel %vm368, %v210, 0
  %v376 = vsel %vm368, %v213, 0
  %v379 = vsel %vm368, %v216, 0
  %v382 = vsel %vm368, %v219, 0
  %v385 = vsel %vm368, %v222, 0
  %v388 = vsel %vm368, %v225, 0
  %v391 = vsel %vm368, %v228, 0
  %v394 = vsel %vm368, %v231, 0
  %v397 = vsel %vm368, %v234, 0
  %v400 = vsel %vm368, %v237, 0
  %402 = vmatprep.subr.bf16.mxu0 0
  %403 = vmatpush1.bf16.msra.mxu0 %v332
  %404 = vmatprep.subr.bf16.mxu0 0
  %405 = vmatpush1.bf16.msra.mxu0 %v333
  %406 = vmatprep.subr.bf16.mxu0 0
  %407 = vmatpush1.bf16.msra.mxu0 %v334
  %408 = vmatprep.subr.bf16.mxu0 0
  %409 = vmatpush1.bf16.msra.mxu0 %v335
  %410 = vmatprep.subr.bf16.mxu0 0
  %411 = vmatpush1.bf16.msra.mxu0 %v336
  %412 = vmatprep.subr.bf16.mxu0 0
  %413 = vmatpush1.bf16.msra.mxu0 %v337
  %414 = vmatprep.subr.bf16.mxu0 0
  %415 = vmatpush1.bf16.msra.mxu0 %v338
  %416 = vmatprep.subr.bf16.mxu0 0
  %417 = vmatpush1.bf16.msra.mxu0 %v339
  %418 = vmatprep.subr.bf16.mxu0 0
  %419 = vmatpush1.bf16.msra.mxu0 %v340
  %420 = vmatprep.subr.bf16.mxu0 0
  %421 = vmatpush1.bf16.msra.mxu0 %v341
  %422 = vmatprep.subr.bf16.mxu0 0
  %423 = vmatpush1.bf16.msra.mxu0 %v342
  %424 = vmatprep.subr.bf16.mxu0 0
  %425 = vmatpush1.bf16.msra.mxu0 %v343
  %426 = vmatprep.subr.bf16.mxu0 0
  %427 = vmatpush1.bf16.msra.mxu0 %v344
  %428 = vmatprep.subr.bf16.mxu0 0
  %429 = vmatpush1.bf16.msra.mxu0 %v345
  %430 = vmatprep.subr.bf16.mxu0 0
  %431 = vmatpush1.bf16.msra.mxu0 %v346
  %432 = vmatprep.subr.bf16.mxu0 0
  %433 = vmatpush1.bf16.msra.mxu0 %v347
  %434 = vmatprep.mubr.bf16.mxu0 %v206
  %435 = vmatmul.mubr.bf16.gmra.mrb[0].mxu0 %v205
  %v436 = vpop.f32.mrb[0].mxu0
  %v437 = vadd.f32 %v98, %v436
  %v438 = vpop.f32.mrb[0].mxu0
  %v439 = vpop.f32.mrb[0].mxu0
  %v440 = vadd.f32 %v98, %v439
  %v441 = vpop.f32.mrb[0].mxu0
  %442 = vmatprep.mubr.bf16.mxu0 %v209
  %443 = vmatmul.mubr.bf16.gmra.mrb[0].mxu0 %v208
  %v444 = vpop.f32.mrb[0].mxu0
  %v445 = vadd.f32 %v98, %v444
  %v446 = vpop.f32.mrb[0].mxu0
  %v447 = vpop.f32.mrb[0].mxu0
  %v448 = vadd.f32 %v98, %v447
  %v449 = vpop.f32.mrb[0].mxu0
  %450 = vmatprep.mubr.bf16.mxu0 %v212
  %451 = vmatmul.mubr.bf16.gmra.mrb[0].mxu0 %v211
  %v452 = vpop.f32.mrb[0].mxu0
  %v453 = vadd.f32 %v98, %v452
  %v454 = vpop.f32.mrb[0].mxu0
  %v455 = vpop.f32.mrb[0].mxu0
  %v456 = vadd.f32 %v98, %v455
  %v457 = vpop.f32.mrb[0].mxu0
  %458 = vmatprep.mubr.bf16.mxu0 %v215
  %459 = vmatmul.mubr.bf16.gmra.mrb[0].mxu0 %v214
  %v460 = vpop.f32.mrb[0].mxu0
  %v461 = vadd.f32 %v98, %v460
  %v462 = vpop.f32.mrb[0].mxu0
  %v463 = vpop.f32.mrb[0].mxu0
  %v464 = vadd.f32 %v98, %v463
  %v465 = vpop.f32.mrb[0].mxu0
  %466 = vmatprep.mubr.bf16.mxu0 %v218
  %467 = vmatmul.mubr.bf16.gmra.mrb[0].mxu0 %v217
  %v468 = vpop.f32.mrb[0].mxu0
  %v469 = vadd.f32 %v98, %v468
  %v470 = vpop.f32.mrb[0].mxu0
  %v471 = vpop.f32.mrb[0].mxu0
  %v472 = vadd.f32 %v98, %v471
  %v473 = vpop.f32.mrb[0].mxu0
  %474 = vmatprep.mubr.bf16.mxu0 %v221
  %475 = vmatmul.mubr.bf16.gmra.mrb[0].mxu0 %v220
  %v476 = vpop.f32.mrb[0].mxu0
  %v477 = vadd.f32 %v98, %v476
  %v478 = vpop.f32.mrb[0].mxu0
  %v479 = vpop.f32.mrb[0].mxu0
  %v480 = vadd.f32 %v98, %v479
  %v481 = vpop.f32.mrb[0].mxu0
  %482 = vmatprep.mubr.bf16.mxu0 %v224
  %483 = vmatmul.mubr.bf16.gmra.mrb[0].mxu0 %v223
  %v484 = vpop.f32.mrb[0].mxu0
  %v485 = vadd.f32 %v98, %v484
  %v486 = vpop.f32.mrb[0].mxu0
  %v487 = vpop.f32.mrb[0].mxu0
  %v488 = vadd.f32 %v98, %v487
  %v489 = vpop.f32.mrb[0].mxu0
  %490 = vmatprep.mubr.bf16.mxu0 %v227
  %491 = vmatmul.mubr.bf16.gmra.mrb[0].mxu0 %v226
  %v492 = vpop.f32.mrb[0].mxu0
  %v493 = vadd.f32 %v98, %v492
  %v494 = vpop.f32.mrb[0].mxu0
  %v495 = vpop.f32.mrb[0].mxu0
  %v496 = vadd.f32 %v98, %v495
  %v497 = vpop.f32.mrb[0].mxu0
  %498 = vmatprep.mubr.bf16.mxu0 %v230
  %499 = vmatmul.mubr.bf16.gmra.mrb[0].mxu0 %v229
  %v500 = vpop.f32.mrb[0].mxu0
  %v501 = vadd.f32 %v98, %v500
  %v502 = vpop.f32.mrb[0].mxu0
  %v503 = vpop.f32.mrb[0].mxu0
  %v504 = vadd.f32 %v98, %v503
  %v505 = vpop.f32.mrb[0].mxu0
  %506 = vmatprep.mubr.bf16.mxu0 %v233
  %507 = vmatmul.mubr.bf16.gmra.mrb[0].mxu0 %v232
  %v508 = vpop.f32.mrb[0].mxu0
  %v509 = vadd.f32 %v98, %v508
  %v510 = vpop.f32.mrb[0].mxu0
  %v511 = vpop.f32.mrb[0].mxu0
  %v512 = vadd.f32 %v98, %v511
  %v513 = vpop.f32.mrb[0].mxu0
  %514 = vmatprep.mubr.bf16.mxu0 %v236
  %515 = vmatmul.mubr.bf16.gmra.mrb[0].mxu0 %v235
  %v516 = vpop.f32.mrb[0].mxu0
  %v517 = vadd.f32 %v98, %v516
  %v518 = vpop.f32.mrb[0].mxu0
  %v519 = vpop.f32.mrb[0].mxu0
  %v520 = vpop.f32.mrb[0].mxu0
  %521 = vdwg.mxu0
  %522 = vmatprep.subr.bf16.mxu0 0
  %523 = vmatpush1.bf16.msra.mxu0 %v348
  %524 = vmatprep.subr.bf16.mxu0 0
  %525 = vmatpush1.bf16.msra.mxu0 %v349
  %526 = vmatprep.subr.bf16.mxu0 0
  %527 = vmatpush1.bf16.msra.mxu0 0
  %528 = vmatprep.subr.bf16.mxu0 0
  %529 = vmatpush1.bf16.msra.mxu0 0
  %530 = vmatprep.subr.bf16.mxu0 0
  %531 = vmatpush1.bf16.msra.mxu0 0
  %532 = vmatprep.subr.bf16.mxu0 0
  %533 = vmatpush1.bf16.msra.mxu0 0
  %534 = vmatprep.subr.bf16.mxu0 0
  %535 = vmatpush1.bf16.msra.mxu0 0
  %536 = vmatprep.subr.bf16.mxu0 0
  %537 = vmatpush1.bf16.msra.mxu0 0
  %538 = vmatprep.subr.bf16.mxu0 0
  %539 = vmatpush1.bf16.msra.mxu0 0
  %540 = vmatprep.subr.bf16.mxu0 0
  %541 = vmatpush1.bf16.msra.mxu0 0
  %542 = vmatprep.subr.bf16.mxu0 0
  %543 = vmatpush1.bf16.msra.mxu0 0
  %544 = vmatprep.subr.bf16.mxu0 0
  %545 = vmatpush1.bf16.msra.mxu0 0
  %546 = vmatprep.subr.bf16.mxu0 0
  %547 = vmatpush1.bf16.msra.mxu0 0
  %548 = vmatprep.subr.bf16.mxu0 0
  %549 = vmatpush1.bf16.msra.mxu0 0
  %550 = vmatprep.subr.bf16.mxu0 0
  %551 = vmatpush1.bf16.msra.mxu0 0
  %552 = vmatprep.subr.bf16.mxu0 0
  %553 = vmatpush1.bf16.msra.mxu0 0
  %554 = vmatprep.mubr.bf16.mxu0 0
  %555 = vmatmul.mubr.bf16.gmra.mrb[0].mxu0 %v370
  %v556 = vpop.f32.mrb[0].mxu0
  %v557 = vadd.f32 %v437, %v556
  %v558 = vpop.f32.mrb[0].mxu0
  %v559 = vpop.f32.mrb[0].mxu0
  %v560 = vadd.f32 %v440, %v559
  %v561 = vpop.f32.mrb[0].mxu0
  %562 = vmatprep.mubr.bf16.mxu0 0
  %563 = vmatmul.mubr.bf16.gmra.mrb[0].mxu0 %v373
  %v564 = vpop.f32.mrb[0].mxu0
  %v565 = vadd.f32 %v445, %v564
  %v566 = vpop.f32.mrb[0].mxu0
  %v567 = vpop.f32.mrb[0].mxu0
  %v568 = vadd.f32 %v448, %v567
  %v569 = vpop.f32.mrb[0].mxu0
  %570 = vmatprep.mubr.bf16.mxu0 0
  %571 = vmatmul.mubr.bf16.gmra.mrb[0].mxu0 %v376
  %v572 = vpop.f32.mrb[0].mxu0
  %v573 = vadd.f32 %v453, %v572
  %v574 = vpop.f32.mrb[0].mxu0
  %v575 = vpop.f32.mrb[0].mxu0
  %v576 = vadd.f32 %v456, %v575
  %v577 = vpop.f32.mrb[0].mxu0
  %578 = vmatprep.mubr.bf16.mxu0 0
  %579 = vmatmul.mubr.bf16.gmra.mrb[0].mxu0 %v379
  %v580 = vpop.f32.mrb[0].mxu0
  %v581 = vadd.f32 %v461, %v580
  %v582 = vpop.f32.mrb[0].mxu0
  %v583 = vpop.f32.mrb[0].mxu0
  %v584 = vadd.f32 %v464, %v583
  %v585 = vpop.f32.mrb[0].mxu0
  %586 = vmatprep.mubr.bf16.mxu0 0
  %587 = vmatmul.mubr.bf16.gmra.mrb[0].mxu0 %v382
  %v588 = vpop.f32.mrb[0].mxu0
  %v589 = vadd.f32 %v469, %v588
  %v590 = vpop.f32.mrb[0].mxu0
  %v591 = vpop.f32.mrb[0].mxu0
  %v592 = vadd.f32 %v472, %v591
  %v593 = vpop.f32.mrb[0].mxu0
  %594 = vmatprep.mubr.bf16.mxu0 0
  %595 = vmatmul.mubr.bf16.gmra.mrb[0].mxu0 %v385
  %v596 = vpop.f32.mrb[0].mxu0
  %v597 = vadd.f32 %v477, %v596
  %v598 = vpop.f32.mrb[0].mxu0
  %v599 = vpop.f32.mrb[0].mxu0
  %v600 = vadd.f32 %v480, %v599
  %v601 = vpop.f32.mrb[0].mxu0
  %602 = vmatprep.mubr.bf16.mxu0 0
  %603 = vmatmul.mubr.bf16.gmra.mrb[0].mxu0 %v388
  %v604 = vpop.f32.mrb[0].mxu0
  %v605 = vadd.f32 %v485, %v604
  %v606 = vpop.f32.mrb[0].mxu0
  %v607 = vpop.f32.mrb[0].mxu0
  %v608 = vadd.f32 %v488, %v607
  %v609 = vpop.f32.mrb[0].mxu0
  %610 = vmatprep.mubr.bf16.mxu0 0
  %611 = vmatmul.mubr.bf16.gmra.mrb[0].mxu0 %v391
  %v612 = vpop.f32.mrb[0].mxu0
  %v613 = vadd.f32 %v493, %v612
  %v614 = vpop.f32.mrb[0].mxu0
  %v615 = vpop.f32.mrb[0].mxu0
  %v616 = vadd.f32 %v496, %v615
  %v617 = vpop.f32.mrb[0].mxu0
  %618 = vmatprep.mubr.bf16.mxu0 0
  %619 = vmatmul.mubr.bf16.gmra.mrb[0].mxu0 %v394
  %v620 = vpop.f32.mrb[0].mxu0
  %v621 = vadd.f32 %v501, %v620
  %v622 = vpop.f32.mrb[0].mxu0
  %v623 = vpop.f32.mrb[0].mxu0
  %v624 = vadd.f32 %v504, %v623
  %v625 = vpop.f32.mrb[0].mxu0
  %626 = vmatprep.mubr.bf16.mxu0 0
  %627 = vmatmul.mubr.bf16.gmra.mrb[0].mxu0 %v397
  %v628 = vpop.f32.mrb[0].mxu0
  %v629 = vadd.f32 %v509, %v628
  %v630 = vpop.f32.mrb[0].mxu0
  %v631 = vpop.f32.mrb[0].mxu0
  %v632 = vadd.f32 %v512, %v631
  %v633 = vpop.f32.mrb[0].mxu0
  %634 = vmatprep.mubr.bf16.mxu0 0
  %635 = vmatmul.mubr.bf16.gmra.mrb[0].mxu0 %v400
  %v636 = vpop.f32.mrb[0].mxu0
  %v637 = vadd.f32 %v517, %v636
  %v638 = vpop.f32.mrb[0].mxu0
  %v639 = vpop.f32.mrb[0].mxu0
  %v640 = vpop.f32.mrb[0].mxu0
  %641 = vdwg.mxu0
  %v642 = vmax.f32 %v557, 0.0
  %v643 = vmax.f32 %v560, 0.0
  %v644 = vmax.f32 %v565, 0.0
  %v645 = vmax.f32 %v568, 0.0
  %v646 = vmax.f32 %v573, 0.0
  %v647 = vmax.f32 %v576, 0.0
  %v648 = vmax.f32 %v581, 0.0
  %v649 = vmax.f32 %v584, 0.0
  %v650 = vmax.f32 %v589, 0.0
  %v651 = vmax.f32 %v592, 0.0
  %v652 = vmax.f32 %v597, 0.0
  %v653 = vmax.f32 %v600, 0.0
  %v654 = vmax.f32 %v605, 0.0
  %v655 = vmax.f32 %v608, 0.0
  %v656 = vmax.f32 %v613, 0.0
  %v657 = vmax.f32 %v616, 0.0
  %v658 = vmax.f32 %v621, 0.0
  %v659 = vmax.f32 %v624, 0.0
  %v660 = vmax.f32 %v629, 0.0
  %v661 = vmax.f32 %v632, 0.0
  %v662 = vmax.f32 %v637, 0.0
  %v663 = vpack.c.bf16 %v643, %v642
  %v664 = vpack.c.bf16 %v645, %v644
  %v665 = vpack.c.bf16 %v647, %v646
  %v666 = vpack.c.bf16 %v649, %v648
  %v667 = vpack.c.bf16 %v651, %v650
  %v668 = vpack.c.bf16 %v653, %v652
  %v669 = vpack.c.bf16 %v655, %v654
  %v670 = vpack.c.bf16 %v657, %v656
  %v671 = vpack.c.bf16 %v659, %v658
  %v672 = vpack.c.bf16 %v661, %v660
  %v673 = vpack.c.bf16 %v662, %v662
  %v685 = vunpack.c.l.b16 %v663
  %v686 = vunpack.c.h.b16 %v663
  %v687 = vunpack.c.l.b16 %v664
  %v688 = vunpack.c.h.b16 %v664
  %v689 = vunpack.c.l.b16 %v665
  %v690 = vunpack.c.h.b16 %v665
  %v691 = vunpack.c.l.b16 %v666
  %v692 = vunpack.c.h.b16 %v666
  %v693 = vunpack.c.l.b16 %v667
  %v694 = vunpack.c.h.b16 %v667
  %v695 = vunpack.c.l.b16 %v668
  %v696 = vunpack.c.h.b16 %v668
  %v697 = vunpack.c.l.b16 %v669
  %v698 = vunpack.c.h.b16 %v669
  %v699 = vunpack.c.l.b16 %v670
  %v700 = vunpack.c.h.b16 %v670
  %v701 = vunpack.c.l.b16 %v671
  %v702 = vunpack.c.h.b16 %v671
  %v703 = vunpack.c.l.b16 %v672
  %v704 = vunpack.c.h.b16 %v672
  %v705 = vunpack.c.l.b16 %v673
  %v706 = vpack.c.b16 %v685, %v685
  %v707 = vpack.c.b16 %v686, %v686
  %v708 = vpack.c.b16 %v687, %v687
  %v709 = vpack.c.b16 %v688, %v688
  %v710 = vpack.c.b16 %v689, %v689
  %v711 = vpack.c.b16 %v690, %v690
  %v712 = vpack.c.b16 %v691, %v691
  %v713 = vpack.c.b16 %v692, %v692
  %v714 = vpack.c.b16 %v693, %v693
  %v715 = vpack.c.b16 %v694, %v694
  %v716 = vpack.c.b16 %v695, %v695
  %v717 = vpack.c.b16 %v696, %v696
  %v718 = vpack.c.b16 %v697, %v697
  %v719 = vpack.c.b16 %v698, %v698
  %v720 = vpack.c.b16 %v699, %v699
  %v721 = vpack.c.b16 %v700, %v700
  %v722 = vpack.c.b16 %v701, %v701
  %v723 = vpack.c.b16 %v702, %v702
  %v724 = vpack.c.b16 %v703, %v703
  %v725 = vpack.c.b16 %v704, %v704
  %v726 = vpack.c.b16 %v705, %v705
  %vm748 = vcmask 257024
  %749 = vst.msk [vmem:[%s3] sm:$0xf] %vm748, %v706
  %750 = vst.msk [vmem:[%s3 + $0x4] sm:$0xf] %vm748, %v707
  %751 = vst.msk [vmem:[%s3 + $0x8] sm:$0xf] %vm748, %v708
  %752 = vst.msk [vmem:[%s3 + $0xc] sm:$0xf] %vm748, %v709
  %753 = vst.msk [vmem:[%s3 + $0x10] sm:$0xf] %vm748, %v710
  %754 = vst.msk [vmem:[%s3 + $0x14] sm:$0xf] %vm748, %v711
  %755 = vst.msk [vmem:[%s3 + $0x18] sm:$0xf] %vm748, %v712
  %756 = vst.msk [vmem:[%s3 + $0x1c] sm:$0xf] %vm748, %v713
  %757 = vst.msk [vmem:[%s3 + $0x20] sm:$0xf] %vm748, %v714
  %758 = vst.msk [vmem:[%s3 + $0x24] sm:$0xf] %vm748, %v715
  %759 = vst.msk [vmem:[%s3 + $0x28] sm:$0xf] %vm748, %v716
  %760 = vst.msk [vmem:[%s3 + $0x2c] sm:$0xf] %vm748, %v717
  %761 = vst.msk [vmem:[%s3 + $0x30] sm:$0xf] %vm748, %v718
  %762 = vst.msk [vmem:[%s3 + $0x34] sm:$0xf] %vm748, %v719
  %763 = vst.msk [vmem:[%s3 + $0x38] sm:$0xf] %vm748, %v720
  %764 = vst.msk [vmem:[%s3 + $0x3c] sm:$0xf] %vm748, %v721
  %765 = vst.msk [vmem:[%s3 + $0x40] sm:$0xf] %vm748, %v722
  %766 = vst.msk [vmem:[%s3 + $0x44] sm:$0xf] %vm748, %v723
  %767 = vst.msk [vmem:[%s3 + $0x48] sm:$0xf] %vm748, %v724
  %768 = vst.msk [vmem:[%s3 + $0x4c] sm:$0xf] %vm748, %v725
  %vm769 = vcmask 253952
  %770 = vst.msk [vmem:[%s3 + $0x50] sm:$0x1] %vm769, %v726
  // Predicated region
  $region14: #{net_forward.17} parent=0 // pred_check
    _
  $region15: #{net_forward.17} parent=0 // pred_check_branch
    %772 = sbr.rel (0) target = $region17
  $region16: #{net_forward.17} parent=0 // pred_region
    _
  $region17: #{net_forward.17} parent=0 // pred_fallthru
    _
  // Predicated region
  $region18: #{net_forward.17} parent=0 // pred_check
    _
  $region19: #{net_forward.17} parent=0 // pred_check_branch
    %774 = sbr.rel (0) target = $region21
  $region20: #{net_forward.17} parent=0 // pred_region
    _
  $region21: #{net_forward.17} parent=0 // pred_fallthru
    _

// kernel: net_forward.19
$region0: #{net_forward.19}
  #allocation0 [shape = 'u32[]', space=smem, size = 0x4, offset = 0x4, fixed_abs, tag = 'smem constant byte address 0x4 - core index']
  #allocation1 [shape = 'u32[144,128]{1,0:T(1,128)}', space=vmem, size = 0x12000, scoped, tag = 'internal scratch']
  %s0 = inlined_call_operand.vmem [shape: bf16[32,288], index: 0, kind: input, shape index: {}]
  %s1 = inlined_call_operand.vmem [shape: bf16[288,64], index: 1, kind: input, shape index: {}]
  %s2 = inlined_call_operand.vmem [shape: f32[1,64], index: 2, kind: input, shape index: {}]
  %s3 = inlined_call_operand.vmem [shape: bf16[32,64], index: 3, kind: input, shape index: {}]
  %s4 = inlined_call_operand.vmem [shape: bf16[32,64], index: 4, kind: output, shape index: {}]
  %s5 = sld [smem:[#allocation0]]
  $region26: #{net_forward.19} parent=0
    _
  %s7 = ssub.s32 1, %s5
  %s8 = scalar_select 0, %s7, %s5
  // Predicated region
  $region2: #{net_forward.19} parent=0 // pred_check
    _
  $region3: #{net_forward.19} parent=0 // pred_check_branch
    %10 = sbr.rel (0) target = $region5
  $region4: #{net_forward.19} parent=0 // pred_region
    _
  $region5: #{net_forward.19} parent=0 // pred_fallthru
    _
  // Predicated region
  $region6: #{net_forward.19} parent=0 // pred_check
    _
  $region7: #{net_forward.19} parent=0 // pred_check_branch
    %12 = sbr.rel (0) target = $region9
  $region8: #{net_forward.19} parent=0 // pred_region
    _
  $region9: #{net_forward.19} parent=0 // pred_fallthru
    _
  // Predicated region
  $region10: #{net_forward.19} parent=0 // pred_check
    _
  $region11: #{net_forward.19} parent=0 // pred_check_branch
    %14 = sbr.rel (0) target = $region13
  $region12: #{net_forward.19} parent=0 // pred_region
    _
  $region13: #{net_forward.19} parent=0 // pred_fallthru
    _
  // Predicated region
  $region14: #{net_forward.19} parent=0 // pred_check
    _
  $region15: #{net_forward.19} parent=0 // pred_check_branch
    %16 = sbr.rel (0) target = $region17
  $region16: #{net_forward.19} parent=0 // pred_region
    _
  $region17: #{net_forward.19} parent=0 // pred_fallthru
    _
  %v18 = vld [vmem:[%s0] sm:$0xff]
  %v19 = vld [vmem:[%s0 + $0x8] sm:$0xf]
  %v20 = vld [vmem:[%s0 + $0xc] sm:$0xff]
  %v21 = vld [vmem:[%s0 + $0x14] sm:$0xf]
  %v22 = vld [vmem:[%s0 + $0x18] sm:$0xff]
  %v23 = vld [vmem:[%s0 + $0x20] sm:$0xf]
  %v24 = vld [vmem:[%s0 + $0x24] sm:$0xff]
  %v25 = vld [vmem:[%s0 + $0x2c] sm:$0xf]
  %v26 = vld [vmem:[%s1] sm:$0xf]
  %v27 = vld [vmem:[%s1 + $0x4] sm:$0xf]
  %v28 = vld [vmem:[%s1 + $0x8] sm:$0xf]
  %v29 = vld [vmem:[%s1 + $0xc] sm:$0xf]
  %v30 = vld [vmem:[%s1 + $0x10] sm:$0xf]
  %v31 = vld [vmem:[%s1 + $0x14] sm:$0xf]
  %v32 = vld [vmem:[%s1 + $0x18] sm:$0xf]
  %v33 = vld [vmem:[%s1 + $0x1c] sm:$0xf]
  %v34 = vld [vmem:[%s1 + $0x20] sm:$0xf]
  %v35 = vld [vmem:[%s1 + $0x24] sm:$0xf]
  %v36 = vld [vmem:[%s1 + $0x28] sm:$0xf]
  %v37 = vld [vmem:[%s1 + $0x2c] sm:$0xf]
  %v38 = vld [vmem:[%s1 + $0x30] sm:$0xf]
  %v39 = vld [vmem:[%s1 + $0x34] sm:$0xf]
  %v40 = vld [vmem:[%s1 + $0x38] sm:$0xf]
  %v41 = vld [vmem:[%s1 + $0x3c] sm:$0xf]
  %v42 = vld [vmem:[%s1 + $0x40] sm:$0xf]
  %v43 = vld [vmem:[%s1 + $0x44] sm:$0xf]
  %v44 = vld [vmem:[%s1 + $0x48] sm:$0xf]
  %v45 = vld [vmem:[%s1 + $0x4c] sm:$0xf]
  %v46 = vld [vmem:[%s1 + $0x50] sm:$0xf]
  %v47 = vld [vmem:[%s1 + $0x54] sm:$0xf]
  %v48 = vld [vmem:[%s1 + $0x58] sm:$0xf]
  %v49 = vld [vmem:[%s1 + $0x5c] sm:$0xf]
  %v50 = vld [vmem:[%s1 + $0x60] sm:$0xf]
  %v51 = vld [vmem:[%s1 + $0x64] sm:$0xf]
  %v52 = vld [vmem:[%s1 + $0x68] sm:$0xf]
  %v53 = vld [vmem:[%s1 + $0x6c] sm:$0xf]
  %v54 = vld [vmem:[%s1 + $0x70] sm:$0xf]
  %v55 = vld [vmem:[%s1 + $0x74] sm:$0xf]
  %v56 = vld [vmem:[%s1 + $0x78] sm:$0xf]
  %v57 = vld [vmem:[%s1 + $0x7c] sm:$0xf]
  %v58 = vld [vmem:[%s1 + $0x80] sm:$0xf]
  %v59 = vld [vmem:[%s1 + $0x84] sm:$0xf]
  %v60 = vld [vmem:[%s1 + $0x88] sm:$0xf]
  %v61 = vld [vmem:[%s1 + $0x8c] sm:$0xf]
  %v62 = vld [vmem:[%s2] sm:$0x1]
  %v64 = vlaneseq
  %v65 = vshrl.u32 %v64, 7
  %v66 = vsub.s32 0, %v65
  %v67 = vrot.slane %v62, %v66
  %v77 = vunpack.c.l.b16 %v18
  %v78 = vunpack.c.h.b16 %v18
  %v79 = vunpack.c.l.b16 %v19
  %v80 = vunpack.c.l.b16 %v20
  %v81 = vunpack.c.h.b16 %v20
  %v82 = vunpack.c.l.b16 %v21
  %v83 = vunpack.c.l.b16 %v22
  %v84 = vunpack.c.h.b16 %v22
  %v85 = vunpack.c.l.b16 %v23
  %v86 = vunpack.c.l.b16 %v24
  %v87 = vunpack.c.h.b16 %v24
  %v88 = vunpack.c.l.b16 %v25
  %v89 = vpack.c.b16 %v80, %v77
  %v90 = vpack.c.b16 %v81, %v78
  %v91 = vpack.c.b16 %v82, %v79
  %v92 = vpack.c.b16 %v86, %v83
  %v93 = vpack.c.b16 %v87, %v84
  %v94 = vpack.c.b16 %v88, %v85
  %v135 = vunpack.c.l.b16 %v26
  %v136 = vunpack.c.l.b16 %v27
  %v137 = vunpack.c.l.b16 %v28
  %v138 = vunpack.c.l.b16 %v29
  %v139 = vunpack.c.l.b16 %v30
  %v140 = vunpack.c.l.b16 %v31
  %v141 = vunpack.c.l.b16 %v32
  %v142 = vunpack.c.l.b16 %v33
  %v143 = vunpack.c.l.b16 %v34
  %v144 = vunpack.c.l.b16 %v35
  %v145 = vunpack.c.l.b16 %v36
  %v146 = vunpack.c.l.b16 %v37
  %v147 = vunpack.c.l.b16 %v38
  %v148 = vunpack.c.l.b16 %v39
  %v149 = vunpack.c.l.b16 %v40
  %v150 = vunpack.c.l.b16 %v41
  %v151 = vunpack.c.l.b16 %v42
  %v152 = vunpack.c.l.b16 %v43
  %v153 = vunpack.c.l.b16 %v44
  %v154 = vunpack.c.l.b16 %v45
  %v155 = vunpack.c.l.b16 %v46
  %v156 = vunpack.c.l.b16 %v47
  %v157 = vunpack.c.l.b16 %v48
  %v158 = vunpack.c.l.b16 %v49
  %v159 = vunpack.c.l.b16 %v50
  %v160 = vunpack.c.l.b16 %v51
  %v161 = vunpack.c.l.b16 %v52
  %v162 = vunpack.c.l.b16 %v53
  %v163 = vunpack.c.l.b16 %v54
  %v164 = vunpack.c.l.b16 %v55
  %v165 = vunpack.c.l.b16 %v56
  %v166 = vunpack.c.l.b16 %v57
  %v167 = vunpack.c.l.b16 %v58
  %v168 = vunpack.c.l.b16 %v59
  %v169 = vunpack.c.l.b16 %v60
  %v170 = vunpack.c.l.b16 %v61
  %v171 = vpack.c.b16 %v136, %v135
  %v172 = vpack.c.b16 %v138, %v137
  %v173 = vpack.c.b16 %v140, %v139
  %v174 = vpack.c.b16 %v142, %v141
  %v175 = vpack.c.b16 %v144, %v143
  %v176 = vpack.c.b16 %v146, %v145
  %v177 = vpack.c.b16 %v148, %v147
  %v178 = vpack.c.b16 %v150, %v149
  %v179 = vpack.c.b16 %v152, %v151
  %v180 = vpack.c.b16 %v154, %v153
  %v181 = vpack.c.b16 %v156, %v155
  %v182 = vpack.c.b16 %v158, %v157
  %v183 = vpack.c.b16 %v160, %v159
  %v184 = vpack.c.b16 %v162, %v161
  %v185 = vpack.c.b16 %v164, %v163
  %v186 = vpack.c.b16 %v166, %v165
  %v187 = vpack.c.b16 %v168, %v167
  %v188 = vpack.c.b16 %v170, %v169
  %vm207 = vcmask 261120
  %v209 = vsel %vm207, %v91, 0
  %v212 = vsel %vm207, %v94, 0
  %214 = vmatprep.subr.bf16.mxu0 0
  %215 = vmatpush1.bf16.msra.mxu0 %v171
  %216 = vmatprep.subr.bf16.mxu0 0
  %217 = vmatpush1.bf16.msra.mxu0 %v172
  %218 = vmatprep.subr.bf16.mxu0 0
  %219 = vmatpush1.bf16.msra.mxu0 %v173
  %220 = vmatprep.subr.bf16.mxu0 0
  %221 = vmatpush1.bf16.msra.mxu0 %v174
  %222 = vmatprep.subr.bf16.mxu0 0
  %223 = vmatpush1.bf16.msra.mxu0 %v175
  %224 = vmatprep.subr.bf16.mxu0 0
  %225 = vmatpush1.bf16.msra.mxu0 %v176
  %226 = vmatprep.subr.bf16.mxu0 0
  %227 = vmatpush1.bf16.msra.mxu0 %v177
  %228 = vmatprep.subr.bf16.mxu0 0
  %229 = vmatpush1.bf16.msra.mxu0 %v178
  %230 = vmatprep.subr.bf16.mxu0 0
  %231 = vmatpush1.bf16.msra.mxu0 %v179
  %232 = vmatprep.subr.bf16.mxu0 0
  %233 = vmatpush1.bf16.msra.mxu0 %v180
  %234 = vmatprep.subr.bf16.mxu0 0
  %235 = vmatpush1.bf16.msra.mxu0 %v181
  %236 = vmatprep.subr.bf16.mxu0 0
  %237 = vmatpush1.bf16.msra.mxu0 %v182
  %238 = vmatprep.subr.bf16.mxu0 0
  %239 = vmatpush1.bf16.msra.mxu0 %v183
  %240 = vmatprep.subr.bf16.mxu0 0
  %241 = vmatpush1.bf16.msra.mxu0 %v184
  %242 = vmatprep.subr.bf16.mxu0 0
  %243 = vmatpush1.bf16.msra.mxu0 %v185
  %244 = vmatprep.subr.bf16.mxu0 0
  %245 = vmatpush1.bf16.msra.mxu0 %v186
  %246 = vmatprep.mubr.bf16.mxu0 %v90
  %247 = vmatmul.mubr.bf16.gmra.mrb[0].mxu0 %v89
  %v248 = vpop.f32.mrb[0].mxu0
  %v249 = vadd.f32 %v67, %v248
  %v250 = vpop.f32.mrb[0].mxu0
  %v251 = vpop.f32.mrb[0].mxu0
  %v252 = vadd.f32 %v67, %v251
  %v253 = vpop.f32.mrb[0].mxu0
  %254 = vmatprep.mubr.bf16.mxu0 %v93
  %255 = vmatmul.mubr.bf16.gmra.mrb[0].mxu0 %v92
  %v256 = vpop.f32.mrb[0].mxu0
  %v257 = vadd.f32 %v67, %v256
  %v258 = vpop.f32.mrb[0].mxu0
  %v259 = vpop.f32.mrb[0].mxu0
  %v260 = vadd.f32 %v67, %v259
  %v261 = vpop.f32.mrb[0].mxu0
  %262 = vdwg.mxu0
  %263 = vmatprep.subr.bf16.mxu0 0
  %264 = vmatpush1.bf16.msra.mxu0 %v187
  %265 = vmatprep.subr.bf16.mxu0 0
  %266 = vmatpush1.bf16.msra.mxu0 %v188
  %267 = vmatprep.subr.bf16.mxu0 0
  %268 = vmatpush1.bf16.msra.mxu0 0
  %269 = vmatprep.subr.bf16.mxu0 0
  %270 = vmatpush1.bf16.msra.mxu0 0
  %271 = vmatprep.subr.bf16.mxu0 0
  %272 = vmatpush1.bf16.msra.mxu0 0
  %273 = vmatprep.subr.bf16.mxu0 0
  %274 = vmatpush1.bf16.msra.mxu0 0
  %275 = vmatprep.subr.bf16.mxu0 0
  %276 = vmatpush1.bf16.msra.mxu0 0
  %277 = vmatprep.subr.bf16.mxu0 0
  %278 = vmatpush1.bf16.msra.mxu0 0
  %279 = vmatprep.subr.bf16.mxu0 0
  %280 = vmatpush1.bf16.msra.mxu0 0
  %281 = vmatprep.subr.bf16.mxu0 0
  %282 = vmatpush1.bf16.msra.mxu0 0
  %283 = vmatprep.subr.bf16.mxu0 0
  %284 = vmatpush1.bf16.msra.mxu0 0
  %285 = vmatprep.subr.bf16.mxu0 0
  %286 = vmatpush1.bf16.msra.mxu0 0
  %287 = vmatprep.subr.bf16.mxu0 0
  %288 = vmatpush1.bf16.msra.mxu0 0
  %289 = vmatprep.subr.bf16.mxu0 0
  %290 = vmatpush1.bf16.msra.mxu0 0
  %291 = vmatprep.subr.bf16.mxu0 0
  %292 = vmatpush1.bf16.msra.mxu0 0
  %293 = vmatprep.subr.bf16.mxu0 0
  %294 = vmatpush1.bf16.msra.mxu0 0
  %295 = vmatprep.mubr.bf16.mxu0 0
  %296 = vmatmul.mubr.bf16.gmra.mrb[0].mxu0 %v209
  %v297 = vpop.f32.mrb[0].mxu0
  %v298 = vadd.f32 %v249, %v297
  %v299 = vpop.f32.mrb[0].mxu0
  %v300 = vpop.f32.mrb[0].mxu0
  %v301 = vadd.f32 %v252, %v300
  %v302 = vpop.f32.mrb[0].mxu0
  %303 = vmatprep.mubr.bf16.mxu0 0
  %304 = vmatmul.mubr.bf16.gmra.mrb[0].mxu0 %v212
  %v305 = vpop.f32.mrb[0].mxu0
  %v306 = vadd.f32 %v257, %v305
  %v307 = vpop.f32.mrb[0].mxu0
  %v308 = vpop.f32.mrb[0].mxu0
  %v309 = vadd.f32 %v260, %v308
  %v310 = vpop.f32.mrb[0].mxu0
  %311 = vdwg.mxu0
  %v312 = vmax.f32 %v298, 0.0
  %v313 = vmax.f32 %v301, 0.0
  %v314 = vmax.f32 %v306, 0.0
  %v315 = vmax.f32 %v309, 0.0
  %v316 = vld [vmem:[%s3] sm:$0xf]
  %v317 = vld [vmem:[%s3 + $0x4] sm:$0xf]
  %v318 = vld [vmem:[%s3 + $0x8] sm:$0xf]
  %v319 = vld [vmem:[%s3 + $0xc] sm:$0xf]
  %v320 = vunpack.c.l.bf16 %v316
  %v321 = vunpack.c.l.bf16 %v317
  %v322 = vunpack.c.l.bf16 %v318
  %v323 = vunpack.c.l.bf16 %v319
  %v324 = vmul.f32 %v312, %v320
  %v325 = vmul.f32 %v313, %v321
  %v326 = vmul.f32 %v314, %v322
  %v327 = vmul.f32 %v315, %v323
  %v328 = vpack.c.bf16 %v325, %v324
  %v329 = vpack.c.bf16 %v327, %v326
  %v332 = vunpack.c.l.b16 %v328
  %v333 = vunpack.c.h.b16 %v328
  %v334 = vunpack.c.l.b16 %v329
  %v335 = vunpack.c.h.b16 %v329
  %v336 = vpack.c.b16 %v332, %v332
  %v337 = vpack.c.b16 %v333, %v333
  %v338 = vpack.c.b16 %v334, %v334
  %v339 = vpack.c.b16 %v335, %v335
  %vm344 = vcmask 519168
  %345 = vst.msk [vmem:[%s4] sm:$0xf] %vm344, %v336
  %346 = vst.msk [vmem:[%s4 + $0x4] sm:$0xf] %vm344, %v337
  %347 = vst.msk [vmem:[%s4 + $0x8] sm:$0xf] %vm344, %v338
  %348 = vst.msk [vmem:[%s4 + $0xc] sm:$0xf] %vm344, %v339
  // Predicated region
  $region18: #{net_forward.19} parent=0 // pred_check
    _
  $region19: #{net_forward.19} parent=0 // pred_check_branch
    %350 = sbr.rel (0) target = $region21
  $region20: #{net_forward.19} parent=0 // pred_region
    _
  $region21: #{net_forward.19} parent=0 // pred_fallthru
    _
  // Predicated region
  $region22: #{net_forward.19} parent=0 // pred_check
    _
  $region23: #{net_forward.19} parent=0 // pred_check_branch
    %352 = sbr.rel (0) target = $region25
  $region24: #{net_forward.19} parent=0 // pred_region
    _
  $region25: #{net_forward.19} parent=0 // pred_fallthru
    _

// kernel: net_forward.20
$region0: #{net_forward.20}
  #allocation0 [shape = 'u32[]', space=smem, size = 0x4, offset = 0x4, fixed_abs, tag = 'smem constant byte address 0x4 - core index']
  #allocation1 [shape = 'u32[144,128]{1,0:T(1,128)}', space=vmem, size = 0x12000, scoped, tag = 'internal scratch']
  %s0 = inlined_call_operand.vmem [shape: bf16[50,256], index: 0, kind: input, shape index: {}]
  %s1 = inlined_call_operand.vmem [shape: bf16[256,64], index: 1, kind: input, shape index: {}]
  %s2 = inlined_call_operand.vmem [shape: f32[1,64], index: 2, kind: input, shape index: {}]
  %s3 = inlined_call_operand.vmem [shape: bf16[50,64], index: 3, kind: output, shape index: {}]
  %s4 = sld [smem:[#allocation0]]
  $region22: #{net_forward.20} parent=0
    _
  %s6 = ssub.s32 1, %s4
  %s7 = scalar_select 0, %s6, %s4
  // Predicated region
  $region2: #{net_forward.20} parent=0 // pred_check
    _
  $region3: #{net_forward.20} parent=0 // pred_check_branch
    %9 = sbr.rel (0) target = $region5
  $region4: #{net_forward.20} parent=0 // pred_region
    _
  $region5: #{net_forward.20} parent=0 // pred_fallthru
    _
  // Predicated region
  $region6: #{net_forward.20} parent=0 // pred_check
    _
  $region7: #{net_forward.20} parent=0 // pred_check_branch
    %11 = sbr.rel (0) target = $region9
  $region8: #{net_forward.20} parent=0 // pred_region
    _
  $region9: #{net_forward.20} parent=0 // pred_fallthru
    _
  // Predicated region
  $region10: #{net_forward.20} parent=0 // pred_check
    _
  $region11: #{net_forward.20} parent=0 // pred_check_branch
    %13 = sbr.rel (0) target = $region13
  $region12: #{net_forward.20} parent=0 // pred_region
    _
  $region13: #{net_forward.20} parent=0 // pred_fallthru
    _
  %v15 = vld [vmem:[%s0] sm:$0xff]
  %v16 = vld [vmem:[%s0 + $0x8] sm:$0xff]
  %v17 = vld [vmem:[%s0 + $0x10] sm:$0xff]
  %v18 = vld [vmem:[%s0 + $0x18] sm:$0xff]
  %v19 = vld [vmem:[%s0 + $0x20] sm:$0xff]
  %v20 = vld [vmem:[%s0 + $0x28] sm:$0xff]
  %v21 = vld [vmem:[%s0 + $0x30] sm:$0x11]
  %v22 = vld [vmem:[%s1] sm:$0xf]
  %v23 = vld [vmem:[%s1 + $0x4] sm:$0xf]
  %v24 = vld [vmem:[%s1 + $0x8] sm:$0xf]
  %v25 = vld [vmem:[%s1 + $0xc] sm:$0xf]
  %v26 = vld [vmem:[%s1 + $0x10] sm:$0xf]
  %v27 = vld [vmem:[%s1 + $0x14] sm:$0xf]
  %v28 = vld [vmem:[%s1 + $0x18] sm:$0xf]
  %v29 = vld [vmem:[%s1 + $0x1c] sm:$0xf]
  %v30 = vld [vmem:[%s1 + $0x20] sm:$0xf]
  %v31 = vld [vmem:[%s1 + $0x24] sm:$0xf]
  %v32 = vld [vmem:[%s1 + $0x28] sm:$0xf]
  %v33 = vld [vmem:[%s1 + $0x2c] sm:$0xf]
  %v34 = vld [vmem:[%s1 + $0x30] sm:$0xf]
  %v35 = vld [vmem:[%s1 + $0x34] sm:$0xf]
  %v36 = vld [vmem:[%s1 + $0x38] sm:$0xf]
  %v37 = vld [vmem:[%s1 + $0x3c] sm:$0xf]
  %v38 = vld [vmem:[%s1 + $0x40] sm:$0xf]
  %v39 = vld [vmem:[%s1 + $0x44] sm:$0xf]
  %v40 = vld [vmem:[%s1 + $0x48] sm:$0xf]
  %v41 = vld [vmem:[%s1 + $0x4c] sm:$0xf]
  %v42 = vld [vmem:[%s1 + $0x50] sm:$0xf]
  %v43 = vld [vmem:[%s1 + $0x54] sm:$0xf]
  %v44 = vld [vmem:[%s1 + $0x58] sm:$0xf]
  %v45 = vld [vmem:[%s1 + $0x5c] sm:$0xf]
  %v46 = vld [vmem:[%s1 + $0x60] sm:$0xf]
  %v47 = vld [vmem:[%s1 + $0x64] sm:$0xf]
  %v48 = vld [vmem:[%s1 + $0x68] sm:$0xf]
  %v49 = vld [vmem:[%s1 + $0x6c] sm:$0xf]
  %v50 = vld [vmem:[%s1 + $0x70] sm:$0xf]
  %v51 = vld [vmem:[%s1 + $0x74] sm:$0xf]
  %v52 = vld [vmem:[%s1 + $0x78] sm:$0xf]
  %v53 = vld [vmem:[%s1 + $0x7c] sm:$0xf]
  %v54 = vld [vmem:[%s2] sm:$0x1]
  %v56 = vlaneseq
  %v57 = vshrl.u32 %v56, 7
  %v58 = vsub.s32 0, %v57
  %v59 = vrot.slane %v54, %v58
  %v68 = vunpack.c.l.b16 %v15
  %v69 = vunpack.c.h.b16 %v15
  %v70 = vunpack.c.l.b16 %v16
  %v71 = vunpack.c.h.b16 %v16
  %v72 = vunpack.c.l.b16 %v17
  %v73 = vunpack.c.h.b16 %v17
  %v74 = vunpack.c.l.b16 %v18
  %v75 = vunpack.c.h.b16 %v18
  %v76 = vunpack.c.l.b16 %v19
  %v77 = vunpack.c.h.b16 %v19
  %v78 = vunpack.c.l.b16 %v20
  %v79 = vunpack.c.h.b16 %v20
  %v80 = vunpack.c.l.b16 %v21
  %v81 = vunpack.c.h.b16 %v21
  %v82 = vpack.c.b16 %v70, %v68
  %v83 = vpack.c.b16 %v71, %v69
  %v84 = vpack.c.b16 %v74, %v72
  %v85 = vpack.c.b16 %v75, %v73
  %v86 = vpack.c.b16 %v78, %v76
  %v87 = vpack.c.b16 %v79, %v77
  %v88 = vpack.c.b16 %v80, %v80
  %v89 = vpack.c.b16 %v81, %v81
  %v130 = vunpack.c.l.b16 %v22
  %v131 = vunpack.c.l.b16 %v23
  %v132 = vunpack.c.l.b16 %v24
  %v133 = vunpack.c.l.b16 %v25
  %v134 = vunpack.c.l.b16 %v26
  %v135 = vunpack.c.l.b16 %v27
  %v136 = vunpack.c.l.b16 %v28
  %v137 = vunpack.c.l.b16 %v29
  %v138 = vunpack.c.l.b16 %v30
  %v139 = vunpack.c.l.b16 %v31
  %v140 = vunpack.c.l.b16 %v32
  %v141 = vunpack.c.l.b16 %v33
  %v142 = vunpack.c.l.b16 %v34
  %v143 = vunpack.c.l.b16 %v35
  %v144 = vunpack.c.l.b16 %v36
  %v145 = vunpack.c.l.b16 %v37
  %v146 = vunpack.c.l.b16 %v38
  %v147 = vunpack.c.l.b16 %v39
  %v148 = vunpack.c.l.b16 %v40
  %v149 = vunpack.c.l.b16 %v41
  %v150 = vunpack.c.l.b16 %v42
  %v151 = vunpack.c.l.b16 %v43
  %v152 = vunpack.c.l.b16 %v44
  %v153 = vunpack.c.l.b16 %v45
  %v154 = vunpack.c.l.b16 %v46
  %v155 = vunpack.c.l.b16 %v47
  %v156 = vunpack.c.l.b16 %v48
  %v157 = vunpack.c.l.b16 %v49
  %v158 = vunpack.c.l.b16 %v50
  %v159 = vunpack.c.l.b16 %v51
  %v160 = vunpack.c.l.b16 %v52
  %v161 = vunpack.c.l.b16 %v53
  %v162 = vpack.c.b16 %v131, %v130
  %v163 = vpack.c.b16 %v133, %v132
  %v164 = vpack.c.b16 %v135, %v134
  %v165 = vpack.c.b16 %v137, %v136
  %v166 = vpack.c.b16 %v139, %v138
  %v167 = vpack.c.b16 %v141, %v140
  %v168 = vpack.c.b16 %v143, %v142
  %v169 = vpack.c.b16 %v145, %v144
  %v170 = vpack.c.b16 %v147, %v146
  %v171 = vpack.c.b16 %v149, %v148
  %v172 = vpack.c.b16 %v151, %v150
  %v173 = vpack.c.b16 %v153, %v152
  %v174 = vpack.c.b16 %v155, %v154
  %v175 = vpack.c.b16 %v157, %v156
  %v176 = vpack.c.b16 %v159, %v158
  %v177 = vpack.c.b16 %v161, %v160
  %194 = vmatprep.subr.bf16.mxu0 0
  %195 = vmatpush1.bf16.msra.mxu0 %v162
  %196 = vmatprep.subr.bf16.mxu0 0
  %197 = vmatpush1.bf16.msra.mxu0 %v163
  %198 = vmatprep.subr.bf16.mxu0 0
  %199 = vmatpush1.bf16.msra.mxu0 %v164
  %200 = vmatprep.subr.bf16.mxu0 0
  %201 = vmatpush1.bf16.msra.mxu0 %v165
  %202 = vmatprep.subr.bf16.mxu0 0
  %203 = vmatpush1.bf16.msra.mxu0 %v166
  %204 = vmatprep.subr.bf16.mxu0 0
  %205 = vmatpush1.bf16.msra.mxu0 %v167
  %206 = vmatprep.subr.bf16.mxu0 0
  %207 = vmatpush1.bf16.msra.mxu0 %v168
  %208 = vmatprep.subr.bf16.mxu0 0
  %209 = vmatpush1.bf16.msra.mxu0 %v169
  %210 = vmatprep.subr.bf16.mxu0 0
  %211 = vmatpush1.bf16.msra.mxu0 %v170
  %212 = vmatprep.subr.bf16.mxu0 0
  %213 = vmatpush1.bf16.msra.mxu0 %v171
  %214 = vmatprep.subr.bf16.mxu0 0
  %215 = vmatpush1.bf16.msra.mxu0 %v172
  %216 = vmatprep.subr.bf16.mxu0 0
  %217 = vmatpush1.bf16.msra.mxu0 %v173
  %218 = vmatprep.subr.bf16.mxu0 0
  %219 = vmatpush1.bf16.msra.mxu0 %v174
  %220 = vmatprep.subr.bf16.mxu0 0
  %221 = vmatpush1.bf16.msra.mxu0 %v175
  %222 = vmatprep.subr.bf16.mxu0 0
  %223 = vmatpush1.bf16.msra.mxu0 %v176
  %224 = vmatprep.subr.bf16.mxu0 0
  %225 = vmatpush1.bf16.msra.mxu0 %v177
  %226 = vmatprep.mubr.bf16.mxu0 %v83
  %227 = vmatmul.mubr.bf16.gmra.mrb[0].mxu0 %v82
  %v228 = vpop.f32.mrb[0].mxu0
  %v229 = vadd.f32 %v59, %v228
  %v230 = vpop.f32.mrb[0].mxu0
  %v231 = vpop.f32.mrb[0].mxu0
  %v232 = vadd.f32 %v59, %v231
  %v233 = vpop.f32.mrb[0].mxu0
  %234 = vmatprep.mubr.bf16.mxu0 %v85
  %235 = vmatmul.mubr.bf16.gmra.mrb[0].mxu0 %v84
  %v236 = vpop.f32.mrb[0].mxu0
  %v237 = vadd.f32 %v59, %v236
  %v238 = vpop.f32.mrb[0].mxu0
  %v239 = vpop.f32.mrb[0].mxu0
  %v240 = vadd.f32 %v59, %v239
  %v241 = vpop.f32.mrb[0].mxu0
  %242 = vmatprep.mubr.bf16.mxu0 %v87
  %243 = vmatmul.mubr.bf16.gmra.mrb[0].mxu0 %v86
  %v244 = vpop.f32.mrb[0].mxu0
  %v245 = vadd.f32 %v59, %v244
  %v246 = vpop.f32.mrb[0].mxu0
  %v247 = vpop.f32.mrb[0].mxu0
  %v248 = vadd.f32 %v59, %v247
  %v249 = vpop.f32.mrb[0].mxu0
  %250 = vmatprep.mubr.bf16.mxu0 %v89
  %251 = vmatmul.mubr.bf16.gmra.mrb[0].mxu0 %v88
  %v252 = vpop.f32.mrb[0].mxu0
  %v253 = vadd.f32 %v59, %v252
  %v254 = vpop.f32.mrb[0].mxu0
  %v255 = vpop.f32.mrb[0].mxu0
  %v256 = vpop.f32.mrb[0].mxu0
  %257 = vdwg.mxu0
  %v258 = vmax.f32 %v229, 0.0
  %v259 = vmax.f32 %v232, 0.0
  %v260 = vmax.f32 %v237, 0.0
  %v261 = vmax.f32 %v240, 0.0
  %v262 = vmax.f32 %v245, 0.0
  %v263 = vmax.f32 %v248, 0.0
  %v264 = vmax.f32 %v253, 0.0
  %v265 = vpack.c.bf16 %v259, %v258
  %v266 = vpack.c.bf16 %v261, %v260
  %v267 = vpack.c.bf16 %v263, %v262
  %v268 = vpack.c.bf16 %v264, %v264
  %v273 = vunpack.c.l.b16 %v265
  %v274 = vunpack.c.h.b16 %v265
  %v275 = vunpack.c.l.b16 %v266
  %v276 = vunpack.c.h.b16 %v266
  %v277 = vunpack.c.l.b16 %v267
  %v278 = vunpack.c.h.b16 %v267
  %v279 = vunpack.c.l.b16 %v268
  %v280 = vpack.c.b16 %v273, %v273
  %v281 = vpack.c.b16 %v274, %v274
  %v282 = vpack.c.b16 %v275, %v275
  %v283 = vpack.c.b16 %v276, %v276
  %v284 = vpack.c.b16 %v277, %v277
  %v285 = vpack.c.b16 %v278, %v278
  %v286 = vpack.c.b16 %v279, %v279
  %vm294 = vcmask 519168
  %295 = vst.msk [vmem:[%s3] sm:$0xf] %vm294, %v280
  %296 = vst.msk [vmem:[%s3 + $0x4] sm:$0xf] %vm294, %v281
  %297 = vst.msk [vmem:[%s3 + $0x8] sm:$0xf] %vm294, %v282
  %298 = vst.msk [vmem:[%s3 + $0xc] sm:$0xf] %vm294, %v283
  %299 = vst.msk [vmem:[%s3 + $0x10] sm:$0xf] %vm294, %v284
  %300 = vst.msk [vmem:[%s3 + $0x14] sm:$0xf] %vm294, %v285
  %vm301 = vcmask 516096
  %302 = vst.msk [vmem:[%s3 + $0x18] sm:$0x1] %vm301, %v286
  // Predicated region
  $region14: #{net_forward.20} parent=0 // pred_check
    _
  $region15: #{net_forward.20} parent=0 // pred_check_branch
    %304 = sbr.rel (0) target = $region17
  $region16: #{net_forward.20} parent=0 // pred_region
    _
  $region17: #{net_forward.20} parent=0 // pred_fallthru
    _
  // Predicated region
  $region18: #{net_forward.20} parent=0 // pred_check
    _
  $region19: #{net_forward.20} parent=0 // pred_check_branch
    %306 = sbr.rel (0) target = $region21
  $region20: #{net_forward.20} parent=0 // pred_region
    _
  $region21: #{net_forward.20} parent=0 // pred_fallthru
    _

// kernel: net_forward.21
$region0: #{net_forward.21}
  #allocation0 [shape = 'u32[]', space=smem, size = 0x4, offset = 0x4, fixed_abs, tag = 'smem constant byte address 0x4 - core index']
  #allocation1 [shape = 'u32[144,128]{1,0:T(1,128)}', space=vmem, size = 0x12000, scoped, tag = 'internal scratch']
  %s0 = inlined_call_operand.vmem [shape: bf16[72,256], index: 0, kind: input, shape index: {}]
  %s1 = inlined_call_operand.vmem [shape: bf16[256,64], index: 1, kind: input, shape index: {}]
  %s2 = inlined_call_operand.vmem [shape: f32[1,64], index: 2, kind: input, shape index: {}]
  %s3 = inlined_call_operand.vmem [shape: bf16[72,64], index: 3, kind: output, shape index: {}]
  %s4 = sld [smem:[#allocation0]]
  $region22: #{net_forward.21} parent=0
    _
  %s6 = ssub.s32 1, %s4
  %s7 = scalar_select 0, %s6, %s4
  // Predicated region
  $region2: #{net_forward.21} parent=0 // pred_check
    _
  $region3: #{net_forward.21} parent=0 // pred_check_branch
    %9 = sbr.rel (0) target = $region5
  $region4: #{net_forward.21} parent=0 // pred_region
    _
  $region5: #{net_forward.21} parent=0 // pred_fallthru
    _
  // Predicated region
  $region6: #{net_forward.21} parent=0 // pred_check
    _
  $region7: #{net_forward.21} parent=0 // pred_check_branch
    %11 = sbr.rel (0) target = $region9
  $region8: #{net_forward.21} parent=0 // pred_region
    _
  $region9: #{net_forward.21} parent=0 // pred_fallthru
    _
  // Predicated region
  $region10: #{net_forward.21} parent=0 // pred_check
    _
  $region11: #{net_forward.21} parent=0 // pred_check_branch
    %13 = sbr.rel (0) target = $region13
  $region12: #{net_forward.21} parent=0 // pred_region
    _
  $region13: #{net_forward.21} parent=0 // pred_fallthru
    _
  %v15 = vld [vmem:[%s0] sm:$0xff]
  %v16 = vld [vmem:[%s0 + $0x8] sm:$0xff]
  %v17 = vld [vmem:[%s0 + $0x10] sm:$0xff]
  %v18 = vld [vmem:[%s0 + $0x18] sm:$0xff]
  %v19 = vld [vmem:[%s0 + $0x20] sm:$0xff]
  %v20 = vld [vmem:[%s0 + $0x28] sm:$0xff]
  %v21 = vld [vmem:[%s0 + $0x30] sm:$0xff]
  %v22 = vld [vmem:[%s0 + $0x38] sm:$0xff]
  %v23 = vld [vmem:[%s0 + $0x40] sm:$0xff]
  %v24 = vld [vmem:[%s1] sm:$0xf]
  %v25 = vld [vmem:[%s1 + $0x4] sm:$0xf]
  %v26 = vld [vmem:[%s1 + $0x8] sm:$0xf]
  %v27 = vld [vmem:[%s1 + $0xc] sm:$0xf]
  %v28 = vld [vmem:[%s1 + $0x10] sm:$0xf]
  %v29 = vld [vmem:[%s1 + $0x14] sm:$0xf]
  %v30 = vld [vmem:[%s1 + $0x18] sm:$0xf]
  %v31 = vld [vmem:[%s1 + $0x1c] sm:$0xf]
  %v32 = vld [vmem:[%s1 + $0x20] sm:$0xf]
  %v33 = vld [vmem:[%s1 + $0x24] sm:$0xf]
  %v34 = vld [vmem:[%s1 + $0x28] sm:$0xf]
  %v35 = vld [vmem:[%s1 + $0x2c] sm:$0xf]
  %v36 = vld [vmem:[%s1 + $0x30] sm:$0xf]
  %v37 = vld [vmem:[%s1 + $0x34] sm:$0xf]
  %v38 = vld [vmem:[%s1 + $0x38] sm:$0xf]
  %v39 = vld [vmem:[%s1 + $0x3c] sm:$0xf]
  %v40 = vld [vmem:[%s1 + $0x40] sm:$0xf]
  %v41 = vld [vmem:[%s1 + $0x44] sm:$0xf]
  %v42 = vld [vmem:[%s1 + $0x48] sm:$0xf]
  %v43 = vld [vmem:[%s1 + $0x4c] sm:$0xf]
  %v44 = vld [vmem:[%s1 + $0x50] sm:$0xf]
  %v45 = vld [vmem:[%s1 + $0x54] sm:$0xf]
  %v46 = vld [vmem:[%s1 + $0x58] sm:$0xf]
  %v47 = vld [vmem:[%s1 + $0x5c] sm:$0xf]
  %v48 = vld [vmem:[%s1 + $0x60] sm:$0xf]
  %v49 = vld [vmem:[%s1 + $0x64] sm:$0xf]
  %v50 = vld [vmem:[%s1 + $0x68] sm:$0xf]
  %v51 = vld [vmem:[%s1 + $0x6c] sm:$0xf]
  %v52 = vld [vmem:[%s1 + $0x70] sm:$0xf]
  %v53 = vld [vmem:[%s1 + $0x74] sm:$0xf]
  %v54 = vld [vmem:[%s1 + $0x78] sm:$0xf]
  %v55 = vld [vmem:[%s1 + $0x7c] sm:$0xf]
  %v56 = vld [vmem:[%s2] sm:$0x1]
  %v58 = vlaneseq
  %v59 = vshrl.u32 %v58, 7
  %v60 = vsub.s32 0, %v59
  %v61 = vrot.slane %v56, %v60
  %v72 = vunpack.c.l.b16 %v15
  %v73 = vunpack.c.h.b16 %v15
  %v74 = vunpack.c.l.b16 %v16
  %v75 = vunpack.c.h.b16 %v16
  %v76 = vunpack.c.l.b16 %v17
  %v77 = vunpack.c.h.b16 %v17
  %v78 = vunpack.c.l.b16 %v18
  %v79 = vunpack.c.h.b16 %v18
  %v80 = vunpack.c.l.b16 %v19
  %v81 = vunpack.c.h.b16 %v19
  %v82 = vunpack.c.l.b16 %v20
  %v83 = vunpack.c.h.b16 %v20
  %v84 = vunpack.c.l.b16 %v21
  %v85 = vunpack.c.h.b16 %v21
  %v86 = vunpack.c.l.b16 %v22
  %v87 = vunpack.c.h.b16 %v22
  %v88 = vunpack.c.l.b16 %v23
  %v89 = vunpack.c.h.b16 %v23
  %v90 = vpack.c.b16 %v74, %v72
  %v91 = vpack.c.b16 %v75, %v73
  %v92 = vpack.c.b16 %v78, %v76
  %v93 = vpack.c.b16 %v79, %v77
  %v94 = vpack.c.b16 %v82, %v80
  %v95 = vpack.c.b16 %v83, %v81
  %v96 = vpack.c.b16 %v86, %v84
  %v97 = vpack.c.b16 %v87, %v85
  %v98 = vpack.c.b16 %v88, %v88
  %v99 = vpack.c.b16 %v89, %v89
  %v142 = vunpack.c.l.b16 %v24
  %v143 = vunpack.c.l.b16 %v25
  %v144 = vunpack.c.l.b16 %v26
  %v145 = vunpack.c.l.b16 %v27
  %v146 = vunpack.c.l.b16 %v28
  %v147 = vunpack.c.l.b16 %v29
  %v148 = vunpack.c.l.b16 %v30
  %v149 = vunpack.c.l.b16 %v31
  %v150 = vunpack.c.l.b16 %v32
  %v151 = vunpack.c.l.b16 %v33
  %v152 = vunpack.c.l.b16 %v34
  %v153 = vunpack.c.l.b16 %v35
  %v154 = vunpack.c.l.b16 %v36
  %v155 = vunpack.c.l.b16 %v37
  %v156 = vunpack.c.l.b16 %v38
  %v157 = vunpack.c.l.b16 %v39
  %v158 = vunpack.c.l.b16 %v40
  %v159 = vunpack.c.l.b16 %v41
  %v160 = vunpack.c.l.b16 %v42
  %v161 = vunpack.c.l.b16 %v43
  %v162 = vunpack.c.l.b16 %v44
  %v163 = vunpack.c.l.b16 %v45
  %v164 = vunpack.c.l.b16 %v46
  %v165 = vunpack.c.l.b16 %v47
  %v166 = vunpack.c.l.b16 %v48
  %v167 = vunpack.c.l.b16 %v49
  %v168 = vunpack.c.l.b16 %v50
  %v169 = vunpack.c.l.b16 %v51
  %v170 = vunpack.c.l.b16 %v52
  %v171 = vunpack.c.l.b16 %v53
  %v172 = vunpack.c.l.b16 %v54
  %v173 = vunpack.c.l.b16 %v55
  %v174 = vpack.c.b16 %v143, %v142
  %v175 = vpack.c.b16 %v145, %v144
  %v176 = vpack.c.b16 %v147, %v146
  %v177 = vpack.c.b16 %v149, %v148
  %v178 = vpack.c.b16 %v151, %v150
  %v179 = vpack.c.b16 %v153, %v152
  %v180 = vpack.c.b16 %v155, %v154
  %v181 = vpack.c.b16 %v157, %v156
  %v182 = vpack.c.b16 %v159, %v158
  %v183 = vpack.c.b16 %v161, %v160
  %v184 = vpack.c.b16 %v163, %v162
  %v185 = vpack.c.b16 %v165, %v164
  %v186 = vpack.c.b16 %v167, %v166
  %v187 = vpack.c.b16 %v169, %v168
  %v188 = vpack.c.b16 %v171, %v170
  %v189 = vpack.c.b16 %v173, %v172
  %206 = vmatprep.subr.bf16.mxu0 0
  %207 = vmatpush1.bf16.msra.mxu0 %v174
  %208 = vmatprep.subr.bf16.mxu0 0
  %209 = vmatpush1.bf16.msra.mxu0 %v175
  %210 = vmatprep.subr.bf16.mxu0 0
  %211 = vmatpush1.bf16.msra.mxu0 %v176
  %212 = vmatprep.subr.bf16.mxu0 0
  %213 = vmatpush1.bf16.msra.mxu0 %v177
  %214 = vmatprep.subr.bf16.mxu0 0
  %215 = vmatpush1.bf16.msra.mxu0 %v178
  %216 = vmatprep.subr.bf16.mxu0 0
  %217 = vmatpush1.bf16.msra.mxu0 %v179
  %218 = vmatprep.subr.bf16.mxu0 0
  %219 = vmatpush1.bf16.msra.mxu0 %v180
  %220 = vmatprep.subr.bf16.mxu0 0
  %221 = vmatpush1.bf16.msra.mxu0 %v181
  %222 = vmatprep.subr.bf16.mxu0 0
  %223 = vmatpush1.bf16.msra.mxu0 %v182
  %224 = vmatprep.subr.bf16.mxu0 0
  %225 = vmatpush1.bf16.msra.mxu0 %v183
  %226 = vmatprep.subr.bf16.mxu0 0
  %227 = vmatpush1.bf16.msra.mxu0 %v184
  %228 = vmatprep.subr.bf16.mxu0 0
  %229 = vmatpush1.bf16.msra.mxu0 %v185
  %230 = vmatprep.subr.bf16.mxu0 0
  %231 = vmatpush1.bf16.msra.mxu0 %v186
  %232 = vmatprep.subr.bf16.mxu0 0
  %233 = vmatpush1.bf16.msra.mxu0 %v187
  %234 = vmatprep.subr.bf16.mxu0 0
  %235 = vmatpush1.bf16.msra.mxu0 %v188
  %236 = vmatprep.subr.bf16.mxu0 0
  %237 = vmatpush1.bf16.msra.mxu0 %v189
  %238 = vmatprep.mubr.bf16.mxu0 %v91
  %239 = vmatmul.mubr.bf16.gmra.mrb[0].mxu0 %v90
  %v240 = vpop.f32.mrb[0].mxu0
  %v241 = vadd.f32 %v61, %v240
  %v242 = vpop.f32.mrb[0].mxu0
  %v243 = vpop.f32.mrb[0].mxu0
  %v244 = vadd.f32 %v61, %v243
  %v245 = vpop.f32.mrb[0].mxu0
  %246 = vmatprep.mubr.bf16.mxu0 %v93
  %247 = vmatmul.mubr.bf16.gmra.mrb[0].mxu0 %v92
  %v248 = vpop.f32.mrb[0].mxu0
  %v249 = vadd.f32 %v61, %v248
  %v250 = vpop.f32.mrb[0].mxu0
  %v251 = vpop.f32.mrb[0].mxu0
  %v252 = vadd.f32 %v61, %v251
  %v253 = vpop.f32.mrb[0].mxu0
  %254 = vmatprep.mubr.bf16.mxu0 %v95
  %255 = vmatmul.mubr.bf16.gmra.mrb[0].mxu0 %v94
  %v256 = vpop.f32.mrb[0].mxu0
  %v257 = vadd.f32 %v61, %v256
  %v258 = vpop.f32.mrb[0].mxu0
  %v259 = vpop.f32.mrb[0].mxu0
  %v260 = vadd.f32 %v61, %v259
  %v261 = vpop.f32.mrb[0].mxu0
  %262 = vmatprep.mubr.bf16.mxu0 %v97
  %263 = vmatmul.mubr.bf16.gmra.mrb[0].mxu0 %v96
  %v264 = vpop.f32.mrb[0].mxu0
  %v265 = vadd.f32 %v61, %v264
  %v266 = vpop.f32.mrb[0].mxu0
  %v267 = vpop.f32.mrb[0].mxu0
  %v268 = vadd.f32 %v61, %v267
  %v269 = vpop.f32.mrb[0].mxu0
  %270 = vmatprep.mubr.bf16.mxu0 %v99
  %271 = vmatmul.mubr.bf16.gmra.mrb[0].mxu0 %v98
  %v272 = vpop.f32.mrb[0].mxu0
  %v273 = vadd.f32 %v61, %v272
  %v274 = vpop.f32.mrb[0].mxu0
  %v275 = vpop.f32.mrb[0].mxu0
  %v276 = vpop.f32.mrb[0].mxu0
  %277 = vdwg.mxu0
  %v278 = vmax.f32 %v241, 0.0
  %v279 = vmax.f32 %v244, 0.0
  %v280 = vmax.f32 %v249, 0.0
  %v281 = vmax.f32 %v252, 0.0
  %v282 = vmax.f32 %v257, 0.0
  %v283 = vmax.f32 %v260, 0.0
  %v284 = vmax.f32 %v265, 0.0
  %v285 = vmax.f32 %v268, 0.0
  %v286 = vmax.f32 %v273, 0.0
  %v287 = vpack.c.bf16 %v279, %v278
  %v288 = vpack.c.bf16 %v281, %v280
  %v289 = vpack.c.bf16 %v283, %v282
  %v290 = vpack.c.bf16 %v285, %v284
  %v291 = vpack.c.bf16 %v286, %v286
  %v297 = vunpack.c.l.b16 %v287
  %v298 = vunpack.c.h.b16 %v287
  %v299 = vunpack.c.l.b16 %v288
  %v300 = vunpack.c.h.b16 %v288
  %v301 = vunpack.c.l.b16 %v289
  %v302 = vunpack.c.h.b16 %v289
  %v303 = vunpack.c.l.b16 %v290
  %v304 = vunpack.c.h.b16 %v290
  %v305 = vunpack.c.l.b16 %v291
  %v306 = vpack.c.b16 %v297, %v297
  %v307 = vpack.c.b16 %v298, %v298
  %v308 = vpack.c.b16 %v299, %v299
  %v309 = vpack.c.b16 %v300, %v300
  %v310 = vpack.c.b16 %v301, %v301
  %v311 = vpack.c.b16 %v302, %v302
  %v312 = vpack.c.b16 %v303, %v303
  %v313 = vpack.c.b16 %v304, %v304
  %v314 = vpack.c.b16 %v305, %v305
  %vm324 = vcmask 519168
  %325 = vst.msk [vmem:[%s3] sm:$0xf] %vm324, %v306
  %326 = vst.msk [vmem:[%s3 + $0x4] sm:$0xf] %vm324, %v307
  %327 = vst.msk [vmem:[%s3 + $0x8] sm:$0xf] %vm324, %v308
  %328 = vst.msk [vmem:[%s3 + $0xc] sm:$0xf] %vm324, %v309
  %329 = vst.msk [vmem:[%s3 + $0x10] sm:$0xf] %vm324, %v310
  %330 = vst.msk [vmem:[%s3 + $0x14] sm:$0xf] %vm324, %v311
  %331 = vst.msk [vmem:[%s3 + $0x18] sm:$0xf] %vm324, %v312
  %332 = vst.msk [vmem:[%s3 + $0x1c] sm:$0xf] %vm324, %v313
  %333 = vst.msk [vmem:[%s3 + $0x20] sm:$0xf] %vm324, %v314
  // Predicated region
  $region14: #{net_forward.21} parent=0 // pred_check
    _
  $region15: #{net_forward.21} parent=0 // pred_check_branch
    %335 = sbr.rel (0) target = $region17
  $region16: #{net_forward.21} parent=0 // pred_region
    _
  $region17: #{net_forward.21} parent=0 // pred_fallthru
    _
  // Predicated region
  $region18: #{net_forward.21} parent=0 // pred_check
    _
  $region19: #{net_forward.21} parent=0 // pred_check_branch
    %337 = sbr.rel (0) target = $region21
  $region20: #{net_forward.21} parent=0 // pred_region
    _
  $region21: #{net_forward.21} parent=0 // pred_fallthru
    _

// kernel: net_forward.22
$region0: #{net_forward.22}
  #allocation0 [shape = 'u32[]', space=smem, size = 0x4, offset = 0x4, fixed_abs, tag = 'smem constant byte address 0x4 - core index']
  #allocation1 [shape = 'u32[144,128]{1,0:T(1,128)}', space=vmem, size = 0x12000, scoped, tag = 'internal scratch']
  %s0 = inlined_call_operand.vmem [shape: bf16[18,256], index: 0, kind: input, shape index: {}]
  %s1 = inlined_call_operand.vmem [shape: bf16[256,128], index: 1, kind: input, shape index: {}]
  %s2 = inlined_call_operand.vmem [shape: f32[1,128], index: 2, kind: input, shape index: {}]
  %s3 = inlined_call_operand.vmem [shape: bf16[18,128], index: 3, kind: input, shape index: {}]
  %s4 = inlined_call_operand.vmem [shape: bf16[18,128], index: 4, kind: output, shape index: {}]
  %s5 = sld [smem:[#allocation0]]
  $region26: #{net_forward.22} parent=0
    _
  %s7 = ssub.s32 1, %s5
  %s8 = scalar_select 0, %s7, %s5
  // Predicated region
  $region2: #{net_forward.22} parent=0 // pred_check
    _
  $region3: #{net_forward.22} parent=0 // pred_check_branch
    %10 = sbr.rel (0) target = $region5
  $region4: #{net_forward.22} parent=0 // pred_region
    _
  $region5: #{net_forward.22} parent=0 // pred_fallthru
    _
  // Predicated region
  $region6: #{net_forward.22} parent=0 // pred_check
    _
  $region7: #{net_forward.22} parent=0 // pred_check_branch
    %12 = sbr.rel (0) target = $region9
  $region8: #{net_forward.22} parent=0 // pred_region
    _
  $region9: #{net_forward.22} parent=0 // pred_fallthru
    _
  // Predicated region
  $region10: #{net_forward.22} parent=0 // pred_check
    _
  $region11: #{net_forward.22} parent=0 // pred_check_branch
    %14 = sbr.rel (0) target = $region13
  $region12: #{net_forward.22} parent=0 // pred_region
    _
  $region13: #{net_forward.22} parent=0 // pred_fallthru
    _
  // Predicated region
  $region14: #{net_forward.22} parent=0 // pred_check
    _
  $region15: #{net_forward.22} parent=0 // pred_check_branch
    %16 = sbr.rel (0) target = $region17
  $region16: #{net_forward.22} parent=0 // pred_region
    _
  $region17: #{net_forward.22} parent=0 // pred_fallthru
    _
  %v18 = vld [vmem:[%s0] sm:$0xff]
  %v19 = vld [vmem:[%s0 + $0x8] sm:$0xff]
  %v20 = vld [vmem:[%s0 + $0x10] sm:$0x11]
  %v21 = vld [vmem:[%s1] sm:$0xf]
  %v22 = vld [vmem:[%s1 + $0x4] sm:$0xf]
  %v23 = vld [vmem:[%s1 + $0x8] sm:$0xf]
  %v24 = vld [vmem:[%s1 + $0xc] sm:$0xf]
  %v25 = vld [vmem:[%s1 + $0x10] sm:$0xf]
  %v26 = vld [vmem:[%s1 + $0x14] sm:$0xf]
  %v27 = vld [vmem:[%s1 + $0x18] sm:$0xf]
  %v28 = vld [vmem:[%s1 + $0x1c] sm:$0xf]
  %v29 = vld [vmem:[%s1 + $0x20] sm:$0xf]
  %v30 = vld [vmem:[%s1 + $0x24] sm:$0xf]
  %v31 = vld [vmem:[%s1 + $0x28] sm:$0xf]
  %v32 = vld [vmem:[%s1 + $0x2c] sm:$0xf]
  %v33 = vld [vmem:[%s1 + $0x30] sm:$0xf]
  %v34 = vld [vmem:[%s1 + $0x34] sm:$0xf]
  %v35 = vld [vmem:[%s1 + $0x38] sm:$0xf]
  %v36 = vld [vmem:[%s1 + $0x3c] sm:$0xf]
  %v37 = vld [vmem:[%s1 + $0x40] sm:$0xf]
  %v38 = vld [vmem:[%s1 + $0x44] sm:$0xf]
  %v39 = vld [vmem:[%s1 + $0x48] sm:$0xf]
  %v40 = vld [vmem:[%s1 + $0x4c] sm:$0xf]
  %v41 = vld [vmem:[%s1 + $0x50] sm:$0xf]
  %v42 = vld [vmem:[%s1 + $0x54] sm:$0xf]
  %v43 = vld [vmem:[%s1 + $0x58] sm:$0xf]
  %v44 = vld [vmem:[%s1 + $0x5c] sm:$0xf]
  %v45 = vld [vmem:[%s1 + $0x60] sm:$0xf]
  %v46 = vld [vmem:[%s1 + $0x64] sm:$0xf]
  %v47 = vld [vmem:[%s1 + $0x68] sm:$0xf]
  %v48 = vld [vmem:[%s1 + $0x6c] sm:$0xf]
  %v49 = vld [vmem:[%s1 + $0x70] sm:$0xf]
  %v50 = vld [vmem:[%s1 + $0x74] sm:$0xf]
  %v51 = vld [vmem:[%s1 + $0x78] sm:$0xf]
  %v52 = vld [vmem:[%s1 + $0x7c] sm:$0xf]
  %v53 = vld [vmem:[%s2] sm:$0x1]
  %v55 = vlaneseq
  %v56 = vshrl.u32 %v55, 7
  %v57 = vsub.s32 0, %v56
  %v58 = vrot.slane %v53, %v57
  %v63 = vunpack.c.l.b16 %v18
  %v64 = vunpack.c.h.b16 %v18
  %v65 = vunpack.c.l.b16 %v19
  %v66 = vunpack.c.h.b16 %v19
  %v67 = vunpack.c.l.b16 %v20
  %v68 = vunpack.c.h.b16 %v20
  %v69 = vpack.c.b16 %v65, %v63
  %v70 = vpack.c.b16 %v66, %v64
  %v71 = vpack.c.b16 %v67, %v67
  %v72 = vpack.c.b16 %v68, %v68
  %v109 = vunpack.c.l.b16 %v21
  %v110 = vunpack.c.l.b16 %v22
  %v111 = vunpack.c.l.b16 %v23
  %v112 = vunpack.c.l.b16 %v24
  %v113 = vunpack.c.l.b16 %v25
  %v114 = vunpack.c.l.b16 %v26
  %v115 = vunpack.c.l.b16 %v27
  %v116 = vunpack.c.l.b16 %v28
  %v117 = vunpack.c.l.b16 %v29
  %v118 = vunpack.c.l.b16 %v30
  %v119 = vunpack.c.l.b16 %v31
  %v120 = vunpack.c.l.b16 %v32
  %v121 = vunpack.c.l.b16 %v33
  %v122 = vunpack.c.l.b16 %v34
  %v123 = vunpack.c.l.b16 %v35
  %v124 = vunpack.c.l.b16 %v36
  %v125 = vunpack.c.l.b16 %v37
  %v126 = vunpack.c.l.b16 %v38
  %v127 = vunpack.c.l.b16 %v39
  %v128 = vunpack.c.l.b16 %v40
  %v129 = vunpack.c.l.b16 %v41
  %v130 = vunpack.c.l.b16 %v42
  %v131 = vunpack.c.l.b16 %v43
  %v132 = vunpack.c.l.b16 %v44
  %v133 = vunpack.c.l.b16 %v45
  %v134 = vunpack.c.l.b16 %v46
  %v135 = vunpack.c.l.b16 %v47
  %v136 = vunpack.c.l.b16 %v48
  %v137 = vunpack.c.l.b16 %v49
  %v138 = vunpack.c.l.b16 %v50
  %v139 = vunpack.c.l.b16 %v51
  %v140 = vunpack.c.l.b16 %v52
  %v141 = vpack.c.b16 %v110, %v109
  %v142 = vpack.c.b16 %v112, %v111
  %v143 = vpack.c.b16 %v114, %v113
  %v144 = vpack.c.b16 %v116, %v115
  %v145 = vpack.c.b16 %v118, %v117
  %v146 = vpack.c.b16 %v120, %v119
  %v147 = vpack.c.b16 %v122, %v121
  %v148 = vpack.c.b16 %v124, %v123
  %v149 = vpack.c.b16 %v126, %v125
  %v150 = vpack.c.b16 %v128, %v127
  %v151 = vpack.c.b16 %v130, %v129
  %v152 = vpack.c.b16 %v132, %v131
  %v153 = vpack.c.b16 %v134, %v133
  %v154 = vpack.c.b16 %v136, %v135
  %v155 = vpack.c.b16 %v138, %v137
  %v156 = vpack.c.b16 %v140, %v139
  %173 = vmatprep.subr.bf16.mxu0 0
  %174 = vmatpush1.bf16.msra.mxu0 %v141
  %175 = vmatprep.subr.bf16.mxu0 0
  %176 = vmatpush1.bf16.msra.mxu0 %v142
  %177 = vmatprep.subr.bf16.mxu0 0
  %178 = vmatpush1.bf16.msra.mxu0 %v143
  %179 = vmatprep.subr.bf16.mxu0 0
  %180 = vmatpush1.bf16.msra.mxu0 %v144
  %181 = vmatprep.subr.bf16.mxu0 0
  %182 = vmatpush1.bf16.msra.mxu0 %v145
  %183 = vmatprep.subr.bf16.mxu0 0
  %184 = vmatpush1.bf16.msra.mxu0 %v146
  %185 = vmatprep.subr.bf16.mxu0 0
  %186 = vmatpush1.bf16.msra.mxu0 %v147
  %187 = vmatprep.subr.bf16.mxu0 0
  %188 = vmatpush1.bf16.msra.mxu0 %v148
  %189 = vmatprep.subr.bf16.mxu0 0
  %190 = vmatpush1.bf16.msra.mxu0 %v149
  %191 = vmatprep.subr.bf16.mxu0 0
  %192 = vmatpush1.bf16.msra.mxu0 %v150
  %193 = vmatprep.subr.bf16.mxu0 0
  %194 = vmatpush1.bf16.msra.mxu0 %v151
  %195 = vmatprep.subr.bf16.mxu0 0
  %196 = vmatpush1.bf16.msra.mxu0 %v152
  %197 = vmatprep.subr.bf16.mxu0 0
  %198 = vmatpush1.bf16.msra.mxu0 %v153
  %199 = vmatprep.subr.bf16.mxu0 0
  %200 = vmatpush1.bf16.msra.mxu0 %v154
  %201 = vmatprep.subr.bf16.mxu0 0
  %202 = vmatpush1.bf16.msra.mxu0 %v155
  %203 = vmatprep.subr.bf16.mxu0 0
  %204 = vmatpush1.bf16.msra.mxu0 %v156
  %205 = vmatprep.mubr.bf16.mxu0 %v70
  %206 = vmatmul.mubr.bf16.gmra.mrb[0].mxu0 %v69
  %v207 = vpop.f32.mrb[0].mxu0
  %v208 = vadd.f32 %v58, %v207
  %v209 = vpop.f32.mrb[0].mxu0
  %v210 = vpop.f32.mrb[0].mxu0
  %v211 = vadd.f32 %v58, %v210
  %v212 = vpop.f32.mrb[0].mxu0
  %213 = vmatprep.mubr.bf16.mxu0 %v72
  %214 = vmatmul.mubr.bf16.gmra.mrb[0].mxu0 %v71
  %v215 = vpop.f32.mrb[0].mxu0
  %v216 = vadd.f32 %v58, %v215
  %v217 = vpop.f32.mrb[0].mxu0
  %v218 = vpop.f32.mrb[0].mxu0
  %v219 = vpop.f32.mrb[0].mxu0
  %220 = vdwg.mxu0
  %v221 = vmax.f32 %v208, 0.0
  %v222 = vmax.f32 %v211, 0.0
  %v223 = vmax.f32 %v216, 0.0
  %v224 = vld [vmem:[%s3] sm:$0xf]
  %v225 = vld [vmem:[%s3 + $0x4] sm:$0xf]
  %v226 = vld [vmem:[%s3 + $0x8] sm:$0x1]
  %v227 = vunpack.c.l.bf16 %v224
  %v228 = vunpack.c.l.bf16 %v225
  %v229 = vunpack.c.l.bf16 %v226
  %v230 = vmul.f32 %v221, %v227
  %v231 = vmul.f32 %v222, %v228
  %v232 = vmul.f32 %v223, %v229
  %v233 = vpack.c.bf16 %v231, %v230
  %v234 = vpack.c.bf16 %v232, %v232
  %v237 = vunpack.c.l.b16 %v233
  %v238 = vunpack.c.h.b16 %v233
  %v239 = vunpack.c.l.b16 %v234
  %v240 = vpack.c.b16 %v237, %v237
  %v241 = vpack.c.b16 %v238, %v238
  %v242 = vpack.c.b16 %v239, %v239
  %246 = vst [vmem:[%s4] sm:$0xf] %v240
  %247 = vst [vmem:[%s4 + $0x4] sm:$0xf] %v241
  %248 = vst [vmem:[%s4 + $0x8] sm:$0x1] %v242
  // Predicated region
  $region18: #{net_forward.22} parent=0 // pred_check
    _
  $region19: #{net_forward.22} parent=0 // pred_check_branch
    %250 = sbr.rel (0) target = $region21
  $region20: #{net_forward.22} parent=0 // pred_region
    _
  $region21: #{net_forward.22} parent=0 // pred_fallthru
    _
  // Predicated region
  $region22: #{net_forward.22} parent=0 // pred_check
    _
  $region23: #{net_forward.22} parent=0 // pred_check_branch
    %252 = sbr.rel (0) target = $region25
  $region24: #{net_forward.22} parent=0 // pred_region
    _
  $region25: #{net_forward.22} parent=0 // pred_fallthru
    _

// kernel: net_forward.23
$region0: #{net_forward.23}
  #allocation0 [shape = 'u32[]', space=smem, size = 0x4, offset = 0x4, fixed_abs, tag = 'smem constant byte address 0x4 - core index']
  #allocation1 [shape = 'u32[144,128]{1,0:T(1,128)}', space=vmem, size = 0x12000, scoped, tag = 'internal scratch']
  %s0 = inlined_call_operand.vmem [shape: bf16[18,128], index: 0, kind: input, shape index: {}]
  %s1 = inlined_call_operand.vmem [shape: bf16[128,128], index: 1, kind: input, shape index: {}]
  %s2 = inlined_call_operand.vmem [shape: f32[1,128], index: 2, kind: input, shape index: {}]
  %s3 = inlined_call_operand.vmem [shape: bf16[128,128], index: 3, kind: input, shape index: {}]
  %s4 = inlined_call_operand.vmem [shape: f32[1,128], index: 4, kind: input, shape index: {}]
  %s5 = inlined_call_operand.vmem [shape: bf16[128,128], index: 5, kind: input, shape index: {}]
  %s6 = inlined_call_operand.vmem [shape: f32[1,128], index: 6, kind: input, shape index: {}]
  %s7 = inlined_call_operand.vmem [shape: bf16[18,128], index: 7, kind: input, shape index: {}]
  %s8 = inlined_call_operand.vmem [shape: f32[2,18], index: 8, kind: input, shape index: {}]
  %s9 = inlined_call_operand.vmem [shape: bf16[128,5], index: 9, kind: input, shape index: {}]
  %s10 = inlined_call_operand.vmem [shape: f32[1,5], index: 10, kind: input, shape index: {}]
  %s11 = inlined_call_operand.hbm [shape: f32[2,5], index: 11, kind: output, shape index: {}]
  %s12 = sld [smem:[#allocation0]]
  $region54: #{net_forward.23} parent=0
    _
  %s14 = ssub.s32 1, %s12
  %s15 = scalar_select 0, %s14, %s12
  $region1: #{net_forward.23} parent=0
    #allocation2 [shape = 'u8[1024]{0}', space=vmem, size = 0x400, scoped, tag = 'output window, operand 0, single buffered']
    #allocation3 [shape = 's32[1]{0}', space=sflag, size = 0x4, scoped, tag = 'scoped memory for net_forward.23']
    %16 = vsyncpa [#allocation3], 0
    // Predicated region
    $region2: #{net_forward.23} parent=1 // pred_check
      _
    $region3: #{net_forward.23} parent=1 // pred_check_branch
      %18 = sbr.rel (0) target = $region5
    $region4: #{net_forward.23} parent=1 // pred_region
      _
    $region5: #{net_forward.23} parent=1 // pred_fallthru
      _
    // Predicated region
    $region6: #{net_forward.23} parent=1 // pred_check
      _
    $region7: #{net_forward.23} parent=1 // pred_check_branch
      %20 = sbr.rel (0) target = $region9
    $region8: #{net_forward.23} parent=1 // pred_region
      _
    $region9: #{net_forward.23} parent=1 // pred_fallthru
      _
    // Predicated region
    $region10: #{net_forward.23} parent=1 // pred_check
      _
    $region11: #{net_forward.23} parent=1 // pred_check_branch
      %22 = sbr.rel (0) target = $region13
    $region12: #{net_forward.23} parent=1 // pred_region
      _
    $region13: #{net_forward.23} parent=1 // pred_fallthru
      _
    // Predicated region
    $region14: #{net_forward.23} parent=1 // pred_check
      _
    $region15: #{net_forward.23} parent=1 // pred_check_branch
      %24 = sbr.rel (0) target = $region17
    $region16: #{net_forward.23} parent=1 // pred_region
      _
    $region17: #{net_forward.23} parent=1 // pred_fallthru
      _
    // Predicated region
    $region18: #{net_forward.23} parent=1 // pred_check
      _
    $region19: #{net_forward.23} parent=1 // pred_check_branch
      %26 = sbr.rel (0) target = $region21
    $region20: #{net_forward.23} parent=1 // pred_region
      _
    $region21: #{net_forward.23} parent=1 // pred_fallthru
      _
    // Predicated region
    $region22: #{net_forward.23} parent=1 // pred_check
      _
    $region23: #{net_forward.23} parent=1 // pred_check_branch
      %28 = sbr.rel (0) target = $region25
    $region24: #{net_forward.23} parent=1 // pred_region
      _
    $region25: #{net_forward.23} parent=1 // pred_fallthru
      _
    // Predicated region
    $region26: #{net_forward.23} parent=1 // pred_check
      _
    $region27: #{net_forward.23} parent=1 // pred_check_branch
      %30 = sbr.rel (0) target = $region29
    $region28: #{net_forward.23} parent=1 // pred_region
      _
    $region29: #{net_forward.23} parent=1 // pred_fallthru
      _
    // Predicated region
    $region30: #{net_forward.23} parent=1 // pred_check
      _
    $region31: #{net_forward.23} parent=1 // pred_check_branch
      %32 = sbr.rel (0) target = $region33
    $region32: #{net_forward.23} parent=1 // pred_region
      _
    $region33: #{net_forward.23} parent=1 // pred_fallthru
      _
    // Predicated region
    $region34: #{net_forward.23} parent=1 // pred_check
      _
    $region35: #{net_forward.23} parent=1 // pred_check_branch
      %34 = sbr.rel (0) target = $region37
    $region36: #{net_forward.23} parent=1 // pred_region
      _
    $region37: #{net_forward.23} parent=1 // pred_fallthru
      _
    // Predicated region
    $region38: #{net_forward.23} parent=1 // pred_check
      _
    $region39: #{net_forward.23} parent=1 // pred_check_branch
      %36 = sbr.rel (0) target = $region41
    $region40: #{net_forward.23} parent=1 // pred_region
      _
    $region41: #{net_forward.23} parent=1 // pred_fallthru
      _
    // Predicated region
    $region42: #{net_forward.23} parent=1 // pred_check
      _
    $region43: #{net_forward.23} parent=1 // pred_check_branch
      %38 = sbr.rel (0) target = $region45
    $region44: #{net_forward.23} parent=1 // pred_region
      _
    $region45: #{net_forward.23} parent=1 // pred_fallthru
      _
    %v40 = vld [vmem:[%s0] sm:$0xf]
    %v41 = vld [vmem:[%s0 + $0x4] sm:$0xf]
    %v42 = vld [vmem:[%s0 + $0x8] sm:$0x1]
    %v43 = vld [vmem:[%s1] sm:$0xf]
    %v44 = vld [vmem:[%s1 + $0x4] sm:$0xf]
    %v45 = vld [vmem:[%s1 + $0x8] sm:$0xf]
    %v46 = vld [vmem:[%s1 + $0xc] sm:$0xf]
    %v47 = vld [vmem:[%s1 + $0x10] sm:$0xf]
    %v48 = vld [vmem:[%s1 + $0x14] sm:$0xf]
    %v49 = vld [vmem:[%s1 + $0x18] sm:$0xf]
    %v50 = vld [vmem:[%s1 + $0x1c] sm:$0xf]
    %v51 = vld [vmem:[%s1 + $0x20] sm:$0xf]
    %v52 = vld [vmem:[%s1 + $0x24] sm:$0xf]
    %v53 = vld [vmem:[%s1 + $0x28] sm:$0xf]
    %v54 = vld [vmem:[%s1 + $0x2c] sm:$0xf]
    %v55 = vld [vmem:[%s1 + $0x30] sm:$0xf]
    %v56 = vld [vmem:[%s1 + $0x34] sm:$0xf]
    %v57 = vld [vmem:[%s1 + $0x38] sm:$0xf]
    %v58 = vld [vmem:[%s1 + $0x3c] sm:$0xf]
    %v59 = vld [vmem:[%s2] sm:$0x1]
    %v61 = vlaneseq
    %v62 = vshrl.u32 %v61, 7
    %v63 = vsub.s32 0, %v62
    %v64 = vrot.slane %v59, %v63
    %v69 = vunpack.c.l.b16 %v40
    %v70 = vunpack.c.l.b16 %v41
    %v71 = vunpack.c.l.b16 %v42
    %v72 = vpack.c.b16 %v70, %v69
    %v73 = vpack.c.b16 %v71, %v71
    %v92 = vunpack.c.l.b16 %v43
    %v93 = vunpack.c.l.b16 %v44
    %v94 = vunpack.c.l.b16 %v45
    %v95 = vunpack.c.l.b16 %v46
    %v96 = vunpack.c.l.b16 %v47
    %v97 = vunpack.c.l.b16 %v48
    %v98 = vunpack.c.l.b16 %v49
    %v99 = vunpack.c.l.b16 %v50
    %v100 = vunpack.c.l.b16 %v51
    %v101 = vunpack.c.l.b16 %v52
    %v102 = vunpack.c.l.b16 %v53
    %v103 = vunpack.c.l.b16 %v54
    %v104 = vunpack.c.l.b16 %v55
    %v105 = vunpack.c.l.b16 %v56
    %v106 = vunpack.c.l.b16 %v57
    %v107 = vunpack.c.l.b16 %v58
    %v108 = vpack.c.b16 %v93, %v92
    %v109 = vpack.c.b16 %v95, %v94
    %v110 = vpack.c.b16 %v97, %v96
    %v111 = vpack.c.b16 %v99, %v98
    %v112 = vpack.c.b16 %v101, %v100
    %v113 = vpack.c.b16 %v103, %v102
    %v114 = vpack.c.b16 %v105, %v104
    %v115 = vpack.c.b16 %v107, %v106
    %124 = vmatprep.subr.bf16.mxu0 0
    %125 = vmatpush1.bf16.msra.mxu0 %v108
    %126 = vmatprep.subr.bf16.mxu0 0
    %127 = vmatpush1.bf16.msra.mxu0 %v109
    %128 = vmatprep.subr.bf16.mxu0 0
    %129 = vmatpush1.bf16.msra.mxu0 %v110
    %130 = vmatprep.subr.bf16.mxu0 0
    %131 = vmatpush1.bf16.msra.mxu0 %v111
    %132 = vmatprep.subr.bf16.mxu0 0
    %133 = vmatpush1.bf16.msra.mxu0 %v112
    %134 = vmatprep.subr.bf16.mxu0 0
    %135 = vmatpush1.bf16.msra.mxu0 %v113
    %136 = vmatprep.subr.bf16.mxu0 0
    %137 = vmatpush1.bf16.msra.mxu0 %v114
    %138 = vmatprep.subr.bf16.mxu0 0
    %139 = vmatpush1.bf16.msra.mxu0 %v115
    %140 = vmatprep.subr.bf16.mxu0 0
    %141 = vmatpush1.bf16.msra.mxu0 0
    %142 = vmatprep.subr.bf16.mxu0 0
    %143 = vmatpush1.bf16.msra.mxu0 0
    %144 = vmatprep.subr.bf16.mxu0 0
    %145 = vmatpush1.bf16.msra.mxu0 0
    %146 = vmatprep.subr.bf16.mxu0 0
    %147 = vmatpush1.bf16.msra.mxu0 0
    %148 = vmatprep.subr.bf16.mxu0 0
    %149 = vmatpush1.bf16.msra.mxu0 0
    %150 = vmatprep.subr.bf16.mxu0 0
    %151 = vmatpush1.bf16.msra.mxu0 0
    %152 = vmatprep.subr.bf16.mxu0 0
    %153 = vmatpush1.bf16.msra.mxu0 0
    %154 = vmatprep.subr.bf16.mxu0 0
    %155 = vmatpush1.bf16.msra.mxu0 0
    %156 = vmatprep.mubr.bf16.mxu0 0
    %157 = vmatmul.mubr.bf16.gmra.mrb[0].mxu0 %v72
    %v158 = vpop.f32.mrb[0].mxu0
    %v159 = vadd.f32 %v64, %v158
    %v160 = vpop.f32.mrb[0].mxu0
    %v161 = vpop.f32.mrb[0].mxu0
    %v162 = vadd.f32 %v64, %v161
    %v163 = vpop.f32.mrb[0].mxu0
    %164 = vmatprep.mubr.bf16.mxu0 0
    %165 = vmatmul.mubr.bf16.gmra.mrb[0].mxu0 %v73
    %v166 = vpop.f32.mrb[0].mxu0
    %v167 = vadd.f32 %v64, %v166
    %v168 = vpop.f32.mrb[0].mxu0
    %v169 = vpop.f32.mrb[0].mxu0
    %v170 = vpop.f32.mrb[0].mxu0
    %171 = vdwg.mxu0
    %v172 = vmax.f32 %v159, 0.0
    %v173 = vmax.f32 %v162, 0.0
    %v174 = vmax.f32 %v167, 0.0
    %v175 = vpack.c.bf16 %v173, %v172
    %v176 = vpack.c.bf16 %v174, %v174
    %v177 = vld [vmem:[%s3] sm:$0xf]
    %v178 = vld [vmem:[%s3 + $0x4] sm:$0xf]
    %v179 = vld [vmem:[%s3 + $0x8] sm:$0xf]
    %v180 = vld [vmem:[%s3 + $0xc] sm:$0xf]
    %v181 = vld [vmem:[%s3 + $0x10] sm:$0xf]
    %v182 = vld [vmem:[%s3 + $0x14] sm:$0xf]
    %v183 = vld [vmem:[%s3 + $0x18] sm:$0xf]
    %v184 = vld [vmem:[%s3 + $0x1c] sm:$0xf]
    %v185 = vld [vmem:[%s3 + $0x20] sm:$0xf]
    %v186 = vld [vmem:[%s3 + $0x24] sm:$0xf]
    %v187 = vld [vmem:[%s3 + $0x28] sm:$0xf]
    %v188 = vld [vmem:[%s3 + $0x2c] sm:$0xf]
    %v189 = vld [vmem:[%s3 + $0x30] sm:$0xf]
    %v190 = vld [vmem:[%s3 + $0x34] sm:$0xf]
    %v191 = vld [vmem:[%s3 + $0x38] sm:$0xf]
    %v192 = vld [vmem:[%s3 + $0x3c] sm:$0xf]
    %v193 = vld [vmem:[%s4] sm:$0x1]
    %v195 = vlaneseq
    %v196 = vshrl.u32 %v195, 7
    %v197 = vsub.s32 0, %v196
    %v198 = vrot.slane %v193, %v197
    %v216 = vunpack.c.l.b16 %v177
    %v217 = vunpack.c.l.b16 %v178
    %v218 = vunpack.c.l.b16 %v179
    %v219 = vunpack.c.l.b16 %v180
    %v220 = vunpack.c.l.b16 %v181
    %v221 = vunpack.c.l.b16 %v182
    %v222 = vunpack.c.l.b16 %v183
    %v223 = vunpack.c.l.b16 %v184
    %v224 = vunpack.c.l.b16 %v185
    %v225 = vunpack.c.l.b16 %v186
    %v226 = vunpack.c.l.b16 %v187
    %v227 = vunpack.c.l.b16 %v188
    %v228 = vunpack.c.l.b16 %v189
    %v229 = vunpack.c.l.b16 %v190
    %v230 = vunpack.c.l.b16 %v191
    %v231 = vunpack.c.l.b16 %v192
    %v232 = vpack.c.b16 %v217, %v216
    %v233 = vpack.c.b16 %v219, %v218
    %v234 = vpack.c.b16 %v221, %v220
    %v235 = vpack.c.b16 %v223, %v222
    %v236 = vpack.c.b16 %v225, %v224
    %v237 = vpack.c.b16 %v227, %v226
    %v238 = vpack.c.b16 %v229, %v228
    %v239 = vpack.c.b16 %v231, %v230
    %248 = vmatprep.subr.bf16.mxu0 0
    %249 = vmatpush1.bf16.msra.mxu0 %v232
    %250 = vmatprep.subr.bf16.mxu0 0
    %251 = vmatpush1.bf16.msra.mxu0 %v233
    %252 = vmatprep.subr.bf16.mxu0 0
    %253 = vmatpush1.bf16.msra.mxu0 %v234
    %254 = vmatprep.subr.bf16.mxu0 0
    %255 = vmatpush1.bf16.msra.mxu0 %v235
    %256 = vmatprep.subr.bf16.mxu0 0
    %257 = vmatpush1.bf16.msra.mxu0 %v236
    %258 = vmatprep.subr.bf16.mxu0 0
    %259 = vmatpush1.bf16.msra.mxu0 %v237
    %260 = vmatprep.subr.bf16.mxu0 0
    %261 = vmatpush1.bf16.msra.mxu0 %v238
    %262 = vmatprep.subr.bf16.mxu0 0
    %263 = vmatpush1.bf16.msra.mxu0 %v239
    %264 = vmatprep.subr.bf16.mxu0 0
    %265 = vmatpush1.bf16.msra.mxu0 0
    %266 = vmatprep.subr.bf16.mxu0 0
    %267 = vmatpush1.bf16.msra.mxu0 0
    %268 = vmatprep.subr.bf16.mxu0 0
    %269 = vmatpush1.bf16.msra.mxu0 0
    %270 = vmatprep.subr.bf16.mxu0 0
    %271 = vmatpush1.bf16.msra.mxu0 0
    %272 = vmatprep.subr.bf16.mxu0 0
    %273 = vmatpush1.bf16.msra.mxu0 0
    %274 = vmatprep.subr.bf16.mxu0 0
    %275 = vmatpush1.bf16.msra.mxu0 0
    %276 = vmatprep.subr.bf16.mxu0 0
    %277 = vmatpush1.bf16.msra.mxu0 0
    %278 = vmatprep.subr.bf16.mxu0 0
    %279 = vmatpush1.bf16.msra.mxu0 0
    %280 = vmatprep.mubr.bf16.mxu0 0
    %281 = vmatmul.mubr.bf16.gmra.mrb[0].mxu0 %v175
    %v282 = vpop.f32.mrb[0].mxu0
    %v283 = vadd.f32 %v198, %v282
    %v284 = vpop.f32.mrb[0].mxu0
    %v285 = vpop.f32.mrb[0].mxu0
    %v286 = vadd.f32 %v198, %v285
    %v287 = vpop.f32.mrb[0].mxu0
    %288 = vmatprep.mubr.bf16.mxu0 0
    %289 = vmatmul.mubr.bf16.gmra.mrb[0].mxu0 %v176
    %v290 = vpop.f32.mrb[0].mxu0
    %v291 = vadd.f32 %v198, %v290
    %v292 = vpop.f32.mrb[0].mxu0
    %v293 = vpop.f32.mrb[0].mxu0
    %v294 = vpop.f32.mrb[0].mxu0
    %295 = vdwg.mxu0
    %v296 = vmax.f32 %v283, 0.0
    %v297 = vmax.f32 %v286, 0.0
    %v298 = vmax.f32 %v291, 0.0
    %v299 = vpack.c.bf16 %v297, %v296
    %v300 = vpack.c.bf16 %v298, %v298
    %v301 = vld [vmem:[%s5] sm:$0xf]
    %v302 = vld [vmem:[%s5 + $0x4] sm:$0xf]
    %v303 = vld [vmem:[%s5 + $0x8] sm:$0xf]
    %v304 = vld [vmem:[%s5 + $0xc] sm:$0xf]
    %v305 = vld [vmem:[%s5 + $0x10] sm:$0xf]
    %v306 = vld [vmem:[%s5 + $0x14] sm:$0xf]
    %v307 = vld [vmem:[%s5 + $0x18] sm:$0xf]
    %v308 = vld [vmem:[%s5 + $0x1c] sm:$0xf]
    %v309 = vld [vmem:[%s5 + $0x20] sm:$0xf]
    %v310 = vld [vmem:[%s5 + $0x24] sm:$0xf]
    %v311 = vld [vmem:[%s5 + $0x28] sm:$0xf]
    %v312 = vld [vmem:[%s5 + $0x2c] sm:$0xf]
    %v313 = vld [vmem:[%s5 + $0x30] sm:$0xf]
    %v314 = vld [vmem:[%s5 + $0x34] sm:$0xf]
    %v315 = vld [vmem:[%s5 + $0x38] sm:$0xf]
    %v316 = vld [vmem:[%s5 + $0x3c] sm:$0xf]
    %v317 = vld [vmem:[%s6] sm:$0x1]
    %v319 = vlaneseq
    %v320 = vshrl.u32 %v319, 7
    %v321 = vsub.s32 0, %v320
    %v322 = vrot.slane %v317, %v321
    %v340 = vunpack.c.l.b16 %v301
    %v341 = vunpack.c.l.b16 %v302
    %v342 = vunpack.c.l.b16 %v303
    %v343 = vunpack.c.l.b16 %v304
    %v344 = vunpack.c.l.b16 %v305
    %v345 = vunpack.c.l.b16 %v306
    %v346 = vunpack.c.l.b16 %v307
    %v347 = vunpack.c.l.b16 %v308
    %v348 = vunpack.c.l.b16 %v309
    %v349 = vunpack.c.l.b16 %v310
    %v350 = vunpack.c.l.b16 %v311
    %v351 = vunpack.c.l.b16 %v312
    %v352 = vunpack.c.l.b16 %v313
    %v353 = vunpack.c.l.b16 %v314
    %v354 = vunpack.c.l.b16 %v315
    %v355 = vunpack.c.l.b16 %v316
    %v356 = vpack.c.b16 %v341, %v340
    %v357 = vpack.c.b16 %v343, %v342
    %v358 = vpack.c.b16 %v345, %v344
    %v359 = vpack.c.b16 %v347, %v346
    %v360 = vpack.c.b16 %v349, %v348
    %v361 = vpack.c.b16 %v351, %v350
    %v362 = vpack.c.b16 %v353, %v352
    %v363 = vpack.c.b16 %v355, %v354
    %372 = vmatprep.subr.bf16.mxu0 0
    %373 = vmatpush1.bf16.msra.mxu0 %v356
    %374 = vmatprep.subr.bf16.mxu0 0
    %375 = vmatpush1.bf16.msra.mxu0 %v357
    %376 = vmatprep.subr.bf16.mxu0 0
    %377 = vmatpush1.bf16.msra.mxu0 %v358
    %378 = vmatprep.subr.bf16.mxu0 0
    %379 = vmatpush1.bf16.msra.mxu0 %v359
    %380 = vmatprep.subr.bf16.mxu0 0
    %381 = vmatpush1.bf16.msra.mxu0 %v360
    %382 = vmatprep.subr.bf16.mxu0 0
    %383 = vmatpush1.bf16.msra.mxu0 %v361
    %384 = vmatprep.subr.bf16.mxu0 0
    %385 = vmatpush1.bf16.msra.mxu0 %v362
    %386 = vmatprep.subr.bf16.mxu0 0
    %387 = vmatpush1.bf16.msra.mxu0 %v363
    %388 = vmatprep.subr.bf16.mxu0 0
    %389 = vmatpush1.bf16.msra.mxu0 0
    %390 = vmatprep.subr.bf16.mxu0 0
    %391 = vmatpush1.bf16.msra.mxu0 0
    %392 = vmatprep.subr.bf16.mxu0 0
    %393 = vmatpush1.bf16.msra.mxu0 0
    %394 = vmatprep.subr.bf16.mxu0 0
    %395 = vmatpush1.bf16.msra.mxu0 0
    %396 = vmatprep.subr.bf16.mxu0 0
    %397 = vmatpush1.bf16.msra.mxu0 0
    %398 = vmatprep.subr.bf16.mxu0 0
    %399 = vmatpush1.bf16.msra.mxu0 0
    %400 = vmatprep.subr.bf16.mxu0 0
    %401 = vmatpush1.bf16.msra.mxu0 0
    %402 = vmatprep.subr.bf16.mxu0 0
    %403 = vmatpush1.bf16.msra.mxu0 0
    %404 = vmatprep.mubr.bf16.mxu0 0
    %405 = vmatmul.mubr.bf16.gmra.mrb[0].mxu0 %v299
    %v406 = vpop.f32.mrb[0].mxu0
    %v407 = vadd.f32 %v322, %v406
    %v408 = vpop.f32.mrb[0].mxu0
    %v409 = vpop.f32.mrb[0].mxu0
    %v410 = vadd.f32 %v322, %v409
    %v411 = vpop.f32.mrb[0].mxu0
    %412 = vmatprep.mubr.bf16.mxu0 0
    %413 = vmatmul.mubr.bf16.gmra.mrb[0].mxu0 %v300
    %v414 = vpop.f32.mrb[0].mxu0
    %v415 = vadd.f32 %v322, %v414
    %v416 = vpop.f32.mrb[0].mxu0
    %v417 = vpop.f32.mrb[0].mxu0
    %v418 = vpop.f32.mrb[0].mxu0
    %419 = vdwg.mxu0
    %v420 = vmax.f32 %v407, 0.0
    %v421 = vmax.f32 %v410, 0.0
    %v422 = vmax.f32 %v415, 0.0
    %v423 = vld [vmem:[%s7] sm:$0xf]
    %v424 = vld [vmem:[%s7 + $0x4] sm:$0xf]
    %v425 = vld [vmem:[%s7 + $0x8] sm:$0x1]
    %v426 = vunpack.c.l.bf16 %v423
    %v427 = vunpack.c.l.bf16 %v424
    %v428 = vunpack.c.l.bf16 %v425
    %v429 = vmul.f32 %v420, %v426
    %v430 = vmul.f32 %v421, %v427
    %v431 = vmul.f32 %v422, %v428
    %v432 = vld [vmem:[%s8] sm:$0x3]
    %vm433 = vcmask 146432
    %v435 = vsel %vm433, %v432, 0
    %vm437 = vcmask 1041408
    %v439 = vsel %vm437, %v431, 0
    %441 = vmatprep.subr.mxu0 0.0
    %442 = vmatpush1.msra.mxu0 %v429
    %443 = vmatprep.subr.mxu0 0.0
    %444 = vmatpush1.msra.mxu0 %v430
    %445 = vmatprep.subr.mxu0 0.0
    %446 = vmatpush1.msra.mxu0 %v439
    %447 = vmatprep.subr.mxu0 0.0
    %448 = vmatpush1.msra.mxu0 0.0
    %449 = vmatprep.subr.mxu0 0.0
    %450 = vmatpush1.msra.mxu0 0.0
    %451 = vmatprep.subr.mxu0 0.0
    %452 = vmatpush1.msra.mxu0 0.0
    %453 = vmatprep.subr.mxu0 0.0
    %454 = vmatpush1.msra.mxu0 0.0
    %455 = vmatprep.subr.mxu0 0.0
    %456 = vmatpush1.msra.mxu0 0.0
    %457 = vmatprep.subr.mxu0 0.0
    %458 = vmatpush1.msra.mxu0 0.0
    %459 = vmatprep.subr.mxu0 0.0
    %460 = vmatpush1.msra.mxu0 0.0
    %461 = vmatprep.subr.mxu0 0.0
    %462 = vmatpush1.msra.mxu0 0.0
    %463 = vmatprep.subr.mxu0 0.0
    %464 = vmatpush1.msra.mxu0 0.0
    %465 = vmatprep.subr.mxu0 0.0
    %466 = vmatpush1.msra.mxu0 0.0
    %467 = vmatprep.subr.mxu0 0.0
    %468 = vmatpush1.msra.mxu0 0.0
    %469 = vmatprep.subr.mxu0 0.0
    %470 = vmatpush1.msra.mxu0 0.0
    %471 = vmatprep.subr.mxu0 0.0
    %472 = vmatpush1.msra.mxu0 0.0
    %473 = vmatprep.subr.mxu0 0.0
    %474 = vmatpush1.msra.mxu0 0.0
    %475 = vmatprep.subr.mxu0 0.0
    %476 = vmatpush1.msra.mxu0 0.0
    %477 = vmatprep.subr.mxu0 0.0
    %478 = vmatpush1.msra.mxu0 0.0
    %479 = vmatprep.subr.mxu0 0.0
    %480 = vmatpush1.msra.mxu0 0.0
    %481 = vmatprep.subr.mxu0 0.0
    %482 = vmatpush1.msra.mxu0 0.0
    %483 = vmatprep.subr.mxu0 0.0
    %484 = vmatpush1.msra.mxu0 0.0
    %485 = vmatprep.subr.mxu0 0.0
    %486 = vmatpush1.msra.mxu0 0.0
    %487 = vmatprep.subr.mxu0 0.0
    %488 = vmatpush1.msra.mxu0 0.0
    %489 = vmatprep.subr.mxu0 0.0
    %490 = vmatpush1.msra.mxu0 0.0
    %491 = vmatprep.subr.mxu0 0.0
    %492 = vmatpush1.msra.mxu0 0.0
    %493 = vmatprep.subr.mxu0 0.0
    %494 = vmatpush1.msra.mxu0 0.0
    %495 = vmatprep.subr.mxu0 0.0
    %496 = vmatpush1.msra.mxu0 0.0
    %497 = vmatprep.subr.mxu0 0.0
    %498 = vmatpush1.msra.mxu0 0.0
    %499 = vmatprep.subr.mxu0 0.0
    %500 = vmatpush1.msra.mxu0 0.0
    %501 = vmatprep.subr.mxu0 0.0
    %502 = vmatpush1.msra.mxu0 0.0
    %503 = vmatprep.subr.mxu0 0.0
    %504 = vmatpush1.msra.mxu0 0.0
    %505 = vmatprep.mubr.f32.mxu0 0.0
    %506 = vmatmul.mubr.f32.gmra.mrb[0].mxu0 %v435
    %v507 = vpop.f32.mrb[0].mxu0
    %v508 = vadd.f32 0.0, %v507
    %v509 = vpop.f32.mrb[0].mxu0
    %510 = vdwg.mxu0
    %v511 = vmax.f32 %v508, 0.0
    %v512 = vpack.c.bf16 %v511, %v511
    %v513 = vld [vmem:[%s9] sm:$0xf]
    %v514 = vld [vmem:[%s9 + $0x4] sm:$0xf]
    %v515 = vld [vmem:[%s9 + $0x8] sm:$0xf]
    %v516 = vld [vmem:[%s9 + $0xc] sm:$0xf]
    %v517 = vld [vmem:[%s9 + $0x10] sm:$0xf]
    %v518 = vld [vmem:[%s9 + $0x14] sm:$0xf]
    %v519 = vld [vmem:[%s9 + $0x18] sm:$0xf]
    %v520 = vld [vmem:[%s9 + $0x1c] sm:$0xf]
    %v521 = vld [vmem:[%s9 + $0x20] sm:$0xf]
    %v522 = vld [vmem:[%s9 + $0x24] sm:$0xf]
    %v523 = vld [vmem:[%s9 + $0x28] sm:$0xf]
    %v524 = vld [vmem:[%s9 + $0x2c] sm:$0xf]
    %v525 = vld [vmem:[%s9 + $0x30] sm:$0xf]
    %v526 = vld [vmem:[%s9 + $0x34] sm:$0xf]
    %v527 = vld [vmem:[%s9 + $0x38] sm:$0xf]
    %v528 = vld [vmem:[%s9 + $0x3c] sm:$0xf]
    %v529 = vld [vmem:[%s10] sm:$0x1]
    %v531 = vlaneseq
    %v532 = vshrl.u32 %v531, 7
    %v533 = vsub.s32 0, %v532
    %v534 = vrot.slane %v529, %v533
    %v552 = vunpack.c.l.b16 %v513
    %v553 = vunpack.c.l.b16 %v514
    %v554 = vunpack.c.l.b16 %v515
    %v555 = vunpack.c.l.b16 %v516
    %v556 = vunpack.c.l.b16 %v517
    %v557 = vunpack.c.l.b16 %v518
    %v558 = vunpack.c.l.b16 %v519
    %v559 = vunpack.c.l.b16 %v520
    %v560 = vunpack.c.l.b16 %v521
    %v561 = vunpack.c.l.b16 %v522
    %v562 = vunpack.c.l.b16 %v523
    %v563 = vunpack.c.l.b16 %v524
    %v564 = vunpack.c.l.b16 %v525
    %v565 = vunpack.c.l.b16 %v526
    %v566 = vunpack.c.l.b16 %v527
    %v567 = vunpack.c.l.b16 %v528
    %v568 = vpack.c.b16 %v553, %v552
    %v569 = vpack.c.b16 %v555, %v554
    %v570 = vpack.c.b16 %v557, %v556
    %v571 = vpack.c.b16 %v559, %v558
    %v572 = vpack.c.b16 %v561, %v560
    %v573 = vpack.c.b16 %v563, %v562
    %v574 = vpack.c.b16 %v565, %v564
    %v575 = vpack.c.b16 %v567, %v566
    %584 = vmatprep.subr.bf16.mxu0 0
    %585 = vmatpush1.bf16.msra.mxu0 %v568
    %586 = vmatprep.subr.bf16.mxu0 0
    %587 = vmatpush1.bf16.msra.mxu0 %v569
    %588 = vmatprep.subr.bf16.mxu0 0
    %589 = vmatpush1.bf16.msra.mxu0 %v570
    %590 = vmatprep.subr.bf16.mxu0 0
    %591 = vmatpush1.bf16.msra.mxu0 %v571
    %592 = vmatprep.subr.bf16.mxu0 0
    %593 = vmatpush1.bf16.msra.mxu0 %v572
    %594 = vmatprep.subr.bf16.mxu0 0
    %595 = vmatpush1.bf16.msra.mxu0 %v573
    %596 = vmatprep.subr.bf16.mxu0 0
    %597 = vmatpush1.bf16.msra.mxu0 %v574
    %598 = vmatprep.subr.bf16.mxu0 0
    %599 = vmatpush1.bf16.msra.mxu0 %v575
    %600 = vmatprep.subr.bf16.mxu0 0
    %601 = vmatpush1.bf16.msra.mxu0 0
    %602 = vmatprep.subr.bf16.mxu0 0
    %603 = vmatpush1.bf16.msra.mxu0 0
    %604 = vmatprep.subr.bf16.mxu0 0
    %605 = vmatpush1.bf16.msra.mxu0 0
    %606 = vmatprep.subr.bf16.mxu0 0
    %607 = vmatpush1.bf16.msra.mxu0 0
    %608 = vmatprep.subr.bf16.mxu0 0
    %609 = vmatpush1.bf16.msra.mxu0 0
    %610 = vmatprep.subr.bf16.mxu0 0
    %611 = vmatpush1.bf16.msra.mxu0 0
    %612 = vmatprep.subr.bf16.mxu0 0
    %613 = vmatpush1.bf16.msra.mxu0 0
    %614 = vmatprep.subr.bf16.mxu0 0
    %615 = vmatpush1.bf16.msra.mxu0 0
    %616 = vmatprep.mubr.bf16.mxu0 0
    %617 = vmatmul.mubr.bf16.gmra.mrb[0].mxu0 %v512
    %v618 = vpop.f32.mrb[0].mxu0
    %v619 = vadd.f32 %v534, %v618
    %v620 = vpop.f32.mrb[0].mxu0
    %v621 = vpop.f32.mrb[0].mxu0
    %v622 = vpop.f32.mrb[0].mxu0
    %623 = vdwg.mxu0
    %vm624 = vcmask 33792
    %625 = vst.msk [vmem:[#allocation2] sm:$0x3] %vm624, %v619
    // Predicated region
    $region46: #{net_forward.23} parent=1 // pred_check
      _
    $region47: #{net_forward.23} parent=1 // pred_check_branch
      %627 = sbr.rel (0) target = $region49
    $region48: #{net_forward.23} parent=1 // pred_region
      %s629 = ssub.s32 32, 32
      %630 = vsyncadd [#allocation3], %s629
      %s632 = sshll.u32 [#allocation2], 4
      %s633 = int_to_ptr.vmem [resolvable:$true] %s632
      %635 = dma.vmem_to_hbm [thread:$0]  %s633, 32, %s11, [#allocation3]
    $region49: #{net_forward.23} parent=1 // pred_fallthru
      _
    // Predicated region
    $region50: #{net_forward.23} parent=1 // pred_check
      _
    $region51: #{net_forward.23} parent=1 // pred_check_branch
      %637 = sbr.rel (0) target = $region53
    $region52: #{net_forward.23} parent=1 // pred_region
      %638 = dma.done [#allocation3], 32
    $region53: #{net_forward.23} parent=1 // pred_fallthru
      _
    %639 = vsyncpa [#allocation3], 1

</llo_original>
